<compile_context>
chip_gen: v7x
topology: tpu7x:2x2x1
jax: 0.10.0
libtpu: 0.0.40
codegen_flags: <defaults>
</compile_context>

<pallas_src>
import functools

import jax
import jax.numpy as jnp
from jax import lax
from jax.experimental import pallas as pl
from jax.experimental.pallas import tpu as pltpu


_NEG_SLOPE = 0.2
_BN_EPS = 1e-5
_VMEM_LIMIT = 32 * 1024 * 1024


# --------------------------- block-size heuristics ---------------------------

def _pick_bb(B, hswo, K, howo, Co, budget_bytes=4 << 20):
    """Largest divisor of B whose bf16 (input + output) block fits the budget."""
    per_img = hswo * K * 2 + howo * Co * 2
    for d in range(B, 0, -1):
        if B % d == 0 and d * per_img <= budget_bytes:
            return d
    return 1


def _pick_hc(Bb, Ho, Wo, Co):
    """Row chunk dividing Ho: f32 accumulator ~<=128KB while keeping M>=256."""
    target_rows = max(256, 32768 // max(Co, 1))
    hc = Ho
    while hc % 2 == 0 and Bb * hc * Wo > target_rows:
        hc //= 2
    return hc


# ------------------------------ Pallas kernels -------------------------------

def _conv_leaky_kernel(x_ref, w_ref, b_ref, o_ref, *, Ho, Wo, hc, neg_slope):
    """2-row-tap conv + bias + LeakyReLU over a block of Bb images.

    x_ref: (Bb, Hs*Wo, 8*Ci) -- W-direction im2col of the padded input.
    w_ref: (2, 8*Ci, Co)     -- weights for kernel row-pairs di in {0,1}.
    """
    Bb, _, K = x_ref.shape
    Co = o_ref.shape[-1]
    for c in range(Ho // hc):
        h0 = c * hc
        acc = None
        for di in range(2):
            xs = x_ref[:, pl.ds((h0 + di) * Wo, hc * Wo), :].reshape(
                Bb * hc * Wo, K)
            p = jnp.dot(xs, w_ref[di], preferred_element_type=jnp.float32)
            acc = p if acc is None else acc + p
        acc = acc + b_ref[...]
        acc = jnp.where(acc >= 0, acc, neg_slope * acc)
        o_ref[:, pl.ds(h0 * Wo, hc * Wo), :] = (
            acc.reshape(Bb, hc * Wo, Co).astype(o_ref.dtype))


def _conv_stats_kernel(x_ref, w_ref, o_ref, sum_ref, sq_ref, *, Ho, Wo, hc):
    """2-row-tap conv (bias dropped: train-mode BN cancels it) + fused
    per-channel PARTIAL sum / sum-of-squares for this batch block.  Partials
    are written per grid step (reduced later in XLA) so the batch axis stays
    "parallel" (v7x megacore)."""
    Bb, _, K = x_ref.shape
    Co = o_ref.shape[-1]
    tsum = jnp.zeros((1, Co), jnp.float32)
    tsq = jnp.zeros((1, Co), jnp.float32)
    for c in range(Ho // hc):
        h0 = c * hc
        acc = None
        for di in range(2):
            xs = x_ref[:, pl.ds((h0 + di) * Wo, hc * Wo), :].reshape(
                Bb * hc * Wo, K)
            p = jnp.dot(xs, w_ref[di], preferred_element_type=jnp.float32)
            acc = p if acc is None else acc + p
        tsum = tsum + jnp.sum(acc, axis=0, keepdims=True)
        tsq = tsq + jnp.sum(acc * acc, axis=0, keepdims=True)
        # NOTE: stats come from the f32 accumulator while the stored/normalized
        # activation is bf16 -- tiny mismatch vs torch, inside 5e-2 tolerance.
        o_ref[:, pl.ds(h0 * Wo, hc * Wo), :] = (
            acc.reshape(Bb, hc * Wo, Co).astype(o_ref.dtype))
    sum_ref[...] = tsum
    sq_ref[...] = tsq


def _head_kernel(feat_ref, hair_ref, eye_ref, wf_ref, wh_ref, we_ref, b_ref,
                 logit_ref, sig_ref):
    """(linear1 composed with linear2's feature slice) + hair/eye dots + sigmoid."""
    z = jnp.sum(feat_ref[...] * wf_ref[...], axis=1, keepdims=True)
    z = z + jnp.sum(hair_ref[...] * wh_ref[...], axis=1, keepdims=True)
    z = z + jnp.sum(eye_ref[...] * we_ref[...], axis=1, keepdims=True)
    z = z + b_ref[...]
    logit_ref[...] = z
    sig_ref[...] = 1.0 / (1.0 + jnp.exp(-z))


# ---------------------------- pallas_call wrappers ---------------------------

def conv_s2d_leaky(x, w_taps, bias, Ho, Wo, neg_slope=_NEG_SLOPE):
    B, hswo, K = x.shape
    Co = w_taps.shape[-1]
    Bb = _pick_bb(B, hswo, K, Ho * Wo, Co)
    hc = _pick_hc(Bb, Ho, Wo, Co)
    kernel = functools.partial(_conv_leaky_kernel, Ho=Ho, Wo=Wo, hc=hc,
                               neg_slope=neg_slope)
    return pl.pallas_call(
        kernel,
        out_shape=jax.ShapeDtypeStruct((B, Ho * Wo, Co), jnp.bfloat16),
        grid=(B // Bb,),
        in_specs=[
            pl.BlockSpec((Bb, hswo, K), lambda b: (b, 0, 0)),
            pl.BlockSpec((2, K, Co), lambda b: (0, 0, 0)),
            pl.BlockSpec((1, Co), lambda b: (0, 0)),
        ],
        out_specs=pl.BlockSpec((Bb, Ho * Wo, Co), lambda b: (b, 0, 0)),
        compiler_params=pltpu.CompilerParams(
            dimension_semantics=("parallel",),
            vmem_limit_bytes=_VMEM_LIMIT),
    )(x, w_taps, bias)


def conv_s2d_bn_stats(x, w_taps, Ho, Wo):
    B, hswo, K = x.shape
    Co = w_taps.shape[-1]
    Bb = _pick_bb(B, hswo, K, Ho * Wo, Co)
    hc = _pick_hc(Bb, Ho, Wo, Co)
    nb = B // Bb
    kernel = functools.partial(_conv_stats_kernel, Ho=Ho, Wo=Wo, hc=hc)
    return pl.pallas_call(
        kernel,
        out_shape=(jax.ShapeDtypeStruct((B, Ho * Wo, Co), jnp.bfloat16),
                   jax.ShapeDtypeStruct((nb, Co), jnp.float32),
                   jax.ShapeDtypeStruct((nb, Co), jnp.float32)),
        grid=(nb,),
        in_specs=[
            pl.BlockSpec((Bb, hswo, K), lambda b: (b, 0, 0)),
            pl.BlockSpec((2, K, Co), lambda b: (0, 0, 0)),
        ],
        out_specs=(pl.BlockSpec((Bb, Ho * Wo, Co), lambda b: (b, 0, 0)),
                   pl.BlockSpec((1, Co), lambda b: (b, 0)),
                   pl.BlockSpec((1, Co), lambda b: (b, 0))),
        compiler_params=pltpu.CompilerParams(
            dimension_semantics=("parallel",),
            vmem_limit_bytes=_VMEM_LIMIT),
    )(x, w_taps)


def head(feat, hair, eye, w_head, w_hair, w_eye, b_head):
    B = feat.shape[0]
    return pl.pallas_call(
        _head_kernel,
        out_shape=(jax.ShapeDtypeStruct((B, 1), jnp.float32),
                   jax.ShapeDtypeStruct((B, 1), jnp.float32)),
        compiler_params=pltpu.CompilerParams(vmem_limit_bytes=_VMEM_LIMIT),
    )(feat, hair, eye, w_head, w_hair, w_eye, b_head)


# --------------------------------- JAX glue ----------------------------------

def prep_conv_input(a_nhwc_bf16):
    """pad(1) + W-direction im2col (window 4, stride 2) + row pairing.

    (B, H, W, C) -> (B, Hs*Wo, 8*C), Hs = H//2 + 1, last-dim order
    (row-in-pair, kw, c).  One fused HBM-bound XLA pass in bf16.
    """
    B, H, W, C = a_nhwc_bf16.shape
    Ho, Wo, Hs = H // 2, W // 2, H // 2 + 1
    ap = jnp.pad(a_nhwc_bf16, ((0, 0), (1, 1), (1, 1), (0, 0)))
    ap = ap.reshape(B, Hs, 2, W + 2, C)
    cols = [lax.slice_in_dim(ap, k, k + 2 * Wo - 1, stride=2, axis=3)
            for k in range(4)]                        # each (B, Hs, 2, Wo, C)
    x = jnp.stack(cols, axis=3)                       # (B, Hs, 2, 4, Wo, C)
    x = jnp.transpose(x, (0, 1, 4, 2, 3, 5))          # (B, Hs, Wo, 2, 4, C)
    return x.reshape(B, Hs * Wo, 8 * C)


def bn_leaky(y, psum, psq, gamma, beta, count, neg_slope=_NEG_SLOPE,
             eps=_BN_EPS):
    """training-mode BatchNorm (partial stats from the conv kernel) + LeakyReLU."""
    ssum = psum.sum(axis=0)
    ssq = psq.sum(axis=0)
    mean = ssum / count
    var = jnp.maximum(ssq / count - mean * mean, 0.0)   # clamp: cancellation guard
    scale = gamma * lax.rsqrt(var + eps)
    shift = beta - mean * scale
    a = y.astype(jnp.float32) * scale + shift
    return jnp.where(a >= 0, a, neg_slope * a)


def conv_weight_to_row_taps(w):
    """torch Conv2d weight (Co,Ci,4,4) -> 2 row-pair tap matrices (2, 8*Ci, Co)."""
    Co, Ci, kH, kW = w.shape
    assert kH == 4 and kW == 4
    w5 = w.reshape(Co, Ci, 2, 2, 4)               # (co, ci, di, r, kw)
    wt = jnp.transpose(w5, (2, 3, 4, 1, 0))       # (di, r, kw, ci, co)
    return wt.reshape(2, 8 * Ci, Co)


def prepare_params(params, ndf, hair_len, eye_len, feat_hw=4):
    """One-time re-layout of torch-style params into kernel-ready tensors."""
    prep = {}
    for i in (1, 2, 3, 4):
        prep[f"conv{i}_wt"] = conv_weight_to_row_taps(
            params[f"conv{i}_w"]).astype(jnp.bfloat16)
    prep["conv1_b"] = params["conv1_b"].reshape(1, -1).astype(jnp.float32)
    for i in (2, 3, 4):
        prep[f"bn{i}_g"] = params[f"bn{i}_g"].astype(jnp.float32)
        prep[f"bn{i}_b"] = params[f"bn{i}_b"].astype(jnp.float32)

    # Head pre-composition (exact: the torch module has NO nonlinearity between
    # linear1 and linear2):
    #   logit = feat @ (lin1_w_perm @ lin2_wf.T) + (lin1_b @ lin2_wf.T + lin2_b)
    #           + hair @ lin2_wh.T + eye @ lin2_we.T
    # lin1's input dim is permuted from torch's NCHW flatten order to the NHWC
    # order produced by the conv pipeline.
    co4 = ndf * 8
    w1 = params["lin1_w"].astype(jnp.float32).T            # (F, 100), NCHW rows
    w1 = w1.reshape(co4, feat_hw, feat_hw, -1)
    w1 = jnp.transpose(w1, (1, 2, 0, 3)).reshape(co4 * feat_hw * feat_hw, -1)
    w2 = params["lin2_w"].astype(jnp.float32)               # (1, 100+hair+eye)
    w2f = w2[:, :100]
    prep["w_head"] = (w1 @ w2f.T).reshape(1, -1)             # (1, F)
    prep["w_hair"] = w2[:, 100:100 + hair_len]
    prep["w_eye"] = w2[:, 100 + hair_len:]
    b_head = (params["lin1_b"].astype(jnp.float32) @ w2f[0]
              + params["lin2_b"].astype(jnp.float32)[0])
    prep["b_head"] = b_head.reshape(1, 1)
    return prep


def discriminator_forward(prep, imgs_nchw, hair, eye, neg_slope=_NEG_SLOPE):
    """Pallas forward.  Returns (logit, sigmoid(logit)) ~ torch's (x, x_sig)."""
    B, _, H, W = imgs_nchw.shape
    x = jnp.transpose(imgs_nchw, (0, 2, 3, 1)).astype(jnp.bfloat16)  # NHWC bf16

    # conv1 + bias + LeakyReLU (no BN on the first block, as in the module)
    Ho, Wo = H // 2, W // 2
    a = conv_s2d_leaky(prep_conv_input(x), prep["conv1_wt"], prep["conv1_b"],
                       Ho, Wo, neg_slope)                 # (B, Ho*Wo, ndf) bf16
    C = prep["conv1_wt"].shape[-1]

    feat = None
    for i in (2, 3, 4):
        Hi, Wi = Ho, Wo
        xs = prep_conv_input(a.reshape(B, Hi, Wi, C))     # bf16 fused XLA pass
        Ho, Wo = Hi // 2, Wi // 2
        y, psum, psq = conv_s2d_bn_stats(xs, prep[f"conv{i}_wt"], Ho, Wo)
        C = prep[f"conv{i}_wt"].shape[-1]
        act = bn_leaky(y, psum, psq, prep[f"bn{i}_g"], prep[f"bn{i}_b"],
                       count=B * Ho * Wo, neg_slope=neg_slope)
        if i < 4:
            a = act.astype(jnp.bfloat16)                  # bf16 inter-layer HBM
        else:
            feat = act.reshape(B, -1)                     # (B, ndf*8*16) f32

    logit, x_sig = head(feat, hair, eye, prep["w_head"], prep["w_hair"],
                        prep["w_eye"], prep["b_head"])
    return logit, x_sig


# ----------------------------- param init (torch-layout) ---------------------

def init_params(key, ndf, hair_len, eye_len):
    ks = jax.random.split(key, 16)
    n = iter(range(16))
    rnd = lambda shape, std=0.05: std * jax.random.normal(
        ks[next(n)], shape, dtype=jnp.float32)
    p = {
        "conv1_w": rnd((ndf, 3, 4, 4)),           "conv1_b": rnd((ndf,)),
        "conv2_w": rnd((ndf * 2, ndf, 4, 4)),     "conv2_b": rnd((ndf * 2,)),
        "bn2_g": 1.0 + rnd((ndf * 2,)),           "bn2_b": rnd((ndf * 2,)),
        "conv3_w": rnd((ndf * 4, ndf * 2, 4, 4)), "conv3_b": rnd((ndf * 4,)),
        "bn3_g": 1.0 + rnd((ndf * 4,)),           "bn3_b": rnd((ndf * 4,)),
        "conv4_w": rnd((ndf * 8, ndf * 4, 4, 4)), "conv4_b": rnd((ndf * 8,)),
        "bn4_g": 1.0 + rnd((ndf * 8,)),           "bn4_b": rnd((ndf * 8,)),
        "lin1_w": rnd((100, ndf * 8 * 4 * 4)),    "lin1_b": rnd((100,)),
    }
    k2 = jax.random.split(ks[-1], 2)
    p["lin2_w"] = 0.05 * jax.random.normal(
        k2[0], (1, 100 + hair_len + eye_len), dtype=jnp.float32)
    p["lin2_b"] = 0.05 * jax.random.normal(k2[1], (1,), dtype=jnp.float32)
    return p


# --------------------------- pure-JAX reference check ------------------------

def reference_forward(params, imgs, hair, eye, neg_slope=_NEG_SLOPE,
                      eps=_BN_EPS):
    def conv(x, w, b):
        y = lax.conv_general_dilated(
            x, w, (2, 2), ((1, 1), (1, 1)),
            dimension_numbers=("NCHW", "OIHW", "NCHW"))
        return y + b[None, :, None, None]

    def leaky(x):
        return jnp.where(x >= 0, x, neg_slope * x)

    def bn(x, g, bt):
        m = x.mean(axis=(0, 2, 3), keepdims=True)
        v = x.var(axis=(0, 2, 3), keepdims=True)
        return ((x - m) / jnp.sqrt(v + eps) * g[None, :, None, None]
                + bt[None, :, None, None])

    x = leaky(conv(imgs, params["conv1_w"], params["conv1_b"]))
    x = leaky(bn(conv(x, params["conv2_w"], params["conv2_b"]),
                 params["bn2_g"], params["bn2_b"]))
    x = leaky(bn(conv(x, params["conv3_w"], params["conv3_b"]),
                 params["bn3_g"], params["bn3_b"]))
    x = leaky(bn(conv(x, params["conv4_w"], params["conv4_b"]),
                 params["bn4_g"], params["bn4_b"]))
    B = imgs.shape[0]
    x = x.reshape(B, -1)
    x = x @ params["lin1_w"].T + params["lin1_b"]
    x = jnp.concatenate([x, hair, eye], axis=1)
    logit = x @ params["lin2_w"].T + params["lin2_b"]
    return logit, jax.nn.sigmoid(logit)


# ------------------------------------ main ------------------------------------

if __name__ == "__main__":
    # Small but shape-consistent config: Linear(ndf*8*4*4, 100) forces 64x64
    # inputs (4 stride-2 convs -> 4x4 spatial).
    B, ndf, hair_len, eye_len = 2, 4, 6, 4

    key = jax.random.PRNGKey(0)
    k_img, k_hair, k_eye, k_param = jax.random.split(key, 4)
    imgs = jax.random.normal(k_img, (B, 3, 64, 64), dtype=jnp.float32)
    hair = jax.random.normal(k_hair, (B, hair_len), dtype=jnp.float32)
    eye = jax.random.normal(k_eye, (B, eye_len), dtype=jnp.float32)

    params = init_params(k_param, ndf, hair_len, eye_len)
    prep = prepare_params(params, ndf, hair_len, eye_len)   # hoisted, once

    fwd = jax.jit(discriminator_forward)
    logit, x_sig = fwd(prep, imgs, hair, eye)
    jax.block_until_ready((logit, x_sig))

    # torch module returns (x, x_sig, 0, 0); self.soft is defined but unused.
    out = (logit, x_sig, 0, 0)

    ref_logit, ref_sig = reference_forward(params, imgs, hair, eye)
    assert logit.shape == (B, 1) and x_sig.shape == (B, 1)
    # bf16 matmul operands (f32 accumulate / BN stats) vs f32 reference.
    assert jnp.allclose(logit, ref_logit, rtol=5e-2, atol=5e-2), (
        float(jnp.max(jnp.abs(logit - ref_logit))))
    assert jnp.allclose(x_sig, ref_sig, rtol=5e-2, atol=5e-2)

    print("KERNEL_OK")
</pallas_src>

<mosaic_0001>
module attributes {stable_mosaic.version = 11 : i64} {
  func.func @_conv_leaky_kernel(%arg0: i32, %arg1: memref<2x1056x24xbf16, #tpu.memory_space<vmem>>, %arg2: memref<2x24x4xbf16, #tpu.memory_space<vmem>>, %arg3: memref<1x4xf32, #tpu.memory_space<vmem>>, %arg4: memref<2x1024x4xbf16, #tpu.memory_space<vmem>>) attributes {dimension_semantics = [#tpu.dimension_semantics<parallel>], iteration_bounds = array<i64: 1>, scalar_prefetch = 0 : i64, scratch_operands = 0 : i64, tpu.core_type = #tpu.core_type<tc>, window_params = [{transform_indices = @transform_0, window_bounds = array<i64: 2, 1056, 24>}, {pipeline_mode = #tpu.pipeline_mode<synchronous>, transform_indices = @transform_1, window_bounds = array<i64: 2, 24, 4>}, {pipeline_mode = #tpu.pipeline_mode<synchronous>, transform_indices = @transform_2, window_bounds = array<i64: 1, 4>}, {transform_indices = @transform_3, window_bounds = array<i64: 2, 1024, 4>}]} {
    %c0 = arith.constant 0 : index
    %c0_0 = arith.constant 0 : index
    %c0_1 = arith.constant 0 : index
    %0 = vector.load %arg1[%c0, %c0_0, %c0_1] : memref<2x1056x24xbf16, #tpu.memory_space<vmem>>, vector<2x1024x24xbf16>
    %1 = vector.shape_cast %0 : vector<2x1024x24xbf16> to vector<2048x24xbf16>
    %c0_2 = arith.constant 0 : index
    %c0_3 = arith.constant 0 : index
    %c0_4 = arith.constant 0 : index
    %2 = vector.load %arg2[%c0_2, %c0_3, %c0_4] : memref<2x24x4xbf16, #tpu.memory_space<vmem>>, vector<1x24x4xbf16>
    %3 = vector.shape_cast %2 : vector<1x24x4xbf16> to vector<24x4xbf16>
    %cst = arith.constant dense<0.000000e+00> : vector<2048x4xf32>
    %4 = tpu.matmul %1, %3, %cst {dimension_numbers = #tpu.dot_dimension_numbers<[1], [0], [0], [1], [0, 0, 1, 1], [], []>} : vector<2048x24xbf16>, vector<24x4xbf16>, vector<2048x4xf32> -> vector<2048x4xf32>
    %c0_5 = arith.constant 0 : index
    %c32 = arith.constant 32 : index
    %c0_6 = arith.constant 0 : index
    %5 = vector.load %arg1[%c0_5, %c32, %c0_6] : memref<2x1056x24xbf16, #tpu.memory_space<vmem>>, vector<2x1024x24xbf16>
    %6 = vector.shape_cast %5 : vector<2x1024x24xbf16> to vector<2048x24xbf16>
    %c1 = arith.constant 1 : index
    %c0_7 = arith.constant 0 : index
    %c0_8 = arith.constant 0 : index
    %7 = vector.load %arg2[%c1, %c0_7, %c0_8] : memref<2x24x4xbf16, #tpu.memory_space<vmem>>, vector<1x24x4xbf16>
    %8 = vector.shape_cast %7 : vector<1x24x4xbf16> to vector<24x4xbf16>
    %cst_9 = arith.constant dense<0.000000e+00> : vector<2048x4xf32>
    %9 = tpu.matmul %6, %8, %cst_9 {dimension_numbers = #tpu.dot_dimension_numbers<[1], [0], [0], [1], [0, 0, 1, 1], [], []>} : vector<2048x24xbf16>, vector<24x4xbf16>, vector<2048x4xf32> -> vector<2048x4xf32>
    %10 = arith.addf %4, %9 : vector<2048x4xf32>
    %c0_10 = arith.constant 0 : index
    %c0_11 = arith.constant 0 : index
    %11 = vector.load %arg3[%c0_10, %c0_11] : memref<1x4xf32, #tpu.memory_space<vmem>>, vector<1x4xf32>
    %12 = vector.broadcast %11 : vector<1x4xf32> to vector<2048x4xf32>
    %13 = arith.addf %10, %12 : vector<2048x4xf32>
    %cst_12 = arith.constant 0.000000e+00 : f32
    %14 = vector.broadcast %cst_12 : f32 to vector<2048x4xf32>
    %15 = arith.cmpf oge, %13, %14 : vector<2048x4xf32>
    %cst_13 = arith.constant 2.000000e-01 : f32
    %16 = vector.broadcast %cst_13 : f32 to vector<2048x4xf32>
    %17 = arith.mulf %16, %13 : vector<2048x4xf32>
    %18 = arith.select %15, %13, %17 : vector<2048x4xi1>, vector<2048x4xf32>
    %19 = vector.shape_cast %18 : vector<2048x4xf32> to vector<2x1024x4xf32>
    %20 = arith.truncf %19 : vector<2x1024x4xf32> to vector<2x1024x4xbf16>
    %c0_14 = arith.constant 0 : index
    %c0_15 = arith.constant 0 : index
    %c0_16 = arith.constant 0 : index
    %21 = vector.load %arg4[%c0_14, %c0_15, %c0_16] : memref<2x1024x4xbf16, #tpu.memory_space<vmem>>, vector<2x1024x4xbf16>
    tpu.vector_store %arg4[%c0_14, %c0_15, %c0_16], %20 {strides = array<i32>} : memref<2x1024x4xbf16, #tpu.memory_space<vmem>>, vector<2x1024x4xbf16>,
    return
  }
  func.func @transform_0(%arg0: i32) -> (i32, i32, i32) {
    %c0_i32 = arith.constant 0 : i32
    %c0_i32_0 = arith.constant 0 : i32
    %c0_i32_1 = arith.constant 0 : i32
    return %arg0, %c0_i32, %c0_i32_0 : i32, i32, i32
  }
  func.func @transform_1(%arg0: i32) -> (i32, i32, i32) {
    %c0_i32 = arith.constant 0 : i32
    %c0_i32_0 = arith.constant 0 : i32
    %c0_i32_1 = arith.constant 0 : i32
    %c0_i32_2 = arith.constant 0 : i32
    return %c0_i32, %c0_i32_0, %c0_i32_1 : i32, i32, i32
  }
  func.func @transform_2(%arg0: i32) -> (i32, i32) {
    %c0_i32 = arith.constant 0 : i32
    %c0_i32_0 = arith.constant 0 : i32
    %c0_i32_1 = arith.constant 0 : i32
    return %c0_i32, %c0_i32_0 : i32, i32
  }
  func.func @transform_3(%arg0: i32) -> (i32, i32, i32) {
    %c0_i32 = arith.constant 0 : i32
    %c0_i32_0 = arith.constant 0 : i32
    %c0_i32_1 = arith.constant 0 : i32
    return %arg0, %c0_i32, %c0_i32_0 : i32, i32, i32
  }
}

module attributes {stable_mosaic.version = 11 : i64} {
  func.func @_conv_stats_kernel(%arg0: i32, %arg1: memref<2x272x32xbf16, #tpu.memory_space<vmem>>, %arg2: memref<2x32x8xbf16, #tpu.memory_space<vmem>>, %arg3: memref<2x256x8xbf16, #tpu.memory_space<vmem>>, %arg4: memref<1x8xf32, #tpu.memory_space<vmem>>, %arg5: memref<1x8xf32, #tpu.memory_space<vmem>>) attributes {dimension_semantics = [#tpu.dimension_semantics<parallel>], iteration_bounds = array<i64: 1>, scalar_prefetch = 0 : i64, scratch_operands = 0 : i64, tpu.core_type = #tpu.core_type<tc>, window_params = [{transform_indices = @transform_0, window_bounds = array<i64: 2, 272, 32>}, {pipeline_mode = #tpu.pipeline_mode<synchronous>, transform_indices = @transform_1, window_bounds = array<i64: 2, 32, 8>}, {transform_indices = @transform_2, window_bounds = array<i64: 2, 256, 8>}, {transform_indices = @transform_3, window_bounds = array<i64: 1, 8>}, {transform_indices = @transform_4, window_bounds = array<i64: 1, 8>}]} {
    %cst = arith.constant 0.000000e+00 : f32
    %0 = vector.broadcast %cst : f32 to vector<1x8xf32>
    %cst_0 = arith.constant 0.000000e+00 : f32
    %1 = vector.broadcast %cst_0 : f32 to vector<1x8xf32>
    %c0 = arith.constant 0 : index
    %c0_1 = arith.constant 0 : index
    %c0_2 = arith.constant 0 : index
    %2 = vector.load %arg1[%c0, %c0_1, %c0_2] : memref<2x272x32xbf16, #tpu.memory_space<vmem>>, vector<2x256x32xbf16>
    %3 = vector.shape_cast %2 : vector<2x256x32xbf16> to vector<512x32xbf16>
    %c0_3 = arith.constant 0 : index
    %c0_4 = arith.constant 0 : index
    %c0_5 = arith.constant 0 : index
    %4 = vector.load %arg2[%c0_3, %c0_4, %c0_5] : memref<2x32x8xbf16, #tpu.memory_space<vmem>>, vector<1x32x8xbf16>
    %5 = vector.shape_cast %4 : vector<1x32x8xbf16> to vector<32x8xbf16>
    %cst_6 = arith.constant dense<0.000000e+00> : vector<512x8xf32>
    %6 = tpu.matmul %3, %5, %cst_6 {dimension_numbers = #tpu.dot_dimension_numbers<[1], [0], [0], [1], [0, 0, 1, 1], [], []>} : vector<512x32xbf16>, vector<32x8xbf16>, vector<512x8xf32> -> vector<512x8xf32>
    %c0_7 = arith.constant 0 : index
    %c16 = arith.constant 16 : index
    %c0_8 = arith.constant 0 : index
    %7 = vector.load %arg1[%c0_7, %c16, %c0_8] : memref<2x272x32xbf16, #tpu.memory_space<vmem>>, vector<2x256x32xbf16>
    %8 = vector.shape_cast %7 : vector<2x256x32xbf16> to vector<512x32xbf16>
    %c1 = arith.constant 1 : index
    %c0_9 = arith.constant 0 : index
    %c0_10 = arith.constant 0 : index
    %9 = vector.load %arg2[%c1, %c0_9, %c0_10] : memref<2x32x8xbf16, #tpu.memory_space<vmem>>, vector<1x32x8xbf16>
    %10 = vector.shape_cast %9 : vector<1x32x8xbf16> to vector<32x8xbf16>
    %cst_11 = arith.constant dense<0.000000e+00> : vector<512x8xf32>
    %11 = tpu.matmul %8, %10, %cst_11 {dimension_numbers = #tpu.dot_dimension_numbers<[1], [0], [0], [1], [0, 0, 1, 1], [], []>} : vector<512x32xbf16>, vector<32x8xbf16>, vector<512x8xf32> -> vector<512x8xf32>
    %12 = arith.addf %6, %11 : vector<512x8xf32>
    %cst_12 = arith.constant dense<0.000000e+00> : vector<8xf32>
    %13 = vector.multi_reduction <add>, %12, %cst_12 [0] : vector<512x8xf32> to vector<8xf32>
    %14 = vector.shape_cast %13 : vector<8xf32> to vector<1x8xf32>
    %15 = arith.addf %0, %14 : vector<1x8xf32>
    %16 = arith.mulf %12, %12 : vector<512x8xf32>
    %cst_13 = arith.constant dense<0.000000e+00> : vector<8xf32>
    %17 = vector.multi_reduction <add>, %16, %cst_13 [0] : vector<512x8xf32> to vector<8xf32>
    %18 = vector.shape_cast %17 : vector<8xf32> to vector<1x8xf32>
    %19 = arith.addf %1, %18 : vector<1x8xf32>
    %20 = vector.shape_cast %12 : vector<512x8xf32> to vector<2x256x8xf32>
    %21 = arith.truncf %20 : vector<2x256x8xf32> to vector<2x256x8xbf16>
    %c0_14 = arith.constant 0 : index
    %c0_15 = arith.constant 0 : index
    %c0_16 = arith.constant 0 : index
    %22 = vector.load %arg3[%c0_14, %c0_15, %c0_16] : memref<2x256x8xbf16, #tpu.memory_space<vmem>>, vector<2x256x8xbf16>
    tpu.vector_store %arg3[%c0_14, %c0_15, %c0_16], %21 {strides = array<i32>} : memref<2x256x8xbf16, #tpu.memory_space<vmem>>, vector<2x256x8xbf16>,
    %c0_17 = arith.constant 0 : index
    %c0_18 = arith.constant 0 : index
    %23 = vector.load %arg4[%c0_17, %c0_18] : memref<1x8xf32, #tpu.memory_space<vmem>>, vector<1x8xf32>
    tpu.vector_store %arg4[%c0_17, %c0_18], %15 {strides = array<i32>} : memref<1x8xf32, #tpu.memory_space<vmem>>, vector<1x8xf32>,
    %c0_19 = arith.constant 0 : index
    %c0_20 = arith.constant 0 : index
    %24 = vector.load %arg5[%c0_19, %c0_20] : memref<1x8xf32, #tpu.memory_space<vmem>>, vector<1x8xf32>
    tpu.vector_store %arg5[%c0_19, %c0_20], %19 {strides = array<i32>} : memref<1x8xf32, #tpu.memory_space<vmem>>, vector<1x8xf32>,
    return
  }
  func.func @transform_0(%arg0: i32) -> (i32, i32, i32) {
    %c0_i32 = arith.constant 0 : i32
    %c0_i32_0 = arith.constant 0 : i32
    %c0_i32_1 = arith.constant 0 : i32
    return %arg0, %c0_i32, %c0_i32_0 : i32, i32, i32
  }
  func.func @transform_1(%arg0: i32) -> (i32, i32, i32) {
    %c0_i32 = arith.constant 0 : i32
    %c0_i32_0 = arith.constant 0 : i32
    %c0_i32_1 = arith.constant 0 : i32
    %c0_i32_2 = arith.constant 0 : i32
    return %c0_i32, %c0_i32_0, %c0_i32_1 : i32, i32, i32
  }
  func.func @transform_2(%arg0: i32) -> (i32, i32, i32) {
    %c0_i32 = arith.constant 0 : i32
    %c0_i32_0 = arith.constant 0 : i32
    %c0_i32_1 = arith.constant 0 : i32
    return %arg0, %c0_i32, %c0_i32_0 : i32, i32, i32
  }
  func.func @transform_3(%arg0: i32) -> (i32, i32) {
    %c0_i32 = arith.constant 0 : i32
    %c0_i32_0 = arith.constant 0 : i32
    return %arg0, %c0_i32 : i32, i32
  }
  func.func @transform_4(%arg0: i32) -> (i32, i32) {
    %c0_i32 = arith.constant 0 : i32
    %c0_i32_0 = arith.constant 0 : i32
    return %arg0, %c0_i32 : i32, i32
  }
}

module attributes {stable_mosaic.version = 11 : i64} {
  func.func @_conv_stats_kernel(%arg0: i32, %arg1: memref<2x72x64xbf16, #tpu.memory_space<vmem>>, %arg2: memref<2x64x16xbf16, #tpu.memory_space<vmem>>, %arg3: memref<2x64x16xbf16, #tpu.memory_space<vmem>>, %arg4: memref<1x16xf32, #tpu.memory_space<vmem>>, %arg5: memref<1x16xf32, #tpu.memory_space<vmem>>) attributes {dimension_semantics = [#tpu.dimension_semantics<parallel>], iteration_bounds = array<i64: 1>, scalar_prefetch = 0 : i64, scratch_operands = 0 : i64, tpu.core_type = #tpu.core_type<tc>, window_params = [{transform_indices = @transform_0, window_bounds = array<i64: 2, 72, 64>}, {pipeline_mode = #tpu.pipeline_mode<synchronous>, transform_indices = @transform_1, window_bounds = array<i64: 2, 64, 16>}, {transform_indices = @transform_2, window_bounds = array<i64: 2, 64, 16>}, {transform_indices = @transform_3, window_bounds = array<i64: 1, 16>}, {transform_indices = @transform_4, window_bounds = array<i64: 1, 16>}]} {
    %cst = arith.constant 0.000000e+00 : f32
    %0 = vector.broadcast %cst : f32 to vector<1x16xf32>
    %cst_0 = arith.constant 0.000000e+00 : f32
    %1 = vector.broadcast %cst_0 : f32 to vector<1x16xf32>
    %c0 = arith.constant 0 : index
    %c0_1 = arith.constant 0 : index
    %c0_2 = arith.constant 0 : index
    %2 = vector.load %arg1[%c0, %c0_1, %c0_2] : memref<2x72x64xbf16, #tpu.memory_space<vmem>>, vector<2x64x64xbf16>
    %3 = vector.shape_cast %2 : vector<2x64x64xbf16> to vector<128x64xbf16>
    %c0_3 = arith.constant 0 : index
    %c0_4 = arith.constant 0 : index
    %c0_5 = arith.constant 0 : index
    %4 = vector.load %arg2[%c0_3, %c0_4, %c0_5] : memref<2x64x16xbf16, #tpu.memory_space<vmem>>, vector<1x64x16xbf16>
    %5 = vector.shape_cast %4 : vector<1x64x16xbf16> to vector<64x16xbf16>
    %cst_6 = arith.constant dense<0.000000e+00> : vector<128x16xf32>
    %6 = tpu.matmul %3, %5, %cst_6 {dimension_numbers = #tpu.dot_dimension_numbers<[1], [0], [0], [1], [0, 0, 1, 1], [], []>} : vector<128x64xbf16>, vector<64x16xbf16>, vector<128x16xf32> -> vector<128x16xf32>
    %c0_7 = arith.constant 0 : index
    %c8 = arith.constant 8 : index
    %c0_8 = arith.constant 0 : index
    %7 = vector.load %arg1[%c0_7, %c8, %c0_8] : memref<2x72x64xbf16, #tpu.memory_space<vmem>>, vector<2x64x64xbf16>
    %8 = vector.shape_cast %7 : vector<2x64x64xbf16> to vector<128x64xbf16>
    %c1 = arith.constant 1 : index
    %c0_9 = arith.constant 0 : index
    %c0_10 = arith.constant 0 : index
    %9 = vector.load %arg2[%c1, %c0_9, %c0_10] : memref<2x64x16xbf16, #tpu.memory_space<vmem>>, vector<1x64x16xbf16>
    %10 = vector.shape_cast %9 : vector<1x64x16xbf16> to vector<64x16xbf16>
    %cst_11 = arith.constant dense<0.000000e+00> : vector<128x16xf32>
    %11 = tpu.matmul %8, %10, %cst_11 {dimension_numbers = #tpu.dot_dimension_numbers<[1], [0], [0], [1], [0, 0, 1, 1], [], []>} : vector<128x64xbf16>, vector<64x16xbf16>, vector<128x16xf32> -> vector<128x16xf32>
    %12 = arith.addf %6, %11 : vector<128x16xf32>
    %cst_12 = arith.constant dense<0.000000e+00> : vector<16xf32>
    %13 = vector.multi_reduction <add>, %12, %cst_12 [0] : vector<128x16xf32> to vector<16xf32>
    %14 = vector.shape_cast %13 : vector<16xf32> to vector<1x16xf32>
    %15 = arith.addf %0, %14 : vector<1x16xf32>
    %16 = arith.mulf %12, %12 : vector<128x16xf32>
    %cst_13 = arith.constant dense<0.000000e+00> : vector<16xf32>
    %17 = vector.multi_reduction <add>, %16, %cst_13 [0] : vector<128x16xf32> to vector<16xf32>
    %18 = vector.shape_cast %17 : vector<16xf32> to vector<1x16xf32>
    %19 = arith.addf %1, %18 : vector<1x16xf32>
    %20 = vector.shape_cast %12 : vector<128x16xf32> to vector<2x64x16xf32>
    %21 = arith.truncf %20 : vector<2x64x16xf32> to vector<2x64x16xbf16>
    %c0_14 = arith.constant 0 : index
    %c0_15 = arith.constant 0 : index
    %c0_16 = arith.constant 0 : index
    %22 = vector.load %arg3[%c0_14, %c0_15, %c0_16] : memref<2x64x16xbf16, #tpu.memory_space<vmem>>, vector<2x64x16xbf16>
    tpu.vector_store %arg3[%c0_14, %c0_15, %c0_16], %21 {strides = array<i32>} : memref<2x64x16xbf16, #tpu.memory_space<vmem>>, vector<2x64x16xbf16>,
    %c0_17 = arith.constant 0 : index
    %c0_18 = arith.constant 0 : index
    %23 = vector.load %arg4[%c0_17, %c0_18] : memref<1x16xf32, #tpu.memory_space<vmem>>, vector<1x16xf32>
    tpu.vector_store %arg4[%c0_17, %c0_18], %15 {strides = array<i32>} : memref<1x16xf32, #tpu.memory_space<vmem>>, vector<1x16xf32>,
    %c0_19 = arith.constant 0 : index
    %c0_20 = arith.constant 0 : index
    %24 = vector.load %arg5[%c0_19, %c0_20] : memref<1x16xf32, #tpu.memory_space<vmem>>, vector<1x16xf32>
    tpu.vector_store %arg5[%c0_19, %c0_20], %19 {strides = array<i32>} : memref<1x16xf32, #tpu.memory_space<vmem>>, vector<1x16xf32>,
    return
  }
  func.func @transform_0(%arg0: i32) -> (i32, i32, i32) {
    %c0_i32 = arith.constant 0 : i32
    %c0_i32_0 = arith.constant 0 : i32
    %c0_i32_1 = arith.constant 0 : i32
    return %arg0, %c0_i32, %c0_i32_0 : i32, i32, i32
  }
  func.func @transform_1(%arg0: i32) -> (i32, i32, i32) {
    %c0_i32 = arith.constant 0 : i32
    %c0_i32_0 = arith.constant 0 : i32
    %c0_i32_1 = arith.constant 0 : i32
    %c0_i32_2 = arith.constant 0 : i32
    return %c0_i32, %c0_i32_0, %c0_i32_1 : i32, i32, i32
  }
  func.func @transform_2(%arg0: i32) -> (i32, i32, i32) {
    %c0_i32 = arith.constant 0 : i32
    %c0_i32_0 = arith.constant 0 : i32
    %c0_i32_1 = arith.constant 0 : i32
    return %arg0, %c0_i32, %c0_i32_0 : i32, i32, i32
  }
  func.func @transform_3(%arg0: i32) -> (i32, i32) {
    %c0_i32 = arith.constant 0 : i32
    %c0_i32_0 = arith.constant 0 : i32
    return %arg0, %c0_i32 : i32, i32
  }
  func.func @transform_4(%arg0: i32) -> (i32, i32) {
    %c0_i32 = arith.constant 0 : i32
    %c0_i32_0 = arith.constant 0 : i32
    return %arg0, %c0_i32 : i32, i32
  }
}

module attributes {stable_mosaic.version = 11 : i64} {
  func.func @_conv_stats_kernel(%arg0: i32, %arg1: memref<2x20x128xbf16, #tpu.memory_space<vmem>>, %arg2: memref<2x128x32xbf16, #tpu.memory_space<vmem>>, %arg3: memref<2x16x32xbf16, #tpu.memory_space<vmem>>, %arg4: memref<1x32xf32, #tpu.memory_space<vmem>>, %arg5: memref<1x32xf32, #tpu.memory_space<vmem>>) attributes {dimension_semantics = [#tpu.dimension_semantics<parallel>], iteration_bounds = array<i64: 1>, scalar_prefetch = 0 : i64, scratch_operands = 0 : i64, tpu.core_type = #tpu.core_type<tc>, window_params = [{transform_indices = @transform_0, window_bounds = array<i64: 2, 20, 128>}, {pipeline_mode = #tpu.pipeline_mode<synchronous>, transform_indices = @transform_1, window_bounds = array<i64: 2, 128, 32>}, {transform_indices = @transform_2, window_bounds = array<i64: 2, 16, 32>}, {transform_indices = @transform_3, window_bounds = array<i64: 1, 32>}, {transform_indices = @transform_4, window_bounds = array<i64: 1, 32>}]} {
    %cst = arith.constant 0.000000e+00 : f32
    %0 = vector.broadcast %cst : f32 to vector<1x32xf32>
    %cst_0 = arith.constant 0.000000e+00 : f32
    %1 = vector.broadcast %cst_0 : f32 to vector<1x32xf32>
    %c0 = arith.constant 0 : index
    %c0_1 = arith.constant 0 : index
    %c0_2 = arith.constant 0 : index
    %2 = vector.load %arg1[%c0, %c0_1, %c0_2] : memref<2x20x128xbf16, #tpu.memory_space<vmem>>, vector<2x16x128xbf16>
    %3 = vector.shape_cast %2 : vector<2x16x128xbf16> to vector<32x128xbf16>
    %c0_3 = arith.constant 0 : index
    %c0_4 = arith.constant 0 : index
    %c0_5 = arith.constant 0 : index
    %4 = vector.load %arg2[%c0_3, %c0_4, %c0_5] : memref<2x128x32xbf16, #tpu.memory_space<vmem>>, vector<1x128x32xbf16>
    %5 = vector.shape_cast %4 : vector<1x128x32xbf16> to vector<128x32xbf16>
    %cst_6 = arith.constant dense<0.000000e+00> : vector<32x32xf32>
    %6 = tpu.matmul %3, %5, %cst_6 {dimension_numbers = #tpu.dot_dimension_numbers<[1], [0], [0], [1], [0, 0, 1, 1], [], []>} : vector<32x128xbf16>, vector<128x32xbf16>, vector<32x32xf32> -> vector<32x32xf32>
    %c0_7 = arith.constant 0 : index
    %c4 = arith.constant 4 : index
    %c0_8 = arith.constant 0 : index
    %7 = vector.load %arg1[%c0_7, %c4, %c0_8] : memref<2x20x128xbf16, #tpu.memory_space<vmem>>, vector<2x16x128xbf16>
    %8 = vector.shape_cast %7 : vector<2x16x128xbf16> to vector<32x128xbf16>
    %c1 = arith.constant 1 : index
    %c0_9 = arith.constant 0 : index
    %c0_10 = arith.constant 0 : index
    %9 = vector.load %arg2[%c1, %c0_9, %c0_10] : memref<2x128x32xbf16, #tpu.memory_space<vmem>>, vector<1x128x32xbf16>
    %10 = vector.shape_cast %9 : vector<1x128x32xbf16> to vector<128x32xbf16>
    %cst_11 = arith.constant dense<0.000000e+00> : vector<32x32xf32>
    %11 = tpu.matmul %8, %10, %cst_11 {dimension_numbers = #tpu.dot_dimension_numbers<[1], [0], [0], [1], [0, 0, 1, 1], [], []>} : vector<32x128xbf16>, vector<128x32xbf16>, vector<32x32xf32> -> vector<32x32xf32>
    %12 = arith.addf %6, %11 : vector<32x32xf32>
    %cst_12 = arith.constant dense<0.000000e+00> : vector<32xf32>
    %13 = vector.multi_reduction <add>, %12, %cst_12 [0] : vector<32x32xf32> to vector<32xf32>
    %14 = vector.shape_cast %13 : vector<32xf32> to vector<1x32xf32>
    %15 = arith.addf %0, %14 : vector<1x32xf32>
    %16 = arith.mulf %12, %12 : vector<32x32xf32>
    %cst_13 = arith.constant dense<0.000000e+00> : vector<32xf32>
    %17 = vector.multi_reduction <add>, %16, %cst_13 [0] : vector<32x32xf32> to vector<32xf32>
    %18 = vector.shape_cast %17 : vector<32xf32> to vector<1x32xf32>
    %19 = arith.addf %1, %18 : vector<1x32xf32>
    %20 = vector.shape_cast %12 : vector<32x32xf32> to vector<2x16x32xf32>
    %21 = arith.truncf %20 : vector<2x16x32xf32> to vector<2x16x32xbf16>
    %c0_14 = arith.constant 0 : index
    %c0_15 = arith.constant 0 : index
    %c0_16 = arith.constant 0 : index
    %22 = vector.load %arg3[%c0_14, %c0_15, %c0_16] : memref<2x16x32xbf16, #tpu.memory_space<vmem>>, vector<2x16x32xbf16>
    tpu.vector_store %arg3[%c0_14, %c0_15, %c0_16], %21 {strides = array<i32>} : memref<2x16x32xbf16, #tpu.memory_space<vmem>>, vector<2x16x32xbf16>,
    %c0_17 = arith.constant 0 : index
    %c0_18 = arith.constant 0 : index
    %23 = vector.load %arg4[%c0_17, %c0_18] : memref<1x32xf32, #tpu.memory_space<vmem>>, vector<1x32xf32>
    tpu.vector_store %arg4[%c0_17, %c0_18], %15 {strides = array<i32>} : memref<1x32xf32, #tpu.memory_space<vmem>>, vector<1x32xf32>,
    %c0_19 = arith.constant 0 : index
    %c0_20 = arith.constant 0 : index
    %24 = vector.load %arg5[%c0_19, %c0_20] : memref<1x32xf32, #tpu.memory_space<vmem>>, vector<1x32xf32>
    tpu.vector_store %arg5[%c0_19, %c0_20], %19 {strides = array<i32>} : memref<1x32xf32, #tpu.memory_space<vmem>>, vector<1x32xf32>,
    return
  }
  func.func @transform_0(%arg0: i32) -> (i32, i32, i32) {
    %c0_i32 = arith.constant 0 : i32
    %c0_i32_0 = arith.constant 0 : i32
    %c0_i32_1 = arith.constant 0 : i32
    return %arg0, %c0_i32, %c0_i32_0 : i32, i32, i32
  }
  func.func @transform_1(%arg0: i32) -> (i32, i32, i32) {
    %c0_i32 = arith.constant 0 : i32
    %c0_i32_0 = arith.constant 0 : i32
    %c0_i32_1 = arith.constant 0 : i32
    %c0_i32_2 = arith.constant 0 : i32
    return %c0_i32, %c0_i32_0, %c0_i32_1 : i32, i32, i32
  }
  func.func @transform_2(%arg0: i32) -> (i32, i32, i32) {
    %c0_i32 = arith.constant 0 : i32
    %c0_i32_0 = arith.constant 0 : i32
    %c0_i32_1 = arith.constant 0 : i32
    return %arg0, %c0_i32, %c0_i32_0 : i32, i32, i32
  }
  func.func @transform_3(%arg0: i32) -> (i32, i32) {
    %c0_i32 = arith.constant 0 : i32
    %c0_i32_0 = arith.constant 0 : i32
    return %arg0, %c0_i32 : i32, i32
  }
  func.func @transform_4(%arg0: i32) -> (i32, i32) {
    %c0_i32 = arith.constant 0 : i32
    %c0_i32_0 = arith.constant 0 : i32
    return %arg0, %c0_i32 : i32, i32
  }
}

module attributes {stable_mosaic.version = 11 : i64} {
  func.func @_head_kernel(%arg0: memref<2x512xf32, #tpu.memory_space<vmem>>, %arg1: memref<2x6xf32, #tpu.memory_space<vmem>>, %arg2: memref<2x4xf32, #tpu.memory_space<vmem>>, %arg3: memref<1x512xf32, #tpu.memory_space<vmem>>, %arg4: memref<1x6xf32, #tpu.memory_space<vmem>>, %arg5: memref<1x4xf32, #tpu.memory_space<vmem>>, %arg6: memref<1x1xf32, #tpu.memory_space<vmem>>, %arg7: memref<2x1xf32, #tpu.memory_space<vmem>>, %arg8: memref<2x1xf32, #tpu.memory_space<vmem>>) attributes {dimension_semantics = [], scalar_prefetch = 0 : i64, scratch_operands = 0 : i64, tpu.core_type = #tpu.core_type<tc>} {
    %c0 = arith.constant 0 : index
    %c0_0 = arith.constant 0 : index
    %0 = vector.load %arg0[%c0, %c0_0] : memref<2x512xf32, #tpu.memory_space<vmem>>, vector<2x512xf32>
    %c0_1 = arith.constant 0 : index
    %c0_2 = arith.constant 0 : index
    %1 = vector.load %arg3[%c0_1, %c0_2] : memref<1x512xf32, #tpu.memory_space<vmem>>, vector<1x512xf32>
    %2 = vector.broadcast %1 : vector<1x512xf32> to vector<2x512xf32>
    %3 = arith.mulf %0, %2 : vector<2x512xf32>
    %cst = arith.constant dense<0.000000e+00> : vector<2xf32>
    %4 = vector.multi_reduction <add>, %3, %cst [1] : vector<2x512xf32> to vector<2xf32>
    %5 = vector.shape_cast %4 : vector<2xf32> to vector<2x1xf32>
    %c0_3 = arith.constant 0 : index
    %c0_4 = arith.constant 0 : index
    %6 = vector.load %arg1[%c0_3, %c0_4] : memref<2x6xf32, #tpu.memory_space<vmem>>, vector<2x6xf32>
    %c0_5 = arith.constant 0 : index
    %c0_6 = arith.constant 0 : index
    %7 = vector.load %arg4[%c0_5, %c0_6] : memref<1x6xf32, #tpu.memory_space<vmem>>, vector<1x6xf32>
    %8 = vector.broadcast %7 : vector<1x6xf32> to vector<2x6xf32>
    %9 = arith.mulf %6, %8 : vector<2x6xf32>
    %cst_7 = arith.constant dense<0.000000e+00> : vector<2xf32>
    %10 = vector.multi_reduction <add>, %9, %cst_7 [1] : vector<2x6xf32> to vector<2xf32>
    %11 = vector.shape_cast %10 : vector<2xf32> to vector<2x1xf32>
    %12 = arith.addf %5, %11 : vector<2x1xf32>
    %c0_8 = arith.constant 0 : index
    %c0_9 = arith.constant 0 : index
    %13 = vector.load %arg2[%c0_8, %c0_9] : memref<2x4xf32, #tpu.memory_space<vmem>>, vector<2x4xf32>
    %c0_10 = arith.constant 0 : index
    %c0_11 = arith.constant 0 : index
    %14 = vector.load %arg5[%c0_10, %c0_11] : memref<1x4xf32, #tpu.memory_space<vmem>>, vector<1x4xf32>
    %15 = vector.broadcast %14 : vector<1x4xf32> to vector<2x4xf32>
    %16 = arith.mulf %13, %15 : vector<2x4xf32>
    %cst_12 = arith.constant dense<0.000000e+00> : vector<2xf32>
    %17 = vector.multi_reduction <add>, %16, %cst_12 [1] : vector<2x4xf32> to vector<2xf32>
    %18 = vector.shape_cast %17 : vector<2xf32> to vector<2x1xf32>
    %19 = arith.addf %12, %18 : vector<2x1xf32>
    %c0_13 = arith.constant 0 : index
    %c0_14 = arith.constant 0 : index
    %20 = vector.load %arg6[%c0_13, %c0_14] : memref<1x1xf32, #tpu.memory_space<vmem>>, vector<1x1xf32>
    %21 = vector.broadcast %20 : vector<1x1xf32> to vector<2x1xf32>
    %22 = arith.addf %19, %21 : vector<2x1xf32>
    %c0_15 = arith.constant 0 : index
    %c0_16 = arith.constant 0 : index
    %23 = vector.load %arg7[%c0_15, %c0_16] : memref<2x1xf32, #tpu.memory_space<vmem>>, vector<2x1xf32>
    tpu.vector_store %arg7[%c0_15, %c0_16], %22 {strides = array<i32>} : memref<2x1xf32, #tpu.memory_space<vmem>>, vector<2x1xf32>,
    %cst_17 = arith.constant 0.000000e+00 : f32
    %24 = vector.broadcast %cst_17 : f32 to vector<2x1xf32>
    %25 = arith.subf %24, %22 : vector<2x1xf32>
    %26 = math.exp %25 : vector<2x1xf32>
    %cst_18 = arith.constant 1.000000e+00 : f32
    %27 = vector.broadcast %cst_18 : f32 to vector<2x1xf32>
    %28 = arith.addf %27, %26 : vector<2x1xf32>
    %cst_19 = arith.constant 1.000000e+00 : f32
    %29 = vector.broadcast %cst_19 : f32 to vector<2x1xf32>
    %30 = arith.divf %29, %28 : vector<2x1xf32>
    %c0_20 = arith.constant 0 : index
    %c0_21 = arith.constant 0 : index
    %31 = vector.load %arg8[%c0_20, %c0_21] : memref<2x1xf32, #tpu.memory_space<vmem>>, vector<2x1xf32>
    tpu.vector_store %arg8[%c0_20, %c0_21], %30 {strides = array<i32>} : memref<2x1xf32, #tpu.memory_space<vmem>>, vector<2x1xf32>,
    return
  }
}

</mosaic_0001>

<llo_original>
// kernel: discriminator_forward.6
$region0: #{discriminator_forward.6}
  #allocation0 [shape = 'u32[]', space=smem, size = 0x4, offset = 0x4, fixed_abs, tag = 'smem constant byte address 0x4 - core index']
  #allocation1 [shape = 'u32[144,128]{1,0:T(1,128)}', space=vmem, size = 0x12000, scoped, tag = 'internal scratch']
  %s0 = inlined_call_operand.vmem [shape: bf16[2,272,32], index: 0, kind: input, shape index: {}]
  %s1 = inlined_call_operand.vmem [shape: bf16[2,32,8], index: 1, kind: input, shape index: {}]
  %s2 = inlined_call_operand.vmem [shape: bf16[2,256,8], index: 2, kind: output, shape index: {0}]
  %s3 = inlined_call_operand.vmem [shape: f32[1,8], index: 3, kind: output, shape index: {1}]
  %s4 = inlined_call_operand.vmem [shape: f32[1,8], index: 4, kind: output, shape index: {2}]
  %5 = xla_tuple %s2, %s3, %s4
  %s6 = sld [smem:[#allocation0]]
  $region34: #{discriminator_forward.6} parent=0
    _
  %s8 = ssub.s32 1, %s6
  %s9 = scalar_select 0, %s8, %s6
  // Predicated region
  $region2: #{discriminator_forward.6} parent=0 // pred_check
    _
  $region3: #{discriminator_forward.6} parent=0 // pred_check_branch
    %11 = sbr.rel (0) target = $region5
  $region4: #{discriminator_forward.6} parent=0 // pred_region
    _
  $region5: #{discriminator_forward.6} parent=0 // pred_fallthru
    _
  // Predicated region
  $region6: #{discriminator_forward.6} parent=0 // pred_check
    _
  $region7: #{discriminator_forward.6} parent=0 // pred_check_branch
    %13 = sbr.rel (0) target = $region9
  $region8: #{discriminator_forward.6} parent=0 // pred_region
    _
  $region9: #{discriminator_forward.6} parent=0 // pred_fallthru
    _
  %v15 = vld [vmem:[%s0] sm:$0xf]
  %v16 = vld [vmem:[%s0 + $0x4] sm:$0xf]
  %v17 = vld [vmem:[%s0 + $0x8] sm:$0xf]
  %v18 = vld [vmem:[%s0 + $0xc] sm:$0xf]
  %v19 = vld [vmem:[%s0 + $0x10] sm:$0xf]
  %v20 = vld [vmem:[%s0 + $0x14] sm:$0xf]
  %v21 = vld [vmem:[%s0 + $0x18] sm:$0xf]
  %v22 = vld [vmem:[%s0 + $0x1c] sm:$0xf]
  %v23 = vld [vmem:[%s0 + $0x20] sm:$0xf]
  %v24 = vld [vmem:[%s0 + $0x24] sm:$0xf]
  %v25 = vld [vmem:[%s0 + $0x28] sm:$0xf]
  %v26 = vld [vmem:[%s0 + $0x2c] sm:$0xf]
  %v27 = vld [vmem:[%s0 + $0x30] sm:$0xf]
  %v28 = vld [vmem:[%s0 + $0x34] sm:$0xf]
  %v29 = vld [vmem:[%s0 + $0x38] sm:$0xf]
  %v30 = vld [vmem:[%s0 + $0x3c] sm:$0xf]
  %v31 = vld [vmem:[%s0 + $0x40] sm:$0xf]
  %v32 = vld [vmem:[%s0 + $0x44] sm:$0xf]
  %v33 = vld [vmem:[%s0 + $0x48] sm:$0xf]
  %v34 = vld [vmem:[%s0 + $0x4c] sm:$0xf]
  %v35 = vld [vmem:[%s0 + $0x50] sm:$0xf]
  %v36 = vld [vmem:[%s0 + $0x54] sm:$0xf]
  %v37 = vld [vmem:[%s0 + $0x58] sm:$0xf]
  %v38 = vld [vmem:[%s0 + $0x5c] sm:$0xf]
  %v39 = vld [vmem:[%s0 + $0x60] sm:$0xf]
  %v40 = vld [vmem:[%s0 + $0x64] sm:$0xf]
  %v41 = vld [vmem:[%s0 + $0x68] sm:$0xf]
  %v42 = vld [vmem:[%s0 + $0x6c] sm:$0xf]
  %v43 = vld [vmem:[%s0 + $0x70] sm:$0xf]
  %v44 = vld [vmem:[%s0 + $0x74] sm:$0xf]
  %v45 = vld [vmem:[%s0 + $0x78] sm:$0xf]
  %v46 = vld [vmem:[%s0 + $0x7c] sm:$0xf]
  %v47 = vld [vmem:[%s0 + $0x88] sm:$0xf]
  %v48 = vld [vmem:[%s0 + $0x8c] sm:$0xf]
  %v49 = vld [vmem:[%s0 + $0x90] sm:$0xf]
  %v50 = vld [vmem:[%s0 + $0x94] sm:$0xf]
  %v51 = vld [vmem:[%s0 + $0x98] sm:$0xf]
  %v52 = vld [vmem:[%s0 + $0x9c] sm:$0xf]
  %v53 = vld [vmem:[%s0 + $0xa0] sm:$0xf]
  %v54 = vld [vmem:[%s0 + $0xa4] sm:$0xf]
  %v55 = vld [vmem:[%s0 + $0xa8] sm:$0xf]
  %v56 = vld [vmem:[%s0 + $0xac] sm:$0xf]
  %v57 = vld [vmem:[%s0 + $0xb0] sm:$0xf]
  %v58 = vld [vmem:[%s0 + $0xb4] sm:$0xf]
  %v59 = vld [vmem:[%s0 + $0xb8] sm:$0xf]
  %v60 = vld [vmem:[%s0 + $0xbc] sm:$0xf]
  %v61 = vld [vmem:[%s0 + $0xc0] sm:$0xf]
  %v62 = vld [vmem:[%s0 + $0xc4] sm:$0xf]
  %v63 = vld [vmem:[%s0 + $0xc8] sm:$0xf]
  %v64 = vld [vmem:[%s0 + $0xcc] sm:$0xf]
  %v65 = vld [vmem:[%s0 + $0xd0] sm:$0xf]
  %v66 = vld [vmem:[%s0 + $0xd4] sm:$0xf]
  %v67 = vld [vmem:[%s0 + $0xd8] sm:$0xf]
  %v68 = vld [vmem:[%s0 + $0xdc] sm:$0xf]
  %v69 = vld [vmem:[%s0 + $0xe0] sm:$0xf]
  %v70 = vld [vmem:[%s0 + $0xe4] sm:$0xf]
  %v71 = vld [vmem:[%s0 + $0xe8] sm:$0xf]
  %v72 = vld [vmem:[%s0 + $0xec] sm:$0xf]
  %v73 = vld [vmem:[%s0 + $0xf0] sm:$0xf]
  %v74 = vld [vmem:[%s0 + $0xf4] sm:$0xf]
  %v75 = vld [vmem:[%s0 + $0xf8] sm:$0xf]
  %v76 = vld [vmem:[%s0 + $0xfc] sm:$0xf]
  %v77 = vld [vmem:[%s0 + $0x100] sm:$0xf]
  %v78 = vld [vmem:[%s0 + $0x104] sm:$0xf]
  %v79 = vld [vmem:[%s1] sm:$0xf]
  %v80 = vld [vmem:[%s1 + $0x4] sm:$0xf]
  %v81 = vld [vmem:[%s1 + $0x8] sm:$0xf]
  %v82 = vld [vmem:[%s1 + $0xc] sm:$0xf]
  %v83 = vld [vmem:[%s0 + $0x80] sm:$0xf]
  %v84 = vld [vmem:[%s0 + $0x84] sm:$0xf]
  %v85 = vld [vmem:[%s0 + $0x108] sm:$0xf]
  %v86 = vld [vmem:[%s0 + $0x10c] sm:$0xf]
  %s87 = scalar_lea.vmem %s1, 16
  %v88 = vld [vmem:[%s87] sm:$0xf]
  %v89 = vld [vmem:[%s87 + $0x4] sm:$0xf]
  %v90 = vld [vmem:[%s87 + $0x8] sm:$0xf]
  %v91 = vld [vmem:[%s87 + $0xc] sm:$0xf]
  %v156 = vunpack.c.l.b16 %v17
  %v157 = vunpack.c.l.b16 %v18
  %v158 = vunpack.c.l.b16 %v19
  %v159 = vunpack.c.l.b16 %v20
  %v160 = vunpack.c.l.b16 %v21
  %v161 = vunpack.c.l.b16 %v22
  %v162 = vunpack.c.l.b16 %v23
  %v163 = vunpack.c.l.b16 %v24
  %v164 = vunpack.c.l.b16 %v25
  %v165 = vunpack.c.l.b16 %v26
  %v166 = vunpack.c.l.b16 %v27
  %v167 = vunpack.c.l.b16 %v28
  %v168 = vunpack.c.l.b16 %v29
  %v169 = vunpack.c.l.b16 %v30
  %v170 = vunpack.c.l.b16 %v31
  %v171 = vunpack.c.l.b16 %v32
  %v172 = vunpack.c.l.b16 %v33
  %v173 = vunpack.c.l.b16 %v34
  %v174 = vunpack.c.l.b16 %v35
  %v175 = vunpack.c.l.b16 %v36
  %v176 = vunpack.c.l.b16 %v37
  %v177 = vunpack.c.l.b16 %v38
  %v178 = vunpack.c.l.b16 %v39
  %v179 = vunpack.c.l.b16 %v40
  %v180 = vunpack.c.l.b16 %v41
  %v181 = vunpack.c.l.b16 %v42
  %v182 = vunpack.c.l.b16 %v43
  %v183 = vunpack.c.l.b16 %v44
  %v184 = vunpack.c.l.b16 %v45
  %v185 = vunpack.c.l.b16 %v46
  %v186 = vunpack.c.l.b16 %v83
  %v187 = vunpack.c.l.b16 %v84
  %v188 = vunpack.c.l.b16 %v49
  %v189 = vunpack.c.l.b16 %v50
  %v190 = vunpack.c.l.b16 %v51
  %v191 = vunpack.c.l.b16 %v52
  %v192 = vunpack.c.l.b16 %v53
  %v193 = vunpack.c.l.b16 %v54
  %v194 = vunpack.c.l.b16 %v55
  %v195 = vunpack.c.l.b16 %v56
  %v196 = vunpack.c.l.b16 %v57
  %v197 = vunpack.c.l.b16 %v58
  %v198 = vunpack.c.l.b16 %v59
  %v199 = vunpack.c.l.b16 %v60
  %v200 = vunpack.c.l.b16 %v61
  %v201 = vunpack.c.l.b16 %v62
  %v202 = vunpack.c.l.b16 %v63
  %v203 = vunpack.c.l.b16 %v64
  %v204 = vunpack.c.l.b16 %v65
  %v205 = vunpack.c.l.b16 %v66
  %v206 = vunpack.c.l.b16 %v67
  %v207 = vunpack.c.l.b16 %v68
  %v208 = vunpack.c.l.b16 %v69
  %v209 = vunpack.c.l.b16 %v70
  %v210 = vunpack.c.l.b16 %v71
  %v211 = vunpack.c.l.b16 %v72
  %v212 = vunpack.c.l.b16 %v73
  %v213 = vunpack.c.l.b16 %v74
  %v214 = vunpack.c.l.b16 %v75
  %v215 = vunpack.c.l.b16 %v76
  %v216 = vunpack.c.l.b16 %v77
  %v217 = vunpack.c.l.b16 %v78
  %v218 = vunpack.c.l.b16 %v85
  %v219 = vunpack.c.l.b16 %v86
  %v220 = vpack.c.b16 %v157, %v156
  %v221 = vpack.c.b16 %v159, %v158
  %v222 = vpack.c.b16 %v161, %v160
  %v223 = vpack.c.b16 %v163, %v162
  %v224 = vpack.c.b16 %v165, %v164
  %v225 = vpack.c.b16 %v167, %v166
  %v226 = vpack.c.b16 %v169, %v168
  %v227 = vpack.c.b16 %v171, %v170
  %v228 = vpack.c.b16 %v173, %v172
  %v229 = vpack.c.b16 %v175, %v174
  %v230 = vpack.c.b16 %v177, %v176
  %v231 = vpack.c.b16 %v179, %v178
  %v232 = vpack.c.b16 %v181, %v180
  %v233 = vpack.c.b16 %v183, %v182
  %v234 = vpack.c.b16 %v185, %v184
  %v235 = vpack.c.b16 %v187, %v186
  %v236 = vpack.c.b16 %v189, %v188
  %v237 = vpack.c.b16 %v191, %v190
  %v238 = vpack.c.b16 %v193, %v192
  %v239 = vpack.c.b16 %v195, %v194
  %v240 = vpack.c.b16 %v197, %v196
  %v241 = vpack.c.b16 %v199, %v198
  %v242 = vpack.c.b16 %v201, %v200
  %v243 = vpack.c.b16 %v203, %v202
  %v244 = vpack.c.b16 %v205, %v204
  %v245 = vpack.c.b16 %v207, %v206
  %v246 = vpack.c.b16 %v209, %v208
  %v247 = vpack.c.b16 %v211, %v210
  %v248 = vpack.c.b16 %v213, %v212
  %v249 = vpack.c.b16 %v215, %v214
  %v250 = vpack.c.b16 %v217, %v216
  %v251 = vpack.c.b16 %v219, %v218
  %v256 = vunpack.c.l.b16 %v88
  %v257 = vunpack.c.l.b16 %v89
  %v258 = vunpack.c.l.b16 %v90
  %v259 = vunpack.c.l.b16 %v91
  %v260 = vpack.c.b16 %v257, %v256
  %v261 = vpack.c.b16 %v259, %v258
  %vm264 = vcmask 261120
  %v266 = vsel %vm264, %v220, 0
  %v269 = vsel %vm264, %v221, 0
  %v272 = vsel %vm264, %v222, 0
  %v275 = vsel %vm264, %v223, 0
  %v278 = vsel %vm264, %v224, 0
  %v281 = vsel %vm264, %v225, 0
  %v284 = vsel %vm264, %v226, 0
  %v287 = vsel %vm264, %v227, 0
  %v290 = vsel %vm264, %v228, 0
  %v293 = vsel %vm264, %v229, 0
  %v296 = vsel %vm264, %v230, 0
  %v299 = vsel %vm264, %v231, 0
  %v302 = vsel %vm264, %v232, 0
  %v305 = vsel %vm264, %v233, 0
  %v308 = vsel %vm264, %v234, 0
  %v311 = vsel %vm264, %v235, 0
  %v314 = vsel %vm264, %v236, 0
  %v317 = vsel %vm264, %v237, 0
  %v320 = vsel %vm264, %v238, 0
  %v323 = vsel %vm264, %v239, 0
  %v326 = vsel %vm264, %v240, 0
  %v329 = vsel %vm264, %v241, 0
  %v332 = vsel %vm264, %v242, 0
  %v335 = vsel %vm264, %v243, 0
  %v338 = vsel %vm264, %v244, 0
  %v341 = vsel %vm264, %v245, 0
  %v344 = vsel %vm264, %v246, 0
  %v347 = vsel %vm264, %v247, 0
  %v350 = vsel %vm264, %v248, 0
  %v353 = vsel %vm264, %v249, 0
  %v356 = vsel %vm264, %v250, 0
  %v359 = vsel %vm264, %v251, 0
  %361 = vmatprep.subr.bf16.mxu0 0
  %362 = vmatpush1.bf16.msra.mxu0 %v260
  %363 = vmatprep.subr.bf16.mxu0 0
  %364 = vmatpush1.bf16.msra.mxu0 %v261
  %365 = vmatprep.subr.bf16.mxu0 0
  %366 = vmatpush1.bf16.msra.mxu0 0
  %367 = vmatprep.subr.bf16.mxu0 0
  %368 = vmatpush1.bf16.msra.mxu0 0
  %369 = vmatprep.subr.bf16.mxu0 0
  %370 = vmatpush1.bf16.msra.mxu0 0
  %371 = vmatprep.subr.bf16.mxu0 0
  %372 = vmatpush1.bf16.msra.mxu0 0
  %373 = vmatprep.subr.bf16.mxu0 0
  %374 = vmatpush1.bf16.msra.mxu0 0
  %375 = vmatprep.subr.bf16.mxu0 0
  %376 = vmatpush1.bf16.msra.mxu0 0
  %377 = vmatprep.subr.bf16.mxu0 0
  %378 = vmatpush1.bf16.msra.mxu0 0
  %379 = vmatprep.subr.bf16.mxu0 0
  %380 = vmatpush1.bf16.msra.mxu0 0
  %381 = vmatprep.subr.bf16.mxu0 0
  %382 = vmatpush1.bf16.msra.mxu0 0
  %383 = vmatprep.subr.bf16.mxu0 0
  %384 = vmatpush1.bf16.msra.mxu0 0
  %385 = vmatprep.subr.bf16.mxu0 0
  %386 = vmatpush1.bf16.msra.mxu0 0
  %387 = vmatprep.subr.bf16.mxu0 0
  %388 = vmatpush1.bf16.msra.mxu0 0
  %389 = vmatprep.subr.bf16.mxu0 0
  %390 = vmatpush1.bf16.msra.mxu0 0
  %391 = vmatprep.subr.bf16.mxu0 0
  %392 = vmatpush1.bf16.msra.mxu0 0
  %393 = vmatprep.mubr.bf16.mxu0 0
  %394 = vmatmul.mubr.bf16.gmra.mrb[0].mxu0 %v266
  %v395 = vpop.f32.mrb[0].mxu0
  %v396 = vadd.f32 0.0, %v395
  %v397 = vpop.f32.mrb[0].mxu0
  %v398 = vpop.f32.mrb[0].mxu0
  %v399 = vadd.f32 0.0, %v398
  %v400 = vpop.f32.mrb[0].mxu0
  %401 = vmatprep.mubr.bf16.mxu0 0
  %402 = vmatmul.mubr.bf16.gmra.mrb[0].mxu0 %v269
  %v403 = vpop.f32.mrb[0].mxu0
  %v404 = vadd.f32 0.0, %v403
  %v405 = vpop.f32.mrb[0].mxu0
  %v406 = vpop.f32.mrb[0].mxu0
  %v407 = vadd.f32 0.0, %v406
  %v408 = vpop.f32.mrb[0].mxu0
  %409 = vmatprep.mubr.bf16.mxu0 0
  %410 = vmatmul.mubr.bf16.gmra.mrb[0].mxu0 %v272
  %v411 = vpop.f32.mrb[0].mxu0
  %v412 = vadd.f32 0.0, %v411
  %v413 = vpop.f32.mrb[0].mxu0
  %v414 = vpop.f32.mrb[0].mxu0
  %v415 = vadd.f32 0.0, %v414
  %v416 = vpop.f32.mrb[0].mxu0
  %417 = vmatprep.mubr.bf16.mxu0 0
  %418 = vmatmul.mubr.bf16.gmra.mrb[0].mxu0 %v275
  %v419 = vpop.f32.mrb[0].mxu0
  %v420 = vadd.f32 0.0, %v419
  %v421 = vpop.f32.mrb[0].mxu0
  %v422 = vpop.f32.mrb[0].mxu0
  %v423 = vadd.f32 0.0, %v422
  %v424 = vpop.f32.mrb[0].mxu0
  %425 = vmatprep.mubr.bf16.mxu0 0
  %426 = vmatmul.mubr.bf16.gmra.mrb[0].mxu0 %v278
  %v427 = vpop.f32.mrb[0].mxu0
  %v428 = vadd.f32 0.0, %v427
  %v429 = vpop.f32.mrb[0].mxu0
  %v430 = vpop.f32.mrb[0].mxu0
  %v431 = vadd.f32 0.0, %v430
  %v432 = vpop.f32.mrb[0].mxu0
  %433 = vmatprep.mubr.bf16.mxu0 0
  %434 = vmatmul.mubr.bf16.gmra.mrb[0].mxu0 %v281
  %v435 = vpop.f32.mrb[0].mxu0
  %v436 = vadd.f32 0.0, %v435
  %v437 = vpop.f32.mrb[0].mxu0
  %v438 = vpop.f32.mrb[0].mxu0
  %v439 = vadd.f32 0.0, %v438
  %v440 = vpop.f32.mrb[0].mxu0
  %441 = vmatprep.mubr.bf16.mxu0 0
  %442 = vmatmul.mubr.bf16.gmra.mrb[0].mxu0 %v284
  %v443 = vpop.f32.mrb[0].mxu0
  %v444 = vadd.f32 0.0, %v443
  %v445 = vpop.f32.mrb[0].mxu0
  %v446 = vpop.f32.mrb[0].mxu0
  %v447 = vadd.f32 0.0, %v446
  %v448 = vpop.f32.mrb[0].mxu0
  %449 = vmatprep.mubr.bf16.mxu0 0
  %450 = vmatmul.mubr.bf16.gmra.mrb[0].mxu0 %v287
  %v451 = vpop.f32.mrb[0].mxu0
  %v452 = vadd.f32 0.0, %v451
  %v453 = vpop.f32.mrb[0].mxu0
  %v454 = vpop.f32.mrb[0].mxu0
  %v455 = vadd.f32 0.0, %v454
  %v456 = vpop.f32.mrb[0].mxu0
  %457 = vmatprep.mubr.bf16.mxu0 0
  %458 = vmatmul.mubr.bf16.gmra.mrb[0].mxu0 %v290
  %v459 = vpop.f32.mrb[0].mxu0
  %v460 = vadd.f32 0.0, %v459
  %v461 = vpop.f32.mrb[0].mxu0
  %v462 = vpop.f32.mrb[0].mxu0
  %v463 = vadd.f32 0.0, %v462
  %v464 = vpop.f32.mrb[0].mxu0
  %465 = vmatprep.mubr.bf16.mxu0 0
  %466 = vmatmul.mubr.bf16.gmra.mrb[0].mxu0 %v293
  %v467 = vpop.f32.mrb[0].mxu0
  %v468 = vadd.f32 0.0, %v467
  %v469 = vpop.f32.mrb[0].mxu0
  %v470 = vpop.f32.mrb[0].mxu0
  %v471 = vadd.f32 0.0, %v470
  %v472 = vpop.f32.mrb[0].mxu0
  %473 = vmatprep.mubr.bf16.mxu0 0
  %474 = vmatmul.mubr.bf16.gmra.mrb[0].mxu0 %v296
  %v475 = vpop.f32.mrb[0].mxu0
  %v476 = vadd.f32 0.0, %v475
  %v477 = vpop.f32.mrb[0].mxu0
  %v478 = vpop.f32.mrb[0].mxu0
  %v479 = vadd.f32 0.0, %v478
  %v480 = vpop.f32.mrb[0].mxu0
  %481 = vmatprep.mubr.bf16.mxu0 0
  %482 = vmatmul.mubr.bf16.gmra.mrb[0].mxu0 %v299
  %v483 = vpop.f32.mrb[0].mxu0
  %v484 = vadd.f32 0.0, %v483
  %v485 = vpop.f32.mrb[0].mxu0
  %v486 = vpop.f32.mrb[0].mxu0
  %v487 = vadd.f32 0.0, %v486
  %v488 = vpop.f32.mrb[0].mxu0
  %489 = vmatprep.mubr.bf16.mxu0 0
  %490 = vmatmul.mubr.bf16.gmra.mrb[0].mxu0 %v302
  %v491 = vpop.f32.mrb[0].mxu0
  %v492 = vadd.f32 0.0, %v491
  %v493 = vpop.f32.mrb[0].mxu0
  %v494 = vpop.f32.mrb[0].mxu0
  %v495 = vadd.f32 0.0, %v494
  %v496 = vpop.f32.mrb[0].mxu0
  %497 = vmatprep.mubr.bf16.mxu0 0
  %498 = vmatmul.mubr.bf16.gmra.mrb[0].mxu0 %v305
  %v499 = vpop.f32.mrb[0].mxu0
  %v500 = vadd.f32 0.0, %v499
  %v501 = vpop.f32.mrb[0].mxu0
  %v502 = vpop.f32.mrb[0].mxu0
  %v503 = vadd.f32 0.0, %v502
  %v504 = vpop.f32.mrb[0].mxu0
  %505 = vmatprep.mubr.bf16.mxu0 0
  %506 = vmatmul.mubr.bf16.gmra.mrb[0].mxu0 %v308
  %v507 = vpop.f32.mrb[0].mxu0
  %v508 = vadd.f32 0.0, %v507
  %v509 = vpop.f32.mrb[0].mxu0
  %v510 = vpop.f32.mrb[0].mxu0
  %v511 = vadd.f32 0.0, %v510
  %v512 = vpop.f32.mrb[0].mxu0
  %513 = vmatprep.mubr.bf16.mxu0 0
  %514 = vmatmul.mubr.bf16.gmra.mrb[0].mxu0 %v311
  %v515 = vpop.f32.mrb[0].mxu0
  %v516 = vadd.f32 0.0, %v515
  %v517 = vpop.f32.mrb[0].mxu0
  %v518 = vpop.f32.mrb[0].mxu0
  %v519 = vadd.f32 0.0, %v518
  %v520 = vpop.f32.mrb[0].mxu0
  %521 = vmatprep.mubr.bf16.mxu0 0
  %522 = vmatmul.mubr.bf16.gmra.mrb[0].mxu0 %v314
  %v523 = vpop.f32.mrb[0].mxu0
  %v524 = vadd.f32 0.0, %v523
  %v525 = vpop.f32.mrb[0].mxu0
  %v526 = vpop.f32.mrb[0].mxu0
  %v527 = vadd.f32 0.0, %v526
  %v528 = vpop.f32.mrb[0].mxu0
  %529 = vmatprep.mubr.bf16.mxu0 0
  %530 = vmatmul.mubr.bf16.gmra.mrb[0].mxu0 %v317
  %v531 = vpop.f32.mrb[0].mxu0
  %v532 = vadd.f32 0.0, %v531
  %v533 = vpop.f32.mrb[0].mxu0
  %v534 = vpop.f32.mrb[0].mxu0
  %v535 = vadd.f32 0.0, %v534
  %v536 = vpop.f32.mrb[0].mxu0
  %537 = vmatprep.mubr.bf16.mxu0 0
  %538 = vmatmul.mubr.bf16.gmra.mrb[0].mxu0 %v320
  %v539 = vpop.f32.mrb[0].mxu0
  %v540 = vadd.f32 0.0, %v539
  %v541 = vpop.f32.mrb[0].mxu0
  %v542 = vpop.f32.mrb[0].mxu0
  %v543 = vadd.f32 0.0, %v542
  %v544 = vpop.f32.mrb[0].mxu0
  %545 = vmatprep.mubr.bf16.mxu0 0
  %546 = vmatmul.mubr.bf16.gmra.mrb[0].mxu0 %v323
  %v547 = vpop.f32.mrb[0].mxu0
  %v548 = vadd.f32 0.0, %v547
  %v549 = vpop.f32.mrb[0].mxu0
  %v550 = vpop.f32.mrb[0].mxu0
  %v551 = vadd.f32 0.0, %v550
  %v552 = vpop.f32.mrb[0].mxu0
  %553 = vmatprep.mubr.bf16.mxu0 0
  %554 = vmatmul.mubr.bf16.gmra.mrb[0].mxu0 %v326
  %v555 = vpop.f32.mrb[0].mxu0
  %v556 = vadd.f32 0.0, %v555
  %v557 = vpop.f32.mrb[0].mxu0
  %v558 = vpop.f32.mrb[0].mxu0
  %v559 = vadd.f32 0.0, %v558
  %v560 = vpop.f32.mrb[0].mxu0
  %561 = vmatprep.mubr.bf16.mxu0 0
  %562 = vmatmul.mubr.bf16.gmra.mrb[0].mxu0 %v329
  %v563 = vpop.f32.mrb[0].mxu0
  %v564 = vadd.f32 0.0, %v563
  %v565 = vpop.f32.mrb[0].mxu0
  %v566 = vpop.f32.mrb[0].mxu0
  %v567 = vadd.f32 0.0, %v566
  %v568 = vpop.f32.mrb[0].mxu0
  %569 = vmatprep.mubr.bf16.mxu0 0
  %570 = vmatmul.mubr.bf16.gmra.mrb[0].mxu0 %v332
  %v571 = vpop.f32.mrb[0].mxu0
  %v572 = vadd.f32 0.0, %v571
  %v573 = vpop.f32.mrb[0].mxu0
  %v574 = vpop.f32.mrb[0].mxu0
  %v575 = vadd.f32 0.0, %v574
  %v576 = vpop.f32.mrb[0].mxu0
  %577 = vmatprep.mubr.bf16.mxu0 0
  %578 = vmatmul.mubr.bf16.gmra.mrb[0].mxu0 %v335
  %v579 = vpop.f32.mrb[0].mxu0
  %v580 = vadd.f32 0.0, %v579
  %v581 = vpop.f32.mrb[0].mxu0
  %v582 = vpop.f32.mrb[0].mxu0
  %v583 = vadd.f32 0.0, %v582
  %v584 = vpop.f32.mrb[0].mxu0
  %585 = vmatprep.mubr.bf16.mxu0 0
  %586 = vmatmul.mubr.bf16.gmra.mrb[0].mxu0 %v338
  %v587 = vpop.f32.mrb[0].mxu0
  %v588 = vadd.f32 0.0, %v587
  %v589 = vpop.f32.mrb[0].mxu0
  %v590 = vpop.f32.mrb[0].mxu0
  %v591 = vadd.f32 0.0, %v590
  %v592 = vpop.f32.mrb[0].mxu0
  %593 = vmatprep.mubr.bf16.mxu0 0
  %594 = vmatmul.mubr.bf16.gmra.mrb[0].mxu0 %v341
  %v595 = vpop.f32.mrb[0].mxu0
  %v596 = vadd.f32 0.0, %v595
  %v597 = vpop.f32.mrb[0].mxu0
  %v598 = vpop.f32.mrb[0].mxu0
  %v599 = vadd.f32 0.0, %v598
  %v600 = vpop.f32.mrb[0].mxu0
  %601 = vmatprep.mubr.bf16.mxu0 0
  %602 = vmatmul.mubr.bf16.gmra.mrb[0].mxu0 %v344
  %v603 = vpop.f32.mrb[0].mxu0
  %v604 = vadd.f32 0.0, %v603
  %v605 = vpop.f32.mrb[0].mxu0
  %v606 = vpop.f32.mrb[0].mxu0
  %v607 = vadd.f32 0.0, %v606
  %v608 = vpop.f32.mrb[0].mxu0
  %609 = vmatprep.mubr.bf16.mxu0 0
  %610 = vmatmul.mubr.bf16.gmra.mrb[0].mxu0 %v347
  %v611 = vpop.f32.mrb[0].mxu0
  %v612 = vadd.f32 0.0, %v611
  %v613 = vpop.f32.mrb[0].mxu0
  %v614 = vpop.f32.mrb[0].mxu0
  %v615 = vadd.f32 0.0, %v614
  %v616 = vpop.f32.mrb[0].mxu0
  %617 = vmatprep.mubr.bf16.mxu0 0
  %618 = vmatmul.mubr.bf16.gmra.mrb[0].mxu0 %v350
  %v619 = vpop.f32.mrb[0].mxu0
  %v620 = vadd.f32 0.0, %v619
  %v621 = vpop.f32.mrb[0].mxu0
  %v622 = vpop.f32.mrb[0].mxu0
  %v623 = vadd.f32 0.0, %v622
  %v624 = vpop.f32.mrb[0].mxu0
  %625 = vmatprep.mubr.bf16.mxu0 0
  %626 = vmatmul.mubr.bf16.gmra.mrb[0].mxu0 %v353
  %v627 = vpop.f32.mrb[0].mxu0
  %v628 = vadd.f32 0.0, %v627
  %v629 = vpop.f32.mrb[0].mxu0
  %v630 = vpop.f32.mrb[0].mxu0
  %v631 = vadd.f32 0.0, %v630
  %v632 = vpop.f32.mrb[0].mxu0
  %633 = vmatprep.mubr.bf16.mxu0 0
  %634 = vmatmul.mubr.bf16.gmra.mrb[0].mxu0 %v356
  %v635 = vpop.f32.mrb[0].mxu0
  %v636 = vadd.f32 0.0, %v635
  %v637 = vpop.f32.mrb[0].mxu0
  %v638 = vpop.f32.mrb[0].mxu0
  %v639 = vadd.f32 0.0, %v638
  %v640 = vpop.f32.mrb[0].mxu0
  %641 = vmatprep.mubr.bf16.mxu0 0
  %642 = vmatmul.mubr.bf16.gmra.mrb[0].mxu0 %v359
  %v643 = vpop.f32.mrb[0].mxu0
  %v644 = vadd.f32 0.0, %v643
  %v645 = vpop.f32.mrb[0].mxu0
  %v646 = vpop.f32.mrb[0].mxu0
  %v647 = vadd.f32 0.0, %v646
  %v648 = vpop.f32.mrb[0].mxu0
  %649 = vdwg.mxu0
  %v654 = vunpack.c.l.b16 %v15
  %v655 = vunpack.c.l.b16 %v16
  %v656 = vunpack.c.l.b16 %v47
  %v657 = vunpack.c.l.b16 %v48
  %v658 = vpack.c.b16 %v655, %v654
  %v659 = vpack.c.b16 %v657, %v656
  %v664 = vunpack.c.l.b16 %v79
  %v665 = vunpack.c.l.b16 %v80
  %v666 = vunpack.c.l.b16 %v81
  %v667 = vunpack.c.l.b16 %v82
  %v668 = vpack.c.b16 %v665, %v664
  %v669 = vpack.c.b16 %v667, %v666
  %v673 = vsel %vm264, %v658, 0
  %v676 = vsel %vm264, %v659, 0
  %678 = vmatprep.subr.bf16.mxu0 0
  %679 = vmatpush1.bf16.msra.mxu0 %v668
  %680 = vmatprep.subr.bf16.mxu0 0
  %681 = vmatpush1.bf16.msra.mxu0 %v669
  %682 = vmatprep.subr.bf16.mxu0 0
  %683 = vmatpush1.bf16.msra.mxu0 0
  %684 = vmatprep.subr.bf16.mxu0 0
  %685 = vmatpush1.bf16.msra.mxu0 0
  %686 = vmatprep.subr.bf16.mxu0 0
  %687 = vmatpush1.bf16.msra.mxu0 0
  %688 = vmatprep.subr.bf16.mxu0 0
  %689 = vmatpush1.bf16.msra.mxu0 0
  %690 = vmatprep.subr.bf16.mxu0 0
  %691 = vmatpush1.bf16.msra.mxu0 0
  %692 = vmatprep.subr.bf16.mxu0 0
  %693 = vmatpush1.bf16.msra.mxu0 0
  %694 = vmatprep.subr.bf16.mxu0 0
  %695 = vmatpush1.bf16.msra.mxu0 0
  %696 = vmatprep.subr.bf16.mxu0 0
  %697 = vmatpush1.bf16.msra.mxu0 0
  %698 = vmatprep.subr.bf16.mxu0 0
  %699 = vmatpush1.bf16.msra.mxu0 0
  %700 = vmatprep.subr.bf16.mxu0 0
  %701 = vmatpush1.bf16.msra.mxu0 0
  %702 = vmatprep.subr.bf16.mxu0 0
  %703 = vmatpush1.bf16.msra.mxu0 0
  %704 = vmatprep.subr.bf16.mxu0 0
  %705 = vmatpush1.bf16.msra.mxu0 0
  %706 = vmatprep.subr.bf16.mxu0 0
  %707 = vmatpush1.bf16.msra.mxu0 0
  %708 = vmatprep.subr.bf16.mxu0 0
  %709 = vmatpush1.bf16.msra.mxu0 0
  %710 = vmatprep.mubr.bf16.mxu0 0
  %711 = vmatmul.mubr.bf16.gmra.mrb[0].mxu0 %v673
  %v712 = vpop.f32.mrb[0].mxu0
  %v713 = vadd.f32 %v396, %v712
  %v714 = vpop.f32.mrb[0].mxu0
  %v715 = vpop.f32.mrb[0].mxu0
  %v716 = vadd.f32 %v399, %v715
  %v717 = vpop.f32.mrb[0].mxu0
  %718 = vmatprep.mubr.bf16.mxu0 0
  %719 = vmatmul.mubr.bf16.gmra.mrb[0].mxu0 %v266
  %v720 = vpop.f32.mrb[0].mxu0
  %v721 = vadd.f32 %v404, %v720
  %v722 = vpop.f32.mrb[0].mxu0
  %v723 = vpop.f32.mrb[0].mxu0
  %v724 = vadd.f32 %v407, %v723
  %v725 = vpop.f32.mrb[0].mxu0
  %726 = vmatprep.mubr.bf16.mxu0 0
  %727 = vmatmul.mubr.bf16.gmra.mrb[0].mxu0 %v269
  %v728 = vpop.f32.mrb[0].mxu0
  %v729 = vadd.f32 %v412, %v728
  %v730 = vpop.f32.mrb[0].mxu0
  %v731 = vpop.f32.mrb[0].mxu0
  %v732 = vadd.f32 %v415, %v731
  %v733 = vpop.f32.mrb[0].mxu0
  %734 = vmatprep.mubr.bf16.mxu0 0
  %735 = vmatmul.mubr.bf16.gmra.mrb[0].mxu0 %v272
  %v736 = vpop.f32.mrb[0].mxu0
  %v737 = vadd.f32 %v420, %v736
  %v738 = vpop.f32.mrb[0].mxu0
  %v739 = vpop.f32.mrb[0].mxu0
  %v740 = vadd.f32 %v423, %v739
  %v741 = vpop.f32.mrb[0].mxu0
  %742 = vmatprep.mubr.bf16.mxu0 0
  %743 = vmatmul.mubr.bf16.gmra.mrb[0].mxu0 %v275
  %v744 = vpop.f32.mrb[0].mxu0
  %v745 = vadd.f32 %v428, %v744
  %v746 = vpop.f32.mrb[0].mxu0
  %v747 = vpop.f32.mrb[0].mxu0
  %v748 = vadd.f32 %v431, %v747
  %v749 = vpop.f32.mrb[0].mxu0
  %750 = vmatprep.mubr.bf16.mxu0 0
  %751 = vmatmul.mubr.bf16.gmra.mrb[0].mxu0 %v278
  %v752 = vpop.f32.mrb[0].mxu0
  %v753 = vadd.f32 %v436, %v752
  %v754 = vpop.f32.mrb[0].mxu0
  %v755 = vpop.f32.mrb[0].mxu0
  %v756 = vadd.f32 %v439, %v755
  %v757 = vpop.f32.mrb[0].mxu0
  %758 = vmatprep.mubr.bf16.mxu0 0
  %759 = vmatmul.mubr.bf16.gmra.mrb[0].mxu0 %v281
  %v760 = vpop.f32.mrb[0].mxu0
  %v761 = vadd.f32 %v444, %v760
  %v762 = vpop.f32.mrb[0].mxu0
  %v763 = vpop.f32.mrb[0].mxu0
  %v764 = vadd.f32 %v447, %v763
  %v765 = vpop.f32.mrb[0].mxu0
  %766 = vmatprep.mubr.bf16.mxu0 0
  %767 = vmatmul.mubr.bf16.gmra.mrb[0].mxu0 %v284
  %v768 = vpop.f32.mrb[0].mxu0
  %v769 = vadd.f32 %v452, %v768
  %v770 = vpop.f32.mrb[0].mxu0
  %v771 = vpop.f32.mrb[0].mxu0
  %v772 = vadd.f32 %v455, %v771
  %v773 = vpop.f32.mrb[0].mxu0
  %774 = vmatprep.mubr.bf16.mxu0 0
  %775 = vmatmul.mubr.bf16.gmra.mrb[0].mxu0 %v287
  %v776 = vpop.f32.mrb[0].mxu0
  %v777 = vadd.f32 %v460, %v776
  %v778 = vpop.f32.mrb[0].mxu0
  %v779 = vpop.f32.mrb[0].mxu0
  %v780 = vadd.f32 %v463, %v779
  %v781 = vpop.f32.mrb[0].mxu0
  %782 = vmatprep.mubr.bf16.mxu0 0
  %783 = vmatmul.mubr.bf16.gmra.mrb[0].mxu0 %v290
  %v784 = vpop.f32.mrb[0].mxu0
  %v785 = vadd.f32 %v468, %v784
  %v786 = vpop.f32.mrb[0].mxu0
  %v787 = vpop.f32.mrb[0].mxu0
  %v788 = vadd.f32 %v471, %v787
  %v789 = vpop.f32.mrb[0].mxu0
  %790 = vmatprep.mubr.bf16.mxu0 0
  %791 = vmatmul.mubr.bf16.gmra.mrb[0].mxu0 %v293
  %v792 = vpop.f32.mrb[0].mxu0
  %v793 = vadd.f32 %v476, %v792
  %v794 = vpop.f32.mrb[0].mxu0
  %v795 = vpop.f32.mrb[0].mxu0
  %v796 = vadd.f32 %v479, %v795
  %v797 = vpop.f32.mrb[0].mxu0
  %798 = vmatprep.mubr.bf16.mxu0 0
  %799 = vmatmul.mubr.bf16.gmra.mrb[0].mxu0 %v296
  %v800 = vpop.f32.mrb[0].mxu0
  %v801 = vadd.f32 %v484, %v800
  %v802 = vpop.f32.mrb[0].mxu0
  %v803 = vpop.f32.mrb[0].mxu0
  %v804 = vadd.f32 %v487, %v803
  %v805 = vpop.f32.mrb[0].mxu0
  %806 = vmatprep.mubr.bf16.mxu0 0
  %807 = vmatmul.mubr.bf16.gmra.mrb[0].mxu0 %v299
  %v808 = vpop.f32.mrb[0].mxu0
  %v809 = vadd.f32 %v492, %v808
  %v810 = vpop.f32.mrb[0].mxu0
  %v811 = vpop.f32.mrb[0].mxu0
  %v812 = vadd.f32 %v495, %v811
  %v813 = vpop.f32.mrb[0].mxu0
  %814 = vmatprep.mubr.bf16.mxu0 0
  %815 = vmatmul.mubr.bf16.gmra.mrb[0].mxu0 %v302
  %v816 = vpop.f32.mrb[0].mxu0
  %v817 = vadd.f32 %v500, %v816
  %v818 = vpop.f32.mrb[0].mxu0
  %v819 = vpop.f32.mrb[0].mxu0
  %v820 = vadd.f32 %v503, %v819
  %v821 = vpop.f32.mrb[0].mxu0
  %822 = vmatprep.mubr.bf16.mxu0 0
  %823 = vmatmul.mubr.bf16.gmra.mrb[0].mxu0 %v305
  %v824 = vpop.f32.mrb[0].mxu0
  %v825 = vadd.f32 %v508, %v824
  %v826 = vpop.f32.mrb[0].mxu0
  %v827 = vpop.f32.mrb[0].mxu0
  %v828 = vadd.f32 %v511, %v827
  %v829 = vpop.f32.mrb[0].mxu0
  %830 = vmatprep.mubr.bf16.mxu0 0
  %831 = vmatmul.mubr.bf16.gmra.mrb[0].mxu0 %v308
  %v832 = vpop.f32.mrb[0].mxu0
  %v833 = vadd.f32 %v516, %v832
  %v834 = vpop.f32.mrb[0].mxu0
  %v835 = vpop.f32.mrb[0].mxu0
  %v836 = vadd.f32 %v519, %v835
  %v837 = vpop.f32.mrb[0].mxu0
  %838 = vmatprep.mubr.bf16.mxu0 0
  %839 = vmatmul.mubr.bf16.gmra.mrb[0].mxu0 %v676
  %v840 = vpop.f32.mrb[0].mxu0
  %v841 = vadd.f32 %v524, %v840
  %v842 = vpop.f32.mrb[0].mxu0
  %v843 = vpop.f32.mrb[0].mxu0
  %v844 = vadd.f32 %v527, %v843
  %v845 = vpop.f32.mrb[0].mxu0
  %846 = vmatprep.mubr.bf16.mxu0 0
  %847 = vmatmul.mubr.bf16.gmra.mrb[0].mxu0 %v314
  %v848 = vpop.f32.mrb[0].mxu0
  %v849 = vadd.f32 %v532, %v848
  %v850 = vpop.f32.mrb[0].mxu0
  %v851 = vpop.f32.mrb[0].mxu0
  %v852 = vadd.f32 %v535, %v851
  %v853 = vpop.f32.mrb[0].mxu0
  %854 = vmatprep.mubr.bf16.mxu0 0
  %855 = vmatmul.mubr.bf16.gmra.mrb[0].mxu0 %v317
  %v856 = vpop.f32.mrb[0].mxu0
  %v857 = vadd.f32 %v540, %v856
  %v858 = vpop.f32.mrb[0].mxu0
  %v859 = vpop.f32.mrb[0].mxu0
  %v860 = vadd.f32 %v543, %v859
  %v861 = vpop.f32.mrb[0].mxu0
  %862 = vmatprep.mubr.bf16.mxu0 0
  %863 = vmatmul.mubr.bf16.gmra.mrb[0].mxu0 %v320
  %v864 = vpop.f32.mrb[0].mxu0
  %v865 = vadd.f32 %v548, %v864
  %v866 = vpop.f32.mrb[0].mxu0
  %v867 = vpop.f32.mrb[0].mxu0
  %v868 = vadd.f32 %v551, %v867
  %v869 = vpop.f32.mrb[0].mxu0
  %870 = vmatprep.mubr.bf16.mxu0 0
  %871 = vmatmul.mubr.bf16.gmra.mrb[0].mxu0 %v323
  %v872 = vpop.f32.mrb[0].mxu0
  %v873 = vadd.f32 %v556, %v872
  %v874 = vpop.f32.mrb[0].mxu0
  %v875 = vpop.f32.mrb[0].mxu0
  %v876 = vadd.f32 %v559, %v875
  %v877 = vpop.f32.mrb[0].mxu0
  %878 = vmatprep.mubr.bf16.mxu0 0
  %879 = vmatmul.mubr.bf16.gmra.mrb[0].mxu0 %v326
  %v880 = vpop.f32.mrb[0].mxu0
  %v881 = vadd.f32 %v564, %v880
  %v882 = vpop.f32.mrb[0].mxu0
  %v883 = vpop.f32.mrb[0].mxu0
  %v884 = vadd.f32 %v567, %v883
  %v885 = vpop.f32.mrb[0].mxu0
  %886 = vmatprep.mubr.bf16.mxu0 0
  %887 = vmatmul.mubr.bf16.gmra.mrb[0].mxu0 %v329
  %v888 = vpop.f32.mrb[0].mxu0
  %v889 = vadd.f32 %v572, %v888
  %v890 = vpop.f32.mrb[0].mxu0
  %v891 = vpop.f32.mrb[0].mxu0
  %v892 = vadd.f32 %v575, %v891
  %v893 = vpop.f32.mrb[0].mxu0
  %894 = vmatprep.mubr.bf16.mxu0 0
  %895 = vmatmul.mubr.bf16.gmra.mrb[0].mxu0 %v332
  %v896 = vpop.f32.mrb[0].mxu0
  %v897 = vadd.f32 %v580, %v896
  %v898 = vpop.f32.mrb[0].mxu0
  %v899 = vpop.f32.mrb[0].mxu0
  %v900 = vadd.f32 %v583, %v899
  %v901 = vpop.f32.mrb[0].mxu0
  %902 = vmatprep.mubr.bf16.mxu0 0
  %903 = vmatmul.mubr.bf16.gmra.mrb[0].mxu0 %v335
  %v904 = vpop.f32.mrb[0].mxu0
  %v905 = vadd.f32 %v588, %v904
  %v906 = vpop.f32.mrb[0].mxu0
  %v907 = vpop.f32.mrb[0].mxu0
  %v908 = vadd.f32 %v591, %v907
  %v909 = vpop.f32.mrb[0].mxu0
  %910 = vmatprep.mubr.bf16.mxu0 0
  %911 = vmatmul.mubr.bf16.gmra.mrb[0].mxu0 %v338
  %v912 = vpop.f32.mrb[0].mxu0
  %v913 = vadd.f32 %v596, %v912
  %v914 = vpop.f32.mrb[0].mxu0
  %v915 = vpop.f32.mrb[0].mxu0
  %v916 = vadd.f32 %v599, %v915
  %v917 = vpop.f32.mrb[0].mxu0
  %918 = vmatprep.mubr.bf16.mxu0 0
  %919 = vmatmul.mubr.bf16.gmra.mrb[0].mxu0 %v341
  %v920 = vpop.f32.mrb[0].mxu0
  %v921 = vadd.f32 %v604, %v920
  %v922 = vpop.f32.mrb[0].mxu0
  %v923 = vpop.f32.mrb[0].mxu0
  %v924 = vadd.f32 %v607, %v923
  %v925 = vpop.f32.mrb[0].mxu0
  %926 = vmatprep.mubr.bf16.mxu0 0
  %927 = vmatmul.mubr.bf16.gmra.mrb[0].mxu0 %v344
  %v928 = vpop.f32.mrb[0].mxu0
  %v929 = vadd.f32 %v612, %v928
  %v930 = vpop.f32.mrb[0].mxu0
  %v931 = vpop.f32.mrb[0].mxu0
  %v932 = vadd.f32 %v615, %v931
  %v933 = vpop.f32.mrb[0].mxu0
  %934 = vmatprep.mubr.bf16.mxu0 0
  %935 = vmatmul.mubr.bf16.gmra.mrb[0].mxu0 %v347
  %v936 = vpop.f32.mrb[0].mxu0
  %v937 = vadd.f32 %v620, %v936
  %v938 = vpop.f32.mrb[0].mxu0
  %v939 = vpop.f32.mrb[0].mxu0
  %v940 = vadd.f32 %v623, %v939
  %v941 = vpop.f32.mrb[0].mxu0
  %942 = vmatprep.mubr.bf16.mxu0 0
  %943 = vmatmul.mubr.bf16.gmra.mrb[0].mxu0 %v350
  %v944 = vpop.f32.mrb[0].mxu0
  %v945 = vadd.f32 %v628, %v944
  %v946 = vpop.f32.mrb[0].mxu0
  %v947 = vpop.f32.mrb[0].mxu0
  %v948 = vadd.f32 %v631, %v947
  %v949 = vpop.f32.mrb[0].mxu0
  %950 = vmatprep.mubr.bf16.mxu0 0
  %951 = vmatmul.mubr.bf16.gmra.mrb[0].mxu0 %v353
  %v952 = vpop.f32.mrb[0].mxu0
  %v953 = vadd.f32 %v636, %v952
  %v954 = vpop.f32.mrb[0].mxu0
  %v955 = vpop.f32.mrb[0].mxu0
  %v956 = vadd.f32 %v639, %v955
  %v957 = vpop.f32.mrb[0].mxu0
  %958 = vmatprep.mubr.bf16.mxu0 0
  %959 = vmatmul.mubr.bf16.gmra.mrb[0].mxu0 %v356
  %v960 = vpop.f32.mrb[0].mxu0
  %v961 = vadd.f32 %v644, %v960
  %v962 = vpop.f32.mrb[0].mxu0
  %v963 = vpop.f32.mrb[0].mxu0
  %v964 = vadd.f32 %v647, %v963
  %v965 = vpop.f32.mrb[0].mxu0
  %966 = vdwg.mxu0
  %vm967 = vcmask 64512
  %v968 = vsel %vm967, %v713, 0.0
  %v969 = vsel %vm967, %v716, 0.0
  %v970 = vadd.f32 %v968, %v969
  %v971 = vsel %vm967, %v721, 0.0
  %v972 = vadd.f32 %v970, %v971
  %v973 = vsel %vm967, %v724, 0.0
  %v974 = vadd.f32 %v972, %v973
  %v975 = vsel %vm967, %v729, 0.0
  %v976 = vadd.f32 %v974, %v975
  %v977 = vsel %vm967, %v732, 0.0
  %v978 = vadd.f32 %v976, %v977
  %v979 = vsel %vm967, %v737, 0.0
  %v980 = vadd.f32 %v978, %v979
  %v981 = vsel %vm967, %v740, 0.0
  %v982 = vadd.f32 %v980, %v981
  %v983 = vsel %vm967, %v745, 0.0
  %v984 = vadd.f32 %v982, %v983
  %v985 = vsel %vm967, %v748, 0.0
  %v986 = vadd.f32 %v984, %v985
  %v987 = vsel %vm967, %v753, 0.0
  %v988 = vadd.f32 %v986, %v987
  %v989 = vsel %vm967, %v756, 0.0
  %v990 = vadd.f32 %v988, %v989
  %v991 = vsel %vm967, %v761, 0.0
  %v992 = vadd.f32 %v990, %v991
  %v993 = vsel %vm967, %v764, 0.0
  %v994 = vadd.f32 %v992, %v993
  %v995 = vsel %vm967, %v769, 0.0
  %v996 = vadd.f32 %v994, %v995
  %v997 = vsel %vm967, %v772, 0.0
  %v998 = vadd.f32 %v996, %v997
  %v999 = vsel %vm967, %v777, 0.0
  %v1000 = vadd.f32 %v998, %v999
  %v1001 = vsel %vm967, %v780, 0.0
  %v1002 = vadd.f32 %v1000, %v1001
  %v1003 = vsel %vm967, %v785, 0.0
  %v1004 = vadd.f32 %v1002, %v1003
  %v1005 = vsel %vm967, %v788, 0.0
  %v1006 = vadd.f32 %v1004, %v1005
  %v1007 = vsel %vm967, %v793, 0.0
  %v1008 = vadd.f32 %v1006, %v1007
  %v1009 = vsel %vm967, %v796, 0.0
  %v1010 = vadd.f32 %v1008, %v1009
  %v1011 = vsel %vm967, %v801, 0.0
  %v1012 = vadd.f32 %v1010, %v1011
  %v1013 = vsel %vm967, %v804, 0.0
  %v1014 = vadd.f32 %v1012, %v1013
  %v1015 = vsel %vm967, %v809, 0.0
  %v1016 = vadd.f32 %v1014, %v1015
  %v1017 = vsel %vm967, %v812, 0.0
  %v1018 = vadd.f32 %v1016, %v1017
  %v1019 = vsel %vm967, %v817, 0.0
  %v1020 = vadd.f32 %v1018, %v1019
  %v1021 = vsel %vm967, %v820, 0.0
  %v1022 = vadd.f32 %v1020, %v1021
  %v1023 = vsel %vm967, %v825, 0.0
  %v1024 = vadd.f32 %v1022, %v1023
  %v1025 = vsel %vm967, %v828, 0.0
  %v1026 = vadd.f32 %v1024, %v1025
  %v1027 = vsel %vm967, %v833, 0.0
  %v1028 = vadd.f32 %v1026, %v1027
  %v1029 = vsel %vm967, %v836, 0.0
  %v1030 = vadd.f32 %v1028, %v1029
  %v1031 = vsel %vm967, %v841, 0.0
  %v1032 = vadd.f32 %v1030, %v1031
  %v1033 = vsel %vm967, %v844, 0.0
  %v1034 = vadd.f32 %v1032, %v1033
  %v1035 = vsel %vm967, %v849, 0.0
  %v1036 = vadd.f32 %v1034, %v1035
  %v1037 = vsel %vm967, %v852, 0.0
  %v1038 = vadd.f32 %v1036, %v1037
  %v1039 = vsel %vm967, %v857, 0.0
  %v1040 = vadd.f32 %v1038, %v1039
  %v1041 = vsel %vm967, %v860, 0.0
  %v1042 = vadd.f32 %v1040, %v1041
  %v1043 = vsel %vm967, %v865, 0.0
  %v1044 = vadd.f32 %v1042, %v1043
  %v1045 = vsel %vm967, %v868, 0.0
  %v1046 = vadd.f32 %v1044, %v1045
  %v1047 = vsel %vm967, %v873, 0.0
  %v1048 = vadd.f32 %v1046, %v1047
  %v1049 = vsel %vm967, %v876, 0.0
  %v1050 = vadd.f32 %v1048, %v1049
  %v1051 = vsel %vm967, %v881, 0.0
  %v1052 = vadd.f32 %v1050, %v1051
  %v1053 = vsel %vm967, %v884, 0.0
  %v1054 = vadd.f32 %v1052, %v1053
  %v1055 = vsel %vm967, %v889, 0.0
  %v1056 = vadd.f32 %v1054, %v1055
  %v1057 = vsel %vm967, %v892, 0.0
  %v1058 = vadd.f32 %v1056, %v1057
  %v1059 = vsel %vm967, %v897, 0.0
  %v1060 = vadd.f32 %v1058, %v1059
  %v1061 = vsel %vm967, %v900, 0.0
  %v1062 = vadd.f32 %v1060, %v1061
  %v1063 = vsel %vm967, %v905, 0.0
  %v1064 = vadd.f32 %v1062, %v1063
  %v1065 = vsel %vm967, %v908, 0.0
  %v1066 = vadd.f32 %v1064, %v1065
  %v1067 = vsel %vm967, %v913, 0.0
  %v1068 = vadd.f32 %v1066, %v1067
  %v1069 = vsel %vm967, %v916, 0.0
  %v1070 = vadd.f32 %v1068, %v1069
  %v1071 = vsel %vm967, %v921, 0.0
  %v1072 = vadd.f32 %v1070, %v1071
  %v1073 = vsel %vm967, %v924, 0.0
  %v1074 = vadd.f32 %v1072, %v1073
  %v1075 = vsel %vm967, %v929, 0.0
  %v1076 = vadd.f32 %v1074, %v1075
  %v1077 = vsel %vm967, %v932, 0.0
  %v1078 = vadd.f32 %v1076, %v1077
  %v1079 = vsel %vm967, %v937, 0.0
  %v1080 = vadd.f32 %v1078, %v1079
  %v1081 = vsel %vm967, %v940, 0.0
  %v1082 = vadd.f32 %v1080, %v1081
  %v1083 = vsel %vm967, %v945, 0.0
  %v1084 = vadd.f32 %v1082, %v1083
  %v1085 = vsel %vm967, %v948, 0.0
  %v1086 = vadd.f32 %v1084, %v1085
  %v1087 = vsel %vm967, %v953, 0.0
  %v1088 = vadd.f32 %v1086, %v1087
  %v1089 = vsel %vm967, %v956, 0.0
  %v1090 = vadd.f32 %v1088, %v1089
  %v1091 = vsel %vm967, %v961, 0.0
  %v1092 = vadd.f32 %v1090, %v1091
  %v1093 = vsel %vm967, %v964, 0.0
  %v1094 = vadd.f32 %v1092, %v1093
  %v1095 = vrot.slane %v1094, 4
  %v1096 = vadd.f32 %v1094, %v1095
  %v1097 = vrot.slane %v1096, 2
  %v1098 = vadd.f32 %v1096, %v1097
  %v1099 = vrot.slane %v1098, 1
  %v1100 = vadd.f32 %v1098, %v1099
  %v1101 = vadd.f32 %v1100, 0.0
  %v1102 = vmul.f32 %v713, %v713
  %v1103 = vmul.f32 %v716, %v716
  %v1104 = vmul.f32 %v721, %v721
  %v1105 = vmul.f32 %v724, %v724
  %v1106 = vmul.f32 %v729, %v729
  %v1107 = vmul.f32 %v732, %v732
  %v1108 = vmul.f32 %v737, %v737
  %v1109 = vmul.f32 %v740, %v740
  %v1110 = vmul.f32 %v745, %v745
  %v1111 = vmul.f32 %v748, %v748
  %v1112 = vmul.f32 %v753, %v753
  %v1113 = vmul.f32 %v756, %v756
  %v1114 = vmul.f32 %v761, %v761
  %v1115 = vmul.f32 %v764, %v764
  %v1116 = vmul.f32 %v769, %v769
  %v1117 = vmul.f32 %v772, %v772
  %v1118 = vmul.f32 %v777, %v777
  %v1119 = vmul.f32 %v780, %v780
  %v1120 = vmul.f32 %v785, %v785
  %v1121 = vmul.f32 %v788, %v788
  %v1122 = vmul.f32 %v793, %v793
  %v1123 = vmul.f32 %v796, %v796
  %v1124 = vmul.f32 %v801, %v801
  %v1125 = vmul.f32 %v804, %v804
  %v1126 = vmul.f32 %v809, %v809
  %v1127 = vmul.f32 %v812, %v812
  %v1128 = vmul.f32 %v817, %v817
  %v1129 = vmul.f32 %v820, %v820
  %v1130 = vmul.f32 %v825, %v825
  %v1131 = vmul.f32 %v828, %v828
  %v1132 = vmul.f32 %v833, %v833
  %v1133 = vmul.f32 %v836, %v836
  %v1134 = vmul.f32 %v841, %v841
  %v1135 = vmul.f32 %v844, %v844
  %v1136 = vmul.f32 %v849, %v849
  %v1137 = vmul.f32 %v852, %v852
  %v1138 = vmul.f32 %v857, %v857
  %v1139 = vmul.f32 %v860, %v860
  %v1140 = vmul.f32 %v865, %v865
  %v1141 = vmul.f32 %v868, %v868
  %v1142 = vmul.f32 %v873, %v873
  %v1143 = vmul.f32 %v876, %v876
  %v1144 = vmul.f32 %v881, %v881
  %v1145 = vmul.f32 %v884, %v884
  %v1146 = vmul.f32 %v889, %v889
  %v1147 = vmul.f32 %v892, %v892
  %v1148 = vmul.f32 %v897, %v897
  %v1149 = vmul.f32 %v900, %v900
  %v1150 = vmul.f32 %v905, %v905
  %v1151 = vmul.f32 %v908, %v908
  %v1152 = vmul.f32 %v913, %v913
  %v1153 = vmul.f32 %v916, %v916
  %v1154 = vmul.f32 %v921, %v921
  %v1155 = vmul.f32 %v924, %v924
  %v1156 = vmul.f32 %v929, %v929
  %v1157 = vmul.f32 %v932, %v932
  %v1158 = vmul.f32 %v937, %v937
  %v1159 = vmul.f32 %v940, %v940
  %v1160 = vmul.f32 %v945, %v945
  %v1161 = vmul.f32 %v948, %v948
  %v1162 = vmul.f32 %v953, %v953
  %v1163 = vmul.f32 %v956, %v956
  %v1164 = vmul.f32 %v961, %v961
  %v1165 = vmul.f32 %v964, %v964
  %v1166 = vsel %vm967, %v1102, 0.0
  %v1167 = vsel %vm967, %v1103, 0.0
  %v1168 = vadd.f32 %v1166, %v1167
  %v1169 = vsel %vm967, %v1104, 0.0
  %v1170 = vadd.f32 %v1168, %v1169
  %v1171 = vsel %vm967, %v1105, 0.0
  %v1172 = vadd.f32 %v1170, %v1171
  %v1173 = vsel %vm967, %v1106, 0.0
  %v1174 = vadd.f32 %v1172, %v1173
  %v1175 = vsel %vm967, %v1107, 0.0
  %v1176 = vadd.f32 %v1174, %v1175
  %v1177 = vsel %vm967, %v1108, 0.0
  %v1178 = vadd.f32 %v1176, %v1177
  %v1179 = vsel %vm967, %v1109, 0.0
  %v1180 = vadd.f32 %v1178, %v1179
  %v1181 = vsel %vm967, %v1110, 0.0
  %v1182 = vadd.f32 %v1180, %v1181
  %v1183 = vsel %vm967, %v1111, 0.0
  %v1184 = vadd.f32 %v1182, %v1183
  %v1185 = vsel %vm967, %v1112, 0.0
  %v1186 = vadd.f32 %v1184, %v1185
  %v1187 = vsel %vm967, %v1113, 0.0
  %v1188 = vadd.f32 %v1186, %v1187
  %v1189 = vsel %vm967, %v1114, 0.0
  %v1190 = vadd.f32 %v1188, %v1189
  %v1191 = vsel %vm967, %v1115, 0.0
  %v1192 = vadd.f32 %v1190, %v1191
  %v1193 = vsel %vm967, %v1116, 0.0
  %v1194 = vadd.f32 %v1192, %v1193
  %v1195 = vsel %vm967, %v1117, 0.0
  %v1196 = vadd.f32 %v1194, %v1195
  %v1197 = vsel %vm967, %v1118, 0.0
  %v1198 = vadd.f32 %v1196, %v1197
  %v1199 = vsel %vm967, %v1119, 0.0
  %v1200 = vadd.f32 %v1198, %v1199
  %v1201 = vsel %vm967, %v1120, 0.0
  %v1202 = vadd.f32 %v1200, %v1201
  %v1203 = vsel %vm967, %v1121, 0.0
  %v1204 = vadd.f32 %v1202, %v1203
  %v1205 = vsel %vm967, %v1122, 0.0
  %v1206 = vadd.f32 %v1204, %v1205
  %v1207 = vsel %vm967, %v1123, 0.0
  %v1208 = vadd.f32 %v1206, %v1207
  %v1209 = vsel %vm967, %v1124, 0.0
  %v1210 = vadd.f32 %v1208, %v1209
  %v1211 = vsel %vm967, %v1125, 0.0
  %v1212 = vadd.f32 %v1210, %v1211
  %v1213 = vsel %vm967, %v1126, 0.0
  %v1214 = vadd.f32 %v1212, %v1213
  %v1215 = vsel %vm967, %v1127, 0.0
  %v1216 = vadd.f32 %v1214, %v1215
  %v1217 = vsel %vm967, %v1128, 0.0
  %v1218 = vadd.f32 %v1216, %v1217
  %v1219 = vsel %vm967, %v1129, 0.0
  %v1220 = vadd.f32 %v1218, %v1219
  %v1221 = vsel %vm967, %v1130, 0.0
  %v1222 = vadd.f32 %v1220, %v1221
  %v1223 = vsel %vm967, %v1131, 0.0
  %v1224 = vadd.f32 %v1222, %v1223
  %v1225 = vsel %vm967, %v1132, 0.0
  %v1226 = vadd.f32 %v1224, %v1225
  %v1227 = vsel %vm967, %v1133, 0.0
  %v1228 = vadd.f32 %v1226, %v1227
  %v1229 = vsel %vm967, %v1134, 0.0
  %v1230 = vadd.f32 %v1228, %v1229
  %v1231 = vsel %vm967, %v1135, 0.0
  %v1232 = vadd.f32 %v1230, %v1231
  %v1233 = vsel %vm967, %v1136, 0.0
  %v1234 = vadd.f32 %v1232, %v1233
  %v1235 = vsel %vm967, %v1137, 0.0
  %v1236 = vadd.f32 %v1234, %v1235
  %v1237 = vsel %vm967, %v1138, 0.0
  %v1238 = vadd.f32 %v1236, %v1237
  %v1239 = vsel %vm967, %v1139, 0.0
  %v1240 = vadd.f32 %v1238, %v1239
  %v1241 = vsel %vm967, %v1140, 0.0
  %v1242 = vadd.f32 %v1240, %v1241
  %v1243 = vsel %vm967, %v1141, 0.0
  %v1244 = vadd.f32 %v1242, %v1243
  %v1245 = vsel %vm967, %v1142, 0.0
  %v1246 = vadd.f32 %v1244, %v1245
  %v1247 = vsel %vm967, %v1143, 0.0
  %v1248 = vadd.f32 %v1246, %v1247
  %v1249 = vsel %vm967, %v1144, 0.0
  %v1250 = vadd.f32 %v1248, %v1249
  %v1251 = vsel %vm967, %v1145, 0.0
  %v1252 = vadd.f32 %v1250, %v1251
  %v1253 = vsel %vm967, %v1146, 0.0
  %v1254 = vadd.f32 %v1252, %v1253
  %v1255 = vsel %vm967, %v1147, 0.0
  %v1256 = vadd.f32 %v1254, %v1255
  %v1257 = vsel %vm967, %v1148, 0.0
  %v1258 = vadd.f32 %v1256, %v1257
  %v1259 = vsel %vm967, %v1149, 0.0
  %v1260 = vadd.f32 %v1258, %v1259
  %v1261 = vsel %vm967, %v1150, 0.0
  %v1262 = vadd.f32 %v1260, %v1261
  %v1263 = vsel %vm967, %v1151, 0.0
  %v1264 = vadd.f32 %v1262, %v1263
  %v1265 = vsel %vm967, %v1152, 0.0
  %v1266 = vadd.f32 %v1264, %v1265
  %v1267 = vsel %vm967, %v1153, 0.0
  %v1268 = vadd.f32 %v1266, %v1267
  %v1269 = vsel %vm967, %v1154, 0.0
  %v1270 = vadd.f32 %v1268, %v1269
  %v1271 = vsel %vm967, %v1155, 0.0
  %v1272 = vadd.f32 %v1270, %v1271
  %v1273 = vsel %vm967, %v1156, 0.0
  %v1274 = vadd.f32 %v1272, %v1273
  %v1275 = vsel %vm967, %v1157, 0.0
  %v1276 = vadd.f32 %v1274, %v1275
  %v1277 = vsel %vm967, %v1158, 0.0
  %v1278 = vadd.f32 %v1276, %v1277
  %v1279 = vsel %vm967, %v1159, 0.0
  %v1280 = vadd.f32 %v1278, %v1279
  %v1281 = vsel %vm967, %v1160, 0.0
  %v1282 = vadd.f32 %v1280, %v1281
  %v1283 = vsel %vm967, %v1161, 0.0
  %v1284 = vadd.f32 %v1282, %v1283
  %v1285 = vsel %vm967, %v1162, 0.0
  %v1286 = vadd.f32 %v1284, %v1285
  %v1287 = vsel %vm967, %v1163, 0.0
  %v1288 = vadd.f32 %v1286, %v1287
  %v1289 = vsel %vm967, %v1164, 0.0
  %v1290 = vadd.f32 %v1288, %v1289
  %v1291 = vsel %vm967, %v1165, 0.0
  %v1292 = vadd.f32 %v1290, %v1291
  %v1293 = vrot.slane %v1292, 4
  %v1294 = vadd.f32 %v1292, %v1293
  %v1295 = vrot.slane %v1294, 2
  %v1296 = vadd.f32 %v1294, %v1295
  %v1297 = vrot.slane %v1296, 1
  %v1298 = vadd.f32 %v1296, %v1297
  %v1299 = vadd.f32 %v1298, 0.0
  %v1300 = vpack.c.bf16 %v716, %v713
  %v1301 = vpack.c.bf16 %v724, %v721
  %v1302 = vpack.c.bf16 %v732, %v729
  %v1303 = vpack.c.bf16 %v740, %v737
  %v1304 = vpack.c.bf16 %v748, %v745
  %v1305 = vpack.c.bf16 %v756, %v753
  %v1306 = vpack.c.bf16 %v764, %v761
  %v1307 = vpack.c.bf16 %v772, %v769
  %v1308 = vpack.c.bf16 %v780, %v777
  %v1309 = vpack.c.bf16 %v788, %v785
  %v1310 = vpack.c.bf16 %v796, %v793
  %v1311 = vpack.c.bf16 %v804, %v801
  %v1312 = vpack.c.bf16 %v812, %v809
  %v1313 = vpack.c.bf16 %v820, %v817
  %v1314 = vpack.c.bf16 %v828, %v825
  %v1315 = vpack.c.bf16 %v836, %v833
  %v1316 = vpack.c.bf16 %v844, %v841
  %v1317 = vpack.c.bf16 %v852, %v849
  %v1318 = vpack.c.bf16 %v860, %v857
  %v1319 = vpack.c.bf16 %v868, %v865
  %v1320 = vpack.c.bf16 %v876, %v873
  %v1321 = vpack.c.bf16 %v884, %v881
  %v1322 = vpack.c.bf16 %v892, %v889
  %v1323 = vpack.c.bf16 %v900, %v897
  %v1324 = vpack.c.bf16 %v908, %v905
  %v1325 = vpack.c.bf16 %v916, %v913
  %v1326 = vpack.c.bf16 %v924, %v921
  %v1327 = vpack.c.bf16 %v932, %v929
  %v1328 = vpack.c.bf16 %v940, %v937
  %v1329 = vpack.c.bf16 %v948, %v945
  %v1330 = vpack.c.bf16 %v956, %v953
  %v1331 = vpack.c.bf16 %v964, %v961
  %v1364 = vunpack.c.l.b16 %v1300
  %v1365 = vunpack.c.h.b16 %v1300
  %v1366 = vunpack.c.l.b16 %v1301
  %v1367 = vunpack.c.h.b16 %v1301
  %v1368 = vunpack.c.l.b16 %v1302
  %v1369 = vunpack.c.h.b16 %v1302
  %v1370 = vunpack.c.l.b16 %v1303
  %v1371 = vunpack.c.h.b16 %v1303
  %v1372 = vunpack.c.l.b16 %v1304
  %v1373 = vunpack.c.h.b16 %v1304
  %v1374 = vunpack.c.l.b16 %v1305
  %v1375 = vunpack.c.h.b16 %v1305
  %v1376 = vunpack.c.l.b16 %v1306
  %v1377 = vunpack.c.h.b16 %v1306
  %v1378 = vunpack.c.l.b16 %v1307
  %v1379 = vunpack.c.h.b16 %v1307
  %v1380 = vunpack.c.l.b16 %v1308
  %v1381 = vunpack.c.h.b16 %v1308
  %v1382 = vunpack.c.l.b16 %v1309
  %v1383 = vunpack.c.h.b16 %v1309
  %v1384 = vunpack.c.l.b16 %v1310
  %v1385 = vunpack.c.h.b16 %v1310
  %v1386 = vunpack.c.l.b16 %v1311
  %v1387 = vunpack.c.h.b16 %v1311
  %v1388 = vunpack.c.l.b16 %v1312
  %v1389 = vunpack.c.h.b16 %v1312
  %v1390 = vunpack.c.l.b16 %v1313
  %v1391 = vunpack.c.h.b16 %v1313
  %v1392 = vunpack.c.l.b16 %v1314
  %v1393 = vunpack.c.h.b16 %v1314
  %v1394 = vunpack.c.l.b16 %v1315
  %v1395 = vunpack.c.h.b16 %v1315
  %v1396 = vunpack.c.l.b16 %v1316
  %v1397 = vunpack.c.h.b16 %v1316
  %v1398 = vunpack.c.l.b16 %v1317
  %v1399 = vunpack.c.h.b16 %v1317
  %v1400 = vunpack.c.l.b16 %v1318
  %v1401 = vunpack.c.h.b16 %v1318
  %v1402 = vunpack.c.l.b16 %v1319
  %v1403 = vunpack.c.h.b16 %v1319
  %v1404 = vunpack.c.l.b16 %v1320
  %v1405 = vunpack.c.h.b16 %v1320
  %v1406 = vunpack.c.l.b16 %v1321
  %v1407 = vunpack.c.h.b16 %v1321
  %v1408 = vunpack.c.l.b16 %v1322
  %v1409 = vunpack.c.h.b16 %v1322
  %v1410 = vunpack.c.l.b16 %v1323
  %v1411 = vunpack.c.h.b16 %v1323
  %v1412 = vunpack.c.l.b16 %v1324
  %v1413 = vunpack.c.h.b16 %v1324
  %v1414 = vunpack.c.l.b16 %v1325
  %v1415 = vunpack.c.h.b16 %v1325
  %v1416 = vunpack.c.l.b16 %v1326
  %v1417 = vunpack.c.h.b16 %v1326
  %v1418 = vunpack.c.l.b16 %v1327
  %v1419 = vunpack.c.h.b16 %v1327
  %v1420 = vunpack.c.l.b16 %v1328
  %v1421 = vunpack.c.h.b16 %v1328
  %v1422 = vunpack.c.l.b16 %v1329
  %v1423 = vunpack.c.h.b16 %v1329
  %v1424 = vunpack.c.l.b16 %v1330
  %v1425 = vunpack.c.h.b16 %v1330
  %v1426 = vunpack.c.l.b16 %v1331
  %v1427 = vunpack.c.h.b16 %v1331
  %v1428 = vpack.c.b16 %v1364, %v1364
  %v1429 = vpack.c.b16 %v1365, %v1365
  %v1430 = vpack.c.b16 %v1366, %v1366
  %v1431 = vpack.c.b16 %v1367, %v1367
  %v1432 = vpack.c.b16 %v1368, %v1368
  %v1433 = vpack.c.b16 %v1369, %v1369
  %v1434 = vpack.c.b16 %v1370, %v1370
  %v1435 = vpack.c.b16 %v1371, %v1371
  %v1436 = vpack.c.b16 %v1372, %v1372
  %v1437 = vpack.c.b16 %v1373, %v1373
  %v1438 = vpack.c.b16 %v1374, %v1374
  %v1439 = vpack.c.b16 %v1375, %v1375
  %v1440 = vpack.c.b16 %v1376, %v1376
  %v1441 = vpack.c.b16 %v1377, %v1377
  %v1442 = vpack.c.b16 %v1378, %v1378
  %v1443 = vpack.c.b16 %v1379, %v1379
  %v1444 = vpack.c.b16 %v1380, %v1380
  %v1445 = vpack.c.b16 %v1381, %v1381
  %v1446 = vpack.c.b16 %v1382, %v1382
  %v1447 = vpack.c.b16 %v1383, %v1383
  %v1448 = vpack.c.b16 %v1384, %v1384
  %v1449 = vpack.c.b16 %v1385, %v1385
  %v1450 = vpack.c.b16 %v1386, %v1386
  %v1451 = vpack.c.b16 %v1387, %v1387
  %v1452 = vpack.c.b16 %v1388, %v1388
  %v1453 = vpack.c.b16 %v1389, %v1389
  %v1454 = vpack.c.b16 %v1390, %v1390
  %v1455 = vpack.c.b16 %v1391, %v1391
  %v1456 = vpack.c.b16 %v1392, %v1392
  %v1457 = vpack.c.b16 %v1393, %v1393
  %v1458 = vpack.c.b16 %v1394, %v1394
  %v1459 = vpack.c.b16 %v1395, %v1395
  %v1460 = vpack.c.b16 %v1396, %v1396
  %v1461 = vpack.c.b16 %v1397, %v1397
  %v1462 = vpack.c.b16 %v1398, %v1398
  %v1463 = vpack.c.b16 %v1399, %v1399
  %v1464 = vpack.c.b16 %v1400, %v1400
  %v1465 = vpack.c.b16 %v1401, %v1401
  %v1466 = vpack.c.b16 %v1402, %v1402
  %v1467 = vpack.c.b16 %v1403, %v1403
  %v1468 = vpack.c.b16 %v1404, %v1404
  %v1469 = vpack.c.b16 %v1405, %v1405
  %v1470 = vpack.c.b16 %v1406, %v1406
  %v1471 = vpack.c.b16 %v1407, %v1407
  %v1472 = vpack.c.b16 %v1408, %v1408
  %v1473 = vpack.c.b16 %v1409, %v1409
  %v1474 = vpack.c.b16 %v1410, %v1410
  %v1475 = vpack.c.b16 %v1411, %v1411
  %v1476 = vpack.c.b16 %v1412, %v1412
  %v1477 = vpack.c.b16 %v1413, %v1413
  %v1478 = vpack.c.b16 %v1414, %v1414
  %v1479 = vpack.c.b16 %v1415, %v1415
  %v1480 = vpack.c.b16 %v1416, %v1416
  %v1481 = vpack.c.b16 %v1417, %v1417
  %v1482 = vpack.c.b16 %v1418, %v1418
  %v1483 = vpack.c.b16 %v1419, %v1419
  %v1484 = vpack.c.b16 %v1420, %v1420
  %v1485 = vpack.c.b16 %v1421, %v1421
  %v1486 = vpack.c.b16 %v1422, %v1422
  %v1487 = vpack.c.b16 %v1423, %v1423
  %v1488 = vpack.c.b16 %v1424, %v1424
  %v1489 = vpack.c.b16 %v1425, %v1425
  %v1490 = vpack.c.b16 %v1426, %v1426
  %v1491 = vpack.c.b16 %v1427, %v1427
  %vm1556 = vcmask 60416
  %1557 = vst.msk [vmem:[%s2] sm:$0xf] %vm1556, %v1428
  %1558 = vst.msk [vmem:[%s2 + $0x4] sm:$0xf] %vm1556, %v1429
  %1559 = vst.msk [vmem:[%s2 + $0x8] sm:$0xf] %vm1556, %v1430
  %1560 = vst.msk [vmem:[%s2 + $0xc] sm:$0xf] %vm1556, %v1431
  %1561 = vst.msk [vmem:[%s2 + $0x10] sm:$0xf] %vm1556, %v1432
  %1562 = vst.msk [vmem:[%s2 + $0x14] sm:$0xf] %vm1556, %v1433
  %1563 = vst.msk [vmem:[%s2 + $0x18] sm:$0xf] %vm1556, %v1434
  %1564 = vst.msk [vmem:[%s2 + $0x1c] sm:$0xf] %vm1556, %v1435
  %1565 = vst.msk [vmem:[%s2 + $0x20] sm:$0xf] %vm1556, %v1436
  %1566 = vst.msk [vmem:[%s2 + $0x24] sm:$0xf] %vm1556, %v1437
  %1567 = vst.msk [vmem:[%s2 + $0x28] sm:$0xf] %vm1556, %v1438
  %1568 = vst.msk [vmem:[%s2 + $0x2c] sm:$0xf] %vm1556, %v1439
  %1569 = vst.msk [vmem:[%s2 + $0x30] sm:$0xf] %vm1556, %v1440
  %1570 = vst.msk [vmem:[%s2 + $0x34] sm:$0xf] %vm1556, %v1441
  %1571 = vst.msk [vmem:[%s2 + $0x38] sm:$0xf] %vm1556, %v1442
  %1572 = vst.msk [vmem:[%s2 + $0x3c] sm:$0xf] %vm1556, %v1443
  %1573 = vst.msk [vmem:[%s2 + $0x40] sm:$0xf] %vm1556, %v1444
  %1574 = vst.msk [vmem:[%s2 + $0x44] sm:$0xf] %vm1556, %v1445
  %1575 = vst.msk [vmem:[%s2 + $0x48] sm:$0xf] %vm1556, %v1446
  %1576 = vst.msk [vmem:[%s2 + $0x4c] sm:$0xf] %vm1556, %v1447
  %1577 = vst.msk [vmem:[%s2 + $0x50] sm:$0xf] %vm1556, %v1448
  %1578 = vst.msk [vmem:[%s2 + $0x54] sm:$0xf] %vm1556, %v1449
  %1579 = vst.msk [vmem:[%s2 + $0x58] sm:$0xf] %vm1556, %v1450
  %1580 = vst.msk [vmem:[%s2 + $0x5c] sm:$0xf] %vm1556, %v1451
  %1581 = vst.msk [vmem:[%s2 + $0x60] sm:$0xf] %vm1556, %v1452
  %1582 = vst.msk [vmem:[%s2 + $0x64] sm:$0xf] %vm1556, %v1453
  %1583 = vst.msk [vmem:[%s2 + $0x68] sm:$0xf] %vm1556, %v1454
  %1584 = vst.msk [vmem:[%s2 + $0x6c] sm:$0xf] %vm1556, %v1455
  %1585 = vst.msk [vmem:[%s2 + $0x70] sm:$0xf] %vm1556, %v1456
  %1586 = vst.msk [vmem:[%s2 + $0x74] sm:$0xf] %vm1556, %v1457
  %1587 = vst.msk [vmem:[%s2 + $0x78] sm:$0xf] %vm1556, %v1458
  %1588 = vst.msk [vmem:[%s2 + $0x7c] sm:$0xf] %vm1556, %v1459
  %1589 = vst.msk [vmem:[%s2 + $0x80] sm:$0xf] %vm1556, %v1460
  %1590 = vst.msk [vmem:[%s2 + $0x84] sm:$0xf] %vm1556, %v1461
  %1591 = vst.msk [vmem:[%s2 + $0x88] sm:$0xf] %vm1556, %v1462
  %1592 = vst.msk [vmem:[%s2 + $0x8c] sm:$0xf] %vm1556, %v1463
  %1593 = vst.msk [vmem:[%s2 + $0x90] sm:$0xf] %vm1556, %v1464
  %1594 = vst.msk [vmem:[%s2 + $0x94] sm:$0xf] %vm1556, %v1465
  %1595 = vst.msk [vmem:[%s2 + $0x98] sm:$0xf] %vm1556, %v1466
  %1596 = vst.msk [vmem:[%s2 + $0x9c] sm:$0xf] %vm1556, %v1467
  %1597 = vst.msk [vmem:[%s2 + $0xa0] sm:$0xf] %vm1556, %v1468
  %1598 = vst.msk [vmem:[%s2 + $0xa4] sm:$0xf] %vm1556, %v1469
  %1599 = vst.msk [vmem:[%s2 + $0xa8] sm:$0xf] %vm1556, %v1470
  %1600 = vst.msk [vmem:[%s2 + $0xac] sm:$0xf] %vm1556, %v1471
  %1601 = vst.msk [vmem:[%s2 + $0xb0] sm:$0xf] %vm1556, %v1472
  %1602 = vst.msk [vmem:[%s2 + $0xb4] sm:$0xf] %vm1556, %v1473
  %1603 = vst.msk [vmem:[%s2 + $0xb8] sm:$0xf] %vm1556, %v1474
  %1604 = vst.msk [vmem:[%s2 + $0xbc] sm:$0xf] %vm1556, %v1475
  %1605 = vst.msk [vmem:[%s2 + $0xc0] sm:$0xf] %vm1556, %v1476
  %1606 = vst.msk [vmem:[%s2 + $0xc4] sm:$0xf] %vm1556, %v1477
  %1607 = vst.msk [vmem:[%s2 + $0xc8] sm:$0xf] %vm1556, %v1478
  %1608 = vst.msk [vmem:[%s2 + $0xcc] sm:$0xf] %vm1556, %v1479
  %1609 = vst.msk [vmem:[%s2 + $0xd0] sm:$0xf] %vm1556, %v1480
  %1610 = vst.msk [vmem:[%s2 + $0xd4] sm:$0xf] %vm1556, %v1481
  %1611 = vst.msk [vmem:[%s2 + $0xd8] sm:$0xf] %vm1556, %v1482
  %1612 = vst.msk [vmem:[%s2 + $0xdc] sm:$0xf] %vm1556, %v1483
  %1613 = vst.msk [vmem:[%s2 + $0xe0] sm:$0xf] %vm1556, %v1484
  %1614 = vst.msk [vmem:[%s2 + $0xe4] sm:$0xf] %vm1556, %v1485
  %1615 = vst.msk [vmem:[%s2 + $0xe8] sm:$0xf] %vm1556, %v1486
  %1616 = vst.msk [vmem:[%s2 + $0xec] sm:$0xf] %vm1556, %v1487
  %1617 = vst.msk [vmem:[%s2 + $0xf0] sm:$0xf] %vm1556, %v1488
  %1618 = vst.msk [vmem:[%s2 + $0xf4] sm:$0xf] %vm1556, %v1489
  %1619 = vst.msk [vmem:[%s2 + $0xf8] sm:$0xf] %vm1556, %v1490
  %1620 = vst.msk [vmem:[%s2 + $0xfc] sm:$0xf] %vm1556, %v1491
  %vm1621 = vcmask 57344
  %1622 = vst.msk [vmem:[%s3] sm:$0x1] %vm1621, %v1101
  %1623 = vst.msk [vmem:[%s4] sm:$0x1] %vm1621, %v1299
  // Predicated region
  $region10: #{discriminator_forward.6} parent=0 // pred_check
    _
  $region11: #{discriminator_forward.6} parent=0 // pred_check_branch
    %1625 = sbr.rel (0) target = $region13
  $region12: #{discriminator_forward.6} parent=0 // pred_region
    _
  $region13: #{discriminator_forward.6} parent=0 // pred_fallthru
    _
  // Predicated region
  $region14: #{discriminator_forward.6} parent=0 // pred_check
    _
  $region15: #{discriminator_forward.6} parent=0 // pred_check_branch
    %1627 = sbr.rel (0) target = $region17
  $region16: #{discriminator_forward.6} parent=0 // pred_region
    _
  $region17: #{discriminator_forward.6} parent=0 // pred_fallthru
    _
  // Predicated region
  $region18: #{discriminator_forward.6} parent=0 // pred_check
    _
  $region19: #{discriminator_forward.6} parent=0 // pred_check_branch
    %1629 = sbr.rel (0) target = $region21
  $region20: #{discriminator_forward.6} parent=0 // pred_region
    _
  $region21: #{discriminator_forward.6} parent=0 // pred_fallthru
    _
  // Predicated region
  $region22: #{discriminator_forward.6} parent=0 // pred_check
    _
  $region23: #{discriminator_forward.6} parent=0 // pred_check_branch
    %1631 = sbr.rel (0) target = $region25
  $region24: #{discriminator_forward.6} parent=0 // pred_region
    _
  $region25: #{discriminator_forward.6} parent=0 // pred_fallthru
    _
  // Predicated region
  $region26: #{discriminator_forward.6} parent=0 // pred_check
    _
  $region27: #{discriminator_forward.6} parent=0 // pred_check_branch
    %1633 = sbr.rel (0) target = $region29
  $region28: #{discriminator_forward.6} parent=0 // pred_region
    _
  $region29: #{discriminator_forward.6} parent=0 // pred_fallthru
    _
  // Predicated region
  $region30: #{discriminator_forward.6} parent=0 // pred_check
    _
  $region31: #{discriminator_forward.6} parent=0 // pred_check_branch
    %1635 = sbr.rel (0) target = $region33
  $region32: #{discriminator_forward.6} parent=0 // pred_region
    _
  $region33: #{discriminator_forward.6} parent=0 // pred_fallthru
    _

// kernel: discriminator_forward.5
$region0: #{discriminator_forward.5}
  #allocation0 [shape = 'u32[]', space=smem, size = 0x4, offset = 0x4, fixed_abs, tag = 'smem constant byte address 0x4 - core index']
  #allocation1 [shape = 'u32[144,128]{1,0:T(1,128)}', space=vmem, size = 0x12000, scoped, tag = 'internal scratch']
  %s0 = inlined_call_operand.vmem [shape: bf16[2,1056,24], index: 0, kind: input, shape index: {}]
  %s1 = inlined_call_operand.vmem [shape: bf16[2,24,4], index: 1, kind: input, shape index: {}]
  %s2 = inlined_call_operand.vmem [shape: f32[1,4], index: 2, kind: input, shape index: {}]
  %s3 = inlined_call_operand.vmem [shape: bf16[2,1024,4], index: 3, kind: output, shape index: {}]
  %s4 = sld [smem:[#allocation0]]
  $region22: #{discriminator_forward.5} parent=0
    _
  %s6 = ssub.s32 1, %s4
  %s7 = scalar_select 0, %s6, %s4
  // Predicated region
  $region2: #{discriminator_forward.5} parent=0 // pred_check
    _
  $region3: #{discriminator_forward.5} parent=0 // pred_check_branch
    %9 = sbr.rel (0) target = $region5
  $region4: #{discriminator_forward.5} parent=0 // pred_region
    _
  $region5: #{discriminator_forward.5} parent=0 // pred_fallthru
    _
  // Predicated region
  $region6: #{discriminator_forward.5} parent=0 // pred_check
    _
  $region7: #{discriminator_forward.5} parent=0 // pred_check_branch
    %11 = sbr.rel (0) target = $region9
  $region8: #{discriminator_forward.5} parent=0 // pred_region
    _
  $region9: #{discriminator_forward.5} parent=0 // pred_fallthru
    _
  // Predicated region
  $region10: #{discriminator_forward.5} parent=0 // pred_check
    _
  $region11: #{discriminator_forward.5} parent=0 // pred_check_branch
    %13 = sbr.rel (0) target = $region13
  $region12: #{discriminator_forward.5} parent=0 // pred_region
    _
  $region13: #{discriminator_forward.5} parent=0 // pred_fallthru
    _
  %v15 = vld [vmem:[%s0] sm:$0xf]
  %v16 = vld [vmem:[%s0 + $0x4] sm:$0xf]
  %v17 = vld [vmem:[%s0 + $0x8] sm:$0xf]
  %v18 = vld [vmem:[%s0 + $0xc] sm:$0xf]
  %v19 = vld [vmem:[%s0 + $0x10] sm:$0xf]
  %v20 = vld [vmem:[%s0 + $0x14] sm:$0xf]
  %v21 = vld [vmem:[%s0 + $0x18] sm:$0xf]
  %v22 = vld [vmem:[%s0 + $0x1c] sm:$0xf]
  %v23 = vld [vmem:[%s0 + $0x20] sm:$0xf]
  %v24 = vld [vmem:[%s0 + $0x24] sm:$0xf]
  %v25 = vld [vmem:[%s0 + $0x28] sm:$0xf]
  %v26 = vld [vmem:[%s0 + $0x2c] sm:$0xf]
  %v27 = vld [vmem:[%s0 + $0x30] sm:$0xf]
  %v28 = vld [vmem:[%s0 + $0x34] sm:$0xf]
  %v29 = vld [vmem:[%s0 + $0x38] sm:$0xf]
  %v30 = vld [vmem:[%s0 + $0x3c] sm:$0xf]
  %v31 = vld [vmem:[%s0 + $0x40] sm:$0xf]
  %v32 = vld [vmem:[%s0 + $0x44] sm:$0xf]
  %v33 = vld [vmem:[%s0 + $0x48] sm:$0xf]
  %v34 = vld [vmem:[%s0 + $0x4c] sm:$0xf]
  %v35 = vld [vmem:[%s0 + $0x50] sm:$0xf]
  %v36 = vld [vmem:[%s0 + $0x54] sm:$0xf]
  %v37 = vld [vmem:[%s0 + $0x58] sm:$0xf]
  %v38 = vld [vmem:[%s0 + $0x5c] sm:$0xf]
  %v39 = vld [vmem:[%s0 + $0x60] sm:$0xf]
  %v40 = vld [vmem:[%s0 + $0x64] sm:$0xf]
  %v41 = vld [vmem:[%s0 + $0x68] sm:$0xf]
  %v42 = vld [vmem:[%s0 + $0x6c] sm:$0xf]
  %v43 = vld [vmem:[%s0 + $0x70] sm:$0xf]
  %v44 = vld [vmem:[%s0 + $0x74] sm:$0xf]
  %v45 = vld [vmem:[%s0 + $0x78] sm:$0xf]
  %v46 = vld [vmem:[%s0 + $0x7c] sm:$0xf]
  %v47 = vld [vmem:[%s0 + $0x80] sm:$0xf]
  %v48 = vld [vmem:[%s0 + $0x84] sm:$0xf]
  %v49 = vld [vmem:[%s0 + $0x88] sm:$0xf]
  %v50 = vld [vmem:[%s0 + $0x8c] sm:$0xf]
  %v51 = vld [vmem:[%s0 + $0x90] sm:$0xf]
  %v52 = vld [vmem:[%s0 + $0x94] sm:$0xf]
  %v53 = vld [vmem:[%s0 + $0x98] sm:$0xf]
  %v54 = vld [vmem:[%s0 + $0x9c] sm:$0xf]
  %v55 = vld [vmem:[%s0 + $0xa0] sm:$0xf]
  %v56 = vld [vmem:[%s0 + $0xa4] sm:$0xf]
  %v57 = vld [vmem:[%s0 + $0xa8] sm:$0xf]
  %v58 = vld [vmem:[%s0 + $0xac] sm:$0xf]
  %v59 = vld [vmem:[%s0 + $0xb0] sm:$0xf]
  %v60 = vld [vmem:[%s0 + $0xb4] sm:$0xf]
  %v61 = vld [vmem:[%s0 + $0xb8] sm:$0xf]
  %v62 = vld [vmem:[%s0 + $0xbc] sm:$0xf]
  %v63 = vld [vmem:[%s0 + $0xc0] sm:$0xf]
  %v64 = vld [vmem:[%s0 + $0xc4] sm:$0xf]
  %v65 = vld [vmem:[%s0 + $0xc8] sm:$0xf]
  %v66 = vld [vmem:[%s0 + $0xcc] sm:$0xf]
  %v67 = vld [vmem:[%s0 + $0xd0] sm:$0xf]
  %v68 = vld [vmem:[%s0 + $0xd4] sm:$0xf]
  %v69 = vld [vmem:[%s0 + $0xd8] sm:$0xf]
  %v70 = vld [vmem:[%s0 + $0xdc] sm:$0xf]
  %v71 = vld [vmem:[%s0 + $0xe0] sm:$0xf]
  %v72 = vld [vmem:[%s0 + $0xe4] sm:$0xf]
  %v73 = vld [vmem:[%s0 + $0xe8] sm:$0xf]
  %v74 = vld [vmem:[%s0 + $0xec] sm:$0xf]
  %v75 = vld [vmem:[%s0 + $0xf0] sm:$0xf]
  %v76 = vld [vmem:[%s0 + $0xf4] sm:$0xf]
  %v77 = vld [vmem:[%s0 + $0xf8] sm:$0xf]
  %v78 = vld [vmem:[%s0 + $0xfc] sm:$0xf]
  %v79 = vld [vmem:[%s0 + $0x100] sm:$0xf]
  %v80 = vld [vmem:[%s0 + $0x104] sm:$0xf]
  %v81 = vld [vmem:[%s0 + $0x108] sm:$0xf]
  %v82 = vld [vmem:[%s0 + $0x10c] sm:$0xf]
  %v83 = vld [vmem:[%s0 + $0x110] sm:$0xf]
  %v84 = vld [vmem:[%s0 + $0x114] sm:$0xf]
  %v85 = vld [vmem:[%s0 + $0x118] sm:$0xf]
  %v86 = vld [vmem:[%s0 + $0x11c] sm:$0xf]
  %v87 = vld [vmem:[%s0 + $0x120] sm:$0xf]
  %v88 = vld [vmem:[%s0 + $0x124] sm:$0xf]
  %v89 = vld [vmem:[%s0 + $0x128] sm:$0xf]
  %v90 = vld [vmem:[%s0 + $0x12c] sm:$0xf]
  %v91 = vld [vmem:[%s0 + $0x130] sm:$0xf]
  %v92 = vld [vmem:[%s0 + $0x134] sm:$0xf]
  %v93 = vld [vmem:[%s0 + $0x138] sm:$0xf]
  %v94 = vld [vmem:[%s0 + $0x13c] sm:$0xf]
  %v95 = vld [vmem:[%s0 + $0x140] sm:$0xf]
  %v96 = vld [vmem:[%s0 + $0x144] sm:$0xf]
  %v97 = vld [vmem:[%s0 + $0x148] sm:$0xf]
  %v98 = vld [vmem:[%s0 + $0x14c] sm:$0xf]
  %v99 = vld [vmem:[%s0 + $0x150] sm:$0xf]
  %v100 = vld [vmem:[%s0 + $0x154] sm:$0xf]
  %v101 = vld [vmem:[%s0 + $0x158] sm:$0xf]
  %v102 = vld [vmem:[%s0 + $0x15c] sm:$0xf]
  %v103 = vld [vmem:[%s0 + $0x160] sm:$0xf]
  %v104 = vld [vmem:[%s0 + $0x164] sm:$0xf]
  %v105 = vld [vmem:[%s0 + $0x168] sm:$0xf]
  %v106 = vld [vmem:[%s0 + $0x16c] sm:$0xf]
  %v107 = vld [vmem:[%s0 + $0x170] sm:$0xf]
  %v108 = vld [vmem:[%s0 + $0x174] sm:$0xf]
  %v109 = vld [vmem:[%s0 + $0x178] sm:$0xf]
  %v110 = vld [vmem:[%s0 + $0x17c] sm:$0xf]
  %v111 = vld [vmem:[%s0 + $0x180] sm:$0xf]
  %v112 = vld [vmem:[%s0 + $0x184] sm:$0xf]
  %v113 = vld [vmem:[%s0 + $0x188] sm:$0xf]
  %v114 = vld [vmem:[%s0 + $0x18c] sm:$0xf]
  %v115 = vld [vmem:[%s0 + $0x190] sm:$0xf]
  %v116 = vld [vmem:[%s0 + $0x194] sm:$0xf]
  %v117 = vld [vmem:[%s0 + $0x198] sm:$0xf]
  %v118 = vld [vmem:[%s0 + $0x19c] sm:$0xf]
  %v119 = vld [vmem:[%s0 + $0x1a0] sm:$0xf]
  %v120 = vld [vmem:[%s0 + $0x1a4] sm:$0xf]
  %v121 = vld [vmem:[%s0 + $0x1a8] sm:$0xf]
  %v122 = vld [vmem:[%s0 + $0x1ac] sm:$0xf]
  %v123 = vld [vmem:[%s0 + $0x1b0] sm:$0xf]
  %v124 = vld [vmem:[%s0 + $0x1b4] sm:$0xf]
  %v125 = vld [vmem:[%s0 + $0x1b8] sm:$0xf]
  %v126 = vld [vmem:[%s0 + $0x1bc] sm:$0xf]
  %v127 = vld [vmem:[%s0 + $0x1c0] sm:$0xf]
  %v128 = vld [vmem:[%s0 + $0x1c4] sm:$0xf]
  %v129 = vld [vmem:[%s0 + $0x1c8] sm:$0xf]
  %v130 = vld [vmem:[%s0 + $0x1cc] sm:$0xf]
  %v131 = vld [vmem:[%s0 + $0x1d0] sm:$0xf]
  %v132 = vld [vmem:[%s0 + $0x1d4] sm:$0xf]
  %v133 = vld [vmem:[%s0 + $0x1d8] sm:$0xf]
  %v134 = vld [vmem:[%s0 + $0x1dc] sm:$0xf]
  %v135 = vld [vmem:[%s0 + $0x1e0] sm:$0xf]
  %v136 = vld [vmem:[%s0 + $0x1e4] sm:$0xf]
  %v137 = vld [vmem:[%s0 + $0x1e8] sm:$0xf]
  %v138 = vld [vmem:[%s0 + $0x1ec] sm:$0xf]
  %v139 = vld [vmem:[%s0 + $0x1f0] sm:$0xf]
  %v140 = vld [vmem:[%s0 + $0x1f4] sm:$0xf]
  %v141 = vld [vmem:[%s0 + $0x1f8] sm:$0xf]
  %v142 = vld [vmem:[%s0 + $0x1fc] sm:$0xf]
  %v143 = vld [vmem:[%s0 + $0x210] sm:$0xf]
  %v144 = vld [vmem:[%s0 + $0x214] sm:$0xf]
  %v145 = vld [vmem:[%s0 + $0x218] sm:$0xf]
  %v146 = vld [vmem:[%s0 + $0x21c] sm:$0xf]
  %v147 = vld [vmem:[%s0 + $0x220] sm:$0xf]
  %v148 = vld [vmem:[%s0 + $0x224] sm:$0xf]
  %v149 = vld [vmem:[%s0 + $0x228] sm:$0xf]
  %v150 = vld [vmem:[%s0 + $0x22c] sm:$0xf]
  %v151 = vld [vmem:[%s0 + $0x230] sm:$0xf]
  %v152 = vld [vmem:[%s0 + $0x234] sm:$0xf]
  %v153 = vld [vmem:[%s0 + $0x238] sm:$0xf]
  %v154 = vld [vmem:[%s0 + $0x23c] sm:$0xf]
  %v155 = vld [vmem:[%s0 + $0x240] sm:$0xf]
  %v156 = vld [vmem:[%s0 + $0x244] sm:$0xf]
  %v157 = vld [vmem:[%s0 + $0x248] sm:$0xf]
  %v158 = vld [vmem:[%s0 + $0x24c] sm:$0xf]
  %v159 = vld [vmem:[%s0 + $0x250] sm:$0xf]
  %v160 = vld [vmem:[%s0 + $0x254] sm:$0xf]
  %v161 = vld [vmem:[%s0 + $0x258] sm:$0xf]
  %v162 = vld [vmem:[%s0 + $0x25c] sm:$0xf]
  %v163 = vld [vmem:[%s0 + $0x260] sm:$0xf]
  %v164 = vld [vmem:[%s0 + $0x264] sm:$0xf]
  %v165 = vld [vmem:[%s0 + $0x268] sm:$0xf]
  %v166 = vld [vmem:[%s0 + $0x26c] sm:$0xf]
  %v167 = vld [vmem:[%s0 + $0x270] sm:$0xf]
  %v168 = vld [vmem:[%s0 + $0x274] sm:$0xf]
  %v169 = vld [vmem:[%s0 + $0x278] sm:$0xf]
  %v170 = vld [vmem:[%s0 + $0x27c] sm:$0xf]
  %v171 = vld [vmem:[%s0 + $0x280] sm:$0xf]
  %v172 = vld [vmem:[%s0 + $0x284] sm:$0xf]
  %v173 = vld [vmem:[%s0 + $0x288] sm:$0xf]
  %v174 = vld [vmem:[%s0 + $0x28c] sm:$0xf]
  %v175 = vld [vmem:[%s0 + $0x290] sm:$0xf]
  %v176 = vld [vmem:[%s0 + $0x294] sm:$0xf]
  %v177 = vld [vmem:[%s0 + $0x298] sm:$0xf]
  %v178 = vld [vmem:[%s0 + $0x29c] sm:$0xf]
  %v179 = vld [vmem:[%s0 + $0x2a0] sm:$0xf]
  %v180 = vld [vmem:[%s0 + $0x2a4] sm:$0xf]
  %v181 = vld [vmem:[%s0 + $0x2a8] sm:$0xf]
  %v182 = vld [vmem:[%s0 + $0x2ac] sm:$0xf]
  %v183 = vld [vmem:[%s0 + $0x2b0] sm:$0xf]
  %v184 = vld [vmem:[%s0 + $0x2b4] sm:$0xf]
  %v185 = vld [vmem:[%s0 + $0x2b8] sm:$0xf]
  %v186 = vld [vmem:[%s0 + $0x2bc] sm:$0xf]
  %v187 = vld [vmem:[%s0 + $0x2c0] sm:$0xf]
  %v188 = vld [vmem:[%s0 + $0x2c4] sm:$0xf]
  %v189 = vld [vmem:[%s0 + $0x2c8] sm:$0xf]
  %v190 = vld [vmem:[%s0 + $0x2cc] sm:$0xf]
  %v191 = vld [vmem:[%s0 + $0x2d0] sm:$0xf]
  %v192 = vld [vmem:[%s0 + $0x2d4] sm:$0xf]
  %v193 = vld [vmem:[%s0 + $0x2d8] sm:$0xf]
  %v194 = vld [vmem:[%s0 + $0x2dc] sm:$0xf]
  %v195 = vld [vmem:[%s0 + $0x2e0] sm:$0xf]
  %v196 = vld [vmem:[%s0 + $0x2e4] sm:$0xf]
  %v197 = vld [vmem:[%s0 + $0x2e8] sm:$0xf]
  %v198 = vld [vmem:[%s0 + $0x2ec] sm:$0xf]
  %v199 = vld [vmem:[%s0 + $0x2f0] sm:$0xf]
  %v200 = vld [vmem:[%s0 + $0x2f4] sm:$0xf]
  %v201 = vld [vmem:[%s0 + $0x2f8] sm:$0xf]
  %v202 = vld [vmem:[%s0 + $0x2fc] sm:$0xf]
  %v203 = vld [vmem:[%s0 + $0x300] sm:$0xf]
  %v204 = vld [vmem:[%s0 + $0x304] sm:$0xf]
  %v205 = vld [vmem:[%s0 + $0x308] sm:$0xf]
  %v206 = vld [vmem:[%s0 + $0x30c] sm:$0xf]
  %v207 = vld [vmem:[%s0 + $0x310] sm:$0xf]
  %v208 = vld [vmem:[%s0 + $0x314] sm:$0xf]
  %v209 = vld [vmem:[%s0 + $0x318] sm:$0xf]
  %v210 = vld [vmem:[%s0 + $0x31c] sm:$0xf]
  %v211 = vld [vmem:[%s0 + $0x320] sm:$0xf]
  %v212 = vld [vmem:[%s0 + $0x324] sm:$0xf]
  %v213 = vld [vmem:[%s0 + $0x328] sm:$0xf]
  %v214 = vld [vmem:[%s0 + $0x32c] sm:$0xf]
  %v215 = vld [vmem:[%s0 + $0x330] sm:$0xf]
  %v216 = vld [vmem:[%s0 + $0x334] sm:$0xf]
  %v217 = vld [vmem:[%s0 + $0x338] sm:$0xf]
  %v218 = vld [vmem:[%s0 + $0x33c] sm:$0xf]
  %v219 = vld [vmem:[%s0 + $0x340] sm:$0xf]
  %v220 = vld [vmem:[%s0 + $0x344] sm:$0xf]
  %v221 = vld [vmem:[%s0 + $0x348] sm:$0xf]
  %v222 = vld [vmem:[%s0 + $0x34c] sm:$0xf]
  %v223 = vld [vmem:[%s0 + $0x350] sm:$0xf]
  %v224 = vld [vmem:[%s0 + $0x354] sm:$0xf]
  %v225 = vld [vmem:[%s0 + $0x358] sm:$0xf]
  %v226 = vld [vmem:[%s0 + $0x35c] sm:$0xf]
  %v227 = vld [vmem:[%s0 + $0x360] sm:$0xf]
  %v228 = vld [vmem:[%s0 + $0x364] sm:$0xf]
  %v229 = vld [vmem:[%s0 + $0x368] sm:$0xf]
  %v230 = vld [vmem:[%s0 + $0x36c] sm:$0xf]
  %v231 = vld [vmem:[%s0 + $0x370] sm:$0xf]
  %v232 = vld [vmem:[%s0 + $0x374] sm:$0xf]
  %v233 = vld [vmem:[%s0 + $0x378] sm:$0xf]
  %v234 = vld [vmem:[%s0 + $0x37c] sm:$0xf]
  %v235 = vld [vmem:[%s0 + $0x380] sm:$0xf]
  %v236 = vld [vmem:[%s0 + $0x384] sm:$0xf]
  %v237 = vld [vmem:[%s0 + $0x388] sm:$0xf]
  %v238 = vld [vmem:[%s0 + $0x38c] sm:$0xf]
  %v239 = vld [vmem:[%s0 + $0x390] sm:$0xf]
  %v240 = vld [vmem:[%s0 + $0x394] sm:$0xf]
  %v241 = vld [vmem:[%s0 + $0x398] sm:$0xf]
  %v242 = vld [vmem:[%s0 + $0x39c] sm:$0xf]
  %v243 = vld [vmem:[%s0 + $0x3a0] sm:$0xf]
  %v244 = vld [vmem:[%s0 + $0x3a4] sm:$0xf]
  %v245 = vld [vmem:[%s0 + $0x3a8] sm:$0xf]
  %v246 = vld [vmem:[%s0 + $0x3ac] sm:$0xf]
  %v247 = vld [vmem:[%s0 + $0x3b0] sm:$0xf]
  %v248 = vld [vmem:[%s0 + $0x3b4] sm:$0xf]
  %v249 = vld [vmem:[%s0 + $0x3b8] sm:$0xf]
  %v250 = vld [vmem:[%s0 + $0x3bc] sm:$0xf]
  %v251 = vld [vmem:[%s0 + $0x3c0] sm:$0xf]
  %v252 = vld [vmem:[%s0 + $0x3c4] sm:$0xf]
  %v253 = vld [vmem:[%s0 + $0x3c8] sm:$0xf]
  %v254 = vld [vmem:[%s0 + $0x3cc] sm:$0xf]
  %v255 = vld [vmem:[%s0 + $0x3d0] sm:$0xf]
  %v256 = vld [vmem:[%s0 + $0x3d4] sm:$0xf]
  %v257 = vld [vmem:[%s0 + $0x3d8] sm:$0xf]
  %v258 = vld [vmem:[%s0 + $0x3dc] sm:$0xf]
  %v259 = vld [vmem:[%s0 + $0x3e0] sm:$0xf]
  %v260 = vld [vmem:[%s0 + $0x3e4] sm:$0xf]
  %v261 = vld [vmem:[%s0 + $0x3e8] sm:$0xf]
  %v262 = vld [vmem:[%s0 + $0x3ec] sm:$0xf]
  %v263 = vld [vmem:[%s0 + $0x3f0] sm:$0xf]
  %v264 = vld [vmem:[%s0 + $0x3f4] sm:$0xf]
  %v265 = vld [vmem:[%s0 + $0x3f8] sm:$0xf]
  %v266 = vld [vmem:[%s0 + $0x3fc] sm:$0xf]
  %v267 = vld [vmem:[%s0 + $0x400] sm:$0xf]
  %v268 = vld [vmem:[%s0 + $0x404] sm:$0xf]
  %v269 = vld [vmem:[%s0 + $0x408] sm:$0xf]
  %v270 = vld [vmem:[%s0 + $0x40c] sm:$0xf]
  %v271 = vld [vmem:[%s1] sm:$0xf]
  %v272 = vld [vmem:[%s1 + $0x4] sm:$0xf]
  %v273 = vld [vmem:[%s1 + $0x8] sm:$0xf]
  %v274 = vld [vmem:[%s0 + $0x200] sm:$0xf]
  %v275 = vld [vmem:[%s0 + $0x204] sm:$0xf]
  %v276 = vld [vmem:[%s0 + $0x208] sm:$0xf]
  %v277 = vld [vmem:[%s0 + $0x20c] sm:$0xf]
  %v278 = vld [vmem:[%s0 + $0x410] sm:$0xf]
  %v279 = vld [vmem:[%s0 + $0x414] sm:$0xf]
  %v280 = vld [vmem:[%s0 + $0x418] sm:$0xf]
  %v281 = vld [vmem:[%s0 + $0x41c] sm:$0xf]
  %s282 = scalar_lea.vmem %s1, 12
  %v283 = vld [vmem:[%s282] sm:$0xf]
  %v284 = vld [vmem:[%s282 + $0x4] sm:$0xf]
  %v285 = vld [vmem:[%s282 + $0x8] sm:$0xf]
  %v542 = vunpack.c.l.b16 %v19
  %v543 = vunpack.c.l.b16 %v20
  %v544 = vunpack.c.l.b16 %v21
  %v545 = vunpack.c.l.b16 %v22
  %v546 = vunpack.c.l.b16 %v23
  %v547 = vunpack.c.l.b16 %v24
  %v548 = vunpack.c.l.b16 %v25
  %v549 = vunpack.c.l.b16 %v26
  %v550 = vunpack.c.l.b16 %v27
  %v551 = vunpack.c.l.b16 %v28
  %v552 = vunpack.c.l.b16 %v29
  %v553 = vunpack.c.l.b16 %v30
  %v554 = vunpack.c.l.b16 %v31
  %v555 = vunpack.c.l.b16 %v32
  %v556 = vunpack.c.l.b16 %v33
  %v557 = vunpack.c.l.b16 %v34
  %v558 = vunpack.c.l.b16 %v35
  %v559 = vunpack.c.l.b16 %v36
  %v560 = vunpack.c.l.b16 %v37
  %v561 = vunpack.c.l.b16 %v38
  %v562 = vunpack.c.l.b16 %v39
  %v563 = vunpack.c.l.b16 %v40
  %v564 = vunpack.c.l.b16 %v41
  %v565 = vunpack.c.l.b16 %v42
  %v566 = vunpack.c.l.b16 %v43
  %v567 = vunpack.c.l.b16 %v44
  %v568 = vunpack.c.l.b16 %v45
  %v569 = vunpack.c.l.b16 %v46
  %v570 = vunpack.c.l.b16 %v47
  %v571 = vunpack.c.l.b16 %v48
  %v572 = vunpack.c.l.b16 %v49
  %v573 = vunpack.c.l.b16 %v50
  %v574 = vunpack.c.l.b16 %v51
  %v575 = vunpack.c.l.b16 %v52
  %v576 = vunpack.c.l.b16 %v53
  %v577 = vunpack.c.l.b16 %v54
  %v578 = vunpack.c.l.b16 %v55
  %v579 = vunpack.c.l.b16 %v56
  %v580 = vunpack.c.l.b16 %v57
  %v581 = vunpack.c.l.b16 %v58
  %v582 = vunpack.c.l.b16 %v59
  %v583 = vunpack.c.l.b16 %v60
  %v584 = vunpack.c.l.b16 %v61
  %v585 = vunpack.c.l.b16 %v62
  %v586 = vunpack.c.l.b16 %v63
  %v587 = vunpack.c.l.b16 %v64
  %v588 = vunpack.c.l.b16 %v65
  %v589 = vunpack.c.l.b16 %v66
  %v590 = vunpack.c.l.b16 %v67
  %v591 = vunpack.c.l.b16 %v68
  %v592 = vunpack.c.l.b16 %v69
  %v593 = vunpack.c.l.b16 %v70
  %v594 = vunpack.c.l.b16 %v71
  %v595 = vunpack.c.l.b16 %v72
  %v596 = vunpack.c.l.b16 %v73
  %v597 = vunpack.c.l.b16 %v74
  %v598 = vunpack.c.l.b16 %v75
  %v599 = vunpack.c.l.b16 %v76
  %v600 = vunpack.c.l.b16 %v77
  %v601 = vunpack.c.l.b16 %v78
  %v602 = vunpack.c.l.b16 %v79
  %v603 = vunpack.c.l.b16 %v80
  %v604 = vunpack.c.l.b16 %v81
  %v605 = vunpack.c.l.b16 %v82
  %v606 = vunpack.c.l.b16 %v83
  %v607 = vunpack.c.l.b16 %v84
  %v608 = vunpack.c.l.b16 %v85
  %v609 = vunpack.c.l.b16 %v86
  %v610 = vunpack.c.l.b16 %v87
  %v611 = vunpack.c.l.b16 %v88
  %v612 = vunpack.c.l.b16 %v89
  %v613 = vunpack.c.l.b16 %v90
  %v614 = vunpack.c.l.b16 %v91
  %v615 = vunpack.c.l.b16 %v92
  %v616 = vunpack.c.l.b16 %v93
  %v617 = vunpack.c.l.b16 %v94
  %v618 = vunpack.c.l.b16 %v95
  %v619 = vunpack.c.l.b16 %v96
  %v620 = vunpack.c.l.b16 %v97
  %v621 = vunpack.c.l.b16 %v98
  %v622 = vunpack.c.l.b16 %v99
  %v623 = vunpack.c.l.b16 %v100
  %v624 = vunpack.c.l.b16 %v101
  %v625 = vunpack.c.l.b16 %v102
  %v626 = vunpack.c.l.b16 %v103
  %v627 = vunpack.c.l.b16 %v104
  %v628 = vunpack.c.l.b16 %v105
  %v629 = vunpack.c.l.b16 %v106
  %v630 = vunpack.c.l.b16 %v107
  %v631 = vunpack.c.l.b16 %v108
  %v632 = vunpack.c.l.b16 %v109
  %v633 = vunpack.c.l.b16 %v110
  %v634 = vunpack.c.l.b16 %v111
  %v635 = vunpack.c.l.b16 %v112
  %v636 = vunpack.c.l.b16 %v113
  %v637 = vunpack.c.l.b16 %v114
  %v638 = vunpack.c.l.b16 %v115
  %v639 = vunpack.c.l.b16 %v116
  %v640 = vunpack.c.l.b16 %v117
  %v641 = vunpack.c.l.b16 %v118
  %v642 = vunpack.c.l.b16 %v119
  %v643 = vunpack.c.l.b16 %v120
  %v644 = vunpack.c.l.b16 %v121
  %v645 = vunpack.c.l.b16 %v122
  %v646 = vunpack.c.l.b16 %v123
  %v647 = vunpack.c.l.b16 %v124
  %v648 = vunpack.c.l.b16 %v125
  %v649 = vunpack.c.l.b16 %v126
  %v650 = vunpack.c.l.b16 %v127
  %v651 = vunpack.c.l.b16 %v128
  %v652 = vunpack.c.l.b16 %v129
  %v653 = vunpack.c.l.b16 %v130
  %v654 = vunpack.c.l.b16 %v131
  %v655 = vunpack.c.l.b16 %v132
  %v656 = vunpack.c.l.b16 %v133
  %v657 = vunpack.c.l.b16 %v134
  %v658 = vunpack.c.l.b16 %v135
  %v659 = vunpack.c.l.b16 %v136
  %v660 = vunpack.c.l.b16 %v137
  %v661 = vunpack.c.l.b16 %v138
  %v662 = vunpack.c.l.b16 %v139
  %v663 = vunpack.c.l.b16 %v140
  %v664 = vunpack.c.l.b16 %v141
  %v665 = vunpack.c.l.b16 %v142
  %v666 = vunpack.c.l.b16 %v274
  %v667 = vunpack.c.l.b16 %v275
  %v668 = vunpack.c.l.b16 %v276
  %v669 = vunpack.c.l.b16 %v277
  %v670 = vunpack.c.l.b16 %v147
  %v671 = vunpack.c.l.b16 %v148
  %v672 = vunpack.c.l.b16 %v149
  %v673 = vunpack.c.l.b16 %v150
  %v674 = vunpack.c.l.b16 %v151
  %v675 = vunpack.c.l.b16 %v152
  %v676 = vunpack.c.l.b16 %v153
  %v677 = vunpack.c.l.b16 %v154
  %v678 = vunpack.c.l.b16 %v155
  %v679 = vunpack.c.l.b16 %v156
  %v680 = vunpack.c.l.b16 %v157
  %v681 = vunpack.c.l.b16 %v158
  %v682 = vunpack.c.l.b16 %v159
  %v683 = vunpack.c.l.b16 %v160
  %v684 = vunpack.c.l.b16 %v161
  %v685 = vunpack.c.l.b16 %v162
  %v686 = vunpack.c.l.b16 %v163
  %v687 = vunpack.c.l.b16 %v164
  %v688 = vunpack.c.l.b16 %v165
  %v689 = vunpack.c.l.b16 %v166
  %v690 = vunpack.c.l.b16 %v167
  %v691 = vunpack.c.l.b16 %v168
  %v692 = vunpack.c.l.b16 %v169
  %v693 = vunpack.c.l.b16 %v170
  %v694 = vunpack.c.l.b16 %v171
  %v695 = vunpack.c.l.b16 %v172
  %v696 = vunpack.c.l.b16 %v173
  %v697 = vunpack.c.l.b16 %v174
  %v698 = vunpack.c.l.b16 %v175
  %v699 = vunpack.c.l.b16 %v176
  %v700 = vunpack.c.l.b16 %v177
  %v701 = vunpack.c.l.b16 %v178
  %v702 = vunpack.c.l.b16 %v179
  %v703 = vunpack.c.l.b16 %v180
  %v704 = vunpack.c.l.b16 %v181
  %v705 = vunpack.c.l.b16 %v182
  %v706 = vunpack.c.l.b16 %v183
  %v707 = vunpack.c.l.b16 %v184
  %v708 = vunpack.c.l.b16 %v185
  %v709 = vunpack.c.l.b16 %v186
  %v710 = vunpack.c.l.b16 %v187
  %v711 = vunpack.c.l.b16 %v188
  %v712 = vunpack.c.l.b16 %v189
  %v713 = vunpack.c.l.b16 %v190
  %v714 = vunpack.c.l.b16 %v191
  %v715 = vunpack.c.l.b16 %v192
  %v716 = vunpack.c.l.b16 %v193
  %v717 = vunpack.c.l.b16 %v194
  %v718 = vunpack.c.l.b16 %v195
  %v719 = vunpack.c.l.b16 %v196
  %v720 = vunpack.c.l.b16 %v197
  %v721 = vunpack.c.l.b16 %v198
  %v722 = vunpack.c.l.b16 %v199
  %v723 = vunpack.c.l.b16 %v200
  %v724 = vunpack.c.l.b16 %v201
  %v725 = vunpack.c.l.b16 %v202
  %v726 = vunpack.c.l.b16 %v203
  %v727 = vunpack.c.l.b16 %v204
  %v728 = vunpack.c.l.b16 %v205
  %v729 = vunpack.c.l.b16 %v206
  %v730 = vunpack.c.l.b16 %v207
  %v731 = vunpack.c.l.b16 %v208
  %v732 = vunpack.c.l.b16 %v209
  %v733 = vunpack.c.l.b16 %v210
  %v734 = vunpack.c.l.b16 %v211
  %v735 = vunpack.c.l.b16 %v212
  %v736 = vunpack.c.l.b16 %v213
  %v737 = vunpack.c.l.b16 %v214
  %v738 = vunpack.c.l.b16 %v215
  %v739 = vunpack.c.l.b16 %v216
  %v740 = vunpack.c.l.b16 %v217
  %v741 = vunpack.c.l.b16 %v218
  %v742 = vunpack.c.l.b16 %v219
  %v743 = vunpack.c.l.b16 %v220
  %v744 = vunpack.c.l.b16 %v221
  %v745 = vunpack.c.l.b16 %v222
  %v746 = vunpack.c.l.b16 %v223
  %v747 = vunpack.c.l.b16 %v224
  %v748 = vunpack.c.l.b16 %v225
  %v749 = vunpack.c.l.b16 %v226
  %v750 = vunpack.c.l.b16 %v227
  %v751 = vunpack.c.l.b16 %v228
  %v752 = vunpack.c.l.b16 %v229
  %v753 = vunpack.c.l.b16 %v230
  %v754 = vunpack.c.l.b16 %v231
  %v755 = vunpack.c.l.b16 %v232
  %v756 = vunpack.c.l.b16 %v233
  %v757 = vunpack.c.l.b16 %v234
  %v758 = vunpack.c.l.b16 %v235
  %v759 = vunpack.c.l.b16 %v236
  %v760 = vunpack.c.l.b16 %v237
  %v761 = vunpack.c.l.b16 %v238
  %v762 = vunpack.c.l.b16 %v239
  %v763 = vunpack.c.l.b16 %v240
  %v764 = vunpack.c.l.b16 %v241
  %v765 = vunpack.c.l.b16 %v242
  %v766 = vunpack.c.l.b16 %v243
  %v767 = vunpack.c.l.b16 %v244
  %v768 = vunpack.c.l.b16 %v245
  %v769 = vunpack.c.l.b16 %v246
  %v770 = vunpack.c.l.b16 %v247
  %v771 = vunpack.c.l.b16 %v248
  %v772 = vunpack.c.l.b16 %v249
  %v773 = vunpack.c.l.b16 %v250
  %v774 = vunpack.c.l.b16 %v251
  %v775 = vunpack.c.l.b16 %v252
  %v776 = vunpack.c.l.b16 %v253
  %v777 = vunpack.c.l.b16 %v254
  %v778 = vunpack.c.l.b16 %v255
  %v779 = vunpack.c.l.b16 %v256
  %v780 = vunpack.c.l.b16 %v257
  %v781 = vunpack.c.l.b16 %v258
  %v782 = vunpack.c.l.b16 %v259
  %v783 = vunpack.c.l.b16 %v260
  %v784 = vunpack.c.l.b16 %v261
  %v785 = vunpack.c.l.b16 %v262
  %v786 = vunpack.c.l.b16 %v263
  %v787 = vunpack.c.l.b16 %v264
  %v788 = vunpack.c.l.b16 %v265
  %v789 = vunpack.c.l.b16 %v266
  %v790 = vunpack.c.l.b16 %v267
  %v791 = vunpack.c.l.b16 %v268
  %v792 = vunpack.c.l.b16 %v269
  %v793 = vunpack.c.l.b16 %v270
  %v794 = vunpack.c.l.b16 %v278
  %v795 = vunpack.c.l.b16 %v279
  %v796 = vunpack.c.l.b16 %v280
  %v797 = vunpack.c.l.b16 %v281
  %v798 = vpack.c.b16 %v543, %v542
  %v799 = vpack.c.b16 %v545, %v544
  %v800 = vpack.c.b16 %v547, %v546
  %v801 = vpack.c.b16 %v549, %v548
  %v802 = vpack.c.b16 %v551, %v550
  %v803 = vpack.c.b16 %v553, %v552
  %v804 = vpack.c.b16 %v555, %v554
  %v805 = vpack.c.b16 %v557, %v556
  %v806 = vpack.c.b16 %v559, %v558
  %v807 = vpack.c.b16 %v561, %v560
  %v808 = vpack.c.b16 %v563, %v562
  %v809 = vpack.c.b16 %v565, %v564
  %v810 = vpack.c.b16 %v567, %v566
  %v811 = vpack.c.b16 %v569, %v568
  %v812 = vpack.c.b16 %v571, %v570
  %v813 = vpack.c.b16 %v573, %v572
  %v814 = vpack.c.b16 %v575, %v574
  %v815 = vpack.c.b16 %v577, %v576
  %v816 = vpack.c.b16 %v579, %v578
  %v817 = vpack.c.b16 %v581, %v580
  %v818 = vpack.c.b16 %v583, %v582
  %v819 = vpack.c.b16 %v585, %v584
  %v820 = vpack.c.b16 %v587, %v586
  %v821 = vpack.c.b16 %v589, %v588
  %v822 = vpack.c.b16 %v591, %v590
  %v823 = vpack.c.b16 %v593, %v592
  %v824 = vpack.c.b16 %v595, %v594
  %v825 = vpack.c.b16 %v597, %v596
  %v826 = vpack.c.b16 %v599, %v598
  %v827 = vpack.c.b16 %v601, %v600
  %v828 = vpack.c.b16 %v603, %v602
  %v829 = vpack.c.b16 %v605, %v604
  %v830 = vpack.c.b16 %v607, %v606
  %v831 = vpack.c.b16 %v609, %v608
  %v832 = vpack.c.b16 %v611, %v610
  %v833 = vpack.c.b16 %v613, %v612
  %v834 = vpack.c.b16 %v615, %v614
  %v835 = vpack.c.b16 %v617, %v616
  %v836 = vpack.c.b16 %v619, %v618
  %v837 = vpack.c.b16 %v621, %v620
  %v838 = vpack.c.b16 %v623, %v622
  %v839 = vpack.c.b16 %v625, %v624
  %v840 = vpack.c.b16 %v627, %v626
  %v841 = vpack.c.b16 %v629, %v628
  %v842 = vpack.c.b16 %v631, %v630
  %v843 = vpack.c.b16 %v633, %v632
  %v844 = vpack.c.b16 %v635, %v634
  %v845 = vpack.c.b16 %v637, %v636
  %v846 = vpack.c.b16 %v639, %v638
  %v847 = vpack.c.b16 %v641, %v640
  %v848 = vpack.c.b16 %v643, %v642
  %v849 = vpack.c.b16 %v645, %v644
  %v850 = vpack.c.b16 %v647, %v646
  %v851 = vpack.c.b16 %v649, %v648
  %v852 = vpack.c.b16 %v651, %v650
  %v853 = vpack.c.b16 %v653, %v652
  %v854 = vpack.c.b16 %v655, %v654
  %v855 = vpack.c.b16 %v657, %v656
  %v856 = vpack.c.b16 %v659, %v658
  %v857 = vpack.c.b16 %v661, %v660
  %v858 = vpack.c.b16 %v663, %v662
  %v859 = vpack.c.b16 %v665, %v664
  %v860 = vpack.c.b16 %v667, %v666
  %v861 = vpack.c.b16 %v669, %v668
  %v862 = vpack.c.b16 %v671, %v670
  %v863 = vpack.c.b16 %v673, %v672
  %v864 = vpack.c.b16 %v675, %v674
  %v865 = vpack.c.b16 %v677, %v676
  %v866 = vpack.c.b16 %v679, %v678
  %v867 = vpack.c.b16 %v681, %v680
  %v868 = vpack.c.b16 %v683, %v682
  %v869 = vpack.c.b16 %v685, %v684
  %v870 = vpack.c.b16 %v687, %v686
  %v871 = vpack.c.b16 %v689, %v688
  %v872 = vpack.c.b16 %v691, %v690
  %v873 = vpack.c.b16 %v693, %v692
  %v874 = vpack.c.b16 %v695, %v694
  %v875 = vpack.c.b16 %v697, %v696
  %v876 = vpack.c.b16 %v699, %v698
  %v877 = vpack.c.b16 %v701, %v700
  %v878 = vpack.c.b16 %v703, %v702
  %v879 = vpack.c.b16 %v705, %v704
  %v880 = vpack.c.b16 %v707, %v706
  %v881 = vpack.c.b16 %v709, %v708
  %v882 = vpack.c.b16 %v711, %v710
  %v883 = vpack.c.b16 %v713, %v712
  %v884 = vpack.c.b16 %v715, %v714
  %v885 = vpack.c.b16 %v717, %v716
  %v886 = vpack.c.b16 %v719, %v718
  %v887 = vpack.c.b16 %v721, %v720
  %v888 = vpack.c.b16 %v723, %v722
  %v889 = vpack.c.b16 %v725, %v724
  %v890 = vpack.c.b16 %v727, %v726
  %v891 = vpack.c.b16 %v729, %v728
  %v892 = vpack.c.b16 %v731, %v730
  %v893 = vpack.c.b16 %v733, %v732
  %v894 = vpack.c.b16 %v735, %v734
  %v895 = vpack.c.b16 %v737, %v736
  %v896 = vpack.c.b16 %v739, %v738
  %v897 = vpack.c.b16 %v741, %v740
  %v898 = vpack.c.b16 %v743, %v742
  %v899 = vpack.c.b16 %v745, %v744
  %v900 = vpack.c.b16 %v747, %v746
  %v901 = vpack.c.b16 %v749, %v748
  %v902 = vpack.c.b16 %v751, %v750
  %v903 = vpack.c.b16 %v753, %v752
  %v904 = vpack.c.b16 %v755, %v754
  %v905 = vpack.c.b16 %v757, %v756
  %v906 = vpack.c.b16 %v759, %v758
  %v907 = vpack.c.b16 %v761, %v760
  %v908 = vpack.c.b16 %v763, %v762
  %v909 = vpack.c.b16 %v765, %v764
  %v910 = vpack.c.b16 %v767, %v766
  %v911 = vpack.c.b16 %v769, %v768
  %v912 = vpack.c.b16 %v771, %v770
  %v913 = vpack.c.b16 %v773, %v772
  %v914 = vpack.c.b16 %v775, %v774
  %v915 = vpack.c.b16 %v777, %v776
  %v916 = vpack.c.b16 %v779, %v778
  %v917 = vpack.c.b16 %v781, %v780
  %v918 = vpack.c.b16 %v783, %v782
  %v919 = vpack.c.b16 %v785, %v784
  %v920 = vpack.c.b16 %v787, %v786
  %v921 = vpack.c.b16 %v789, %v788
  %v922 = vpack.c.b16 %v791, %v790
  %v923 = vpack.c.b16 %v793, %v792
  %v924 = vpack.c.b16 %v795, %v794
  %v925 = vpack.c.b16 %v797, %v796
  %v929 = vunpack.c.l.b16 %v283
  %v930 = vunpack.c.l.b16 %v284
  %v931 = vunpack.c.l.b16 %v285
  %v932 = vpack.c.b16 %v930, %v929
  %v933 = vpack.c.b16 %v931, %v931
  %vm935 = vcmask 195584
  %v937 = vsel %vm935, %v798, 0
  %v940 = vsel %vm935, %v799, 0
  %v943 = vsel %vm935, %v800, 0
  %v946 = vsel %vm935, %v801, 0
  %v949 = vsel %vm935, %v802, 0
  %v952 = vsel %vm935, %v803, 0
  %v955 = vsel %vm935, %v804, 0
  %v958 = vsel %vm935, %v805, 0
  %v961 = vsel %vm935, %v806, 0
  %v964 = vsel %vm935, %v807, 0
  %v967 = vsel %vm935, %v808, 0
  %v970 = vsel %vm935, %v809, 0
  %v973 = vsel %vm935, %v810, 0
  %v976 = vsel %vm935, %v811, 0
  %v979 = vsel %vm935, %v812, 0
  %v982 = vsel %vm935, %v813, 0
  %v985 = vsel %vm935, %v814, 0
  %v988 = vsel %vm935, %v815, 0
  %v991 = vsel %vm935, %v816, 0
  %v994 = vsel %vm935, %v817, 0
  %v997 = vsel %vm935, %v818, 0
  %v1000 = vsel %vm935, %v819, 0
  %v1003 = vsel %vm935, %v820, 0
  %v1006 = vsel %vm935, %v821, 0
  %v1009 = vsel %vm935, %v822, 0
  %v1012 = vsel %vm935, %v823, 0
  %v1015 = vsel %vm935, %v824, 0
  %v1018 = vsel %vm935, %v825, 0
  %v1021 = vsel %vm935, %v826, 0
  %v1024 = vsel %vm935, %v827, 0
  %v1027 = vsel %vm935, %v828, 0
  %v1030 = vsel %vm935, %v829, 0
  %v1033 = vsel %vm935, %v830, 0
  %v1036 = vsel %vm935, %v831, 0
  %v1039 = vsel %vm935, %v832, 0
  %v1042 = vsel %vm935, %v833, 0
  %v1045 = vsel %vm935, %v834, 0
  %v1048 = vsel %vm935, %v835, 0
  %v1051 = vsel %vm935, %v836, 0
  %v1054 = vsel %vm935, %v837, 0
  %v1057 = vsel %vm935, %v838, 0
  %v1060 = vsel %vm935, %v839, 0
  %v1063 = vsel %vm935, %v840, 0
  %v1066 = vsel %vm935, %v841, 0
  %v1069 = vsel %vm935, %v842, 0
  %v1072 = vsel %vm935, %v843, 0
  %v1075 = vsel %vm935, %v844, 0
  %v1078 = vsel %vm935, %v845, 0
  %v1081 = vsel %vm935, %v846, 0
  %v1084 = vsel %vm935, %v847, 0
  %v1087 = vsel %vm935, %v848, 0
  %v1090 = vsel %vm935, %v849, 0
  %v1093 = vsel %vm935, %v850, 0
  %v1096 = vsel %vm935, %v851, 0
  %v1099 = vsel %vm935, %v852, 0
  %v1102 = vsel %vm935, %v853, 0
  %v1105 = vsel %vm935, %v854, 0
  %v1108 = vsel %vm935, %v855, 0
  %v1111 = vsel %vm935, %v856, 0
  %v1114 = vsel %vm935, %v857, 0
  %v1117 = vsel %vm935, %v858, 0
  %v1120 = vsel %vm935, %v859, 0
  %v1123 = vsel %vm935, %v860, 0
  %v1126 = vsel %vm935, %v861, 0
  %v1129 = vsel %vm935, %v862, 0
  %v1132 = vsel %vm935, %v863, 0
  %v1135 = vsel %vm935, %v864, 0
  %v1138 = vsel %vm935, %v865, 0
  %v1141 = vsel %vm935, %v866, 0
  %v1144 = vsel %vm935, %v867, 0
  %v1147 = vsel %vm935, %v868, 0
  %v1150 = vsel %vm935, %v869, 0
  %v1153 = vsel %vm935, %v870, 0
  %v1156 = vsel %vm935, %v871, 0
  %v1159 = vsel %vm935, %v872, 0
  %v1162 = vsel %vm935, %v873, 0
  %v1165 = vsel %vm935, %v874, 0
  %v1168 = vsel %vm935, %v875, 0
  %v1171 = vsel %vm935, %v876, 0
  %v1174 = vsel %vm935, %v877, 0
  %v1177 = vsel %vm935, %v878, 0
  %v1180 = vsel %vm935, %v879, 0
  %v1183 = vsel %vm935, %v880, 0
  %v1186 = vsel %vm935, %v881, 0
  %v1189 = vsel %vm935, %v882, 0
  %v1192 = vsel %vm935, %v883, 0
  %v1195 = vsel %vm935, %v884, 0
  %v1198 = vsel %vm935, %v885, 0
  %v1201 = vsel %vm935, %v886, 0
  %v1204 = vsel %vm935, %v887, 0
  %v1207 = vsel %vm935, %v888, 0
  %v1210 = vsel %vm935, %v889, 0
  %v1213 = vsel %vm935, %v890, 0
  %v1216 = vsel %vm935, %v891, 0
  %v1219 = vsel %vm935, %v892, 0
  %v1222 = vsel %vm935, %v893, 0
  %v1225 = vsel %vm935, %v894, 0
  %v1228 = vsel %vm935, %v895, 0
  %v1231 = vsel %vm935, %v896, 0
  %v1234 = vsel %vm935, %v897, 0
  %v1237 = vsel %vm935, %v898, 0
  %v1240 = vsel %vm935, %v899, 0
  %v1243 = vsel %vm935, %v900, 0
  %v1246 = vsel %vm935, %v901, 0
  %v1249 = vsel %vm935, %v902, 0
  %v1252 = vsel %vm935, %v903, 0
  %v1255 = vsel %vm935, %v904, 0
  %v1258 = vsel %vm935, %v905, 0
  %v1261 = vsel %vm935, %v906, 0
  %v1264 = vsel %vm935, %v907, 0
  %v1267 = vsel %vm935, %v908, 0
  %v1270 = vsel %vm935, %v909, 0
  %v1273 = vsel %vm935, %v910, 0
  %v1276 = vsel %vm935, %v911, 0
  %v1279 = vsel %vm935, %v912, 0
  %v1282 = vsel %vm935, %v913, 0
  %v1285 = vsel %vm935, %v914, 0
  %v1288 = vsel %vm935, %v915, 0
  %v1291 = vsel %vm935, %v916, 0
  %v1294 = vsel %vm935, %v917, 0
  %v1297 = vsel %vm935, %v918, 0
  %v1300 = vsel %vm935, %v919, 0
  %v1303 = vsel %vm935, %v920, 0
  %v1306 = vsel %vm935, %v921, 0
  %v1309 = vsel %vm935, %v922, 0
  %v1312 = vsel %vm935, %v923, 0
  %v1315 = vsel %vm935, %v924, 0
  %v1318 = vsel %vm935, %v925, 0
  %vm1320 = vcmask 1043456
  %v1322 = vsel %vm1320, %v933, 0
  %1324 = vmatprep.subr.bf16.mxu0 0
  %1325 = vmatpush1.bf16.msra.mxu0 %v932
  %1326 = vmatprep.subr.bf16.mxu0 0
  %1327 = vmatpush1.bf16.msra.mxu0 %v1322
  %1328 = vmatprep.subr.bf16.mxu0 0
  %1329 = vmatpush1.bf16.msra.mxu0 0
  %1330 = vmatprep.subr.bf16.mxu0 0
  %1331 = vmatpush1.bf16.msra.mxu0 0
  %1332 = vmatprep.subr.bf16.mxu0 0
  %1333 = vmatpush1.bf16.msra.mxu0 0
  %1334 = vmatprep.subr.bf16.mxu0 0
  %1335 = vmatpush1.bf16.msra.mxu0 0
  %1336 = vmatprep.subr.bf16.mxu0 0
  %1337 = vmatpush1.bf16.msra.mxu0 0
  %1338 = vmatprep.subr.bf16.mxu0 0
  %1339 = vmatpush1.bf16.msra.mxu0 0
  %1340 = vmatprep.subr.bf16.mxu0 0
  %1341 = vmatpush1.bf16.msra.mxu0 0
  %1342 = vmatprep.subr.bf16.mxu0 0
  %1343 = vmatpush1.bf16.msra.mxu0 0
  %1344 = vmatprep.subr.bf16.mxu0 0
  %1345 = vmatpush1.bf16.msra.mxu0 0
  %1346 = vmatprep.subr.bf16.mxu0 0
  %1347 = vmatpush1.bf16.msra.mxu0 0
  %1348 = vmatprep.subr.bf16.mxu0 0
  %1349 = vmatpush1.bf16.msra.mxu0 0
  %1350 = vmatprep.subr.bf16.mxu0 0
  %1351 = vmatpush1.bf16.msra.mxu0 0
  %1352 = vmatprep.subr.bf16.mxu0 0
  %1353 = vmatpush1.bf16.msra.mxu0 0
  %1354 = vmatprep.subr.bf16.mxu0 0
  %1355 = vmatpush1.bf16.msra.mxu0 0
  %1356 = vmatprep.mubr.bf16.mxu0 0
  %1357 = vmatmul.mubr.bf16.gmra.mrb[0].mxu0 %v937
  %v1358 = vpop.f32.mrb[0].mxu0
  %v1359 = vadd.f32 0.0, %v1358
  %v1360 = vpop.f32.mrb[0].mxu0
  %v1361 = vpop.f32.mrb[0].mxu0
  %v1362 = vadd.f32 0.0, %v1361
  %v1363 = vpop.f32.mrb[0].mxu0
  %1364 = vmatprep.mubr.bf16.mxu0 0
  %1365 = vmatmul.mubr.bf16.gmra.mrb[0].mxu0 %v940
  %v1366 = vpop.f32.mrb[0].mxu0
  %v1367 = vadd.f32 0.0, %v1366
  %v1368 = vpop.f32.mrb[0].mxu0
  %v1369 = vpop.f32.mrb[0].mxu0
  %v1370 = vadd.f32 0.0, %v1369
  %v1371 = vpop.f32.mrb[0].mxu0
  %1372 = vmatprep.mubr.bf16.mxu0 0
  %1373 = vmatmul.mubr.bf16.gmra.mrb[0].mxu0 %v943
  %v1374 = vpop.f32.mrb[0].mxu0
  %v1375 = vadd.f32 0.0, %v1374
  %v1376 = vpop.f32.mrb[0].mxu0
  %v1377 = vpop.f32.mrb[0].mxu0
  %v1378 = vadd.f32 0.0, %v1377
  %v1379 = vpop.f32.mrb[0].mxu0
  %1380 = vmatprep.mubr.bf16.mxu0 0
  %1381 = vmatmul.mubr.bf16.gmra.mrb[0].mxu0 %v946
  %v1382 = vpop.f32.mrb[0].mxu0
  %v1383 = vadd.f32 0.0, %v1382
  %v1384 = vpop.f32.mrb[0].mxu0
  %v1385 = vpop.f32.mrb[0].mxu0
  %v1386 = vadd.f32 0.0, %v1385
  %v1387 = vpop.f32.mrb[0].mxu0
  %1388 = vmatprep.mubr.bf16.mxu0 0
  %1389 = vmatmul.mubr.bf16.gmra.mrb[0].mxu0 %v949
  %v1390 = vpop.f32.mrb[0].mxu0
  %v1391 = vadd.f32 0.0, %v1390
  %v1392 = vpop.f32.mrb[0].mxu0
  %v1393 = vpop.f32.mrb[0].mxu0
  %v1394 = vadd.f32 0.0, %v1393
  %v1395 = vpop.f32.mrb[0].mxu0
  %1396 = vmatprep.mubr.bf16.mxu0 0
  %1397 = vmatmul.mubr.bf16.gmra.mrb[0].mxu0 %v952
  %v1398 = vpop.f32.mrb[0].mxu0
  %v1399 = vadd.f32 0.0, %v1398
  %v1400 = vpop.f32.mrb[0].mxu0
  %v1401 = vpop.f32.mrb[0].mxu0
  %v1402 = vadd.f32 0.0, %v1401
  %v1403 = vpop.f32.mrb[0].mxu0
  %1404 = vmatprep.mubr.bf16.mxu0 0
  %1405 = vmatmul.mubr.bf16.gmra.mrb[0].mxu0 %v955
  %v1406 = vpop.f32.mrb[0].mxu0
  %v1407 = vadd.f32 0.0, %v1406
  %v1408 = vpop.f32.mrb[0].mxu0
  %v1409 = vpop.f32.mrb[0].mxu0
  %v1410 = vadd.f32 0.0, %v1409
  %v1411 = vpop.f32.mrb[0].mxu0
  %1412 = vmatprep.mubr.bf16.mxu0 0
  %1413 = vmatmul.mubr.bf16.gmra.mrb[0].mxu0 %v958
  %v1414 = vpop.f32.mrb[0].mxu0
  %v1415 = vadd.f32 0.0, %v1414
  %v1416 = vpop.f32.mrb[0].mxu0
  %v1417 = vpop.f32.mrb[0].mxu0
  %v1418 = vadd.f32 0.0, %v1417
  %v1419 = vpop.f32.mrb[0].mxu0
  %1420 = vmatprep.mubr.bf16.mxu0 0
  %1421 = vmatmul.mubr.bf16.gmra.mrb[0].mxu0 %v961
  %v1422 = vpop.f32.mrb[0].mxu0
  %v1423 = vadd.f32 0.0, %v1422
  %v1424 = vpop.f32.mrb[0].mxu0
  %v1425 = vpop.f32.mrb[0].mxu0
  %v1426 = vadd.f32 0.0, %v1425
  %v1427 = vpop.f32.mrb[0].mxu0
  %1428 = vmatprep.mubr.bf16.mxu0 0
  %1429 = vmatmul.mubr.bf16.gmra.mrb[0].mxu0 %v964
  %v1430 = vpop.f32.mrb[0].mxu0
  %v1431 = vadd.f32 0.0, %v1430
  %v1432 = vpop.f32.mrb[0].mxu0
  %v1433 = vpop.f32.mrb[0].mxu0
  %v1434 = vadd.f32 0.0, %v1433
  %v1435 = vpop.f32.mrb[0].mxu0
  %1436 = vmatprep.mubr.bf16.mxu0 0
  %1437 = vmatmul.mubr.bf16.gmra.mrb[0].mxu0 %v967
  %v1438 = vpop.f32.mrb[0].mxu0
  %v1439 = vadd.f32 0.0, %v1438
  %v1440 = vpop.f32.mrb[0].mxu0
  %v1441 = vpop.f32.mrb[0].mxu0
  %v1442 = vadd.f32 0.0, %v1441
  %v1443 = vpop.f32.mrb[0].mxu0
  %1444 = vmatprep.mubr.bf16.mxu0 0
  %1445 = vmatmul.mubr.bf16.gmra.mrb[0].mxu0 %v970
  %v1446 = vpop.f32.mrb[0].mxu0
  %v1447 = vadd.f32 0.0, %v1446
  %v1448 = vpop.f32.mrb[0].mxu0
  %v1449 = vpop.f32.mrb[0].mxu0
  %v1450 = vadd.f32 0.0, %v1449
  %v1451 = vpop.f32.mrb[0].mxu0
  %1452 = vmatprep.mubr.bf16.mxu0 0
  %1453 = vmatmul.mubr.bf16.gmra.mrb[0].mxu0 %v973
  %v1454 = vpop.f32.mrb[0].mxu0
  %v1455 = vadd.f32 0.0, %v1454
  %v1456 = vpop.f32.mrb[0].mxu0
  %v1457 = vpop.f32.mrb[0].mxu0
  %v1458 = vadd.f32 0.0, %v1457
  %v1459 = vpop.f32.mrb[0].mxu0
  %1460 = vmatprep.mubr.bf16.mxu0 0
  %1461 = vmatmul.mubr.bf16.gmra.mrb[0].mxu0 %v976
  %v1462 = vpop.f32.mrb[0].mxu0
  %v1463 = vadd.f32 0.0, %v1462
  %v1464 = vpop.f32.mrb[0].mxu0
  %v1465 = vpop.f32.mrb[0].mxu0
  %v1466 = vadd.f32 0.0, %v1465
  %v1467 = vpop.f32.mrb[0].mxu0
  %1468 = vmatprep.mubr.bf16.mxu0 0
  %1469 = vmatmul.mubr.bf16.gmra.mrb[0].mxu0 %v979
  %v1470 = vpop.f32.mrb[0].mxu0
  %v1471 = vadd.f32 0.0, %v1470
  %v1472 = vpop.f32.mrb[0].mxu0
  %v1473 = vpop.f32.mrb[0].mxu0
  %v1474 = vadd.f32 0.0, %v1473
  %v1475 = vpop.f32.mrb[0].mxu0
  %1476 = vmatprep.mubr.bf16.mxu0 0
  %1477 = vmatmul.mubr.bf16.gmra.mrb[0].mxu0 %v982
  %v1478 = vpop.f32.mrb[0].mxu0
  %v1479 = vadd.f32 0.0, %v1478
  %v1480 = vpop.f32.mrb[0].mxu0
  %v1481 = vpop.f32.mrb[0].mxu0
  %v1482 = vadd.f32 0.0, %v1481
  %v1483 = vpop.f32.mrb[0].mxu0
  %1484 = vmatprep.mubr.bf16.mxu0 0
  %1485 = vmatmul.mubr.bf16.gmra.mrb[0].mxu0 %v985
  %v1486 = vpop.f32.mrb[0].mxu0
  %v1487 = vadd.f32 0.0, %v1486
  %v1488 = vpop.f32.mrb[0].mxu0
  %v1489 = vpop.f32.mrb[0].mxu0
  %v1490 = vadd.f32 0.0, %v1489
  %v1491 = vpop.f32.mrb[0].mxu0
  %1492 = vmatprep.mubr.bf16.mxu0 0
  %1493 = vmatmul.mubr.bf16.gmra.mrb[0].mxu0 %v988
  %v1494 = vpop.f32.mrb[0].mxu0
  %v1495 = vadd.f32 0.0, %v1494
  %v1496 = vpop.f32.mrb[0].mxu0
  %v1497 = vpop.f32.mrb[0].mxu0
  %v1498 = vadd.f32 0.0, %v1497
  %v1499 = vpop.f32.mrb[0].mxu0
  %1500 = vmatprep.mubr.bf16.mxu0 0
  %1501 = vmatmul.mubr.bf16.gmra.mrb[0].mxu0 %v991
  %v1502 = vpop.f32.mrb[0].mxu0
  %v1503 = vadd.f32 0.0, %v1502
  %v1504 = vpop.f32.mrb[0].mxu0
  %v1505 = vpop.f32.mrb[0].mxu0
  %v1506 = vadd.f32 0.0, %v1505
  %v1507 = vpop.f32.mrb[0].mxu0
  %1508 = vmatprep.mubr.bf16.mxu0 0
  %1509 = vmatmul.mubr.bf16.gmra.mrb[0].mxu0 %v994
  %v1510 = vpop.f32.mrb[0].mxu0
  %v1511 = vadd.f32 0.0, %v1510
  %v1512 = vpop.f32.mrb[0].mxu0
  %v1513 = vpop.f32.mrb[0].mxu0
  %v1514 = vadd.f32 0.0, %v1513
  %v1515 = vpop.f32.mrb[0].mxu0
  %1516 = vmatprep.mubr.bf16.mxu0 0
  %1517 = vmatmul.mubr.bf16.gmra.mrb[0].mxu0 %v997
  %v1518 = vpop.f32.mrb[0].mxu0
  %v1519 = vadd.f32 0.0, %v1518
  %v1520 = vpop.f32.mrb[0].mxu0
  %v1521 = vpop.f32.mrb[0].mxu0
  %v1522 = vadd.f32 0.0, %v1521
  %v1523 = vpop.f32.mrb[0].mxu0
  %1524 = vmatprep.mubr.bf16.mxu0 0
  %1525 = vmatmul.mubr.bf16.gmra.mrb[0].mxu0 %v1000
  %v1526 = vpop.f32.mrb[0].mxu0
  %v1527 = vadd.f32 0.0, %v1526
  %v1528 = vpop.f32.mrb[0].mxu0
  %v1529 = vpop.f32.mrb[0].mxu0
  %v1530 = vadd.f32 0.0, %v1529
  %v1531 = vpop.f32.mrb[0].mxu0
  %1532 = vmatprep.mubr.bf16.mxu0 0
  %1533 = vmatmul.mubr.bf16.gmra.mrb[0].mxu0 %v1003
  %v1534 = vpop.f32.mrb[0].mxu0
  %v1535 = vadd.f32 0.0, %v1534
  %v1536 = vpop.f32.mrb[0].mxu0
  %v1537 = vpop.f32.mrb[0].mxu0
  %v1538 = vadd.f32 0.0, %v1537
  %v1539 = vpop.f32.mrb[0].mxu0
  %1540 = vmatprep.mubr.bf16.mxu0 0
  %1541 = vmatmul.mubr.bf16.gmra.mrb[0].mxu0 %v1006
  %v1542 = vpop.f32.mrb[0].mxu0
  %v1543 = vadd.f32 0.0, %v1542
  %v1544 = vpop.f32.mrb[0].mxu0
  %v1545 = vpop.f32.mrb[0].mxu0
  %v1546 = vadd.f32 0.0, %v1545
  %v1547 = vpop.f32.mrb[0].mxu0
  %1548 = vmatprep.mubr.bf16.mxu0 0
  %1549 = vmatmul.mubr.bf16.gmra.mrb[0].mxu0 %v1009
  %v1550 = vpop.f32.mrb[0].mxu0
  %v1551 = vadd.f32 0.0, %v1550
  %v1552 = vpop.f32.mrb[0].mxu0
  %v1553 = vpop.f32.mrb[0].mxu0
  %v1554 = vadd.f32 0.0, %v1553
  %v1555 = vpop.f32.mrb[0].mxu0
  %1556 = vmatprep.mubr.bf16.mxu0 0
  %1557 = vmatmul.mubr.bf16.gmra.mrb[0].mxu0 %v1012
  %v1558 = vpop.f32.mrb[0].mxu0
  %v1559 = vadd.f32 0.0, %v1558
  %v1560 = vpop.f32.mrb[0].mxu0
  %v1561 = vpop.f32.mrb[0].mxu0
  %v1562 = vadd.f32 0.0, %v1561
  %v1563 = vpop.f32.mrb[0].mxu0
  %1564 = vmatprep.mubr.bf16.mxu0 0
  %1565 = vmatmul.mubr.bf16.gmra.mrb[0].mxu0 %v1015
  %v1566 = vpop.f32.mrb[0].mxu0
  %v1567 = vadd.f32 0.0, %v1566
  %v1568 = vpop.f32.mrb[0].mxu0
  %v1569 = vpop.f32.mrb[0].mxu0
  %v1570 = vadd.f32 0.0, %v1569
  %v1571 = vpop.f32.mrb[0].mxu0
  %1572 = vmatprep.mubr.bf16.mxu0 0
  %1573 = vmatmul.mubr.bf16.gmra.mrb[0].mxu0 %v1018
  %v1574 = vpop.f32.mrb[0].mxu0
  %v1575 = vadd.f32 0.0, %v1574
  %v1576 = vpop.f32.mrb[0].mxu0
  %v1577 = vpop.f32.mrb[0].mxu0
  %v1578 = vadd.f32 0.0, %v1577
  %v1579 = vpop.f32.mrb[0].mxu0
  %1580 = vmatprep.mubr.bf16.mxu0 0
  %1581 = vmatmul.mubr.bf16.gmra.mrb[0].mxu0 %v1021
  %v1582 = vpop.f32.mrb[0].mxu0
  %v1583 = vadd.f32 0.0, %v1582
  %v1584 = vpop.f32.mrb[0].mxu0
  %v1585 = vpop.f32.mrb[0].mxu0
  %v1586 = vadd.f32 0.0, %v1585
  %v1587 = vpop.f32.mrb[0].mxu0
  %1588 = vmatprep.mubr.bf16.mxu0 0
  %1589 = vmatmul.mubr.bf16.gmra.mrb[0].mxu0 %v1024
  %v1590 = vpop.f32.mrb[0].mxu0
  %v1591 = vadd.f32 0.0, %v1590
  %v1592 = vpop.f32.mrb[0].mxu0
  %v1593 = vpop.f32.mrb[0].mxu0
  %v1594 = vadd.f32 0.0, %v1593
  %v1595 = vpop.f32.mrb[0].mxu0
  %1596 = vmatprep.mubr.bf16.mxu0 0
  %1597 = vmatmul.mubr.bf16.gmra.mrb[0].mxu0 %v1027
  %v1598 = vpop.f32.mrb[0].mxu0
  %v1599 = vadd.f32 0.0, %v1598
  %v1600 = vpop.f32.mrb[0].mxu0
  %v1601 = vpop.f32.mrb[0].mxu0
  %v1602 = vadd.f32 0.0, %v1601
  %v1603 = vpop.f32.mrb[0].mxu0
  %1604 = vmatprep.mubr.bf16.mxu0 0
  %1605 = vmatmul.mubr.bf16.gmra.mrb[0].mxu0 %v1030
  %v1606 = vpop.f32.mrb[0].mxu0
  %v1607 = vadd.f32 0.0, %v1606
  %v1608 = vpop.f32.mrb[0].mxu0
  %v1609 = vpop.f32.mrb[0].mxu0
  %v1610 = vadd.f32 0.0, %v1609
  %v1611 = vpop.f32.mrb[0].mxu0
  %1612 = vmatprep.mubr.bf16.mxu0 0
  %1613 = vmatmul.mubr.bf16.gmra.mrb[0].mxu0 %v1033
  %v1614 = vpop.f32.mrb[0].mxu0
  %v1615 = vadd.f32 0.0, %v1614
  %v1616 = vpop.f32.mrb[0].mxu0
  %v1617 = vpop.f32.mrb[0].mxu0
  %v1618 = vadd.f32 0.0, %v1617
  %v1619 = vpop.f32.mrb[0].mxu0
  %1620 = vmatprep.mubr.bf16.mxu0 0
  %1621 = vmatmul.mubr.bf16.gmra.mrb[0].mxu0 %v1036
  %v1622 = vpop.f32.mrb[0].mxu0
  %v1623 = vadd.f32 0.0, %v1622
  %v1624 = vpop.f32.mrb[0].mxu0
  %v1625 = vpop.f32.mrb[0].mxu0
  %v1626 = vadd.f32 0.0, %v1625
  %v1627 = vpop.f32.mrb[0].mxu0
  %1628 = vmatprep.mubr.bf16.mxu0 0
  %1629 = vmatmul.mubr.bf16.gmra.mrb[0].mxu0 %v1039
  %v1630 = vpop.f32.mrb[0].mxu0
  %v1631 = vadd.f32 0.0, %v1630
  %v1632 = vpop.f32.mrb[0].mxu0
  %v1633 = vpop.f32.mrb[0].mxu0
  %v1634 = vadd.f32 0.0, %v1633
  %v1635 = vpop.f32.mrb[0].mxu0
  %1636 = vmatprep.mubr.bf16.mxu0 0
  %1637 = vmatmul.mubr.bf16.gmra.mrb[0].mxu0 %v1042
  %v1638 = vpop.f32.mrb[0].mxu0
  %v1639 = vadd.f32 0.0, %v1638
  %v1640 = vpop.f32.mrb[0].mxu0
  %v1641 = vpop.f32.mrb[0].mxu0
  %v1642 = vadd.f32 0.0, %v1641
  %v1643 = vpop.f32.mrb[0].mxu0
  %1644 = vmatprep.mubr.bf16.mxu0 0
  %1645 = vmatmul.mubr.bf16.gmra.mrb[0].mxu0 %v1045
  %v1646 = vpop.f32.mrb[0].mxu0
  %v1647 = vadd.f32 0.0, %v1646
  %v1648 = vpop.f32.mrb[0].mxu0
  %v1649 = vpop.f32.mrb[0].mxu0
  %v1650 = vadd.f32 0.0, %v1649
  %v1651 = vpop.f32.mrb[0].mxu0
  %1652 = vmatprep.mubr.bf16.mxu0 0
  %1653 = vmatmul.mubr.bf16.gmra.mrb[0].mxu0 %v1048
  %v1654 = vpop.f32.mrb[0].mxu0
  %v1655 = vadd.f32 0.0, %v1654
  %v1656 = vpop.f32.mrb[0].mxu0
  %v1657 = vpop.f32.mrb[0].mxu0
  %v1658 = vadd.f32 0.0, %v1657
  %v1659 = vpop.f32.mrb[0].mxu0
  %1660 = vmatprep.mubr.bf16.mxu0 0
  %1661 = vmatmul.mubr.bf16.gmra.mrb[0].mxu0 %v1051
  %v1662 = vpop.f32.mrb[0].mxu0
  %v1663 = vadd.f32 0.0, %v1662
  %v1664 = vpop.f32.mrb[0].mxu0
  %v1665 = vpop.f32.mrb[0].mxu0
  %v1666 = vadd.f32 0.0, %v1665
  %v1667 = vpop.f32.mrb[0].mxu0
  %1668 = vmatprep.mubr.bf16.mxu0 0
  %1669 = vmatmul.mubr.bf16.gmra.mrb[0].mxu0 %v1054
  %v1670 = vpop.f32.mrb[0].mxu0
  %v1671 = vadd.f32 0.0, %v1670
  %v1672 = vpop.f32.mrb[0].mxu0
  %v1673 = vpop.f32.mrb[0].mxu0
  %v1674 = vadd.f32 0.0, %v1673
  %v1675 = vpop.f32.mrb[0].mxu0
  %1676 = vmatprep.mubr.bf16.mxu0 0
  %1677 = vmatmul.mubr.bf16.gmra.mrb[0].mxu0 %v1057
  %v1678 = vpop.f32.mrb[0].mxu0
  %v1679 = vadd.f32 0.0, %v1678
  %v1680 = vpop.f32.mrb[0].mxu0
  %v1681 = vpop.f32.mrb[0].mxu0
  %v1682 = vadd.f32 0.0, %v1681
  %v1683 = vpop.f32.mrb[0].mxu0
  %1684 = vmatprep.mubr.bf16.mxu0 0
  %1685 = vmatmul.mubr.bf16.gmra.mrb[0].mxu0 %v1060
  %v1686 = vpop.f32.mrb[0].mxu0
  %v1687 = vadd.f32 0.0, %v1686
  %v1688 = vpop.f32.mrb[0].mxu0
  %v1689 = vpop.f32.mrb[0].mxu0
  %v1690 = vadd.f32 0.0, %v1689
  %v1691 = vpop.f32.mrb[0].mxu0
  %1692 = vmatprep.mubr.bf16.mxu0 0
  %1693 = vmatmul.mubr.bf16.gmra.mrb[0].mxu0 %v1063
  %v1694 = vpop.f32.mrb[0].mxu0
  %v1695 = vadd.f32 0.0, %v1694
  %v1696 = vpop.f32.mrb[0].mxu0
  %v1697 = vpop.f32.mrb[0].mxu0
  %v1698 = vadd.f32 0.0, %v1697
  %v1699 = vpop.f32.mrb[0].mxu0
  %1700 = vmatprep.mubr.bf16.mxu0 0
  %1701 = vmatmul.mubr.bf16.gmra.mrb[0].mxu0 %v1066
  %v1702 = vpop.f32.mrb[0].mxu0
  %v1703 = vadd.f32 0.0, %v1702
  %v1704 = vpop.f32.mrb[0].mxu0
  %v1705 = vpop.f32.mrb[0].mxu0
  %v1706 = vadd.f32 0.0, %v1705
  %v1707 = vpop.f32.mrb[0].mxu0
  %1708 = vmatprep.mubr.bf16.mxu0 0
  %1709 = vmatmul.mubr.bf16.gmra.mrb[0].mxu0 %v1069
  %v1710 = vpop.f32.mrb[0].mxu0
  %v1711 = vadd.f32 0.0, %v1710
  %v1712 = vpop.f32.mrb[0].mxu0
  %v1713 = vpop.f32.mrb[0].mxu0
  %v1714 = vadd.f32 0.0, %v1713
  %v1715 = vpop.f32.mrb[0].mxu0
  %1716 = vmatprep.mubr.bf16.mxu0 0
  %1717 = vmatmul.mubr.bf16.gmra.mrb[0].mxu0 %v1072
  %v1718 = vpop.f32.mrb[0].mxu0
  %v1719 = vadd.f32 0.0, %v1718
  %v1720 = vpop.f32.mrb[0].mxu0
  %v1721 = vpop.f32.mrb[0].mxu0
  %v1722 = vadd.f32 0.0, %v1721
  %v1723 = vpop.f32.mrb[0].mxu0
  %1724 = vmatprep.mubr.bf16.mxu0 0
  %1725 = vmatmul.mubr.bf16.gmra.mrb[0].mxu0 %v1075
  %v1726 = vpop.f32.mrb[0].mxu0
  %v1727 = vadd.f32 0.0, %v1726
  %v1728 = vpop.f32.mrb[0].mxu0
  %v1729 = vpop.f32.mrb[0].mxu0
  %v1730 = vadd.f32 0.0, %v1729
  %v1731 = vpop.f32.mrb[0].mxu0
  %1732 = vmatprep.mubr.bf16.mxu0 0
  %1733 = vmatmul.mubr.bf16.gmra.mrb[0].mxu0 %v1078
  %v1734 = vpop.f32.mrb[0].mxu0
  %v1735 = vadd.f32 0.0, %v1734
  %v1736 = vpop.f32.mrb[0].mxu0
  %v1737 = vpop.f32.mrb[0].mxu0
  %v1738 = vadd.f32 0.0, %v1737
  %v1739 = vpop.f32.mrb[0].mxu0
  %1740 = vmatprep.mubr.bf16.mxu0 0
  %1741 = vmatmul.mubr.bf16.gmra.mrb[0].mxu0 %v1081
  %v1742 = vpop.f32.mrb[0].mxu0
  %v1743 = vadd.f32 0.0, %v1742
  %v1744 = vpop.f32.mrb[0].mxu0
  %v1745 = vpop.f32.mrb[0].mxu0
  %v1746 = vadd.f32 0.0, %v1745
  %v1747 = vpop.f32.mrb[0].mxu0
  %1748 = vmatprep.mubr.bf16.mxu0 0
  %1749 = vmatmul.mubr.bf16.gmra.mrb[0].mxu0 %v1084
  %v1750 = vpop.f32.mrb[0].mxu0
  %v1751 = vadd.f32 0.0, %v1750
  %v1752 = vpop.f32.mrb[0].mxu0
  %v1753 = vpop.f32.mrb[0].mxu0
  %v1754 = vadd.f32 0.0, %v1753
  %v1755 = vpop.f32.mrb[0].mxu0
  %1756 = vmatprep.mubr.bf16.mxu0 0
  %1757 = vmatmul.mubr.bf16.gmra.mrb[0].mxu0 %v1087
  %v1758 = vpop.f32.mrb[0].mxu0
  %v1759 = vadd.f32 0.0, %v1758
  %v1760 = vpop.f32.mrb[0].mxu0
  %v1761 = vpop.f32.mrb[0].mxu0
  %v1762 = vadd.f32 0.0, %v1761
  %v1763 = vpop.f32.mrb[0].mxu0
  %1764 = vmatprep.mubr.bf16.mxu0 0
  %1765 = vmatmul.mubr.bf16.gmra.mrb[0].mxu0 %v1090
  %v1766 = vpop.f32.mrb[0].mxu0
  %v1767 = vadd.f32 0.0, %v1766
  %v1768 = vpop.f32.mrb[0].mxu0
  %v1769 = vpop.f32.mrb[0].mxu0
  %v1770 = vadd.f32 0.0, %v1769
  %v1771 = vpop.f32.mrb[0].mxu0
  %1772 = vmatprep.mubr.bf16.mxu0 0
  %1773 = vmatmul.mubr.bf16.gmra.mrb[0].mxu0 %v1093
  %v1774 = vpop.f32.mrb[0].mxu0
  %v1775 = vadd.f32 0.0, %v1774
  %v1776 = vpop.f32.mrb[0].mxu0
  %v1777 = vpop.f32.mrb[0].mxu0
  %v1778 = vadd.f32 0.0, %v1777
  %v1779 = vpop.f32.mrb[0].mxu0
  %1780 = vmatprep.mubr.bf16.mxu0 0
  %1781 = vmatmul.mubr.bf16.gmra.mrb[0].mxu0 %v1096
  %v1782 = vpop.f32.mrb[0].mxu0
  %v1783 = vadd.f32 0.0, %v1782
  %v1784 = vpop.f32.mrb[0].mxu0
  %v1785 = vpop.f32.mrb[0].mxu0
  %v1786 = vadd.f32 0.0, %v1785
  %v1787 = vpop.f32.mrb[0].mxu0
  %1788 = vmatprep.mubr.bf16.mxu0 0
  %1789 = vmatmul.mubr.bf16.gmra.mrb[0].mxu0 %v1099
  %v1790 = vpop.f32.mrb[0].mxu0
  %v1791 = vadd.f32 0.0, %v1790
  %v1792 = vpop.f32.mrb[0].mxu0
  %v1793 = vpop.f32.mrb[0].mxu0
  %v1794 = vadd.f32 0.0, %v1793
  %v1795 = vpop.f32.mrb[0].mxu0
  %1796 = vmatprep.mubr.bf16.mxu0 0
  %1797 = vmatmul.mubr.bf16.gmra.mrb[0].mxu0 %v1102
  %v1798 = vpop.f32.mrb[0].mxu0
  %v1799 = vadd.f32 0.0, %v1798
  %v1800 = vpop.f32.mrb[0].mxu0
  %v1801 = vpop.f32.mrb[0].mxu0
  %v1802 = vadd.f32 0.0, %v1801
  %v1803 = vpop.f32.mrb[0].mxu0
  %1804 = vmatprep.mubr.bf16.mxu0 0
  %1805 = vmatmul.mubr.bf16.gmra.mrb[0].mxu0 %v1105
  %v1806 = vpop.f32.mrb[0].mxu0
  %v1807 = vadd.f32 0.0, %v1806
  %v1808 = vpop.f32.mrb[0].mxu0
  %v1809 = vpop.f32.mrb[0].mxu0
  %v1810 = vadd.f32 0.0, %v1809
  %v1811 = vpop.f32.mrb[0].mxu0
  %1812 = vmatprep.mubr.bf16.mxu0 0
  %1813 = vmatmul.mubr.bf16.gmra.mrb[0].mxu0 %v1108
  %v1814 = vpop.f32.mrb[0].mxu0
  %v1815 = vadd.f32 0.0, %v1814
  %v1816 = vpop.f32.mrb[0].mxu0
  %v1817 = vpop.f32.mrb[0].mxu0
  %v1818 = vadd.f32 0.0, %v1817
  %v1819 = vpop.f32.mrb[0].mxu0
  %1820 = vmatprep.mubr.bf16.mxu0 0
  %1821 = vmatmul.mubr.bf16.gmra.mrb[0].mxu0 %v1111
  %v1822 = vpop.f32.mrb[0].mxu0
  %v1823 = vadd.f32 0.0, %v1822
  %v1824 = vpop.f32.mrb[0].mxu0
  %v1825 = vpop.f32.mrb[0].mxu0
  %v1826 = vadd.f32 0.0, %v1825
  %v1827 = vpop.f32.mrb[0].mxu0
  %1828 = vmatprep.mubr.bf16.mxu0 0
  %1829 = vmatmul.mubr.bf16.gmra.mrb[0].mxu0 %v1114
  %v1830 = vpop.f32.mrb[0].mxu0
  %v1831 = vadd.f32 0.0, %v1830
  %v1832 = vpop.f32.mrb[0].mxu0
  %v1833 = vpop.f32.mrb[0].mxu0
  %v1834 = vadd.f32 0.0, %v1833
  %v1835 = vpop.f32.mrb[0].mxu0
  %1836 = vmatprep.mubr.bf16.mxu0 0
  %1837 = vmatmul.mubr.bf16.gmra.mrb[0].mxu0 %v1117
  %v1838 = vpop.f32.mrb[0].mxu0
  %v1839 = vadd.f32 0.0, %v1838
  %v1840 = vpop.f32.mrb[0].mxu0
  %v1841 = vpop.f32.mrb[0].mxu0
  %v1842 = vadd.f32 0.0, %v1841
  %v1843 = vpop.f32.mrb[0].mxu0
  %1844 = vmatprep.mubr.bf16.mxu0 0
  %1845 = vmatmul.mubr.bf16.gmra.mrb[0].mxu0 %v1120
  %v1846 = vpop.f32.mrb[0].mxu0
  %v1847 = vadd.f32 0.0, %v1846
  %v1848 = vpop.f32.mrb[0].mxu0
  %v1849 = vpop.f32.mrb[0].mxu0
  %v1850 = vadd.f32 0.0, %v1849
  %v1851 = vpop.f32.mrb[0].mxu0
  %1852 = vmatprep.mubr.bf16.mxu0 0
  %1853 = vmatmul.mubr.bf16.gmra.mrb[0].mxu0 %v1123
  %v1854 = vpop.f32.mrb[0].mxu0
  %v1855 = vadd.f32 0.0, %v1854
  %v1856 = vpop.f32.mrb[0].mxu0
  %v1857 = vpop.f32.mrb[0].mxu0
  %v1858 = vadd.f32 0.0, %v1857
  %v1859 = vpop.f32.mrb[0].mxu0
  %1860 = vmatprep.mubr.bf16.mxu0 0
  %1861 = vmatmul.mubr.bf16.gmra.mrb[0].mxu0 %v1126
  %v1862 = vpop.f32.mrb[0].mxu0
  %v1863 = vadd.f32 0.0, %v1862
  %v1864 = vpop.f32.mrb[0].mxu0
  %v1865 = vpop.f32.mrb[0].mxu0
  %v1866 = vadd.f32 0.0, %v1865
  %v1867 = vpop.f32.mrb[0].mxu0
  %1868 = vmatprep.mubr.bf16.mxu0 0
  %1869 = vmatmul.mubr.bf16.gmra.mrb[0].mxu0 %v1129
  %v1870 = vpop.f32.mrb[0].mxu0
  %v1871 = vadd.f32 0.0, %v1870
  %v1872 = vpop.f32.mrb[0].mxu0
  %v1873 = vpop.f32.mrb[0].mxu0
  %v1874 = vadd.f32 0.0, %v1873
  %v1875 = vpop.f32.mrb[0].mxu0
  %1876 = vmatprep.mubr.bf16.mxu0 0
  %1877 = vmatmul.mubr.bf16.gmra.mrb[0].mxu0 %v1132
  %v1878 = vpop.f32.mrb[0].mxu0
  %v1879 = vadd.f32 0.0, %v1878
  %v1880 = vpop.f32.mrb[0].mxu0
  %v1881 = vpop.f32.mrb[0].mxu0
  %v1882 = vadd.f32 0.0, %v1881
  %v1883 = vpop.f32.mrb[0].mxu0
  %1884 = vmatprep.mubr.bf16.mxu0 0
  %1885 = vmatmul.mubr.bf16.gmra.mrb[0].mxu0 %v1135
  %v1886 = vpop.f32.mrb[0].mxu0
  %v1887 = vadd.f32 0.0, %v1886
  %v1888 = vpop.f32.mrb[0].mxu0
  %v1889 = vpop.f32.mrb[0].mxu0
  %v1890 = vadd.f32 0.0, %v1889
  %v1891 = vpop.f32.mrb[0].mxu0
  %1892 = vmatprep.mubr.bf16.mxu0 0
  %1893 = vmatmul.mubr.bf16.gmra.mrb[0].mxu0 %v1138
  %v1894 = vpop.f32.mrb[0].mxu0
  %v1895 = vadd.f32 0.0, %v1894
  %v1896 = vpop.f32.mrb[0].mxu0
  %v1897 = vpop.f32.mrb[0].mxu0
  %v1898 = vadd.f32 0.0, %v1897
  %v1899 = vpop.f32.mrb[0].mxu0
  %1900 = vmatprep.mubr.bf16.mxu0 0
  %1901 = vmatmul.mubr.bf16.gmra.mrb[0].mxu0 %v1141
  %v1902 = vpop.f32.mrb[0].mxu0
  %v1903 = vadd.f32 0.0, %v1902
  %v1904 = vpop.f32.mrb[0].mxu0
  %v1905 = vpop.f32.mrb[0].mxu0
  %v1906 = vadd.f32 0.0, %v1905
  %v1907 = vpop.f32.mrb[0].mxu0
  %1908 = vmatprep.mubr.bf16.mxu0 0
  %1909 = vmatmul.mubr.bf16.gmra.mrb[0].mxu0 %v1144
  %v1910 = vpop.f32.mrb[0].mxu0
  %v1911 = vadd.f32 0.0, %v1910
  %v1912 = vpop.f32.mrb[0].mxu0
  %v1913 = vpop.f32.mrb[0].mxu0
  %v1914 = vadd.f32 0.0, %v1913
  %v1915 = vpop.f32.mrb[0].mxu0
  %1916 = vmatprep.mubr.bf16.mxu0 0
  %1917 = vmatmul.mubr.bf16.gmra.mrb[0].mxu0 %v1147
  %v1918 = vpop.f32.mrb[0].mxu0
  %v1919 = vadd.f32 0.0, %v1918
  %v1920 = vpop.f32.mrb[0].mxu0
  %v1921 = vpop.f32.mrb[0].mxu0
  %v1922 = vadd.f32 0.0, %v1921
  %v1923 = vpop.f32.mrb[0].mxu0
  %1924 = vmatprep.mubr.bf16.mxu0 0
  %1925 = vmatmul.mubr.bf16.gmra.mrb[0].mxu0 %v1150
  %v1926 = vpop.f32.mrb[0].mxu0
  %v1927 = vadd.f32 0.0, %v1926
  %v1928 = vpop.f32.mrb[0].mxu0
  %v1929 = vpop.f32.mrb[0].mxu0
  %v1930 = vadd.f32 0.0, %v1929
  %v1931 = vpop.f32.mrb[0].mxu0
  %1932 = vmatprep.mubr.bf16.mxu0 0
  %1933 = vmatmul.mubr.bf16.gmra.mrb[0].mxu0 %v1153
  %v1934 = vpop.f32.mrb[0].mxu0
  %v1935 = vadd.f32 0.0, %v1934
  %v1936 = vpop.f32.mrb[0].mxu0
  %v1937 = vpop.f32.mrb[0].mxu0
  %v1938 = vadd.f32 0.0, %v1937
  %v1939 = vpop.f32.mrb[0].mxu0
  %1940 = vmatprep.mubr.bf16.mxu0 0
  %1941 = vmatmul.mubr.bf16.gmra.mrb[0].mxu0 %v1156
  %v1942 = vpop.f32.mrb[0].mxu0
  %v1943 = vadd.f32 0.0, %v1942
  %v1944 = vpop.f32.mrb[0].mxu0
  %v1945 = vpop.f32.mrb[0].mxu0
  %v1946 = vadd.f32 0.0, %v1945
  %v1947 = vpop.f32.mrb[0].mxu0
  %1948 = vmatprep.mubr.bf16.mxu0 0
  %1949 = vmatmul.mubr.bf16.gmra.mrb[0].mxu0 %v1159
  %v1950 = vpop.f32.mrb[0].mxu0
  %v1951 = vadd.f32 0.0, %v1950
  %v1952 = vpop.f32.mrb[0].mxu0
  %v1953 = vpop.f32.mrb[0].mxu0
  %v1954 = vadd.f32 0.0, %v1953
  %v1955 = vpop.f32.mrb[0].mxu0
  %1956 = vmatprep.mubr.bf16.mxu0 0
  %1957 = vmatmul.mubr.bf16.gmra.mrb[0].mxu0 %v1162
  %v1958 = vpop.f32.mrb[0].mxu0
  %v1959 = vadd.f32 0.0, %v1958
  %v1960 = vpop.f32.mrb[0].mxu0
  %v1961 = vpop.f32.mrb[0].mxu0
  %v1962 = vadd.f32 0.0, %v1961
  %v1963 = vpop.f32.mrb[0].mxu0
  %1964 = vmatprep.mubr.bf16.mxu0 0
  %1965 = vmatmul.mubr.bf16.gmra.mrb[0].mxu0 %v1165
  %v1966 = vpop.f32.mrb[0].mxu0
  %v1967 = vadd.f32 0.0, %v1966
  %v1968 = vpop.f32.mrb[0].mxu0
  %v1969 = vpop.f32.mrb[0].mxu0
  %v1970 = vadd.f32 0.0, %v1969
  %v1971 = vpop.f32.mrb[0].mxu0
  %1972 = vmatprep.mubr.bf16.mxu0 0
  %1973 = vmatmul.mubr.bf16.gmra.mrb[0].mxu0 %v1168
  %v1974 = vpop.f32.mrb[0].mxu0
  %v1975 = vadd.f32 0.0, %v1974
  %v1976 = vpop.f32.mrb[0].mxu0
  %v1977 = vpop.f32.mrb[0].mxu0
  %v1978 = vadd.f32 0.0, %v1977
  %v1979 = vpop.f32.mrb[0].mxu0
  %1980 = vmatprep.mubr.bf16.mxu0 0
  %1981 = vmatmul.mubr.bf16.gmra.mrb[0].mxu0 %v1171
  %v1982 = vpop.f32.mrb[0].mxu0
  %v1983 = vadd.f32 0.0, %v1982
  %v1984 = vpop.f32.mrb[0].mxu0
  %v1985 = vpop.f32.mrb[0].mxu0
  %v1986 = vadd.f32 0.0, %v1985
  %v1987 = vpop.f32.mrb[0].mxu0
  %1988 = vmatprep.mubr.bf16.mxu0 0
  %1989 = vmatmul.mubr.bf16.gmra.mrb[0].mxu0 %v1174
  %v1990 = vpop.f32.mrb[0].mxu0
  %v1991 = vadd.f32 0.0, %v1990
  %v1992 = vpop.f32.mrb[0].mxu0
  %v1993 = vpop.f32.mrb[0].mxu0
  %v1994 = vadd.f32 0.0, %v1993
  %v1995 = vpop.f32.mrb[0].mxu0
  %1996 = vmatprep.mubr.bf16.mxu0 0
  %1997 = vmatmul.mubr.bf16.gmra.mrb[0].mxu0 %v1177
  %v1998 = vpop.f32.mrb[0].mxu0
  %v1999 = vadd.f32 0.0, %v1998
  %v2000 = vpop.f32.mrb[0].mxu0
  %v2001 = vpop.f32.mrb[0].mxu0
  %v2002 = vadd.f32 0.0, %v2001
  %v2003 = vpop.f32.mrb[0].mxu0
  %2004 = vmatprep.mubr.bf16.mxu0 0
  %2005 = vmatmul.mubr.bf16.gmra.mrb[0].mxu0 %v1180
  %v2006 = vpop.f32.mrb[0].mxu0
  %v2007 = vadd.f32 0.0, %v2006
  %v2008 = vpop.f32.mrb[0].mxu0
  %v2009 = vpop.f32.mrb[0].mxu0
  %v2010 = vadd.f32 0.0, %v2009
  %v2011 = vpop.f32.mrb[0].mxu0
  %2012 = vmatprep.mubr.bf16.mxu0 0
  %2013 = vmatmul.mubr.bf16.gmra.mrb[0].mxu0 %v1183
  %v2014 = vpop.f32.mrb[0].mxu0
  %v2015 = vadd.f32 0.0, %v2014
  %v2016 = vpop.f32.mrb[0].mxu0
  %v2017 = vpop.f32.mrb[0].mxu0
  %v2018 = vadd.f32 0.0, %v2017
  %v2019 = vpop.f32.mrb[0].mxu0
  %2020 = vmatprep.mubr.bf16.mxu0 0
  %2021 = vmatmul.mubr.bf16.gmra.mrb[0].mxu0 %v1186
  %v2022 = vpop.f32.mrb[0].mxu0
  %v2023 = vadd.f32 0.0, %v2022
  %v2024 = vpop.f32.mrb[0].mxu0
  %v2025 = vpop.f32.mrb[0].mxu0
  %v2026 = vadd.f32 0.0, %v2025
  %v2027 = vpop.f32.mrb[0].mxu0
  %2028 = vmatprep.mubr.bf16.mxu0 0
  %2029 = vmatmul.mubr.bf16.gmra.mrb[0].mxu0 %v1189
  %v2030 = vpop.f32.mrb[0].mxu0
  %v2031 = vadd.f32 0.0, %v2030
  %v2032 = vpop.f32.mrb[0].mxu0
  %v2033 = vpop.f32.mrb[0].mxu0
  %v2034 = vadd.f32 0.0, %v2033
  %v2035 = vpop.f32.mrb[0].mxu0
  %2036 = vmatprep.mubr.bf16.mxu0 0
  %2037 = vmatmul.mubr.bf16.gmra.mrb[0].mxu0 %v1192
  %v2038 = vpop.f32.mrb[0].mxu0
  %v2039 = vadd.f32 0.0, %v2038
  %v2040 = vpop.f32.mrb[0].mxu0
  %v2041 = vpop.f32.mrb[0].mxu0
  %v2042 = vadd.f32 0.0, %v2041
  %v2043 = vpop.f32.mrb[0].mxu0
  %2044 = vmatprep.mubr.bf16.mxu0 0
  %2045 = vmatmul.mubr.bf16.gmra.mrb[0].mxu0 %v1195
  %v2046 = vpop.f32.mrb[0].mxu0
  %v2047 = vadd.f32 0.0, %v2046
  %v2048 = vpop.f32.mrb[0].mxu0
  %v2049 = vpop.f32.mrb[0].mxu0
  %v2050 = vadd.f32 0.0, %v2049
  %v2051 = vpop.f32.mrb[0].mxu0
  %2052 = vmatprep.mubr.bf16.mxu0 0
  %2053 = vmatmul.mubr.bf16.gmra.mrb[0].mxu0 %v1198
  %v2054 = vpop.f32.mrb[0].mxu0
  %v2055 = vadd.f32 0.0, %v2054
  %v2056 = vpop.f32.mrb[0].mxu0
  %v2057 = vpop.f32.mrb[0].mxu0
  %v2058 = vadd.f32 0.0, %v2057
  %v2059 = vpop.f32.mrb[0].mxu0
  %2060 = vmatprep.mubr.bf16.mxu0 0
  %2061 = vmatmul.mubr.bf16.gmra.mrb[0].mxu0 %v1201
  %v2062 = vpop.f32.mrb[0].mxu0
  %v2063 = vadd.f32 0.0, %v2062
  %v2064 = vpop.f32.mrb[0].mxu0
  %v2065 = vpop.f32.mrb[0].mxu0
  %v2066 = vadd.f32 0.0, %v2065
  %v2067 = vpop.f32.mrb[0].mxu0
  %2068 = vmatprep.mubr.bf16.mxu0 0
  %2069 = vmatmul.mubr.bf16.gmra.mrb[0].mxu0 %v1204
  %v2070 = vpop.f32.mrb[0].mxu0
  %v2071 = vadd.f32 0.0, %v2070
  %v2072 = vpop.f32.mrb[0].mxu0
  %v2073 = vpop.f32.mrb[0].mxu0
  %v2074 = vadd.f32 0.0, %v2073
  %v2075 = vpop.f32.mrb[0].mxu0
  %2076 = vmatprep.mubr.bf16.mxu0 0
  %2077 = vmatmul.mubr.bf16.gmra.mrb[0].mxu0 %v1207
  %v2078 = vpop.f32.mrb[0].mxu0
  %v2079 = vadd.f32 0.0, %v2078
  %v2080 = vpop.f32.mrb[0].mxu0
  %v2081 = vpop.f32.mrb[0].mxu0
  %v2082 = vadd.f32 0.0, %v2081
  %v2083 = vpop.f32.mrb[0].mxu0
  %2084 = vmatprep.mubr.bf16.mxu0 0
  %2085 = vmatmul.mubr.bf16.gmra.mrb[0].mxu0 %v1210
  %v2086 = vpop.f32.mrb[0].mxu0
  %v2087 = vadd.f32 0.0, %v2086
  %v2088 = vpop.f32.mrb[0].mxu0
  %v2089 = vpop.f32.mrb[0].mxu0
  %v2090 = vadd.f32 0.0, %v2089
  %v2091 = vpop.f32.mrb[0].mxu0
  %2092 = vmatprep.mubr.bf16.mxu0 0
  %2093 = vmatmul.mubr.bf16.gmra.mrb[0].mxu0 %v1213
  %v2094 = vpop.f32.mrb[0].mxu0
  %v2095 = vadd.f32 0.0, %v2094
  %v2096 = vpop.f32.mrb[0].mxu0
  %v2097 = vpop.f32.mrb[0].mxu0
  %v2098 = vadd.f32 0.0, %v2097
  %v2099 = vpop.f32.mrb[0].mxu0
  %2100 = vmatprep.mubr.bf16.mxu0 0
  %2101 = vmatmul.mubr.bf16.gmra.mrb[0].mxu0 %v1216
  %v2102 = vpop.f32.mrb[0].mxu0
  %v2103 = vadd.f32 0.0, %v2102
  %v2104 = vpop.f32.mrb[0].mxu0
  %v2105 = vpop.f32.mrb[0].mxu0
  %v2106 = vadd.f32 0.0, %v2105
  %v2107 = vpop.f32.mrb[0].mxu0
  %2108 = vmatprep.mubr.bf16.mxu0 0
  %2109 = vmatmul.mubr.bf16.gmra.mrb[0].mxu0 %v1219
  %v2110 = vpop.f32.mrb[0].mxu0
  %v2111 = vadd.f32 0.0, %v2110
  %v2112 = vpop.f32.mrb[0].mxu0
  %v2113 = vpop.f32.mrb[0].mxu0
  %v2114 = vadd.f32 0.0, %v2113
  %v2115 = vpop.f32.mrb[0].mxu0
  %2116 = vmatprep.mubr.bf16.mxu0 0
  %2117 = vmatmul.mubr.bf16.gmra.mrb[0].mxu0 %v1222
  %v2118 = vpop.f32.mrb[0].mxu0
  %v2119 = vadd.f32 0.0, %v2118
  %v2120 = vpop.f32.mrb[0].mxu0
  %v2121 = vpop.f32.mrb[0].mxu0
  %v2122 = vadd.f32 0.0, %v2121
  %v2123 = vpop.f32.mrb[0].mxu0
  %2124 = vmatprep.mubr.bf16.mxu0 0
  %2125 = vmatmul.mubr.bf16.gmra.mrb[0].mxu0 %v1225
  %v2126 = vpop.f32.mrb[0].mxu0
  %v2127 = vadd.f32 0.0, %v2126
  %v2128 = vpop.f32.mrb[0].mxu0
  %v2129 = vpop.f32.mrb[0].mxu0
  %v2130 = vadd.f32 0.0, %v2129
  %v2131 = vpop.f32.mrb[0].mxu0
  %2132 = vmatprep.mubr.bf16.mxu0 0
  %2133 = vmatmul.mubr.bf16.gmra.mrb[0].mxu0 %v1228
  %v2134 = vpop.f32.mrb[0].mxu0
  %v2135 = vadd.f32 0.0, %v2134
  %v2136 = vpop.f32.mrb[0].mxu0
  %v2137 = vpop.f32.mrb[0].mxu0
  %v2138 = vadd.f32 0.0, %v2137
  %v2139 = vpop.f32.mrb[0].mxu0
  %2140 = vmatprep.mubr.bf16.mxu0 0
  %2141 = vmatmul.mubr.bf16.gmra.mrb[0].mxu0 %v1231
  %v2142 = vpop.f32.mrb[0].mxu0
  %v2143 = vadd.f32 0.0, %v2142
  %v2144 = vpop.f32.mrb[0].mxu0
  %v2145 = vpop.f32.mrb[0].mxu0
  %v2146 = vadd.f32 0.0, %v2145
  %v2147 = vpop.f32.mrb[0].mxu0
  %2148 = vmatprep.mubr.bf16.mxu0 0
  %2149 = vmatmul.mubr.bf16.gmra.mrb[0].mxu0 %v1234
  %v2150 = vpop.f32.mrb[0].mxu0
  %v2151 = vadd.f32 0.0, %v2150
  %v2152 = vpop.f32.mrb[0].mxu0
  %v2153 = vpop.f32.mrb[0].mxu0
  %v2154 = vadd.f32 0.0, %v2153
  %v2155 = vpop.f32.mrb[0].mxu0
  %2156 = vmatprep.mubr.bf16.mxu0 0
  %2157 = vmatmul.mubr.bf16.gmra.mrb[0].mxu0 %v1237
  %v2158 = vpop.f32.mrb[0].mxu0
  %v2159 = vadd.f32 0.0, %v2158
  %v2160 = vpop.f32.mrb[0].mxu0
  %v2161 = vpop.f32.mrb[0].mxu0
  %v2162 = vadd.f32 0.0, %v2161
  %v2163 = vpop.f32.mrb[0].mxu0
  %2164 = vmatprep.mubr.bf16.mxu0 0
  %2165 = vmatmul.mubr.bf16.gmra.mrb[0].mxu0 %v1240
  %v2166 = vpop.f32.mrb[0].mxu0
  %v2167 = vadd.f32 0.0, %v2166
  %v2168 = vpop.f32.mrb[0].mxu0
  %v2169 = vpop.f32.mrb[0].mxu0
  %v2170 = vadd.f32 0.0, %v2169
  %v2171 = vpop.f32.mrb[0].mxu0
  %2172 = vmatprep.mubr.bf16.mxu0 0
  %2173 = vmatmul.mubr.bf16.gmra.mrb[0].mxu0 %v1243
  %v2174 = vpop.f32.mrb[0].mxu0
  %v2175 = vadd.f32 0.0, %v2174
  %v2176 = vpop.f32.mrb[0].mxu0
  %v2177 = vpop.f32.mrb[0].mxu0
  %v2178 = vadd.f32 0.0, %v2177
  %v2179 = vpop.f32.mrb[0].mxu0
  %2180 = vmatprep.mubr.bf16.mxu0 0
  %2181 = vmatmul.mubr.bf16.gmra.mrb[0].mxu0 %v1246
  %v2182 = vpop.f32.mrb[0].mxu0
  %v2183 = vadd.f32 0.0, %v2182
  %v2184 = vpop.f32.mrb[0].mxu0
  %v2185 = vpop.f32.mrb[0].mxu0
  %v2186 = vadd.f32 0.0, %v2185
  %v2187 = vpop.f32.mrb[0].mxu0
  %2188 = vmatprep.mubr.bf16.mxu0 0
  %2189 = vmatmul.mubr.bf16.gmra.mrb[0].mxu0 %v1249
  %v2190 = vpop.f32.mrb[0].mxu0
  %v2191 = vadd.f32 0.0, %v2190
  %v2192 = vpop.f32.mrb[0].mxu0
  %v2193 = vpop.f32.mrb[0].mxu0
  %v2194 = vadd.f32 0.0, %v2193
  %v2195 = vpop.f32.mrb[0].mxu0
  %2196 = vmatprep.mubr.bf16.mxu0 0
  %2197 = vmatmul.mubr.bf16.gmra.mrb[0].mxu0 %v1252
  %v2198 = vpop.f32.mrb[0].mxu0
  %v2199 = vadd.f32 0.0, %v2198
  %v2200 = vpop.f32.mrb[0].mxu0
  %v2201 = vpop.f32.mrb[0].mxu0
  %v2202 = vadd.f32 0.0, %v2201
  %v2203 = vpop.f32.mrb[0].mxu0
  %2204 = vmatprep.mubr.bf16.mxu0 0
  %2205 = vmatmul.mubr.bf16.gmra.mrb[0].mxu0 %v1255
  %v2206 = vpop.f32.mrb[0].mxu0
  %v2207 = vadd.f32 0.0, %v2206
  %v2208 = vpop.f32.mrb[0].mxu0
  %v2209 = vpop.f32.mrb[0].mxu0
  %v2210 = vadd.f32 0.0, %v2209
  %v2211 = vpop.f32.mrb[0].mxu0
  %2212 = vmatprep.mubr.bf16.mxu0 0
  %2213 = vmatmul.mubr.bf16.gmra.mrb[0].mxu0 %v1258
  %v2214 = vpop.f32.mrb[0].mxu0
  %v2215 = vadd.f32 0.0, %v2214
  %v2216 = vpop.f32.mrb[0].mxu0
  %v2217 = vpop.f32.mrb[0].mxu0
  %v2218 = vadd.f32 0.0, %v2217
  %v2219 = vpop.f32.mrb[0].mxu0
  %2220 = vmatprep.mubr.bf16.mxu0 0
  %2221 = vmatmul.mubr.bf16.gmra.mrb[0].mxu0 %v1261
  %v2222 = vpop.f32.mrb[0].mxu0
  %v2223 = vadd.f32 0.0, %v2222
  %v2224 = vpop.f32.mrb[0].mxu0
  %v2225 = vpop.f32.mrb[0].mxu0
  %v2226 = vadd.f32 0.0, %v2225
  %v2227 = vpop.f32.mrb[0].mxu0
  %2228 = vmatprep.mubr.bf16.mxu0 0
  %2229 = vmatmul.mubr.bf16.gmra.mrb[0].mxu0 %v1264
  %v2230 = vpop.f32.mrb[0].mxu0
  %v2231 = vadd.f32 0.0, %v2230
  %v2232 = vpop.f32.mrb[0].mxu0
  %v2233 = vpop.f32.mrb[0].mxu0
  %v2234 = vadd.f32 0.0, %v2233
  %v2235 = vpop.f32.mrb[0].mxu0
  %2236 = vmatprep.mubr.bf16.mxu0 0
  %2237 = vmatmul.mubr.bf16.gmra.mrb[0].mxu0 %v1267
  %v2238 = vpop.f32.mrb[0].mxu0
  %v2239 = vadd.f32 0.0, %v2238
  %v2240 = vpop.f32.mrb[0].mxu0
  %v2241 = vpop.f32.mrb[0].mxu0
  %v2242 = vadd.f32 0.0, %v2241
  %v2243 = vpop.f32.mrb[0].mxu0
  %2244 = vmatprep.mubr.bf16.mxu0 0
  %2245 = vmatmul.mubr.bf16.gmra.mrb[0].mxu0 %v1270
  %v2246 = vpop.f32.mrb[0].mxu0
  %v2247 = vadd.f32 0.0, %v2246
  %v2248 = vpop.f32.mrb[0].mxu0
  %v2249 = vpop.f32.mrb[0].mxu0
  %v2250 = vadd.f32 0.0, %v2249
  %v2251 = vpop.f32.mrb[0].mxu0
  %2252 = vmatprep.mubr.bf16.mxu0 0
  %2253 = vmatmul.mubr.bf16.gmra.mrb[0].mxu0 %v1273
  %v2254 = vpop.f32.mrb[0].mxu0
  %v2255 = vadd.f32 0.0, %v2254
  %v2256 = vpop.f32.mrb[0].mxu0
  %v2257 = vpop.f32.mrb[0].mxu0
  %v2258 = vadd.f32 0.0, %v2257
  %v2259 = vpop.f32.mrb[0].mxu0
  %2260 = vmatprep.mubr.bf16.mxu0 0
  %2261 = vmatmul.mubr.bf16.gmra.mrb[0].mxu0 %v1276
  %v2262 = vpop.f32.mrb[0].mxu0
  %v2263 = vadd.f32 0.0, %v2262
  %v2264 = vpop.f32.mrb[0].mxu0
  %v2265 = vpop.f32.mrb[0].mxu0
  %v2266 = vadd.f32 0.0, %v2265
  %v2267 = vpop.f32.mrb[0].mxu0
  %2268 = vmatprep.mubr.bf16.mxu0 0
  %2269 = vmatmul.mubr.bf16.gmra.mrb[0].mxu0 %v1279
  %v2270 = vpop.f32.mrb[0].mxu0
  %v2271 = vadd.f32 0.0, %v2270
  %v2272 = vpop.f32.mrb[0].mxu0
  %v2273 = vpop.f32.mrb[0].mxu0
  %v2274 = vadd.f32 0.0, %v2273
  %v2275 = vpop.f32.mrb[0].mxu0
  %2276 = vmatprep.mubr.bf16.mxu0 0
  %2277 = vmatmul.mubr.bf16.gmra.mrb[0].mxu0 %v1282
  %v2278 = vpop.f32.mrb[0].mxu0
  %v2279 = vadd.f32 0.0, %v2278
  %v2280 = vpop.f32.mrb[0].mxu0
  %v2281 = vpop.f32.mrb[0].mxu0
  %v2282 = vadd.f32 0.0, %v2281
  %v2283 = vpop.f32.mrb[0].mxu0
  %2284 = vmatprep.mubr.bf16.mxu0 0
  %2285 = vmatmul.mubr.bf16.gmra.mrb[0].mxu0 %v1285
  %v2286 = vpop.f32.mrb[0].mxu0
  %v2287 = vadd.f32 0.0, %v2286
  %v2288 = vpop.f32.mrb[0].mxu0
  %v2289 = vpop.f32.mrb[0].mxu0
  %v2290 = vadd.f32 0.0, %v2289
  %v2291 = vpop.f32.mrb[0].mxu0
  %2292 = vmatprep.mubr.bf16.mxu0 0
  %2293 = vmatmul.mubr.bf16.gmra.mrb[0].mxu0 %v1288
  %v2294 = vpop.f32.mrb[0].mxu0
  %v2295 = vadd.f32 0.0, %v2294
  %v2296 = vpop.f32.mrb[0].mxu0
  %v2297 = vpop.f32.mrb[0].mxu0
  %v2298 = vadd.f32 0.0, %v2297
  %v2299 = vpop.f32.mrb[0].mxu0
  %2300 = vmatprep.mubr.bf16.mxu0 0
  %2301 = vmatmul.mubr.bf16.gmra.mrb[0].mxu0 %v1291
  %v2302 = vpop.f32.mrb[0].mxu0
  %v2303 = vadd.f32 0.0, %v2302
  %v2304 = vpop.f32.mrb[0].mxu0
  %v2305 = vpop.f32.mrb[0].mxu0
  %v2306 = vadd.f32 0.0, %v2305
  %v2307 = vpop.f32.mrb[0].mxu0
  %2308 = vmatprep.mubr.bf16.mxu0 0
  %2309 = vmatmul.mubr.bf16.gmra.mrb[0].mxu0 %v1294
  %v2310 = vpop.f32.mrb[0].mxu0
  %v2311 = vadd.f32 0.0, %v2310
  %v2312 = vpop.f32.mrb[0].mxu0
  %v2313 = vpop.f32.mrb[0].mxu0
  %v2314 = vadd.f32 0.0, %v2313
  %v2315 = vpop.f32.mrb[0].mxu0
  %2316 = vmatprep.mubr.bf16.mxu0 0
  %2317 = vmatmul.mubr.bf16.gmra.mrb[0].mxu0 %v1297
  %v2318 = vpop.f32.mrb[0].mxu0
  %v2319 = vadd.f32 0.0, %v2318
  %v2320 = vpop.f32.mrb[0].mxu0
  %v2321 = vpop.f32.mrb[0].mxu0
  %v2322 = vadd.f32 0.0, %v2321
  %v2323 = vpop.f32.mrb[0].mxu0
  %2324 = vmatprep.mubr.bf16.mxu0 0
  %2325 = vmatmul.mubr.bf16.gmra.mrb[0].mxu0 %v1300
  %v2326 = vpop.f32.mrb[0].mxu0
  %v2327 = vadd.f32 0.0, %v2326
  %v2328 = vpop.f32.mrb[0].mxu0
  %v2329 = vpop.f32.mrb[0].mxu0
  %v2330 = vadd.f32 0.0, %v2329
  %v2331 = vpop.f32.mrb[0].mxu0
  %2332 = vmatprep.mubr.bf16.mxu0 0
  %2333 = vmatmul.mubr.bf16.gmra.mrb[0].mxu0 %v1303
  %v2334 = vpop.f32.mrb[0].mxu0
  %v2335 = vadd.f32 0.0, %v2334
  %v2336 = vpop.f32.mrb[0].mxu0
  %v2337 = vpop.f32.mrb[0].mxu0
  %v2338 = vadd.f32 0.0, %v2337
  %v2339 = vpop.f32.mrb[0].mxu0
  %2340 = vmatprep.mubr.bf16.mxu0 0
  %2341 = vmatmul.mubr.bf16.gmra.mrb[0].mxu0 %v1306
  %v2342 = vpop.f32.mrb[0].mxu0
  %v2343 = vadd.f32 0.0, %v2342
  %v2344 = vpop.f32.mrb[0].mxu0
  %v2345 = vpop.f32.mrb[0].mxu0
  %v2346 = vadd.f32 0.0, %v2345
  %v2347 = vpop.f32.mrb[0].mxu0
  %2348 = vmatprep.mubr.bf16.mxu0 0
  %2349 = vmatmul.mubr.bf16.gmra.mrb[0].mxu0 %v1309
  %v2350 = vpop.f32.mrb[0].mxu0
  %v2351 = vadd.f32 0.0, %v2350
  %v2352 = vpop.f32.mrb[0].mxu0
  %v2353 = vpop.f32.mrb[0].mxu0
  %v2354 = vadd.f32 0.0, %v2353
  %v2355 = vpop.f32.mrb[0].mxu0
  %2356 = vmatprep.mubr.bf16.mxu0 0
  %2357 = vmatmul.mubr.bf16.gmra.mrb[0].mxu0 %v1312
  %v2358 = vpop.f32.mrb[0].mxu0
  %v2359 = vadd.f32 0.0, %v2358
  %v2360 = vpop.f32.mrb[0].mxu0
  %v2361 = vpop.f32.mrb[0].mxu0
  %v2362 = vadd.f32 0.0, %v2361
  %v2363 = vpop.f32.mrb[0].mxu0
  %2364 = vmatprep.mubr.bf16.mxu0 0
  %2365 = vmatmul.mubr.bf16.gmra.mrb[0].mxu0 %v1315
  %v2366 = vpop.f32.mrb[0].mxu0
  %v2367 = vadd.f32 0.0, %v2366
  %v2368 = vpop.f32.mrb[0].mxu0
  %v2369 = vpop.f32.mrb[0].mxu0
  %v2370 = vadd.f32 0.0, %v2369
  %v2371 = vpop.f32.mrb[0].mxu0
  %2372 = vmatprep.mubr.bf16.mxu0 0
  %2373 = vmatmul.mubr.bf16.gmra.mrb[0].mxu0 %v1318
  %v2374 = vpop.f32.mrb[0].mxu0
  %v2375 = vadd.f32 0.0, %v2374
  %v2376 = vpop.f32.mrb[0].mxu0
  %v2377 = vpop.f32.mrb[0].mxu0
  %v2378 = vadd.f32 0.0, %v2377
  %v2379 = vpop.f32.mrb[0].mxu0
  %2380 = vdwg.mxu0
  %v2389 = vunpack.c.l.b16 %v15
  %v2390 = vunpack.c.l.b16 %v16
  %v2391 = vunpack.c.l.b16 %v17
  %v2392 = vunpack.c.l.b16 %v18
  %v2393 = vunpack.c.l.b16 %v143
  %v2394 = vunpack.c.l.b16 %v144
  %v2395 = vunpack.c.l.b16 %v145
  %v2396 = vunpack.c.l.b16 %v146
  %v2397 = vpack.c.b16 %v2390, %v2389
  %v2398 = vpack.c.b16 %v2392, %v2391
  %v2399 = vpack.c.b16 %v2394, %v2393
  %v2400 = vpack.c.b16 %v2396, %v2395
  %v2404 = vunpack.c.l.b16 %v271
  %v2405 = vunpack.c.l.b16 %v272
  %v2406 = vunpack.c.l.b16 %v273
  %v2407 = vpack.c.b16 %v2405, %v2404
  %v2408 = vpack.c.b16 %v2406, %v2406
  %v2411 = vsel %vm935, %v2397, 0
  %v2414 = vsel %vm935, %v2398, 0
  %v2417 = vsel %vm935, %v2399, 0
  %v2420 = vsel %vm935, %v2400, 0
  %v2423 = vsel %vm1320, %v2408, 0
  %2425 = vmatprep.subr.bf16.mxu0 0
  %2426 = vmatpush1.bf16.msra.mxu0 %v2407
  %2427 = vmatprep.subr.bf16.mxu0 0
  %2428 = vmatpush1.bf16.msra.mxu0 %v2423
  %2429 = vmatprep.subr.bf16.mxu0 0
  %2430 = vmatpush1.bf16.msra.mxu0 0
  %2431 = vmatprep.subr.bf16.mxu0 0
  %2432 = vmatpush1.bf16.msra.mxu0 0
  %2433 = vmatprep.subr.bf16.mxu0 0
  %2434 = vmatpush1.bf16.msra.mxu0 0
  %2435 = vmatprep.subr.bf16.mxu0 0
  %2436 = vmatpush1.bf16.msra.mxu0 0
  %2437 = vmatprep.subr.bf16.mxu0 0
  %2438 = vmatpush1.bf16.msra.mxu0 0
  %2439 = vmatprep.subr.bf16.mxu0 0
  %2440 = vmatpush1.bf16.msra.mxu0 0
  %2441 = vmatprep.subr.bf16.mxu0 0
  %2442 = vmatpush1.bf16.msra.mxu0 0
  %2443 = vmatprep.subr.bf16.mxu0 0
  %2444 = vmatpush1.bf16.msra.mxu0 0
  %2445 = vmatprep.subr.bf16.mxu0 0
  %2446 = vmatpush1.bf16.msra.mxu0 0
  %2447 = vmatprep.subr.bf16.mxu0 0
  %2448 = vmatpush1.bf16.msra.mxu0 0
  %2449 = vmatprep.subr.bf16.mxu0 0
  %2450 = vmatpush1.bf16.msra.mxu0 0
  %2451 = vmatprep.subr.bf16.mxu0 0
  %2452 = vmatpush1.bf16.msra.mxu0 0
  %2453 = vmatprep.subr.bf16.mxu0 0
  %2454 = vmatpush1.bf16.msra.mxu0 0
  %2455 = vmatprep.subr.bf16.mxu0 0
  %2456 = vmatpush1.bf16.msra.mxu0 0
  %2457 = vmatprep.mubr.bf16.mxu0 0
  %2458 = vmatmul.mubr.bf16.gmra.mrb[0].mxu0 %v2411
  %v2459 = vpop.f32.mrb[0].mxu0
  %v2460 = vadd.f32 %v1359, %v2459
  %v2461 = vpop.f32.mrb[0].mxu0
  %v2462 = vpop.f32.mrb[0].mxu0
  %v2463 = vadd.f32 %v1362, %v2462
  %v2464 = vpop.f32.mrb[0].mxu0
  %2465 = vmatprep.mubr.bf16.mxu0 0
  %2466 = vmatmul.mubr.bf16.gmra.mrb[0].mxu0 %v2414
  %v2467 = vpop.f32.mrb[0].mxu0
  %v2468 = vadd.f32 %v1367, %v2467
  %v2469 = vpop.f32.mrb[0].mxu0
  %v2470 = vpop.f32.mrb[0].mxu0
  %v2471 = vadd.f32 %v1370, %v2470
  %v2472 = vpop.f32.mrb[0].mxu0
  %2473 = vmatprep.mubr.bf16.mxu0 0
  %2474 = vmatmul.mubr.bf16.gmra.mrb[0].mxu0 %v937
  %v2475 = vpop.f32.mrb[0].mxu0
  %v2476 = vadd.f32 %v1375, %v2475
  %v2477 = vpop.f32.mrb[0].mxu0
  %v2478 = vpop.f32.mrb[0].mxu0
  %v2479 = vadd.f32 %v1378, %v2478
  %v2480 = vpop.f32.mrb[0].mxu0
  %2481 = vmatprep.mubr.bf16.mxu0 0
  %2482 = vmatmul.mubr.bf16.gmra.mrb[0].mxu0 %v940
  %v2483 = vpop.f32.mrb[0].mxu0
  %v2484 = vadd.f32 %v1383, %v2483
  %v2485 = vpop.f32.mrb[0].mxu0
  %v2486 = vpop.f32.mrb[0].mxu0
  %v2487 = vadd.f32 %v1386, %v2486
  %v2488 = vpop.f32.mrb[0].mxu0
  %2489 = vmatprep.mubr.bf16.mxu0 0
  %2490 = vmatmul.mubr.bf16.gmra.mrb[0].mxu0 %v943
  %v2491 = vpop.f32.mrb[0].mxu0
  %v2492 = vadd.f32 %v1391, %v2491
  %v2493 = vpop.f32.mrb[0].mxu0
  %v2494 = vpop.f32.mrb[0].mxu0
  %v2495 = vadd.f32 %v1394, %v2494
  %v2496 = vpop.f32.mrb[0].mxu0
  %2497 = vmatprep.mubr.bf16.mxu0 0
  %2498 = vmatmul.mubr.bf16.gmra.mrb[0].mxu0 %v946
  %v2499 = vpop.f32.mrb[0].mxu0
  %v2500 = vadd.f32 %v1399, %v2499
  %v2501 = vpop.f32.mrb[0].mxu0
  %v2502 = vpop.f32.mrb[0].mxu0
  %v2503 = vadd.f32 %v1402, %v2502
  %v2504 = vpop.f32.mrb[0].mxu0
  %2505 = vmatprep.mubr.bf16.mxu0 0
  %2506 = vmatmul.mubr.bf16.gmra.mrb[0].mxu0 %v949
  %v2507 = vpop.f32.mrb[0].mxu0
  %v2508 = vadd.f32 %v1407, %v2507
  %v2509 = vpop.f32.mrb[0].mxu0
  %v2510 = vpop.f32.mrb[0].mxu0
  %v2511 = vadd.f32 %v1410, %v2510
  %v2512 = vpop.f32.mrb[0].mxu0
  %2513 = vmatprep.mubr.bf16.mxu0 0
  %2514 = vmatmul.mubr.bf16.gmra.mrb[0].mxu0 %v952
  %v2515 = vpop.f32.mrb[0].mxu0
  %v2516 = vadd.f32 %v1415, %v2515
  %v2517 = vpop.f32.mrb[0].mxu0
  %v2518 = vpop.f32.mrb[0].mxu0
  %v2519 = vadd.f32 %v1418, %v2518
  %v2520 = vpop.f32.mrb[0].mxu0
  %2521 = vmatprep.mubr.bf16.mxu0 0
  %2522 = vmatmul.mubr.bf16.gmra.mrb[0].mxu0 %v955
  %v2523 = vpop.f32.mrb[0].mxu0
  %v2524 = vadd.f32 %v1423, %v2523
  %v2525 = vpop.f32.mrb[0].mxu0
  %v2526 = vpop.f32.mrb[0].mxu0
  %v2527 = vadd.f32 %v1426, %v2526
  %v2528 = vpop.f32.mrb[0].mxu0
  %2529 = vmatprep.mubr.bf16.mxu0 0
  %2530 = vmatmul.mubr.bf16.gmra.mrb[0].mxu0 %v958
  %v2531 = vpop.f32.mrb[0].mxu0
  %v2532 = vadd.f32 %v1431, %v2531
  %v2533 = vpop.f32.mrb[0].mxu0
  %v2534 = vpop.f32.mrb[0].mxu0
  %v2535 = vadd.f32 %v1434, %v2534
  %v2536 = vpop.f32.mrb[0].mxu0
  %2537 = vmatprep.mubr.bf16.mxu0 0
  %2538 = vmatmul.mubr.bf16.gmra.mrb[0].mxu0 %v961
  %v2539 = vpop.f32.mrb[0].mxu0
  %v2540 = vadd.f32 %v1439, %v2539
  %v2541 = vpop.f32.mrb[0].mxu0
  %v2542 = vpop.f32.mrb[0].mxu0
  %v2543 = vadd.f32 %v1442, %v2542
  %v2544 = vpop.f32.mrb[0].mxu0
  %2545 = vmatprep.mubr.bf16.mxu0 0
  %2546 = vmatmul.mubr.bf16.gmra.mrb[0].mxu0 %v964
  %v2547 = vpop.f32.mrb[0].mxu0
  %v2548 = vadd.f32 %v1447, %v2547
  %v2549 = vpop.f32.mrb[0].mxu0
  %v2550 = vpop.f32.mrb[0].mxu0
  %v2551 = vadd.f32 %v1450, %v2550
  %v2552 = vpop.f32.mrb[0].mxu0
  %2553 = vmatprep.mubr.bf16.mxu0 0
  %2554 = vmatmul.mubr.bf16.gmra.mrb[0].mxu0 %v967
  %v2555 = vpop.f32.mrb[0].mxu0
  %v2556 = vadd.f32 %v1455, %v2555
  %v2557 = vpop.f32.mrb[0].mxu0
  %v2558 = vpop.f32.mrb[0].mxu0
  %v2559 = vadd.f32 %v1458, %v2558
  %v2560 = vpop.f32.mrb[0].mxu0
  %2561 = vmatprep.mubr.bf16.mxu0 0
  %2562 = vmatmul.mubr.bf16.gmra.mrb[0].mxu0 %v970
  %v2563 = vpop.f32.mrb[0].mxu0
  %v2564 = vadd.f32 %v1463, %v2563
  %v2565 = vpop.f32.mrb[0].mxu0
  %v2566 = vpop.f32.mrb[0].mxu0
  %v2567 = vadd.f32 %v1466, %v2566
  %v2568 = vpop.f32.mrb[0].mxu0
  %2569 = vmatprep.mubr.bf16.mxu0 0
  %2570 = vmatmul.mubr.bf16.gmra.mrb[0].mxu0 %v973
  %v2571 = vpop.f32.mrb[0].mxu0
  %v2572 = vadd.f32 %v1471, %v2571
  %v2573 = vpop.f32.mrb[0].mxu0
  %v2574 = vpop.f32.mrb[0].mxu0
  %v2575 = vadd.f32 %v1474, %v2574
  %v2576 = vpop.f32.mrb[0].mxu0
  %2577 = vmatprep.mubr.bf16.mxu0 0
  %2578 = vmatmul.mubr.bf16.gmra.mrb[0].mxu0 %v976
  %v2579 = vpop.f32.mrb[0].mxu0
  %v2580 = vadd.f32 %v1479, %v2579
  %v2581 = vpop.f32.mrb[0].mxu0
  %v2582 = vpop.f32.mrb[0].mxu0
  %v2583 = vadd.f32 %v1482, %v2582
  %v2584 = vpop.f32.mrb[0].mxu0
  %2585 = vmatprep.mubr.bf16.mxu0 0
  %2586 = vmatmul.mubr.bf16.gmra.mrb[0].mxu0 %v979
  %v2587 = vpop.f32.mrb[0].mxu0
  %v2588 = vadd.f32 %v1487, %v2587
  %v2589 = vpop.f32.mrb[0].mxu0
  %v2590 = vpop.f32.mrb[0].mxu0
  %v2591 = vadd.f32 %v1490, %v2590
  %v2592 = vpop.f32.mrb[0].mxu0
  %2593 = vmatprep.mubr.bf16.mxu0 0
  %2594 = vmatmul.mubr.bf16.gmra.mrb[0].mxu0 %v982
  %v2595 = vpop.f32.mrb[0].mxu0
  %v2596 = vadd.f32 %v1495, %v2595
  %v2597 = vpop.f32.mrb[0].mxu0
  %v2598 = vpop.f32.mrb[0].mxu0
  %v2599 = vadd.f32 %v1498, %v2598
  %v2600 = vpop.f32.mrb[0].mxu0
  %2601 = vmatprep.mubr.bf16.mxu0 0
  %2602 = vmatmul.mubr.bf16.gmra.mrb[0].mxu0 %v985
  %v2603 = vpop.f32.mrb[0].mxu0
  %v2604 = vadd.f32 %v1503, %v2603
  %v2605 = vpop.f32.mrb[0].mxu0
  %v2606 = vpop.f32.mrb[0].mxu0
  %v2607 = vadd.f32 %v1506, %v2606
  %v2608 = vpop.f32.mrb[0].mxu0
  %2609 = vmatprep.mubr.bf16.mxu0 0
  %2610 = vmatmul.mubr.bf16.gmra.mrb[0].mxu0 %v988
  %v2611 = vpop.f32.mrb[0].mxu0
  %v2612 = vadd.f32 %v1511, %v2611
  %v2613 = vpop.f32.mrb[0].mxu0
  %v2614 = vpop.f32.mrb[0].mxu0
  %v2615 = vadd.f32 %v1514, %v2614
  %v2616 = vpop.f32.mrb[0].mxu0
  %2617 = vmatprep.mubr.bf16.mxu0 0
  %2618 = vmatmul.mubr.bf16.gmra.mrb[0].mxu0 %v991
  %v2619 = vpop.f32.mrb[0].mxu0
  %v2620 = vadd.f32 %v1519, %v2619
  %v2621 = vpop.f32.mrb[0].mxu0
  %v2622 = vpop.f32.mrb[0].mxu0
  %v2623 = vadd.f32 %v1522, %v2622
  %v2624 = vpop.f32.mrb[0].mxu0
  %2625 = vmatprep.mubr.bf16.mxu0 0
  %2626 = vmatmul.mubr.bf16.gmra.mrb[0].mxu0 %v994
  %v2627 = vpop.f32.mrb[0].mxu0
  %v2628 = vadd.f32 %v1527, %v2627
  %v2629 = vpop.f32.mrb[0].mxu0
  %v2630 = vpop.f32.mrb[0].mxu0
  %v2631 = vadd.f32 %v1530, %v2630
  %v2632 = vpop.f32.mrb[0].mxu0
  %2633 = vmatprep.mubr.bf16.mxu0 0
  %2634 = vmatmul.mubr.bf16.gmra.mrb[0].mxu0 %v997
  %v2635 = vpop.f32.mrb[0].mxu0
  %v2636 = vadd.f32 %v1535, %v2635
  %v2637 = vpop.f32.mrb[0].mxu0
  %v2638 = vpop.f32.mrb[0].mxu0
  %v2639 = vadd.f32 %v1538, %v2638
  %v2640 = vpop.f32.mrb[0].mxu0
  %2641 = vmatprep.mubr.bf16.mxu0 0
  %2642 = vmatmul.mubr.bf16.gmra.mrb[0].mxu0 %v1000
  %v2643 = vpop.f32.mrb[0].mxu0
  %v2644 = vadd.f32 %v1543, %v2643
  %v2645 = vpop.f32.mrb[0].mxu0
  %v2646 = vpop.f32.mrb[0].mxu0
  %v2647 = vadd.f32 %v1546, %v2646
  %v2648 = vpop.f32.mrb[0].mxu0
  %2649 = vmatprep.mubr.bf16.mxu0 0
  %2650 = vmatmul.mubr.bf16.gmra.mrb[0].mxu0 %v1003
  %v2651 = vpop.f32.mrb[0].mxu0
  %v2652 = vadd.f32 %v1551, %v2651
  %v2653 = vpop.f32.mrb[0].mxu0
  %v2654 = vpop.f32.mrb[0].mxu0
  %v2655 = vadd.f32 %v1554, %v2654
  %v2656 = vpop.f32.mrb[0].mxu0
  %2657 = vmatprep.mubr.bf16.mxu0 0
  %2658 = vmatmul.mubr.bf16.gmra.mrb[0].mxu0 %v1006
  %v2659 = vpop.f32.mrb[0].mxu0
  %v2660 = vadd.f32 %v1559, %v2659
  %v2661 = vpop.f32.mrb[0].mxu0
  %v2662 = vpop.f32.mrb[0].mxu0
  %v2663 = vadd.f32 %v1562, %v2662
  %v2664 = vpop.f32.mrb[0].mxu0
  %2665 = vmatprep.mubr.bf16.mxu0 0
  %2666 = vmatmul.mubr.bf16.gmra.mrb[0].mxu0 %v1009
  %v2667 = vpop.f32.mrb[0].mxu0
  %v2668 = vadd.f32 %v1567, %v2667
  %v2669 = vpop.f32.mrb[0].mxu0
  %v2670 = vpop.f32.mrb[0].mxu0
  %v2671 = vadd.f32 %v1570, %v2670
  %v2672 = vpop.f32.mrb[0].mxu0
  %2673 = vmatprep.mubr.bf16.mxu0 0
  %2674 = vmatmul.mubr.bf16.gmra.mrb[0].mxu0 %v1012
  %v2675 = vpop.f32.mrb[0].mxu0
  %v2676 = vadd.f32 %v1575, %v2675
  %v2677 = vpop.f32.mrb[0].mxu0
  %v2678 = vpop.f32.mrb[0].mxu0
  %v2679 = vadd.f32 %v1578, %v2678
  %v2680 = vpop.f32.mrb[0].mxu0
  %2681 = vmatprep.mubr.bf16.mxu0 0
  %2682 = vmatmul.mubr.bf16.gmra.mrb[0].mxu0 %v1015
  %v2683 = vpop.f32.mrb[0].mxu0
  %v2684 = vadd.f32 %v1583, %v2683
  %v2685 = vpop.f32.mrb[0].mxu0
  %v2686 = vpop.f32.mrb[0].mxu0
  %v2687 = vadd.f32 %v1586, %v2686
  %v2688 = vpop.f32.mrb[0].mxu0
  %2689 = vmatprep.mubr.bf16.mxu0 0
  %2690 = vmatmul.mubr.bf16.gmra.mrb[0].mxu0 %v1018
  %v2691 = vpop.f32.mrb[0].mxu0
  %v2692 = vadd.f32 %v1591, %v2691
  %v2693 = vpop.f32.mrb[0].mxu0
  %v2694 = vpop.f32.mrb[0].mxu0
  %v2695 = vadd.f32 %v1594, %v2694
  %v2696 = vpop.f32.mrb[0].mxu0
  %2697 = vmatprep.mubr.bf16.mxu0 0
  %2698 = vmatmul.mubr.bf16.gmra.mrb[0].mxu0 %v1021
  %v2699 = vpop.f32.mrb[0].mxu0
  %v2700 = vadd.f32 %v1599, %v2699
  %v2701 = vpop.f32.mrb[0].mxu0
  %v2702 = vpop.f32.mrb[0].mxu0
  %v2703 = vadd.f32 %v1602, %v2702
  %v2704 = vpop.f32.mrb[0].mxu0
  %2705 = vmatprep.mubr.bf16.mxu0 0
  %2706 = vmatmul.mubr.bf16.gmra.mrb[0].mxu0 %v1024
  %v2707 = vpop.f32.mrb[0].mxu0
  %v2708 = vadd.f32 %v1607, %v2707
  %v2709 = vpop.f32.mrb[0].mxu0
  %v2710 = vpop.f32.mrb[0].mxu0
  %v2711 = vadd.f32 %v1610, %v2710
  %v2712 = vpop.f32.mrb[0].mxu0
  %2713 = vmatprep.mubr.bf16.mxu0 0
  %2714 = vmatmul.mubr.bf16.gmra.mrb[0].mxu0 %v1027
  %v2715 = vpop.f32.mrb[0].mxu0
  %v2716 = vadd.f32 %v1615, %v2715
  %v2717 = vpop.f32.mrb[0].mxu0
  %v2718 = vpop.f32.mrb[0].mxu0
  %v2719 = vadd.f32 %v1618, %v2718
  %v2720 = vpop.f32.mrb[0].mxu0
  %2721 = vmatprep.mubr.bf16.mxu0 0
  %2722 = vmatmul.mubr.bf16.gmra.mrb[0].mxu0 %v1030
  %v2723 = vpop.f32.mrb[0].mxu0
  %v2724 = vadd.f32 %v1623, %v2723
  %v2725 = vpop.f32.mrb[0].mxu0
  %v2726 = vpop.f32.mrb[0].mxu0
  %v2727 = vadd.f32 %v1626, %v2726
  %v2728 = vpop.f32.mrb[0].mxu0
  %2729 = vmatprep.mubr.bf16.mxu0 0
  %2730 = vmatmul.mubr.bf16.gmra.mrb[0].mxu0 %v1033
  %v2731 = vpop.f32.mrb[0].mxu0
  %v2732 = vadd.f32 %v1631, %v2731
  %v2733 = vpop.f32.mrb[0].mxu0
  %v2734 = vpop.f32.mrb[0].mxu0
  %v2735 = vadd.f32 %v1634, %v2734
  %v2736 = vpop.f32.mrb[0].mxu0
  %2737 = vmatprep.mubr.bf16.mxu0 0
  %2738 = vmatmul.mubr.bf16.gmra.mrb[0].mxu0 %v1036
  %v2739 = vpop.f32.mrb[0].mxu0
  %v2740 = vadd.f32 %v1639, %v2739
  %v2741 = vpop.f32.mrb[0].mxu0
  %v2742 = vpop.f32.mrb[0].mxu0
  %v2743 = vadd.f32 %v1642, %v2742
  %v2744 = vpop.f32.mrb[0].mxu0
  %2745 = vmatprep.mubr.bf16.mxu0 0
  %2746 = vmatmul.mubr.bf16.gmra.mrb[0].mxu0 %v1039
  %v2747 = vpop.f32.mrb[0].mxu0
  %v2748 = vadd.f32 %v1647, %v2747
  %v2749 = vpop.f32.mrb[0].mxu0
  %v2750 = vpop.f32.mrb[0].mxu0
  %v2751 = vadd.f32 %v1650, %v2750
  %v2752 = vpop.f32.mrb[0].mxu0
  %2753 = vmatprep.mubr.bf16.mxu0 0
  %2754 = vmatmul.mubr.bf16.gmra.mrb[0].mxu0 %v1042
  %v2755 = vpop.f32.mrb[0].mxu0
  %v2756 = vadd.f32 %v1655, %v2755
  %v2757 = vpop.f32.mrb[0].mxu0
  %v2758 = vpop.f32.mrb[0].mxu0
  %v2759 = vadd.f32 %v1658, %v2758
  %v2760 = vpop.f32.mrb[0].mxu0
  %2761 = vmatprep.mubr.bf16.mxu0 0
  %2762 = vmatmul.mubr.bf16.gmra.mrb[0].mxu0 %v1045
  %v2763 = vpop.f32.mrb[0].mxu0
  %v2764 = vadd.f32 %v1663, %v2763
  %v2765 = vpop.f32.mrb[0].mxu0
  %v2766 = vpop.f32.mrb[0].mxu0
  %v2767 = vadd.f32 %v1666, %v2766
  %v2768 = vpop.f32.mrb[0].mxu0
  %2769 = vmatprep.mubr.bf16.mxu0 0
  %2770 = vmatmul.mubr.bf16.gmra.mrb[0].mxu0 %v1048
  %v2771 = vpop.f32.mrb[0].mxu0
  %v2772 = vadd.f32 %v1671, %v2771
  %v2773 = vpop.f32.mrb[0].mxu0
  %v2774 = vpop.f32.mrb[0].mxu0
  %v2775 = vadd.f32 %v1674, %v2774
  %v2776 = vpop.f32.mrb[0].mxu0
  %2777 = vmatprep.mubr.bf16.mxu0 0
  %2778 = vmatmul.mubr.bf16.gmra.mrb[0].mxu0 %v1051
  %v2779 = vpop.f32.mrb[0].mxu0
  %v2780 = vadd.f32 %v1679, %v2779
  %v2781 = vpop.f32.mrb[0].mxu0
  %v2782 = vpop.f32.mrb[0].mxu0
  %v2783 = vadd.f32 %v1682, %v2782
  %v2784 = vpop.f32.mrb[0].mxu0
  %2785 = vmatprep.mubr.bf16.mxu0 0
  %2786 = vmatmul.mubr.bf16.gmra.mrb[0].mxu0 %v1054
  %v2787 = vpop.f32.mrb[0].mxu0
  %v2788 = vadd.f32 %v1687, %v2787
  %v2789 = vpop.f32.mrb[0].mxu0
  %v2790 = vpop.f32.mrb[0].mxu0
  %v2791 = vadd.f32 %v1690, %v2790
  %v2792 = vpop.f32.mrb[0].mxu0
  %2793 = vmatprep.mubr.bf16.mxu0 0
  %2794 = vmatmul.mubr.bf16.gmra.mrb[0].mxu0 %v1057
  %v2795 = vpop.f32.mrb[0].mxu0
  %v2796 = vadd.f32 %v1695, %v2795
  %v2797 = vpop.f32.mrb[0].mxu0
  %v2798 = vpop.f32.mrb[0].mxu0
  %v2799 = vadd.f32 %v1698, %v2798
  %v2800 = vpop.f32.mrb[0].mxu0
  %2801 = vmatprep.mubr.bf16.mxu0 0
  %2802 = vmatmul.mubr.bf16.gmra.mrb[0].mxu0 %v1060
  %v2803 = vpop.f32.mrb[0].mxu0
  %v2804 = vadd.f32 %v1703, %v2803
  %v2805 = vpop.f32.mrb[0].mxu0
  %v2806 = vpop.f32.mrb[0].mxu0
  %v2807 = vadd.f32 %v1706, %v2806
  %v2808 = vpop.f32.mrb[0].mxu0
  %2809 = vmatprep.mubr.bf16.mxu0 0
  %2810 = vmatmul.mubr.bf16.gmra.mrb[0].mxu0 %v1063
  %v2811 = vpop.f32.mrb[0].mxu0
  %v2812 = vadd.f32 %v1711, %v2811
  %v2813 = vpop.f32.mrb[0].mxu0
  %v2814 = vpop.f32.mrb[0].mxu0
  %v2815 = vadd.f32 %v1714, %v2814
  %v2816 = vpop.f32.mrb[0].mxu0
  %2817 = vmatprep.mubr.bf16.mxu0 0
  %2818 = vmatmul.mubr.bf16.gmra.mrb[0].mxu0 %v1066
  %v2819 = vpop.f32.mrb[0].mxu0
  %v2820 = vadd.f32 %v1719, %v2819
  %v2821 = vpop.f32.mrb[0].mxu0
  %v2822 = vpop.f32.mrb[0].mxu0
  %v2823 = vadd.f32 %v1722, %v2822
  %v2824 = vpop.f32.mrb[0].mxu0
  %2825 = vmatprep.mubr.bf16.mxu0 0
  %2826 = vmatmul.mubr.bf16.gmra.mrb[0].mxu0 %v1069
  %v2827 = vpop.f32.mrb[0].mxu0
  %v2828 = vadd.f32 %v1727, %v2827
  %v2829 = vpop.f32.mrb[0].mxu0
  %v2830 = vpop.f32.mrb[0].mxu0
  %v2831 = vadd.f32 %v1730, %v2830
  %v2832 = vpop.f32.mrb[0].mxu0
  %2833 = vmatprep.mubr.bf16.mxu0 0
  %2834 = vmatmul.mubr.bf16.gmra.mrb[0].mxu0 %v1072
  %v2835 = vpop.f32.mrb[0].mxu0
  %v2836 = vadd.f32 %v1735, %v2835
  %v2837 = vpop.f32.mrb[0].mxu0
  %v2838 = vpop.f32.mrb[0].mxu0
  %v2839 = vadd.f32 %v1738, %v2838
  %v2840 = vpop.f32.mrb[0].mxu0
  %2841 = vmatprep.mubr.bf16.mxu0 0
  %2842 = vmatmul.mubr.bf16.gmra.mrb[0].mxu0 %v1075
  %v2843 = vpop.f32.mrb[0].mxu0
  %v2844 = vadd.f32 %v1743, %v2843
  %v2845 = vpop.f32.mrb[0].mxu0
  %v2846 = vpop.f32.mrb[0].mxu0
  %v2847 = vadd.f32 %v1746, %v2846
  %v2848 = vpop.f32.mrb[0].mxu0
  %2849 = vmatprep.mubr.bf16.mxu0 0
  %2850 = vmatmul.mubr.bf16.gmra.mrb[0].mxu0 %v1078
  %v2851 = vpop.f32.mrb[0].mxu0
  %v2852 = vadd.f32 %v1751, %v2851
  %v2853 = vpop.f32.mrb[0].mxu0
  %v2854 = vpop.f32.mrb[0].mxu0
  %v2855 = vadd.f32 %v1754, %v2854
  %v2856 = vpop.f32.mrb[0].mxu0
  %2857 = vmatprep.mubr.bf16.mxu0 0
  %2858 = vmatmul.mubr.bf16.gmra.mrb[0].mxu0 %v1081
  %v2859 = vpop.f32.mrb[0].mxu0
  %v2860 = vadd.f32 %v1759, %v2859
  %v2861 = vpop.f32.mrb[0].mxu0
  %v2862 = vpop.f32.mrb[0].mxu0
  %v2863 = vadd.f32 %v1762, %v2862
  %v2864 = vpop.f32.mrb[0].mxu0
  %2865 = vmatprep.mubr.bf16.mxu0 0
  %2866 = vmatmul.mubr.bf16.gmra.mrb[0].mxu0 %v1084
  %v2867 = vpop.f32.mrb[0].mxu0
  %v2868 = vadd.f32 %v1767, %v2867
  %v2869 = vpop.f32.mrb[0].mxu0
  %v2870 = vpop.f32.mrb[0].mxu0
  %v2871 = vadd.f32 %v1770, %v2870
  %v2872 = vpop.f32.mrb[0].mxu0
  %2873 = vmatprep.mubr.bf16.mxu0 0
  %2874 = vmatmul.mubr.bf16.gmra.mrb[0].mxu0 %v1087
  %v2875 = vpop.f32.mrb[0].mxu0
  %v2876 = vadd.f32 %v1775, %v2875
  %v2877 = vpop.f32.mrb[0].mxu0
  %v2878 = vpop.f32.mrb[0].mxu0
  %v2879 = vadd.f32 %v1778, %v2878
  %v2880 = vpop.f32.mrb[0].mxu0
  %2881 = vmatprep.mubr.bf16.mxu0 0
  %2882 = vmatmul.mubr.bf16.gmra.mrb[0].mxu0 %v1090
  %v2883 = vpop.f32.mrb[0].mxu0
  %v2884 = vadd.f32 %v1783, %v2883
  %v2885 = vpop.f32.mrb[0].mxu0
  %v2886 = vpop.f32.mrb[0].mxu0
  %v2887 = vadd.f32 %v1786, %v2886
  %v2888 = vpop.f32.mrb[0].mxu0
  %2889 = vmatprep.mubr.bf16.mxu0 0
  %2890 = vmatmul.mubr.bf16.gmra.mrb[0].mxu0 %v1093
  %v2891 = vpop.f32.mrb[0].mxu0
  %v2892 = vadd.f32 %v1791, %v2891
  %v2893 = vpop.f32.mrb[0].mxu0
  %v2894 = vpop.f32.mrb[0].mxu0
  %v2895 = vadd.f32 %v1794, %v2894
  %v2896 = vpop.f32.mrb[0].mxu0
  %2897 = vmatprep.mubr.bf16.mxu0 0
  %2898 = vmatmul.mubr.bf16.gmra.mrb[0].mxu0 %v1096
  %v2899 = vpop.f32.mrb[0].mxu0
  %v2900 = vadd.f32 %v1799, %v2899
  %v2901 = vpop.f32.mrb[0].mxu0
  %v2902 = vpop.f32.mrb[0].mxu0
  %v2903 = vadd.f32 %v1802, %v2902
  %v2904 = vpop.f32.mrb[0].mxu0
  %2905 = vmatprep.mubr.bf16.mxu0 0
  %2906 = vmatmul.mubr.bf16.gmra.mrb[0].mxu0 %v1099
  %v2907 = vpop.f32.mrb[0].mxu0
  %v2908 = vadd.f32 %v1807, %v2907
  %v2909 = vpop.f32.mrb[0].mxu0
  %v2910 = vpop.f32.mrb[0].mxu0
  %v2911 = vadd.f32 %v1810, %v2910
  %v2912 = vpop.f32.mrb[0].mxu0
  %2913 = vmatprep.mubr.bf16.mxu0 0
  %2914 = vmatmul.mubr.bf16.gmra.mrb[0].mxu0 %v1102
  %v2915 = vpop.f32.mrb[0].mxu0
  %v2916 = vadd.f32 %v1815, %v2915
  %v2917 = vpop.f32.mrb[0].mxu0
  %v2918 = vpop.f32.mrb[0].mxu0
  %v2919 = vadd.f32 %v1818, %v2918
  %v2920 = vpop.f32.mrb[0].mxu0
  %2921 = vmatprep.mubr.bf16.mxu0 0
  %2922 = vmatmul.mubr.bf16.gmra.mrb[0].mxu0 %v1105
  %v2923 = vpop.f32.mrb[0].mxu0
  %v2924 = vadd.f32 %v1823, %v2923
  %v2925 = vpop.f32.mrb[0].mxu0
  %v2926 = vpop.f32.mrb[0].mxu0
  %v2927 = vadd.f32 %v1826, %v2926
  %v2928 = vpop.f32.mrb[0].mxu0
  %2929 = vmatprep.mubr.bf16.mxu0 0
  %2930 = vmatmul.mubr.bf16.gmra.mrb[0].mxu0 %v1108
  %v2931 = vpop.f32.mrb[0].mxu0
  %v2932 = vadd.f32 %v1831, %v2931
  %v2933 = vpop.f32.mrb[0].mxu0
  %v2934 = vpop.f32.mrb[0].mxu0
  %v2935 = vadd.f32 %v1834, %v2934
  %v2936 = vpop.f32.mrb[0].mxu0
  %2937 = vmatprep.mubr.bf16.mxu0 0
  %2938 = vmatmul.mubr.bf16.gmra.mrb[0].mxu0 %v1111
  %v2939 = vpop.f32.mrb[0].mxu0
  %v2940 = vadd.f32 %v1839, %v2939
  %v2941 = vpop.f32.mrb[0].mxu0
  %v2942 = vpop.f32.mrb[0].mxu0
  %v2943 = vadd.f32 %v1842, %v2942
  %v2944 = vpop.f32.mrb[0].mxu0
  %2945 = vmatprep.mubr.bf16.mxu0 0
  %2946 = vmatmul.mubr.bf16.gmra.mrb[0].mxu0 %v1114
  %v2947 = vpop.f32.mrb[0].mxu0
  %v2948 = vadd.f32 %v1847, %v2947
  %v2949 = vpop.f32.mrb[0].mxu0
  %v2950 = vpop.f32.mrb[0].mxu0
  %v2951 = vadd.f32 %v1850, %v2950
  %v2952 = vpop.f32.mrb[0].mxu0
  %2953 = vmatprep.mubr.bf16.mxu0 0
  %2954 = vmatmul.mubr.bf16.gmra.mrb[0].mxu0 %v1117
  %v2955 = vpop.f32.mrb[0].mxu0
  %v2956 = vadd.f32 %v1855, %v2955
  %v2957 = vpop.f32.mrb[0].mxu0
  %v2958 = vpop.f32.mrb[0].mxu0
  %v2959 = vadd.f32 %v1858, %v2958
  %v2960 = vpop.f32.mrb[0].mxu0
  %2961 = vmatprep.mubr.bf16.mxu0 0
  %2962 = vmatmul.mubr.bf16.gmra.mrb[0].mxu0 %v1120
  %v2963 = vpop.f32.mrb[0].mxu0
  %v2964 = vadd.f32 %v1863, %v2963
  %v2965 = vpop.f32.mrb[0].mxu0
  %v2966 = vpop.f32.mrb[0].mxu0
  %v2967 = vadd.f32 %v1866, %v2966
  %v2968 = vpop.f32.mrb[0].mxu0
  %2969 = vmatprep.mubr.bf16.mxu0 0
  %2970 = vmatmul.mubr.bf16.gmra.mrb[0].mxu0 %v2417
  %v2971 = vpop.f32.mrb[0].mxu0
  %v2972 = vadd.f32 %v1871, %v2971
  %v2973 = vpop.f32.mrb[0].mxu0
  %v2974 = vpop.f32.mrb[0].mxu0
  %v2975 = vadd.f32 %v1874, %v2974
  %v2976 = vpop.f32.mrb[0].mxu0
  %2977 = vmatprep.mubr.bf16.mxu0 0
  %2978 = vmatmul.mubr.bf16.gmra.mrb[0].mxu0 %v2420
  %v2979 = vpop.f32.mrb[0].mxu0
  %v2980 = vadd.f32 %v1879, %v2979
  %v2981 = vpop.f32.mrb[0].mxu0
  %v2982 = vpop.f32.mrb[0].mxu0
  %v2983 = vadd.f32 %v1882, %v2982
  %v2984 = vpop.f32.mrb[0].mxu0
  %2985 = vmatprep.mubr.bf16.mxu0 0
  %2986 = vmatmul.mubr.bf16.gmra.mrb[0].mxu0 %v1129
  %v2987 = vpop.f32.mrb[0].mxu0
  %v2988 = vadd.f32 %v1887, %v2987
  %v2989 = vpop.f32.mrb[0].mxu0
  %v2990 = vpop.f32.mrb[0].mxu0
  %v2991 = vadd.f32 %v1890, %v2990
  %v2992 = vpop.f32.mrb[0].mxu0
  %2993 = vmatprep.mubr.bf16.mxu0 0
  %2994 = vmatmul.mubr.bf16.gmra.mrb[0].mxu0 %v1132
  %v2995 = vpop.f32.mrb[0].mxu0
  %v2996 = vadd.f32 %v1895, %v2995
  %v2997 = vpop.f32.mrb[0].mxu0
  %v2998 = vpop.f32.mrb[0].mxu0
  %v2999 = vadd.f32 %v1898, %v2998
  %v3000 = vpop.f32.mrb[0].mxu0
  %3001 = vmatprep.mubr.bf16.mxu0 0
  %3002 = vmatmul.mubr.bf16.gmra.mrb[0].mxu0 %v1135
  %v3003 = vpop.f32.mrb[0].mxu0
  %v3004 = vadd.f32 %v1903, %v3003
  %v3005 = vpop.f32.mrb[0].mxu0
  %v3006 = vpop.f32.mrb[0].mxu0
  %v3007 = vadd.f32 %v1906, %v3006
  %v3008 = vpop.f32.mrb[0].mxu0
  %3009 = vmatprep.mubr.bf16.mxu0 0
  %3010 = vmatmul.mubr.bf16.gmra.mrb[0].mxu0 %v1138
  %v3011 = vpop.f32.mrb[0].mxu0
  %v3012 = vadd.f32 %v1911, %v3011
  %v3013 = vpop.f32.mrb[0].mxu0
  %v3014 = vpop.f32.mrb[0].mxu0
  %v3015 = vadd.f32 %v1914, %v3014
  %v3016 = vpop.f32.mrb[0].mxu0
  %3017 = vmatprep.mubr.bf16.mxu0 0
  %3018 = vmatmul.mubr.bf16.gmra.mrb[0].mxu0 %v1141
  %v3019 = vpop.f32.mrb[0].mxu0
  %v3020 = vadd.f32 %v1919, %v3019
  %v3021 = vpop.f32.mrb[0].mxu0
  %v3022 = vpop.f32.mrb[0].mxu0
  %v3023 = vadd.f32 %v1922, %v3022
  %v3024 = vpop.f32.mrb[0].mxu0
  %3025 = vmatprep.mubr.bf16.mxu0 0
  %3026 = vmatmul.mubr.bf16.gmra.mrb[0].mxu0 %v1144
  %v3027 = vpop.f32.mrb[0].mxu0
  %v3028 = vadd.f32 %v1927, %v3027
  %v3029 = vpop.f32.mrb[0].mxu0
  %v3030 = vpop.f32.mrb[0].mxu0
  %v3031 = vadd.f32 %v1930, %v3030
  %v3032 = vpop.f32.mrb[0].mxu0
  %3033 = vmatprep.mubr.bf16.mxu0 0
  %3034 = vmatmul.mubr.bf16.gmra.mrb[0].mxu0 %v1147
  %v3035 = vpop.f32.mrb[0].mxu0
  %v3036 = vadd.f32 %v1935, %v3035
  %v3037 = vpop.f32.mrb[0].mxu0
  %v3038 = vpop.f32.mrb[0].mxu0
  %v3039 = vadd.f32 %v1938, %v3038
  %v3040 = vpop.f32.mrb[0].mxu0
  %3041 = vmatprep.mubr.bf16.mxu0 0
  %3042 = vmatmul.mubr.bf16.gmra.mrb[0].mxu0 %v1150
  %v3043 = vpop.f32.mrb[0].mxu0
  %v3044 = vadd.f32 %v1943, %v3043
  %v3045 = vpop.f32.mrb[0].mxu0
  %v3046 = vpop.f32.mrb[0].mxu0
  %v3047 = vadd.f32 %v1946, %v3046
  %v3048 = vpop.f32.mrb[0].mxu0
  %3049 = vmatprep.mubr.bf16.mxu0 0
  %3050 = vmatmul.mubr.bf16.gmra.mrb[0].mxu0 %v1153
  %v3051 = vpop.f32.mrb[0].mxu0
  %v3052 = vadd.f32 %v1951, %v3051
  %v3053 = vpop.f32.mrb[0].mxu0
  %v3054 = vpop.f32.mrb[0].mxu0
  %v3055 = vadd.f32 %v1954, %v3054
  %v3056 = vpop.f32.mrb[0].mxu0
  %3057 = vmatprep.mubr.bf16.mxu0 0
  %3058 = vmatmul.mubr.bf16.gmra.mrb[0].mxu0 %v1156
  %v3059 = vpop.f32.mrb[0].mxu0
  %v3060 = vadd.f32 %v1959, %v3059
  %v3061 = vpop.f32.mrb[0].mxu0
  %v3062 = vpop.f32.mrb[0].mxu0
  %v3063 = vadd.f32 %v1962, %v3062
  %v3064 = vpop.f32.mrb[0].mxu0
  %3065 = vmatprep.mubr.bf16.mxu0 0
  %3066 = vmatmul.mubr.bf16.gmra.mrb[0].mxu0 %v1159
  %v3067 = vpop.f32.mrb[0].mxu0
  %v3068 = vadd.f32 %v1967, %v3067
  %v3069 = vpop.f32.mrb[0].mxu0
  %v3070 = vpop.f32.mrb[0].mxu0
  %v3071 = vadd.f32 %v1970, %v3070
  %v3072 = vpop.f32.mrb[0].mxu0
  %3073 = vmatprep.mubr.bf16.mxu0 0
  %3074 = vmatmul.mubr.bf16.gmra.mrb[0].mxu0 %v1162
  %v3075 = vpop.f32.mrb[0].mxu0
  %v3076 = vadd.f32 %v1975, %v3075
  %v3077 = vpop.f32.mrb[0].mxu0
  %v3078 = vpop.f32.mrb[0].mxu0
  %v3079 = vadd.f32 %v1978, %v3078
  %v3080 = vpop.f32.mrb[0].mxu0
  %3081 = vmatprep.mubr.bf16.mxu0 0
  %3082 = vmatmul.mubr.bf16.gmra.mrb[0].mxu0 %v1165
  %v3083 = vpop.f32.mrb[0].mxu0
  %v3084 = vadd.f32 %v1983, %v3083
  %v3085 = vpop.f32.mrb[0].mxu0
  %v3086 = vpop.f32.mrb[0].mxu0
  %v3087 = vadd.f32 %v1986, %v3086
  %v3088 = vpop.f32.mrb[0].mxu0
  %3089 = vmatprep.mubr.bf16.mxu0 0
  %3090 = vmatmul.mubr.bf16.gmra.mrb[0].mxu0 %v1168
  %v3091 = vpop.f32.mrb[0].mxu0
  %v3092 = vadd.f32 %v1991, %v3091
  %v3093 = vpop.f32.mrb[0].mxu0
  %v3094 = vpop.f32.mrb[0].mxu0
  %v3095 = vadd.f32 %v1994, %v3094
  %v3096 = vpop.f32.mrb[0].mxu0
  %3097 = vmatprep.mubr.bf16.mxu0 0
  %3098 = vmatmul.mubr.bf16.gmra.mrb[0].mxu0 %v1171
  %v3099 = vpop.f32.mrb[0].mxu0
  %v3100 = vadd.f32 %v1999, %v3099
  %v3101 = vpop.f32.mrb[0].mxu0
  %v3102 = vpop.f32.mrb[0].mxu0
  %v3103 = vadd.f32 %v2002, %v3102
  %v3104 = vpop.f32.mrb[0].mxu0
  %3105 = vmatprep.mubr.bf16.mxu0 0
  %3106 = vmatmul.mubr.bf16.gmra.mrb[0].mxu0 %v1174
  %v3107 = vpop.f32.mrb[0].mxu0
  %v3108 = vadd.f32 %v2007, %v3107
  %v3109 = vpop.f32.mrb[0].mxu0
  %v3110 = vpop.f32.mrb[0].mxu0
  %v3111 = vadd.f32 %v2010, %v3110
  %v3112 = vpop.f32.mrb[0].mxu0
  %3113 = vmatprep.mubr.bf16.mxu0 0
  %3114 = vmatmul.mubr.bf16.gmra.mrb[0].mxu0 %v1177
  %v3115 = vpop.f32.mrb[0].mxu0
  %v3116 = vadd.f32 %v2015, %v3115
  %v3117 = vpop.f32.mrb[0].mxu0
  %v3118 = vpop.f32.mrb[0].mxu0
  %v3119 = vadd.f32 %v2018, %v3118
  %v3120 = vpop.f32.mrb[0].mxu0
  %3121 = vmatprep.mubr.bf16.mxu0 0
  %3122 = vmatmul.mubr.bf16.gmra.mrb[0].mxu0 %v1180
  %v3123 = vpop.f32.mrb[0].mxu0
  %v3124 = vadd.f32 %v2023, %v3123
  %v3125 = vpop.f32.mrb[0].mxu0
  %v3126 = vpop.f32.mrb[0].mxu0
  %v3127 = vadd.f32 %v2026, %v3126
  %v3128 = vpop.f32.mrb[0].mxu0
  %3129 = vmatprep.mubr.bf16.mxu0 0
  %3130 = vmatmul.mubr.bf16.gmra.mrb[0].mxu0 %v1183
  %v3131 = vpop.f32.mrb[0].mxu0
  %v3132 = vadd.f32 %v2031, %v3131
  %v3133 = vpop.f32.mrb[0].mxu0
  %v3134 = vpop.f32.mrb[0].mxu0
  %v3135 = vadd.f32 %v2034, %v3134
  %v3136 = vpop.f32.mrb[0].mxu0
  %3137 = vmatprep.mubr.bf16.mxu0 0
  %3138 = vmatmul.mubr.bf16.gmra.mrb[0].mxu0 %v1186
  %v3139 = vpop.f32.mrb[0].mxu0
  %v3140 = vadd.f32 %v2039, %v3139
  %v3141 = vpop.f32.mrb[0].mxu0
  %v3142 = vpop.f32.mrb[0].mxu0
  %v3143 = vadd.f32 %v2042, %v3142
  %v3144 = vpop.f32.mrb[0].mxu0
  %3145 = vmatprep.mubr.bf16.mxu0 0
  %3146 = vmatmul.mubr.bf16.gmra.mrb[0].mxu0 %v1189
  %v3147 = vpop.f32.mrb[0].mxu0
  %v3148 = vadd.f32 %v2047, %v3147
  %v3149 = vpop.f32.mrb[0].mxu0
  %v3150 = vpop.f32.mrb[0].mxu0
  %v3151 = vadd.f32 %v2050, %v3150
  %v3152 = vpop.f32.mrb[0].mxu0
  %3153 = vmatprep.mubr.bf16.mxu0 0
  %3154 = vmatmul.mubr.bf16.gmra.mrb[0].mxu0 %v1192
  %v3155 = vpop.f32.mrb[0].mxu0
  %v3156 = vadd.f32 %v2055, %v3155
  %v3157 = vpop.f32.mrb[0].mxu0
  %v3158 = vpop.f32.mrb[0].mxu0
  %v3159 = vadd.f32 %v2058, %v3158
  %v3160 = vpop.f32.mrb[0].mxu0
  %3161 = vmatprep.mubr.bf16.mxu0 0
  %3162 = vmatmul.mubr.bf16.gmra.mrb[0].mxu0 %v1195
  %v3163 = vpop.f32.mrb[0].mxu0
  %v3164 = vadd.f32 %v2063, %v3163
  %v3165 = vpop.f32.mrb[0].mxu0
  %v3166 = vpop.f32.mrb[0].mxu0
  %v3167 = vadd.f32 %v2066, %v3166
  %v3168 = vpop.f32.mrb[0].mxu0
  %3169 = vmatprep.mubr.bf16.mxu0 0
  %3170 = vmatmul.mubr.bf16.gmra.mrb[0].mxu0 %v1198
  %v3171 = vpop.f32.mrb[0].mxu0
  %v3172 = vadd.f32 %v2071, %v3171
  %v3173 = vpop.f32.mrb[0].mxu0
  %v3174 = vpop.f32.mrb[0].mxu0
  %v3175 = vadd.f32 %v2074, %v3174
  %v3176 = vpop.f32.mrb[0].mxu0
  %3177 = vmatprep.mubr.bf16.mxu0 0
  %3178 = vmatmul.mubr.bf16.gmra.mrb[0].mxu0 %v1201
  %v3179 = vpop.f32.mrb[0].mxu0
  %v3180 = vadd.f32 %v2079, %v3179
  %v3181 = vpop.f32.mrb[0].mxu0
  %v3182 = vpop.f32.mrb[0].mxu0
  %v3183 = vadd.f32 %v2082, %v3182
  %v3184 = vpop.f32.mrb[0].mxu0
  %3185 = vmatprep.mubr.bf16.mxu0 0
  %3186 = vmatmul.mubr.bf16.gmra.mrb[0].mxu0 %v1204
  %v3187 = vpop.f32.mrb[0].mxu0
  %v3188 = vadd.f32 %v2087, %v3187
  %v3189 = vpop.f32.mrb[0].mxu0
  %v3190 = vpop.f32.mrb[0].mxu0
  %v3191 = vadd.f32 %v2090, %v3190
  %v3192 = vpop.f32.mrb[0].mxu0
  %3193 = vmatprep.mubr.bf16.mxu0 0
  %3194 = vmatmul.mubr.bf16.gmra.mrb[0].mxu0 %v1207
  %v3195 = vpop.f32.mrb[0].mxu0
  %v3196 = vadd.f32 %v2095, %v3195
  %v3197 = vpop.f32.mrb[0].mxu0
  %v3198 = vpop.f32.mrb[0].mxu0
  %v3199 = vadd.f32 %v2098, %v3198
  %v3200 = vpop.f32.mrb[0].mxu0
  %3201 = vmatprep.mubr.bf16.mxu0 0
  %3202 = vmatmul.mubr.bf16.gmra.mrb[0].mxu0 %v1210
  %v3203 = vpop.f32.mrb[0].mxu0
  %v3204 = vadd.f32 %v2103, %v3203
  %v3205 = vpop.f32.mrb[0].mxu0
  %v3206 = vpop.f32.mrb[0].mxu0
  %v3207 = vadd.f32 %v2106, %v3206
  %v3208 = vpop.f32.mrb[0].mxu0
  %3209 = vmatprep.mubr.bf16.mxu0 0
  %3210 = vmatmul.mubr.bf16.gmra.mrb[0].mxu0 %v1213
  %v3211 = vpop.f32.mrb[0].mxu0
  %v3212 = vadd.f32 %v2111, %v3211
  %v3213 = vpop.f32.mrb[0].mxu0
  %v3214 = vpop.f32.mrb[0].mxu0
  %v3215 = vadd.f32 %v2114, %v3214
  %v3216 = vpop.f32.mrb[0].mxu0
  %3217 = vmatprep.mubr.bf16.mxu0 0
  %3218 = vmatmul.mubr.bf16.gmra.mrb[0].mxu0 %v1216
  %v3219 = vpop.f32.mrb[0].mxu0
  %v3220 = vadd.f32 %v2119, %v3219
  %v3221 = vpop.f32.mrb[0].mxu0
  %v3222 = vpop.f32.mrb[0].mxu0
  %v3223 = vadd.f32 %v2122, %v3222
  %v3224 = vpop.f32.mrb[0].mxu0
  %3225 = vmatprep.mubr.bf16.mxu0 0
  %3226 = vmatmul.mubr.bf16.gmra.mrb[0].mxu0 %v1219
  %v3227 = vpop.f32.mrb[0].mxu0
  %v3228 = vadd.f32 %v2127, %v3227
  %v3229 = vpop.f32.mrb[0].mxu0
  %v3230 = vpop.f32.mrb[0].mxu0
  %v3231 = vadd.f32 %v2130, %v3230
  %v3232 = vpop.f32.mrb[0].mxu0
  %3233 = vmatprep.mubr.bf16.mxu0 0
  %3234 = vmatmul.mubr.bf16.gmra.mrb[0].mxu0 %v1222
  %v3235 = vpop.f32.mrb[0].mxu0
  %v3236 = vadd.f32 %v2135, %v3235
  %v3237 = vpop.f32.mrb[0].mxu0
  %v3238 = vpop.f32.mrb[0].mxu0
  %v3239 = vadd.f32 %v2138, %v3238
  %v3240 = vpop.f32.mrb[0].mxu0
  %3241 = vmatprep.mubr.bf16.mxu0 0
  %3242 = vmatmul.mubr.bf16.gmra.mrb[0].mxu0 %v1225
  %v3243 = vpop.f32.mrb[0].mxu0
  %v3244 = vadd.f32 %v2143, %v3243
  %v3245 = vpop.f32.mrb[0].mxu0
  %v3246 = vpop.f32.mrb[0].mxu0
  %v3247 = vadd.f32 %v2146, %v3246
  %v3248 = vpop.f32.mrb[0].mxu0
  %3249 = vmatprep.mubr.bf16.mxu0 0
  %3250 = vmatmul.mubr.bf16.gmra.mrb[0].mxu0 %v1228
  %v3251 = vpop.f32.mrb[0].mxu0
  %v3252 = vadd.f32 %v2151, %v3251
  %v3253 = vpop.f32.mrb[0].mxu0
  %v3254 = vpop.f32.mrb[0].mxu0
  %v3255 = vadd.f32 %v2154, %v3254
  %v3256 = vpop.f32.mrb[0].mxu0
  %3257 = vmatprep.mubr.bf16.mxu0 0
  %3258 = vmatmul.mubr.bf16.gmra.mrb[0].mxu0 %v1231
  %v3259 = vpop.f32.mrb[0].mxu0
  %v3260 = vadd.f32 %v2159, %v3259
  %v3261 = vpop.f32.mrb[0].mxu0
  %v3262 = vpop.f32.mrb[0].mxu0
  %v3263 = vadd.f32 %v2162, %v3262
  %v3264 = vpop.f32.mrb[0].mxu0
  %3265 = vmatprep.mubr.bf16.mxu0 0
  %3266 = vmatmul.mubr.bf16.gmra.mrb[0].mxu0 %v1234
  %v3267 = vpop.f32.mrb[0].mxu0
  %v3268 = vadd.f32 %v2167, %v3267
  %v3269 = vpop.f32.mrb[0].mxu0
  %v3270 = vpop.f32.mrb[0].mxu0
  %v3271 = vadd.f32 %v2170, %v3270
  %v3272 = vpop.f32.mrb[0].mxu0
  %3273 = vmatprep.mubr.bf16.mxu0 0
  %3274 = vmatmul.mubr.bf16.gmra.mrb[0].mxu0 %v1237
  %v3275 = vpop.f32.mrb[0].mxu0
  %v3276 = vadd.f32 %v2175, %v3275
  %v3277 = vpop.f32.mrb[0].mxu0
  %v3278 = vpop.f32.mrb[0].mxu0
  %v3279 = vadd.f32 %v2178, %v3278
  %v3280 = vpop.f32.mrb[0].mxu0
  %3281 = vmatprep.mubr.bf16.mxu0 0
  %3282 = vmatmul.mubr.bf16.gmra.mrb[0].mxu0 %v1240
  %v3283 = vpop.f32.mrb[0].mxu0
  %v3284 = vadd.f32 %v2183, %v3283
  %v3285 = vpop.f32.mrb[0].mxu0
  %v3286 = vpop.f32.mrb[0].mxu0
  %v3287 = vadd.f32 %v2186, %v3286
  %v3288 = vpop.f32.mrb[0].mxu0
  %3289 = vmatprep.mubr.bf16.mxu0 0
  %3290 = vmatmul.mubr.bf16.gmra.mrb[0].mxu0 %v1243
  %v3291 = vpop.f32.mrb[0].mxu0
  %v3292 = vadd.f32 %v2191, %v3291
  %v3293 = vpop.f32.mrb[0].mxu0
  %v3294 = vpop.f32.mrb[0].mxu0
  %v3295 = vadd.f32 %v2194, %v3294
  %v3296 = vpop.f32.mrb[0].mxu0
  %3297 = vmatprep.mubr.bf16.mxu0 0
  %3298 = vmatmul.mubr.bf16.gmra.mrb[0].mxu0 %v1246
  %v3299 = vpop.f32.mrb[0].mxu0
  %v3300 = vadd.f32 %v2199, %v3299
  %v3301 = vpop.f32.mrb[0].mxu0
  %v3302 = vpop.f32.mrb[0].mxu0
  %v3303 = vadd.f32 %v2202, %v3302
  %v3304 = vpop.f32.mrb[0].mxu0
  %3305 = vmatprep.mubr.bf16.mxu0 0
  %3306 = vmatmul.mubr.bf16.gmra.mrb[0].mxu0 %v1249
  %v3307 = vpop.f32.mrb[0].mxu0
  %v3308 = vadd.f32 %v2207, %v3307
  %v3309 = vpop.f32.mrb[0].mxu0
  %v3310 = vpop.f32.mrb[0].mxu0
  %v3311 = vadd.f32 %v2210, %v3310
  %v3312 = vpop.f32.mrb[0].mxu0
  %3313 = vmatprep.mubr.bf16.mxu0 0
  %3314 = vmatmul.mubr.bf16.gmra.mrb[0].mxu0 %v1252
  %v3315 = vpop.f32.mrb[0].mxu0
  %v3316 = vadd.f32 %v2215, %v3315
  %v3317 = vpop.f32.mrb[0].mxu0
  %v3318 = vpop.f32.mrb[0].mxu0
  %v3319 = vadd.f32 %v2218, %v3318
  %v3320 = vpop.f32.mrb[0].mxu0
  %3321 = vmatprep.mubr.bf16.mxu0 0
  %3322 = vmatmul.mubr.bf16.gmra.mrb[0].mxu0 %v1255
  %v3323 = vpop.f32.mrb[0].mxu0
  %v3324 = vadd.f32 %v2223, %v3323
  %v3325 = vpop.f32.mrb[0].mxu0
  %v3326 = vpop.f32.mrb[0].mxu0
  %v3327 = vadd.f32 %v2226, %v3326
  %v3328 = vpop.f32.mrb[0].mxu0
  %3329 = vmatprep.mubr.bf16.mxu0 0
  %3330 = vmatmul.mubr.bf16.gmra.mrb[0].mxu0 %v1258
  %v3331 = vpop.f32.mrb[0].mxu0
  %v3332 = vadd.f32 %v2231, %v3331
  %v3333 = vpop.f32.mrb[0].mxu0
  %v3334 = vpop.f32.mrb[0].mxu0
  %v3335 = vadd.f32 %v2234, %v3334
  %v3336 = vpop.f32.mrb[0].mxu0
  %3337 = vmatprep.mubr.bf16.mxu0 0
  %3338 = vmatmul.mubr.bf16.gmra.mrb[0].mxu0 %v1261
  %v3339 = vpop.f32.mrb[0].mxu0
  %v3340 = vadd.f32 %v2239, %v3339
  %v3341 = vpop.f32.mrb[0].mxu0
  %v3342 = vpop.f32.mrb[0].mxu0
  %v3343 = vadd.f32 %v2242, %v3342
  %v3344 = vpop.f32.mrb[0].mxu0
  %3345 = vmatprep.mubr.bf16.mxu0 0
  %3346 = vmatmul.mubr.bf16.gmra.mrb[0].mxu0 %v1264
  %v3347 = vpop.f32.mrb[0].mxu0
  %v3348 = vadd.f32 %v2247, %v3347
  %v3349 = vpop.f32.mrb[0].mxu0
  %v3350 = vpop.f32.mrb[0].mxu0
  %v3351 = vadd.f32 %v2250, %v3350
  %v3352 = vpop.f32.mrb[0].mxu0
  %3353 = vmatprep.mubr.bf16.mxu0 0
  %3354 = vmatmul.mubr.bf16.gmra.mrb[0].mxu0 %v1267
  %v3355 = vpop.f32.mrb[0].mxu0
  %v3356 = vadd.f32 %v2255, %v3355
  %v3357 = vpop.f32.mrb[0].mxu0
  %v3358 = vpop.f32.mrb[0].mxu0
  %v3359 = vadd.f32 %v2258, %v3358
  %v3360 = vpop.f32.mrb[0].mxu0
  %3361 = vmatprep.mubr.bf16.mxu0 0
  %3362 = vmatmul.mubr.bf16.gmra.mrb[0].mxu0 %v1270
  %v3363 = vpop.f32.mrb[0].mxu0
  %v3364 = vadd.f32 %v2263, %v3363
  %v3365 = vpop.f32.mrb[0].mxu0
  %v3366 = vpop.f32.mrb[0].mxu0
  %v3367 = vadd.f32 %v2266, %v3366
  %v3368 = vpop.f32.mrb[0].mxu0
  %3369 = vmatprep.mubr.bf16.mxu0 0
  %3370 = vmatmul.mubr.bf16.gmra.mrb[0].mxu0 %v1273
  %v3371 = vpop.f32.mrb[0].mxu0
  %v3372 = vadd.f32 %v2271, %v3371
  %v3373 = vpop.f32.mrb[0].mxu0
  %v3374 = vpop.f32.mrb[0].mxu0
  %v3375 = vadd.f32 %v2274, %v3374
  %v3376 = vpop.f32.mrb[0].mxu0
  %3377 = vmatprep.mubr.bf16.mxu0 0
  %3378 = vmatmul.mubr.bf16.gmra.mrb[0].mxu0 %v1276
  %v3379 = vpop.f32.mrb[0].mxu0
  %v3380 = vadd.f32 %v2279, %v3379
  %v3381 = vpop.f32.mrb[0].mxu0
  %v3382 = vpop.f32.mrb[0].mxu0
  %v3383 = vadd.f32 %v2282, %v3382
  %v3384 = vpop.f32.mrb[0].mxu0
  %3385 = vmatprep.mubr.bf16.mxu0 0
  %3386 = vmatmul.mubr.bf16.gmra.mrb[0].mxu0 %v1279
  %v3387 = vpop.f32.mrb[0].mxu0
  %v3388 = vadd.f32 %v2287, %v3387
  %v3389 = vpop.f32.mrb[0].mxu0
  %v3390 = vpop.f32.mrb[0].mxu0
  %v3391 = vadd.f32 %v2290, %v3390
  %v3392 = vpop.f32.mrb[0].mxu0
  %3393 = vmatprep.mubr.bf16.mxu0 0
  %3394 = vmatmul.mubr.bf16.gmra.mrb[0].mxu0 %v1282
  %v3395 = vpop.f32.mrb[0].mxu0
  %v3396 = vadd.f32 %v2295, %v3395
  %v3397 = vpop.f32.mrb[0].mxu0
  %v3398 = vpop.f32.mrb[0].mxu0
  %v3399 = vadd.f32 %v2298, %v3398
  %v3400 = vpop.f32.mrb[0].mxu0
  %3401 = vmatprep.mubr.bf16.mxu0 0
  %3402 = vmatmul.mubr.bf16.gmra.mrb[0].mxu0 %v1285
  %v3403 = vpop.f32.mrb[0].mxu0
  %v3404 = vadd.f32 %v2303, %v3403
  %v3405 = vpop.f32.mrb[0].mxu0
  %v3406 = vpop.f32.mrb[0].mxu0
  %v3407 = vadd.f32 %v2306, %v3406
  %v3408 = vpop.f32.mrb[0].mxu0
  %3409 = vmatprep.mubr.bf16.mxu0 0
  %3410 = vmatmul.mubr.bf16.gmra.mrb[0].mxu0 %v1288
  %v3411 = vpop.f32.mrb[0].mxu0
  %v3412 = vadd.f32 %v2311, %v3411
  %v3413 = vpop.f32.mrb[0].mxu0
  %v3414 = vpop.f32.mrb[0].mxu0
  %v3415 = vadd.f32 %v2314, %v3414
  %v3416 = vpop.f32.mrb[0].mxu0
  %3417 = vmatprep.mubr.bf16.mxu0 0
  %3418 = vmatmul.mubr.bf16.gmra.mrb[0].mxu0 %v1291
  %v3419 = vpop.f32.mrb[0].mxu0
  %v3420 = vadd.f32 %v2319, %v3419
  %v3421 = vpop.f32.mrb[0].mxu0
  %v3422 = vpop.f32.mrb[0].mxu0
  %v3423 = vadd.f32 %v2322, %v3422
  %v3424 = vpop.f32.mrb[0].mxu0
  %3425 = vmatprep.mubr.bf16.mxu0 0
  %3426 = vmatmul.mubr.bf16.gmra.mrb[0].mxu0 %v1294
  %v3427 = vpop.f32.mrb[0].mxu0
  %v3428 = vadd.f32 %v2327, %v3427
  %v3429 = vpop.f32.mrb[0].mxu0
  %v3430 = vpop.f32.mrb[0].mxu0
  %v3431 = vadd.f32 %v2330, %v3430
  %v3432 = vpop.f32.mrb[0].mxu0
  %3433 = vmatprep.mubr.bf16.mxu0 0
  %3434 = vmatmul.mubr.bf16.gmra.mrb[0].mxu0 %v1297
  %v3435 = vpop.f32.mrb[0].mxu0
  %v3436 = vadd.f32 %v2335, %v3435
  %v3437 = vpop.f32.mrb[0].mxu0
  %v3438 = vpop.f32.mrb[0].mxu0
  %v3439 = vadd.f32 %v2338, %v3438
  %v3440 = vpop.f32.mrb[0].mxu0
  %3441 = vmatprep.mubr.bf16.mxu0 0
  %3442 = vmatmul.mubr.bf16.gmra.mrb[0].mxu0 %v1300
  %v3443 = vpop.f32.mrb[0].mxu0
  %v3444 = vadd.f32 %v2343, %v3443
  %v3445 = vpop.f32.mrb[0].mxu0
  %v3446 = vpop.f32.mrb[0].mxu0
  %v3447 = vadd.f32 %v2346, %v3446
  %v3448 = vpop.f32.mrb[0].mxu0
  %3449 = vmatprep.mubr.bf16.mxu0 0
  %3450 = vmatmul.mubr.bf16.gmra.mrb[0].mxu0 %v1303
  %v3451 = vpop.f32.mrb[0].mxu0
  %v3452 = vadd.f32 %v2351, %v3451
  %v3453 = vpop.f32.mrb[0].mxu0
  %v3454 = vpop.f32.mrb[0].mxu0
  %v3455 = vadd.f32 %v2354, %v3454
  %v3456 = vpop.f32.mrb[0].mxu0
  %3457 = vmatprep.mubr.bf16.mxu0 0
  %3458 = vmatmul.mubr.bf16.gmra.mrb[0].mxu0 %v1306
  %v3459 = vpop.f32.mrb[0].mxu0
  %v3460 = vadd.f32 %v2359, %v3459
  %v3461 = vpop.f32.mrb[0].mxu0
  %v3462 = vpop.f32.mrb[0].mxu0
  %v3463 = vadd.f32 %v2362, %v3462
  %v3464 = vpop.f32.mrb[0].mxu0
  %3465 = vmatprep.mubr.bf16.mxu0 0
  %3466 = vmatmul.mubr.bf16.gmra.mrb[0].mxu0 %v1309
  %v3467 = vpop.f32.mrb[0].mxu0
  %v3468 = vadd.f32 %v2367, %v3467
  %v3469 = vpop.f32.mrb[0].mxu0
  %v3470 = vpop.f32.mrb[0].mxu0
  %v3471 = vadd.f32 %v2370, %v3470
  %v3472 = vpop.f32.mrb[0].mxu0
  %3473 = vmatprep.mubr.bf16.mxu0 0
  %3474 = vmatmul.mubr.bf16.gmra.mrb[0].mxu0 %v1312
  %v3475 = vpop.f32.mrb[0].mxu0
  %v3476 = vadd.f32 %v2375, %v3475
  %v3477 = vpop.f32.mrb[0].mxu0
  %v3478 = vpop.f32.mrb[0].mxu0
  %v3479 = vadd.f32 %v2378, %v3478
  %v3480 = vpop.f32.mrb[0].mxu0
  %3481 = vdwg.mxu0
  %v3482 = vld [vmem:[%s2] sm:$0x1]
  %v3484 = vlaneseq
  %v3485 = vshrl.u32 %v3484, 7
  %v3486 = vsub.s32 0, %v3485
  %v3487 = vrot.slane %v3482, %v3486
  %v3489 = vadd.f32 %v2460, %v3487
  %v3490 = vadd.f32 %v2463, %v3487
  %v3491 = vadd.f32 %v2468, %v3487
  %v3492 = vadd.f32 %v2471, %v3487
  %v3493 = vadd.f32 %v2476, %v3487
  %v3494 = vadd.f32 %v2479, %v3487
  %v3495 = vadd.f32 %v2484, %v3487
  %v3496 = vadd.f32 %v2487, %v3487
  %v3497 = vadd.f32 %v2492, %v3487
  %v3498 = vadd.f32 %v2495, %v3487
  %v3499 = vadd.f32 %v2500, %v3487
  %v3500 = vadd.f32 %v2503, %v3487
  %v3501 = vadd.f32 %v2508, %v3487
  %v3502 = vadd.f32 %v2511, %v3487
  %v3503 = vadd.f32 %v2516, %v3487
  %v3504 = vadd.f32 %v2519, %v3487
  %v3505 = vadd.f32 %v2524, %v3487
  %v3506 = vadd.f32 %v2527, %v3487
  %v3507 = vadd.f32 %v2532, %v3487
  %v3508 = vadd.f32 %v2535, %v3487
  %v3509 = vadd.f32 %v2540, %v3487
  %v3510 = vadd.f32 %v2543, %v3487
  %v3511 = vadd.f32 %v2548, %v3487
  %v3512 = vadd.f32 %v2551, %v3487
  %v3513 = vadd.f32 %v2556, %v3487
  %v3514 = vadd.f32 %v2559, %v3487
  %v3515 = vadd.f32 %v2564, %v3487
  %v3516 = vadd.f32 %v2567, %v3487
  %v3517 = vadd.f32 %v2572, %v3487
  %v3518 = vadd.f32 %v2575, %v3487
  %v3519 = vadd.f32 %v2580, %v3487
  %v3520 = vadd.f32 %v2583, %v3487
  %v3521 = vadd.f32 %v2588, %v3487
  %v3522 = vadd.f32 %v2591, %v3487
  %v3523 = vadd.f32 %v2596, %v3487
  %v3524 = vadd.f32 %v2599, %v3487
  %v3525 = vadd.f32 %v2604, %v3487
  %v3526 = vadd.f32 %v2607, %v3487
  %v3527 = vadd.f32 %v2612, %v3487
  %v3528 = vadd.f32 %v2615, %v3487
  %v3529 = vadd.f32 %v2620, %v3487
  %v3530 = vadd.f32 %v2623, %v3487
  %v3531 = vadd.f32 %v2628, %v3487
  %v3532 = vadd.f32 %v2631, %v3487
  %v3533 = vadd.f32 %v2636, %v3487
  %v3534 = vadd.f32 %v2639, %v3487
  %v3535 = vadd.f32 %v2644, %v3487
  %v3536 = vadd.f32 %v2647, %v3487
  %v3537 = vadd.f32 %v2652, %v3487
  %v3538 = vadd.f32 %v2655, %v3487
  %v3539 = vadd.f32 %v2660, %v3487
  %v3540 = vadd.f32 %v2663, %v3487
  %v3541 = vadd.f32 %v2668, %v3487
  %v3542 = vadd.f32 %v2671, %v3487
  %v3543 = vadd.f32 %v2676, %v3487
  %v3544 = vadd.f32 %v2679, %v3487
  %v3545 = vadd.f32 %v2684, %v3487
  %v3546 = vadd.f32 %v2687, %v3487
  %v3547 = vadd.f32 %v2692, %v3487
  %v3548 = vadd.f32 %v2695, %v3487
  %v3549 = vadd.f32 %v2700, %v3487
  %v3550 = vadd.f32 %v2703, %v3487
  %v3551 = vadd.f32 %v2708, %v3487
  %v3552 = vadd.f32 %v2711, %v3487
  %v3553 = vadd.f32 %v2716, %v3487
  %v3554 = vadd.f32 %v2719, %v3487
  %v3555 = vadd.f32 %v2724, %v3487
  %v3556 = vadd.f32 %v2727, %v3487
  %v3557 = vadd.f32 %v2732, %v3487
  %v3558 = vadd.f32 %v2735, %v3487
  %v3559 = vadd.f32 %v2740, %v3487
  %v3560 = vadd.f32 %v2743, %v3487
  %v3561 = vadd.f32 %v2748, %v3487
  %v3562 = vadd.f32 %v2751, %v3487
  %v3563 = vadd.f32 %v2756, %v3487
  %v3564 = vadd.f32 %v2759, %v3487
  %v3565 = vadd.f32 %v2764, %v3487
  %v3566 = vadd.f32 %v2767, %v3487
  %v3567 = vadd.f32 %v2772, %v3487
  %v3568 = vadd.f32 %v2775, %v3487
  %v3569 = vadd.f32 %v2780, %v3487
  %v3570 = vadd.f32 %v2783, %v3487
  %v3571 = vadd.f32 %v2788, %v3487
  %v3572 = vadd.f32 %v2791, %v3487
  %v3573 = vadd.f32 %v2796, %v3487
  %v3574 = vadd.f32 %v2799, %v3487
  %v3575 = vadd.f32 %v2804, %v3487
  %v3576 = vadd.f32 %v2807, %v3487
  %v3577 = vadd.f32 %v2812, %v3487
  %v3578 = vadd.f32 %v2815, %v3487
  %v3579 = vadd.f32 %v2820, %v3487
  %v3580 = vadd.f32 %v2823, %v3487
  %v3581 = vadd.f32 %v2828, %v3487
  %v3582 = vadd.f32 %v2831, %v3487
  %v3583 = vadd.f32 %v2836, %v3487
  %v3584 = vadd.f32 %v2839, %v3487
  %v3585 = vadd.f32 %v2844, %v3487
  %v3586 = vadd.f32 %v2847, %v3487
  %v3587 = vadd.f32 %v2852, %v3487
  %v3588 = vadd.f32 %v2855, %v3487
  %v3589 = vadd.f32 %v2860, %v3487
  %v3590 = vadd.f32 %v2863, %v3487
  %v3591 = vadd.f32 %v2868, %v3487
  %v3592 = vadd.f32 %v2871, %v3487
  %v3593 = vadd.f32 %v2876, %v3487
  %v3594 = vadd.f32 %v2879, %v3487
  %v3595 = vadd.f32 %v2884, %v3487
  %v3596 = vadd.f32 %v2887, %v3487
  %v3597 = vadd.f32 %v2892, %v3487
  %v3598 = vadd.f32 %v2895, %v3487
  %v3599 = vadd.f32 %v2900, %v3487
  %v3600 = vadd.f32 %v2903, %v3487
  %v3601 = vadd.f32 %v2908, %v3487
  %v3602 = vadd.f32 %v2911, %v3487
  %v3603 = vadd.f32 %v2916, %v3487
  %v3604 = vadd.f32 %v2919, %v3487
  %v3605 = vadd.f32 %v2924, %v3487
  %v3606 = vadd.f32 %v2927, %v3487
  %v3607 = vadd.f32 %v2932, %v3487
  %v3608 = vadd.f32 %v2935, %v3487
  %v3609 = vadd.f32 %v2940, %v3487
  %v3610 = vadd.f32 %v2943, %v3487
  %v3611 = vadd.f32 %v2948, %v3487
  %v3612 = vadd.f32 %v2951, %v3487
  %v3613 = vadd.f32 %v2956, %v3487
  %v3614 = vadd.f32 %v2959, %v3487
  %v3615 = vadd.f32 %v2964, %v3487
  %v3616 = vadd.f32 %v2967, %v3487
  %v3617 = vadd.f32 %v2972, %v3487
  %v3618 = vadd.f32 %v2975, %v3487
  %v3619 = vadd.f32 %v2980, %v3487
  %v3620 = vadd.f32 %v2983, %v3487
  %v3621 = vadd.f32 %v2988, %v3487
  %v3622 = vadd.f32 %v2991, %v3487
  %v3623 = vadd.f32 %v2996, %v3487
  %v3624 = vadd.f32 %v2999, %v3487
  %v3625 = vadd.f32 %v3004, %v3487
  %v3626 = vadd.f32 %v3007, %v3487
  %v3627 = vadd.f32 %v3012, %v3487
  %v3628 = vadd.f32 %v3015, %v3487
  %v3629 = vadd.f32 %v3020, %v3487
  %v3630 = vadd.f32 %v3023, %v3487
  %v3631 = vadd.f32 %v3028, %v3487
  %v3632 = vadd.f32 %v3031, %v3487
  %v3633 = vadd.f32 %v3036, %v3487
  %v3634 = vadd.f32 %v3039, %v3487
  %v3635 = vadd.f32 %v3044, %v3487
  %v3636 = vadd.f32 %v3047, %v3487
  %v3637 = vadd.f32 %v3052, %v3487
  %v3638 = vadd.f32 %v3055, %v3487
  %v3639 = vadd.f32 %v3060, %v3487
  %v3640 = vadd.f32 %v3063, %v3487
  %v3641 = vadd.f32 %v3068, %v3487
  %v3642 = vadd.f32 %v3071, %v3487
  %v3643 = vadd.f32 %v3076, %v3487
  %v3644 = vadd.f32 %v3079, %v3487
  %v3645 = vadd.f32 %v3084, %v3487
  %v3646 = vadd.f32 %v3087, %v3487
  %v3647 = vadd.f32 %v3092, %v3487
  %v3648 = vadd.f32 %v3095, %v3487
  %v3649 = vadd.f32 %v3100, %v3487
  %v3650 = vadd.f32 %v3103, %v3487
  %v3651 = vadd.f32 %v3108, %v3487
  %v3652 = vadd.f32 %v3111, %v3487
  %v3653 = vadd.f32 %v3116, %v3487
  %v3654 = vadd.f32 %v3119, %v3487
  %v3655 = vadd.f32 %v3124, %v3487
  %v3656 = vadd.f32 %v3127, %v3487
  %v3657 = vadd.f32 %v3132, %v3487
  %v3658 = vadd.f32 %v3135, %v3487
  %v3659 = vadd.f32 %v3140, %v3487
  %v3660 = vadd.f32 %v3143, %v3487
  %v3661 = vadd.f32 %v3148, %v3487
  %v3662 = vadd.f32 %v3151, %v3487
  %v3663 = vadd.f32 %v3156, %v3487
  %v3664 = vadd.f32 %v3159, %v3487
  %v3665 = vadd.f32 %v3164, %v3487
  %v3666 = vadd.f32 %v3167, %v3487
  %v3667 = vadd.f32 %v3172, %v3487
  %v3668 = vadd.f32 %v3175, %v3487
  %v3669 = vadd.f32 %v3180, %v3487
  %v3670 = vadd.f32 %v3183, %v3487
  %v3671 = vadd.f32 %v3188, %v3487
  %v3672 = vadd.f32 %v3191, %v3487
  %v3673 = vadd.f32 %v3196, %v3487
  %v3674 = vadd.f32 %v3199, %v3487
  %v3675 = vadd.f32 %v3204, %v3487
  %v3676 = vadd.f32 %v3207, %v3487
  %v3677 = vadd.f32 %v3212, %v3487
  %v3678 = vadd.f32 %v3215, %v3487
  %v3679 = vadd.f32 %v3220, %v3487
  %v3680 = vadd.f32 %v3223, %v3487
  %v3681 = vadd.f32 %v3228, %v3487
  %v3682 = vadd.f32 %v3231, %v3487
  %v3683 = vadd.f32 %v3236, %v3487
  %v3684 = vadd.f32 %v3239, %v3487
  %v3685 = vadd.f32 %v3244, %v3487
  %v3686 = vadd.f32 %v3247, %v3487
  %v3687 = vadd.f32 %v3252, %v3487
  %v3688 = vadd.f32 %v3255, %v3487
  %v3689 = vadd.f32 %v3260, %v3487
  %v3690 = vadd.f32 %v3263, %v3487
  %v3691 = vadd.f32 %v3268, %v3487
  %v3692 = vadd.f32 %v3271, %v3487
  %v3693 = vadd.f32 %v3276, %v3487
  %v3694 = vadd.f32 %v3279, %v3487
  %v3695 = vadd.f32 %v3284, %v3487
  %v3696 = vadd.f32 %v3287, %v3487
  %v3697 = vadd.f32 %v3292, %v3487
  %v3698 = vadd.f32 %v3295, %v3487
  %v3699 = vadd.f32 %v3300, %v3487
  %v3700 = vadd.f32 %v3303, %v3487
  %v3701 = vadd.f32 %v3308, %v3487
  %v3702 = vadd.f32 %v3311, %v3487
  %v3703 = vadd.f32 %v3316, %v3487
  %v3704 = vadd.f32 %v3319, %v3487
  %v3705 = vadd.f32 %v3324, %v3487
  %v3706 = vadd.f32 %v3327, %v3487
  %v3707 = vadd.f32 %v3332, %v3487
  %v3708 = vadd.f32 %v3335, %v3487
  %v3709 = vadd.f32 %v3340, %v3487
  %v3710 = vadd.f32 %v3343, %v3487
  %v3711 = vadd.f32 %v3348, %v3487
  %v3712 = vadd.f32 %v3351, %v3487
  %v3713 = vadd.f32 %v3356, %v3487
  %v3714 = vadd.f32 %v3359, %v3487
  %v3715 = vadd.f32 %v3364, %v3487
  %v3716 = vadd.f32 %v3367, %v3487
  %v3717 = vadd.f32 %v3372, %v3487
  %v3718 = vadd.f32 %v3375, %v3487
  %v3719 = vadd.f32 %v3380, %v3487
  %v3720 = vadd.f32 %v3383, %v3487
  %v3721 = vadd.f32 %v3388, %v3487
  %v3722 = vadd.f32 %v3391, %v3487
  %v3723 = vadd.f32 %v3396, %v3487
  %v3724 = vadd.f32 %v3399, %v3487
  %v3725 = vadd.f32 %v3404, %v3487
  %v3726 = vadd.f32 %v3407, %v3487
  %v3727 = vadd.f32 %v3412, %v3487
  %v3728 = vadd.f32 %v3415, %v3487
  %v3729 = vadd.f32 %v3420, %v3487
  %v3730 = vadd.f32 %v3423, %v3487
  %v3731 = vadd.f32 %v3428, %v3487
  %v3732 = vadd.f32 %v3431, %v3487
  %v3733 = vadd.f32 %v3436, %v3487
  %v3734 = vadd.f32 %v3439, %v3487
  %v3735 = vadd.f32 %v3444, %v3487
  %v3736 = vadd.f32 %v3447, %v3487
  %v3737 = vadd.f32 %v3452, %v3487
  %v3738 = vadd.f32 %v3455, %v3487
  %v3739 = vadd.f32 %v3460, %v3487
  %v3740 = vadd.f32 %v3463, %v3487
  %v3741 = vadd.f32 %v3468, %v3487
  %v3742 = vadd.f32 %v3471, %v3487
  %v3743 = vadd.f32 %v3476, %v3487
  %v3744 = vadd.f32 %v3479, %v3487
  %vm3745 = vcmp.ge.f32.partialorder %v3489, 0.0
  %vm3746 = vcmp.ge.f32.partialorder %v3490, 0.0
  %vm3747 = vcmp.ge.f32.partialorder %v3491, 0.0
  %vm3748 = vcmp.ge.f32.partialorder %v3492, 0.0
  %vm3749 = vcmp.ge.f32.partialorder %v3493, 0.0
  %vm3750 = vcmp.ge.f32.partialorder %v3494, 0.0
  %vm3751 = vcmp.ge.f32.partialorder %v3495, 0.0
  %vm3752 = vcmp.ge.f32.partialorder %v3496, 0.0
  %vm3753 = vcmp.ge.f32.partialorder %v3497, 0.0
  %vm3754 = vcmp.ge.f32.partialorder %v3498, 0.0
  %vm3755 = vcmp.ge.f32.partialorder %v3499, 0.0
  %vm3756 = vcmp.ge.f32.partialorder %v3500, 0.0
  %vm3757 = vcmp.ge.f32.partialorder %v3501, 0.0
  %vm3758 = vcmp.ge.f32.partialorder %v3502, 0.0
  %vm3759 = vcmp.ge.f32.partialorder %v3503, 0.0
  %vm3760 = vcmp.ge.f32.partialorder %v3504, 0.0
  %vm3761 = vcmp.ge.f32.partialorder %v3505, 0.0
  %vm3762 = vcmp.ge.f32.partialorder %v3506, 0.0
  %vm3763 = vcmp.ge.f32.partialorder %v3507, 0.0
  %vm3764 = vcmp.ge.f32.partialorder %v3508, 0.0
  %vm3765 = vcmp.ge.f32.partialorder %v3509, 0.0
  %vm3766 = vcmp.ge.f32.partialorder %v3510, 0.0
  %vm3767 = vcmp.ge.f32.partialorder %v3511, 0.0
  %vm3768 = vcmp.ge.f32.partialorder %v3512, 0.0
  %vm3769 = vcmp.ge.f32.partialorder %v3513, 0.0
  %vm3770 = vcmp.ge.f32.partialorder %v3514, 0.0
  %vm3771 = vcmp.ge.f32.partialorder %v3515, 0.0
  %vm3772 = vcmp.ge.f32.partialorder %v3516, 0.0
  %vm3773 = vcmp.ge.f32.partialorder %v3517, 0.0
  %vm3774 = vcmp.ge.f32.partialorder %v3518, 0.0
  %vm3775 = vcmp.ge.f32.partialorder %v3519, 0.0
  %vm3776 = vcmp.ge.f32.partialorder %v3520, 0.0
  %vm3777 = vcmp.ge.f32.partialorder %v3521, 0.0
  %vm3778 = vcmp.ge.f32.partialorder %v3522, 0.0
  %vm3779 = vcmp.ge.f32.partialorder %v3523, 0.0
  %vm3780 = vcmp.ge.f32.partialorder %v3524, 0.0
  %vm3781 = vcmp.ge.f32.partialorder %v3525, 0.0
  %vm3782 = vcmp.ge.f32.partialorder %v3526, 0.0
  %vm3783 = vcmp.ge.f32.partialorder %v3527, 0.0
  %vm3784 = vcmp.ge.f32.partialorder %v3528, 0.0
  %vm3785 = vcmp.ge.f32.partialorder %v3529, 0.0
  %vm3786 = vcmp.ge.f32.partialorder %v3530, 0.0
  %vm3787 = vcmp.ge.f32.partialorder %v3531, 0.0
  %vm3788 = vcmp.ge.f32.partialorder %v3532, 0.0
  %vm3789 = vcmp.ge.f32.partialorder %v3533, 0.0
  %vm3790 = vcmp.ge.f32.partialorder %v3534, 0.0
  %vm3791 = vcmp.ge.f32.partialorder %v3535, 0.0
  %vm3792 = vcmp.ge.f32.partialorder %v3536, 0.0
  %vm3793 = vcmp.ge.f32.partialorder %v3537, 0.0
  %vm3794 = vcmp.ge.f32.partialorder %v3538, 0.0
  %vm3795 = vcmp.ge.f32.partialorder %v3539, 0.0
  %vm3796 = vcmp.ge.f32.partialorder %v3540, 0.0
  %vm3797 = vcmp.ge.f32.partialorder %v3541, 0.0
  %vm3798 = vcmp.ge.f32.partialorder %v3542, 0.0
  %vm3799 = vcmp.ge.f32.partialorder %v3543, 0.0
  %vm3800 = vcmp.ge.f32.partialorder %v3544, 0.0
  %vm3801 = vcmp.ge.f32.partialorder %v3545, 0.0
  %vm3802 = vcmp.ge.f32.partialorder %v3546, 0.0
  %vm3803 = vcmp.ge.f32.partialorder %v3547, 0.0
  %vm3804 = vcmp.ge.f32.partialorder %v3548, 0.0
  %vm3805 = vcmp.ge.f32.partialorder %v3549, 0.0
  %vm3806 = vcmp.ge.f32.partialorder %v3550, 0.0
  %vm3807 = vcmp.ge.f32.partialorder %v3551, 0.0
  %vm3808 = vcmp.ge.f32.partialorder %v3552, 0.0
  %vm3809 = vcmp.ge.f32.partialorder %v3553, 0.0
  %vm3810 = vcmp.ge.f32.partialorder %v3554, 0.0
  %vm3811 = vcmp.ge.f32.partialorder %v3555, 0.0
  %vm3812 = vcmp.ge.f32.partialorder %v3556, 0.0
  %vm3813 = vcmp.ge.f32.partialorder %v3557, 0.0
  %vm3814 = vcmp.ge.f32.partialorder %v3558, 0.0
  %vm3815 = vcmp.ge.f32.partialorder %v3559, 0.0
  %vm3816 = vcmp.ge.f32.partialorder %v3560, 0.0
  %vm3817 = vcmp.ge.f32.partialorder %v3561, 0.0
  %vm3818 = vcmp.ge.f32.partialorder %v3562, 0.0
  %vm3819 = vcmp.ge.f32.partialorder %v3563, 0.0
  %vm3820 = vcmp.ge.f32.partialorder %v3564, 0.0
  %vm3821 = vcmp.ge.f32.partialorder %v3565, 0.0
  %vm3822 = vcmp.ge.f32.partialorder %v3566, 0.0
  %vm3823 = vcmp.ge.f32.partialorder %v3567, 0.0
  %vm3824 = vcmp.ge.f32.partialorder %v3568, 0.0
  %vm3825 = vcmp.ge.f32.partialorder %v3569, 0.0
  %vm3826 = vcmp.ge.f32.partialorder %v3570, 0.0
  %vm3827 = vcmp.ge.f32.partialorder %v3571, 0.0
  %vm3828 = vcmp.ge.f32.partialorder %v3572, 0.0
  %vm3829 = vcmp.ge.f32.partialorder %v3573, 0.0
  %vm3830 = vcmp.ge.f32.partialorder %v3574, 0.0
  %vm3831 = vcmp.ge.f32.partialorder %v3575, 0.0
  %vm3832 = vcmp.ge.f32.partialorder %v3576, 0.0
  %vm3833 = vcmp.ge.f32.partialorder %v3577, 0.0
  %vm3834 = vcmp.ge.f32.partialorder %v3578, 0.0
  %vm3835 = vcmp.ge.f32.partialorder %v3579, 0.0
  %vm3836 = vcmp.ge.f32.partialorder %v3580, 0.0
  %vm3837 = vcmp.ge.f32.partialorder %v3581, 0.0
  %vm3838 = vcmp.ge.f32.partialorder %v3582, 0.0
  %vm3839 = vcmp.ge.f32.partialorder %v3583, 0.0
  %vm3840 = vcmp.ge.f32.partialorder %v3584, 0.0
  %vm3841 = vcmp.ge.f32.partialorder %v3585, 0.0
  %vm3842 = vcmp.ge.f32.partialorder %v3586, 0.0
  %vm3843 = vcmp.ge.f32.partialorder %v3587, 0.0
  %vm3844 = vcmp.ge.f32.partialorder %v3588, 0.0
  %vm3845 = vcmp.ge.f32.partialorder %v3589, 0.0
  %vm3846 = vcmp.ge.f32.partialorder %v3590, 0.0
  %vm3847 = vcmp.ge.f32.partialorder %v3591, 0.0
  %vm3848 = vcmp.ge.f32.partialorder %v3592, 0.0
  %vm3849 = vcmp.ge.f32.partialorder %v3593, 0.0
  %vm3850 = vcmp.ge.f32.partialorder %v3594, 0.0
  %vm3851 = vcmp.ge.f32.partialorder %v3595, 0.0
  %vm3852 = vcmp.ge.f32.partialorder %v3596, 0.0
  %vm3853 = vcmp.ge.f32.partialorder %v3597, 0.0
  %vm3854 = vcmp.ge.f32.partialorder %v3598, 0.0
  %vm3855 = vcmp.ge.f32.partialorder %v3599, 0.0
  %vm3856 = vcmp.ge.f32.partialorder %v3600, 0.0
  %vm3857 = vcmp.ge.f32.partialorder %v3601, 0.0
  %vm3858 = vcmp.ge.f32.partialorder %v3602, 0.0
  %vm3859 = vcmp.ge.f32.partialorder %v3603, 0.0
  %vm3860 = vcmp.ge.f32.partialorder %v3604, 0.0
  %vm3861 = vcmp.ge.f32.partialorder %v3605, 0.0
  %vm3862 = vcmp.ge.f32.partialorder %v3606, 0.0
  %vm3863 = vcmp.ge.f32.partialorder %v3607, 0.0
  %vm3864 = vcmp.ge.f32.partialorder %v3608, 0.0
  %vm3865 = vcmp.ge.f32.partialorder %v3609, 0.0
  %vm3866 = vcmp.ge.f32.partialorder %v3610, 0.0
  %vm3867 = vcmp.ge.f32.partialorder %v3611, 0.0
  %vm3868 = vcmp.ge.f32.partialorder %v3612, 0.0
  %vm3869 = vcmp.ge.f32.partialorder %v3613, 0.0
  %vm3870 = vcmp.ge.f32.partialorder %v3614, 0.0
  %vm3871 = vcmp.ge.f32.partialorder %v3615, 0.0
  %vm3872 = vcmp.ge.f32.partialorder %v3616, 0.0
  %vm3873 = vcmp.ge.f32.partialorder %v3617, 0.0
  %vm3874 = vcmp.ge.f32.partialorder %v3618, 0.0
  %vm3875 = vcmp.ge.f32.partialorder %v3619, 0.0
  %vm3876 = vcmp.ge.f32.partialorder %v3620, 0.0
  %vm3877 = vcmp.ge.f32.partialorder %v3621, 0.0
  %vm3878 = vcmp.ge.f32.partialorder %v3622, 0.0
  %vm3879 = vcmp.ge.f32.partialorder %v3623, 0.0
  %vm3880 = vcmp.ge.f32.partialorder %v3624, 0.0
  %vm3881 = vcmp.ge.f32.partialorder %v3625, 0.0
  %vm3882 = vcmp.ge.f32.partialorder %v3626, 0.0
  %vm3883 = vcmp.ge.f32.partialorder %v3627, 0.0
  %vm3884 = vcmp.ge.f32.partialorder %v3628, 0.0
  %vm3885 = vcmp.ge.f32.partialorder %v3629, 0.0
  %vm3886 = vcmp.ge.f32.partialorder %v3630, 0.0
  %vm3887 = vcmp.ge.f32.partialorder %v3631, 0.0
  %vm3888 = vcmp.ge.f32.partialorder %v3632, 0.0
  %vm3889 = vcmp.ge.f32.partialorder %v3633, 0.0
  %vm3890 = vcmp.ge.f32.partialorder %v3634, 0.0
  %vm3891 = vcmp.ge.f32.partialorder %v3635, 0.0
  %vm3892 = vcmp.ge.f32.partialorder %v3636, 0.0
  %vm3893 = vcmp.ge.f32.partialorder %v3637, 0.0
  %vm3894 = vcmp.ge.f32.partialorder %v3638, 0.0
  %vm3895 = vcmp.ge.f32.partialorder %v3639, 0.0
  %vm3896 = vcmp.ge.f32.partialorder %v3640, 0.0
  %vm3897 = vcmp.ge.f32.partialorder %v3641, 0.0
  %vm3898 = vcmp.ge.f32.partialorder %v3642, 0.0
  %vm3899 = vcmp.ge.f32.partialorder %v3643, 0.0
  %vm3900 = vcmp.ge.f32.partialorder %v3644, 0.0
  %vm3901 = vcmp.ge.f32.partialorder %v3645, 0.0
  %vm3902 = vcmp.ge.f32.partialorder %v3646, 0.0
  %vm3903 = vcmp.ge.f32.partialorder %v3647, 0.0
  %vm3904 = vcmp.ge.f32.partialorder %v3648, 0.0
  %vm3905 = vcmp.ge.f32.partialorder %v3649, 0.0
  %vm3906 = vcmp.ge.f32.partialorder %v3650, 0.0
  %vm3907 = vcmp.ge.f32.partialorder %v3651, 0.0
  %vm3908 = vcmp.ge.f32.partialorder %v3652, 0.0
  %vm3909 = vcmp.ge.f32.partialorder %v3653, 0.0
  %vm3910 = vcmp.ge.f32.partialorder %v3654, 0.0
  %vm3911 = vcmp.ge.f32.partialorder %v3655, 0.0
  %vm3912 = vcmp.ge.f32.partialorder %v3656, 0.0
  %vm3913 = vcmp.ge.f32.partialorder %v3657, 0.0
  %vm3914 = vcmp.ge.f32.partialorder %v3658, 0.0
  %vm3915 = vcmp.ge.f32.partialorder %v3659, 0.0
  %vm3916 = vcmp.ge.f32.partialorder %v3660, 0.0
  %vm3917 = vcmp.ge.f32.partialorder %v3661, 0.0
  %vm3918 = vcmp.ge.f32.partialorder %v3662, 0.0
  %vm3919 = vcmp.ge.f32.partialorder %v3663, 0.0
  %vm3920 = vcmp.ge.f32.partialorder %v3664, 0.0
  %vm3921 = vcmp.ge.f32.partialorder %v3665, 0.0
  %vm3922 = vcmp.ge.f32.partialorder %v3666, 0.0
  %vm3923 = vcmp.ge.f32.partialorder %v3667, 0.0
  %vm3924 = vcmp.ge.f32.partialorder %v3668, 0.0
  %vm3925 = vcmp.ge.f32.partialorder %v3669, 0.0
  %vm3926 = vcmp.ge.f32.partialorder %v3670, 0.0
  %vm3927 = vcmp.ge.f32.partialorder %v3671, 0.0
  %vm3928 = vcmp.ge.f32.partialorder %v3672, 0.0
  %vm3929 = vcmp.ge.f32.partialorder %v3673, 0.0
  %vm3930 = vcmp.ge.f32.partialorder %v3674, 0.0
  %vm3931 = vcmp.ge.f32.partialorder %v3675, 0.0
  %vm3932 = vcmp.ge.f32.partialorder %v3676, 0.0
  %vm3933 = vcmp.ge.f32.partialorder %v3677, 0.0
  %vm3934 = vcmp.ge.f32.partialorder %v3678, 0.0
  %vm3935 = vcmp.ge.f32.partialorder %v3679, 0.0
  %vm3936 = vcmp.ge.f32.partialorder %v3680, 0.0
  %vm3937 = vcmp.ge.f32.partialorder %v3681, 0.0
  %vm3938 = vcmp.ge.f32.partialorder %v3682, 0.0
  %vm3939 = vcmp.ge.f32.partialorder %v3683, 0.0
  %vm3940 = vcmp.ge.f32.partialorder %v3684, 0.0
  %vm3941 = vcmp.ge.f32.partialorder %v3685, 0.0
  %vm3942 = vcmp.ge.f32.partialorder %v3686, 0.0
  %vm3943 = vcmp.ge.f32.partialorder %v3687, 0.0
  %vm3944 = vcmp.ge.f32.partialorder %v3688, 0.0
  %vm3945 = vcmp.ge.f32.partialorder %v3689, 0.0
  %vm3946 = vcmp.ge.f32.partialorder %v3690, 0.0
  %vm3947 = vcmp.ge.f32.partialorder %v3691, 0.0
  %vm3948 = vcmp.ge.f32.partialorder %v3692, 0.0
  %vm3949 = vcmp.ge.f32.partialorder %v3693, 0.0
  %vm3950 = vcmp.ge.f32.partialorder %v3694, 0.0
  %vm3951 = vcmp.ge.f32.partialorder %v3695, 0.0
  %vm3952 = vcmp.ge.f32.partialorder %v3696, 0.0
  %vm3953 = vcmp.ge.f32.partialorder %v3697, 0.0
  %vm3954 = vcmp.ge.f32.partialorder %v3698, 0.0
  %vm3955 = vcmp.ge.f32.partialorder %v3699, 0.0
  %vm3956 = vcmp.ge.f32.partialorder %v3700, 0.0
  %vm3957 = vcmp.ge.f32.partialorder %v3701, 0.0
  %vm3958 = vcmp.ge.f32.partialorder %v3702, 0.0
  %vm3959 = vcmp.ge.f32.partialorder %v3703, 0.0
  %vm3960 = vcmp.ge.f32.partialorder %v3704, 0.0
  %vm3961 = vcmp.ge.f32.partialorder %v3705, 0.0
  %vm3962 = vcmp.ge.f32.partialorder %v3706, 0.0
  %vm3963 = vcmp.ge.f32.partialorder %v3707, 0.0
  %vm3964 = vcmp.ge.f32.partialorder %v3708, 0.0
  %vm3965 = vcmp.ge.f32.partialorder %v3709, 0.0
  %vm3966 = vcmp.ge.f32.partialorder %v3710, 0.0
  %vm3967 = vcmp.ge.f32.partialorder %v3711, 0.0
  %vm3968 = vcmp.ge.f32.partialorder %v3712, 0.0
  %vm3969 = vcmp.ge.f32.partialorder %v3713, 0.0
  %vm3970 = vcmp.ge.f32.partialorder %v3714, 0.0
  %vm3971 = vcmp.ge.f32.partialorder %v3715, 0.0
  %vm3972 = vcmp.ge.f32.partialorder %v3716, 0.0
  %vm3973 = vcmp.ge.f32.partialorder %v3717, 0.0
  %vm3974 = vcmp.ge.f32.partialorder %v3718, 0.0
  %vm3975 = vcmp.ge.f32.partialorder %v3719, 0.0
  %vm3976 = vcmp.ge.f32.partialorder %v3720, 0.0
  %vm3977 = vcmp.ge.f32.partialorder %v3721, 0.0
  %vm3978 = vcmp.ge.f32.partialorder %v3722, 0.0
  %vm3979 = vcmp.ge.f32.partialorder %v3723, 0.0
  %vm3980 = vcmp.ge.f32.partialorder %v3724, 0.0
  %vm3981 = vcmp.ge.f32.partialorder %v3725, 0.0
  %vm3982 = vcmp.ge.f32.partialorder %v3726, 0.0
  %vm3983 = vcmp.ge.f32.partialorder %v3727, 0.0
  %vm3984 = vcmp.ge.f32.partialorder %v3728, 0.0
  %vm3985 = vcmp.ge.f32.partialorder %v3729, 0.0
  %vm3986 = vcmp.ge.f32.partialorder %v3730, 0.0
  %vm3987 = vcmp.ge.f32.partialorder %v3731, 0.0
  %vm3988 = vcmp.ge.f32.partialorder %v3732, 0.0
  %vm3989 = vcmp.ge.f32.partialorder %v3733, 0.0
  %vm3990 = vcmp.ge.f32.partialorder %v3734, 0.0
  %vm3991 = vcmp.ge.f32.partialorder %v3735, 0.0
  %vm3992 = vcmp.ge.f32.partialorder %v3736, 0.0
  %vm3993 = vcmp.ge.f32.partialorder %v3737, 0.0
  %vm3994 = vcmp.ge.f32.partialorder %v3738, 0.0
  %vm3995 = vcmp.ge.f32.partialorder %v3739, 0.0
  %vm3996 = vcmp.ge.f32.partialorder %v3740, 0.0
  %vm3997 = vcmp.ge.f32.partialorder %v3741, 0.0
  %vm3998 = vcmp.ge.f32.partialorder %v3742, 0.0
  %vm3999 = vcmp.ge.f32.partialorder %v3743, 0.0
  %vm4000 = vcmp.ge.f32.partialorder %v3744, 0.0
  %v4001 = vmul.f32 %v3489, 0.2
  %v4002 = vmul.f32 %v3490, 0.2
  %v4003 = vmul.f32 %v3491, 0.2
  %v4004 = vmul.f32 %v3492, 0.2
  %v4005 = vmul.f32 %v3493, 0.2
  %v4006 = vmul.f32 %v3494, 0.2
  %v4007 = vmul.f32 %v3495, 0.2
  %v4008 = vmul.f32 %v3496, 0.2
  %v4009 = vmul.f32 %v3497, 0.2
  %v4010 = vmul.f32 %v3498, 0.2
  %v4011 = vmul.f32 %v3499, 0.2
  %v4012 = vmul.f32 %v3500, 0.2
  %v4013 = vmul.f32 %v3501, 0.2
  %v4014 = vmul.f32 %v3502, 0.2
  %v4015 = vmul.f32 %v3503, 0.2
  %v4016 = vmul.f32 %v3504, 0.2
  %v4017 = vmul.f32 %v3505, 0.2
  %v4018 = vmul.f32 %v3506, 0.2
  %v4019 = vmul.f32 %v3507, 0.2
  %v4020 = vmul.f32 %v3508, 0.2
  %v4021 = vmul.f32 %v3509, 0.2
  %v4022 = vmul.f32 %v3510, 0.2
  %v4023 = vmul.f32 %v3511, 0.2
  %v4024 = vmul.f32 %v3512, 0.2
  %v4025 = vmul.f32 %v3513, 0.2
  %v4026 = vmul.f32 %v3514, 0.2
  %v4027 = vmul.f32 %v3515, 0.2
  %v4028 = vmul.f32 %v3516, 0.2
  %v4029 = vmul.f32 %v3517, 0.2
  %v4030 = vmul.f32 %v3518, 0.2
  %v4031 = vmul.f32 %v3519, 0.2
  %v4032 = vmul.f32 %v3520, 0.2
  %v4033 = vmul.f32 %v3521, 0.2
  %v4034 = vmul.f32 %v3522, 0.2
  %v4035 = vmul.f32 %v3523, 0.2
  %v4036 = vmul.f32 %v3524, 0.2
  %v4037 = vmul.f32 %v3525, 0.2
  %v4038 = vmul.f32 %v3526, 0.2
  %v4039 = vmul.f32 %v3527, 0.2
  %v4040 = vmul.f32 %v3528, 0.2
  %v4041 = vmul.f32 %v3529, 0.2
  %v4042 = vmul.f32 %v3530, 0.2
  %v4043 = vmul.f32 %v3531, 0.2
  %v4044 = vmul.f32 %v3532, 0.2
  %v4045 = vmul.f32 %v3533, 0.2
  %v4046 = vmul.f32 %v3534, 0.2
  %v4047 = vmul.f32 %v3535, 0.2
  %v4048 = vmul.f32 %v3536, 0.2
  %v4049 = vmul.f32 %v3537, 0.2
  %v4050 = vmul.f32 %v3538, 0.2
  %v4051 = vmul.f32 %v3539, 0.2
  %v4052 = vmul.f32 %v3540, 0.2
  %v4053 = vmul.f32 %v3541, 0.2
  %v4054 = vmul.f32 %v3542, 0.2
  %v4055 = vmul.f32 %v3543, 0.2
  %v4056 = vmul.f32 %v3544, 0.2
  %v4057 = vmul.f32 %v3545, 0.2
  %v4058 = vmul.f32 %v3546, 0.2
  %v4059 = vmul.f32 %v3547, 0.2
  %v4060 = vmul.f32 %v3548, 0.2
  %v4061 = vmul.f32 %v3549, 0.2
  %v4062 = vmul.f32 %v3550, 0.2
  %v4063 = vmul.f32 %v3551, 0.2
  %v4064 = vmul.f32 %v3552, 0.2
  %v4065 = vmul.f32 %v3553, 0.2
  %v4066 = vmul.f32 %v3554, 0.2
  %v4067 = vmul.f32 %v3555, 0.2
  %v4068 = vmul.f32 %v3556, 0.2
  %v4069 = vmul.f32 %v3557, 0.2
  %v4070 = vmul.f32 %v3558, 0.2
  %v4071 = vmul.f32 %v3559, 0.2
  %v4072 = vmul.f32 %v3560, 0.2
  %v4073 = vmul.f32 %v3561, 0.2
  %v4074 = vmul.f32 %v3562, 0.2
  %v4075 = vmul.f32 %v3563, 0.2
  %v4076 = vmul.f32 %v3564, 0.2
  %v4077 = vmul.f32 %v3565, 0.2
  %v4078 = vmul.f32 %v3566, 0.2
  %v4079 = vmul.f32 %v3567, 0.2
  %v4080 = vmul.f32 %v3568, 0.2
  %v4081 = vmul.f32 %v3569, 0.2
  %v4082 = vmul.f32 %v3570, 0.2
  %v4083 = vmul.f32 %v3571, 0.2
  %v4084 = vmul.f32 %v3572, 0.2
  %v4085 = vmul.f32 %v3573, 0.2
  %v4086 = vmul.f32 %v3574, 0.2
  %v4087 = vmul.f32 %v3575, 0.2
  %v4088 = vmul.f32 %v3576, 0.2
  %v4089 = vmul.f32 %v3577, 0.2
  %v4090 = vmul.f32 %v3578, 0.2
  %v4091 = vmul.f32 %v3579, 0.2
  %v4092 = vmul.f32 %v3580, 0.2
  %v4093 = vmul.f32 %v3581, 0.2
  %v4094 = vmul.f32 %v3582, 0.2
  %v4095 = vmul.f32 %v3583, 0.2
  %v4096 = vmul.f32 %v3584, 0.2
  %v4097 = vmul.f32 %v3585, 0.2
  %v4098 = vmul.f32 %v3586, 0.2
  %v4099 = vmul.f32 %v3587, 0.2
  %v4100 = vmul.f32 %v3588, 0.2
  %v4101 = vmul.f32 %v3589, 0.2
  %v4102 = vmul.f32 %v3590, 0.2
  %v4103 = vmul.f32 %v3591, 0.2
  %v4104 = vmul.f32 %v3592, 0.2
  %v4105 = vmul.f32 %v3593, 0.2
  %v4106 = vmul.f32 %v3594, 0.2
  %v4107 = vmul.f32 %v3595, 0.2
  %v4108 = vmul.f32 %v3596, 0.2
  %v4109 = vmul.f32 %v3597, 0.2
  %v4110 = vmul.f32 %v3598, 0.2
  %v4111 = vmul.f32 %v3599, 0.2
  %v4112 = vmul.f32 %v3600, 0.2
  %v4113 = vmul.f32 %v3601, 0.2
  %v4114 = vmul.f32 %v3602, 0.2
  %v4115 = vmul.f32 %v3603, 0.2
  %v4116 = vmul.f32 %v3604, 0.2
  %v4117 = vmul.f32 %v3605, 0.2
  %v4118 = vmul.f32 %v3606, 0.2
  %v4119 = vmul.f32 %v3607, 0.2
  %v4120 = vmul.f32 %v3608, 0.2
  %v4121 = vmul.f32 %v3609, 0.2
  %v4122 = vmul.f32 %v3610, 0.2
  %v4123 = vmul.f32 %v3611, 0.2
  %v4124 = vmul.f32 %v3612, 0.2
  %v4125 = vmul.f32 %v3613, 0.2
  %v4126 = vmul.f32 %v3614, 0.2
  %v4127 = vmul.f32 %v3615, 0.2
  %v4128 = vmul.f32 %v3616, 0.2
  %v4129 = vmul.f32 %v3617, 0.2
  %v4130 = vmul.f32 %v3618, 0.2
  %v4131 = vmul.f32 %v3619, 0.2
  %v4132 = vmul.f32 %v3620, 0.2
  %v4133 = vmul.f32 %v3621, 0.2
  %v4134 = vmul.f32 %v3622, 0.2
  %v4135 = vmul.f32 %v3623, 0.2
  %v4136 = vmul.f32 %v3624, 0.2
  %v4137 = vmul.f32 %v3625, 0.2
  %v4138 = vmul.f32 %v3626, 0.2
  %v4139 = vmul.f32 %v3627, 0.2
  %v4140 = vmul.f32 %v3628, 0.2
  %v4141 = vmul.f32 %v3629, 0.2
  %v4142 = vmul.f32 %v3630, 0.2
  %v4143 = vmul.f32 %v3631, 0.2
  %v4144 = vmul.f32 %v3632, 0.2
  %v4145 = vmul.f32 %v3633, 0.2
  %v4146 = vmul.f32 %v3634, 0.2
  %v4147 = vmul.f32 %v3635, 0.2
  %v4148 = vmul.f32 %v3636, 0.2
  %v4149 = vmul.f32 %v3637, 0.2
  %v4150 = vmul.f32 %v3638, 0.2
  %v4151 = vmul.f32 %v3639, 0.2
  %v4152 = vmul.f32 %v3640, 0.2
  %v4153 = vmul.f32 %v3641, 0.2
  %v4154 = vmul.f32 %v3642, 0.2
  %v4155 = vmul.f32 %v3643, 0.2
  %v4156 = vmul.f32 %v3644, 0.2
  %v4157 = vmul.f32 %v3645, 0.2
  %v4158 = vmul.f32 %v3646, 0.2
  %v4159 = vmul.f32 %v3647, 0.2
  %v4160 = vmul.f32 %v3648, 0.2
  %v4161 = vmul.f32 %v3649, 0.2
  %v4162 = vmul.f32 %v3650, 0.2
  %v4163 = vmul.f32 %v3651, 0.2
  %v4164 = vmul.f32 %v3652, 0.2
  %v4165 = vmul.f32 %v3653, 0.2
  %v4166 = vmul.f32 %v3654, 0.2
  %v4167 = vmul.f32 %v3655, 0.2
  %v4168 = vmul.f32 %v3656, 0.2
  %v4169 = vmul.f32 %v3657, 0.2
  %v4170 = vmul.f32 %v3658, 0.2
  %v4171 = vmul.f32 %v3659, 0.2
  %v4172 = vmul.f32 %v3660, 0.2
  %v4173 = vmul.f32 %v3661, 0.2
  %v4174 = vmul.f32 %v3662, 0.2
  %v4175 = vmul.f32 %v3663, 0.2
  %v4176 = vmul.f32 %v3664, 0.2
  %v4177 = vmul.f32 %v3665, 0.2
  %v4178 = vmul.f32 %v3666, 0.2
  %v4179 = vmul.f32 %v3667, 0.2
  %v4180 = vmul.f32 %v3668, 0.2
  %v4181 = vmul.f32 %v3669, 0.2
  %v4182 = vmul.f32 %v3670, 0.2
  %v4183 = vmul.f32 %v3671, 0.2
  %v4184 = vmul.f32 %v3672, 0.2
  %v4185 = vmul.f32 %v3673, 0.2
  %v4186 = vmul.f32 %v3674, 0.2
  %v4187 = vmul.f32 %v3675, 0.2
  %v4188 = vmul.f32 %v3676, 0.2
  %v4189 = vmul.f32 %v3677, 0.2
  %v4190 = vmul.f32 %v3678, 0.2
  %v4191 = vmul.f32 %v3679, 0.2
  %v4192 = vmul.f32 %v3680, 0.2
  %v4193 = vmul.f32 %v3681, 0.2
  %v4194 = vmul.f32 %v3682, 0.2
  %v4195 = vmul.f32 %v3683, 0.2
  %v4196 = vmul.f32 %v3684, 0.2
  %v4197 = vmul.f32 %v3685, 0.2
  %v4198 = vmul.f32 %v3686, 0.2
  %v4199 = vmul.f32 %v3687, 0.2
  %v4200 = vmul.f32 %v3688, 0.2
  %v4201 = vmul.f32 %v3689, 0.2
  %v4202 = vmul.f32 %v3690, 0.2
  %v4203 = vmul.f32 %v3691, 0.2
  %v4204 = vmul.f32 %v3692, 0.2
  %v4205 = vmul.f32 %v3693, 0.2
  %v4206 = vmul.f32 %v3694, 0.2
  %v4207 = vmul.f32 %v3695, 0.2
  %v4208 = vmul.f32 %v3696, 0.2
  %v4209 = vmul.f32 %v3697, 0.2
  %v4210 = vmul.f32 %v3698, 0.2
  %v4211 = vmul.f32 %v3699, 0.2
  %v4212 = vmul.f32 %v3700, 0.2
  %v4213 = vmul.f32 %v3701, 0.2
  %v4214 = vmul.f32 %v3702, 0.2
  %v4215 = vmul.f32 %v3703, 0.2
  %v4216 = vmul.f32 %v3704, 0.2
  %v4217 = vmul.f32 %v3705, 0.2
  %v4218 = vmul.f32 %v3706, 0.2
  %v4219 = vmul.f32 %v3707, 0.2
  %v4220 = vmul.f32 %v3708, 0.2
  %v4221 = vmul.f32 %v3709, 0.2
  %v4222 = vmul.f32 %v3710, 0.2
  %v4223 = vmul.f32 %v3711, 0.2
  %v4224 = vmul.f32 %v3712, 0.2
  %v4225 = vmul.f32 %v3713, 0.2
  %v4226 = vmul.f32 %v3714, 0.2
  %v4227 = vmul.f32 %v3715, 0.2
  %v4228 = vmul.f32 %v3716, 0.2
  %v4229 = vmul.f32 %v3717, 0.2
  %v4230 = vmul.f32 %v3718, 0.2
  %v4231 = vmul.f32 %v3719, 0.2
  %v4232 = vmul.f32 %v3720, 0.2
  %v4233 = vmul.f32 %v3721, 0.2
  %v4234 = vmul.f32 %v3722, 0.2
  %v4235 = vmul.f32 %v3723, 0.2
  %v4236 = vmul.f32 %v3724, 0.2
  %v4237 = vmul.f32 %v3725, 0.2
  %v4238 = vmul.f32 %v3726, 0.2
  %v4239 = vmul.f32 %v3727, 0.2
  %v4240 = vmul.f32 %v3728, 0.2
  %v4241 = vmul.f32 %v3729, 0.2
  %v4242 = vmul.f32 %v3730, 0.2
  %v4243 = vmul.f32 %v3731, 0.2
  %v4244 = vmul.f32 %v3732, 0.2
  %v4245 = vmul.f32 %v3733, 0.2
  %v4246 = vmul.f32 %v3734, 0.2
  %v4247 = vmul.f32 %v3735, 0.2
  %v4248 = vmul.f32 %v3736, 0.2
  %v4249 = vmul.f32 %v3737, 0.2
  %v4250 = vmul.f32 %v3738, 0.2
  %v4251 = vmul.f32 %v3739, 0.2
  %v4252 = vmul.f32 %v3740, 0.2
  %v4253 = vmul.f32 %v3741, 0.2
  %v4254 = vmul.f32 %v3742, 0.2
  %v4255 = vmul.f32 %v3743, 0.2
  %v4256 = vmul.f32 %v3744, 0.2
  %v4257 = vsel %vm3745, %v3489, %v4001
  %v4258 = vsel %vm3746, %v3490, %v4002
  %v4259 = vsel %vm3747, %v3491, %v4003
  %v4260 = vsel %vm3748, %v3492, %v4004
  %v4261 = vsel %vm3749, %v3493, %v4005
  %v4262 = vsel %vm3750, %v3494, %v4006
  %v4263 = vsel %vm3751, %v3495, %v4007
  %v4264 = vsel %vm3752, %v3496, %v4008
  %v4265 = vsel %vm3753, %v3497, %v4009
  %v4266 = vsel %vm3754, %v3498, %v4010
  %v4267 = vsel %vm3755, %v3499, %v4011
  %v4268 = vsel %vm3756, %v3500, %v4012
  %v4269 = vsel %vm3757, %v3501, %v4013
  %v4270 = vsel %vm3758, %v3502, %v4014
  %v4271 = vsel %vm3759, %v3503, %v4015
  %v4272 = vsel %vm3760, %v3504, %v4016
  %v4273 = vsel %vm3761, %v3505, %v4017
  %v4274 = vsel %vm3762, %v3506, %v4018
  %v4275 = vsel %vm3763, %v3507, %v4019
  %v4276 = vsel %vm3764, %v3508, %v4020
  %v4277 = vsel %vm3765, %v3509, %v4021
  %v4278 = vsel %vm3766, %v3510, %v4022
  %v4279 = vsel %vm3767, %v3511, %v4023
  %v4280 = vsel %vm3768, %v3512, %v4024
  %v4281 = vsel %vm3769, %v3513, %v4025
  %v4282 = vsel %vm3770, %v3514, %v4026
  %v4283 = vsel %vm3771, %v3515, %v4027
  %v4284 = vsel %vm3772, %v3516, %v4028
  %v4285 = vsel %vm3773, %v3517, %v4029
  %v4286 = vsel %vm3774, %v3518, %v4030
  %v4287 = vsel %vm3775, %v3519, %v4031
  %v4288 = vsel %vm3776, %v3520, %v4032
  %v4289 = vsel %vm3777, %v3521, %v4033
  %v4290 = vsel %vm3778, %v3522, %v4034
  %v4291 = vsel %vm3779, %v3523, %v4035
  %v4292 = vsel %vm3780, %v3524, %v4036
  %v4293 = vsel %vm3781, %v3525, %v4037
  %v4294 = vsel %vm3782, %v3526, %v4038
  %v4295 = vsel %vm3783, %v3527, %v4039
  %v4296 = vsel %vm3784, %v3528, %v4040
  %v4297 = vsel %vm3785, %v3529, %v4041
  %v4298 = vsel %vm3786, %v3530, %v4042
  %v4299 = vsel %vm3787, %v3531, %v4043
  %v4300 = vsel %vm3788, %v3532, %v4044
  %v4301 = vsel %vm3789, %v3533, %v4045
  %v4302 = vsel %vm3790, %v3534, %v4046
  %v4303 = vsel %vm3791, %v3535, %v4047
  %v4304 = vsel %vm3792, %v3536, %v4048
  %v4305 = vsel %vm3793, %v3537, %v4049
  %v4306 = vsel %vm3794, %v3538, %v4050
  %v4307 = vsel %vm3795, %v3539, %v4051
  %v4308 = vsel %vm3796, %v3540, %v4052
  %v4309 = vsel %vm3797, %v3541, %v4053
  %v4310 = vsel %vm3798, %v3542, %v4054
  %v4311 = vsel %vm3799, %v3543, %v4055
  %v4312 = vsel %vm3800, %v3544, %v4056
  %v4313 = vsel %vm3801, %v3545, %v4057
  %v4314 = vsel %vm3802, %v3546, %v4058
  %v4315 = vsel %vm3803, %v3547, %v4059
  %v4316 = vsel %vm3804, %v3548, %v4060
  %v4317 = vsel %vm3805, %v3549, %v4061
  %v4318 = vsel %vm3806, %v3550, %v4062
  %v4319 = vsel %vm3807, %v3551, %v4063
  %v4320 = vsel %vm3808, %v3552, %v4064
  %v4321 = vsel %vm3809, %v3553, %v4065
  %v4322 = vsel %vm3810, %v3554, %v4066
  %v4323 = vsel %vm3811, %v3555, %v4067
  %v4324 = vsel %vm3812, %v3556, %v4068
  %v4325 = vsel %vm3813, %v3557, %v4069
  %v4326 = vsel %vm3814, %v3558, %v4070
  %v4327 = vsel %vm3815, %v3559, %v4071
  %v4328 = vsel %vm3816, %v3560, %v4072
  %v4329 = vsel %vm3817, %v3561, %v4073
  %v4330 = vsel %vm3818, %v3562, %v4074
  %v4331 = vsel %vm3819, %v3563, %v4075
  %v4332 = vsel %vm3820, %v3564, %v4076
  %v4333 = vsel %vm3821, %v3565, %v4077
  %v4334 = vsel %vm3822, %v3566, %v4078
  %v4335 = vsel %vm3823, %v3567, %v4079
  %v4336 = vsel %vm3824, %v3568, %v4080
  %v4337 = vsel %vm3825, %v3569, %v4081
  %v4338 = vsel %vm3826, %v3570, %v4082
  %v4339 = vsel %vm3827, %v3571, %v4083
  %v4340 = vsel %vm3828, %v3572, %v4084
  %v4341 = vsel %vm3829, %v3573, %v4085
  %v4342 = vsel %vm3830, %v3574, %v4086
  %v4343 = vsel %vm3831, %v3575, %v4087
  %v4344 = vsel %vm3832, %v3576, %v4088
  %v4345 = vsel %vm3833, %v3577, %v4089
  %v4346 = vsel %vm3834, %v3578, %v4090
  %v4347 = vsel %vm3835, %v3579, %v4091
  %v4348 = vsel %vm3836, %v3580, %v4092
  %v4349 = vsel %vm3837, %v3581, %v4093
  %v4350 = vsel %vm3838, %v3582, %v4094
  %v4351 = vsel %vm3839, %v3583, %v4095
  %v4352 = vsel %vm3840, %v3584, %v4096
  %v4353 = vsel %vm3841, %v3585, %v4097
  %v4354 = vsel %vm3842, %v3586, %v4098
  %v4355 = vsel %vm3843, %v3587, %v4099
  %v4356 = vsel %vm3844, %v3588, %v4100
  %v4357 = vsel %vm3845, %v3589, %v4101
  %v4358 = vsel %vm3846, %v3590, %v4102
  %v4359 = vsel %vm3847, %v3591, %v4103
  %v4360 = vsel %vm3848, %v3592, %v4104
  %v4361 = vsel %vm3849, %v3593, %v4105
  %v4362 = vsel %vm3850, %v3594, %v4106
  %v4363 = vsel %vm3851, %v3595, %v4107
  %v4364 = vsel %vm3852, %v3596, %v4108
  %v4365 = vsel %vm3853, %v3597, %v4109
  %v4366 = vsel %vm3854, %v3598, %v4110
  %v4367 = vsel %vm3855, %v3599, %v4111
  %v4368 = vsel %vm3856, %v3600, %v4112
  %v4369 = vsel %vm3857, %v3601, %v4113
  %v4370 = vsel %vm3858, %v3602, %v4114
  %v4371 = vsel %vm3859, %v3603, %v4115
  %v4372 = vsel %vm3860, %v3604, %v4116
  %v4373 = vsel %vm3861, %v3605, %v4117
  %v4374 = vsel %vm3862, %v3606, %v4118
  %v4375 = vsel %vm3863, %v3607, %v4119
  %v4376 = vsel %vm3864, %v3608, %v4120
  %v4377 = vsel %vm3865, %v3609, %v4121
  %v4378 = vsel %vm3866, %v3610, %v4122
  %v4379 = vsel %vm3867, %v3611, %v4123
  %v4380 = vsel %vm3868, %v3612, %v4124
  %v4381 = vsel %vm3869, %v3613, %v4125
  %v4382 = vsel %vm3870, %v3614, %v4126
  %v4383 = vsel %vm3871, %v3615, %v4127
  %v4384 = vsel %vm3872, %v3616, %v4128
  %v4385 = vsel %vm3873, %v3617, %v4129
  %v4386 = vsel %vm3874, %v3618, %v4130
  %v4387 = vsel %vm3875, %v3619, %v4131
  %v4388 = vsel %vm3876, %v3620, %v4132
  %v4389 = vsel %vm3877, %v3621, %v4133
  %v4390 = vsel %vm3878, %v3622, %v4134
  %v4391 = vsel %vm3879, %v3623, %v4135
  %v4392 = vsel %vm3880, %v3624, %v4136
  %v4393 = vsel %vm3881, %v3625, %v4137
  %v4394 = vsel %vm3882, %v3626, %v4138
  %v4395 = vsel %vm3883, %v3627, %v4139
  %v4396 = vsel %vm3884, %v3628, %v4140
  %v4397 = vsel %vm3885, %v3629, %v4141
  %v4398 = vsel %vm3886, %v3630, %v4142
  %v4399 = vsel %vm3887, %v3631, %v4143
  %v4400 = vsel %vm3888, %v3632, %v4144
  %v4401 = vsel %vm3889, %v3633, %v4145
  %v4402 = vsel %vm3890, %v3634, %v4146
  %v4403 = vsel %vm3891, %v3635, %v4147
  %v4404 = vsel %vm3892, %v3636, %v4148
  %v4405 = vsel %vm3893, %v3637, %v4149
  %v4406 = vsel %vm3894, %v3638, %v4150
  %v4407 = vsel %vm3895, %v3639, %v4151
  %v4408 = vsel %vm3896, %v3640, %v4152
  %v4409 = vsel %vm3897, %v3641, %v4153
  %v4410 = vsel %vm3898, %v3642, %v4154
  %v4411 = vsel %vm3899, %v3643, %v4155
  %v4412 = vsel %vm3900, %v3644, %v4156
  %v4413 = vsel %vm3901, %v3645, %v4157
  %v4414 = vsel %vm3902, %v3646, %v4158
  %v4415 = vsel %vm3903, %v3647, %v4159
  %v4416 = vsel %vm3904, %v3648, %v4160
  %v4417 = vsel %vm3905, %v3649, %v4161
  %v4418 = vsel %vm3906, %v3650, %v4162
  %v4419 = vsel %vm3907, %v3651, %v4163
  %v4420 = vsel %vm3908, %v3652, %v4164
  %v4421 = vsel %vm3909, %v3653, %v4165
  %v4422 = vsel %vm3910, %v3654, %v4166
  %v4423 = vsel %vm3911, %v3655, %v4167
  %v4424 = vsel %vm3912, %v3656, %v4168
  %v4425 = vsel %vm3913, %v3657, %v4169
  %v4426 = vsel %vm3914, %v3658, %v4170
  %v4427 = vsel %vm3915, %v3659, %v4171
  %v4428 = vsel %vm3916, %v3660, %v4172
  %v4429 = vsel %vm3917, %v3661, %v4173
  %v4430 = vsel %vm3918, %v3662, %v4174
  %v4431 = vsel %vm3919, %v3663, %v4175
  %v4432 = vsel %vm3920, %v3664, %v4176
  %v4433 = vsel %vm3921, %v3665, %v4177
  %v4434 = vsel %vm3922, %v3666, %v4178
  %v4435 = vsel %vm3923, %v3667, %v4179
  %v4436 = vsel %vm3924, %v3668, %v4180
  %v4437 = vsel %vm3925, %v3669, %v4181
  %v4438 = vsel %vm3926, %v3670, %v4182
  %v4439 = vsel %vm3927, %v3671, %v4183
  %v4440 = vsel %vm3928, %v3672, %v4184
  %v4441 = vsel %vm3929, %v3673, %v4185
  %v4442 = vsel %vm3930, %v3674, %v4186
  %v4443 = vsel %vm3931, %v3675, %v4187
  %v4444 = vsel %vm3932, %v3676, %v4188
  %v4445 = vsel %vm3933, %v3677, %v4189
  %v4446 = vsel %vm3934, %v3678, %v4190
  %v4447 = vsel %vm3935, %v3679, %v4191
  %v4448 = vsel %vm3936, %v3680, %v4192
  %v4449 = vsel %vm3937, %v3681, %v4193
  %v4450 = vsel %vm3938, %v3682, %v4194
  %v4451 = vsel %vm3939, %v3683, %v4195
  %v4452 = vsel %vm3940, %v3684, %v4196
  %v4453 = vsel %vm3941, %v3685, %v4197
  %v4454 = vsel %vm3942, %v3686, %v4198
  %v4455 = vsel %vm3943, %v3687, %v4199
  %v4456 = vsel %vm3944, %v3688, %v4200
  %v4457 = vsel %vm3945, %v3689, %v4201
  %v4458 = vsel %vm3946, %v3690, %v4202
  %v4459 = vsel %vm3947, %v3691, %v4203
  %v4460 = vsel %vm3948, %v3692, %v4204
  %v4461 = vsel %vm3949, %v3693, %v4205
  %v4462 = vsel %vm3950, %v3694, %v4206
  %v4463 = vsel %vm3951, %v3695, %v4207
  %v4464 = vsel %vm3952, %v3696, %v4208
  %v4465 = vsel %vm3953, %v3697, %v4209
  %v4466 = vsel %vm3954, %v3698, %v4210
  %v4467 = vsel %vm3955, %v3699, %v4211
  %v4468 = vsel %vm3956, %v3700, %v4212
  %v4469 = vsel %vm3957, %v3701, %v4213
  %v4470 = vsel %vm3958, %v3702, %v4214
  %v4471 = vsel %vm3959, %v3703, %v4215
  %v4472 = vsel %vm3960, %v3704, %v4216
  %v4473 = vsel %vm3961, %v3705, %v4217
  %v4474 = vsel %vm3962, %v3706, %v4218
  %v4475 = vsel %vm3963, %v3707, %v4219
  %v4476 = vsel %vm3964, %v3708, %v4220
  %v4477 = vsel %vm3965, %v3709, %v4221
  %v4478 = vsel %vm3966, %v3710, %v4222
  %v4479 = vsel %vm3967, %v3711, %v4223
  %v4480 = vsel %vm3968, %v3712, %v4224
  %v4481 = vsel %vm3969, %v3713, %v4225
  %v4482 = vsel %vm3970, %v3714, %v4226
  %v4483 = vsel %vm3971, %v3715, %v4227
  %v4484 = vsel %vm3972, %v3716, %v4228
  %v4485 = vsel %vm3973, %v3717, %v4229
  %v4486 = vsel %vm3974, %v3718, %v4230
  %v4487 = vsel %vm3975, %v3719, %v4231
  %v4488 = vsel %vm3976, %v3720, %v4232
  %v4489 = vsel %vm3977, %v3721, %v4233
  %v4490 = vsel %vm3978, %v3722, %v4234
  %v4491 = vsel %vm3979, %v3723, %v4235
  %v4492 = vsel %vm3980, %v3724, %v4236
  %v4493 = vsel %vm3981, %v3725, %v4237
  %v4494 = vsel %vm3982, %v3726, %v4238
  %v4495 = vsel %vm3983, %v3727, %v4239
  %v4496 = vsel %vm3984, %v3728, %v4240
  %v4497 = vsel %vm3985, %v3729, %v4241
  %v4498 = vsel %vm3986, %v3730, %v4242
  %v4499 = vsel %vm3987, %v3731, %v4243
  %v4500 = vsel %vm3988, %v3732, %v4244
  %v4501 = vsel %vm3989, %v3733, %v4245
  %v4502 = vsel %vm3990, %v3734, %v4246
  %v4503 = vsel %vm3991, %v3735, %v4247
  %v4504 = vsel %vm3992, %v3736, %v4248
  %v4505 = vsel %vm3993, %v3737, %v4249
  %v4506 = vsel %vm3994, %v3738, %v4250
  %v4507 = vsel %vm3995, %v3739, %v4251
  %v4508 = vsel %vm3996, %v3740, %v4252
  %v4509 = vsel %vm3997, %v3741, %v4253
  %v4510 = vsel %vm3998, %v3742, %v4254
  %v4511 = vsel %vm3999, %v3743, %v4255
  %v4512 = vsel %vm4000, %v3744, %v4256
  %v4513 = vpack.c.bf16 %v4258, %v4257
  %v4514 = vpack.c.bf16 %v4260, %v4259
  %v4515 = vpack.c.bf16 %v4262, %v4261
  %v4516 = vpack.c.bf16 %v4264, %v4263
  %v4517 = vpack.c.bf16 %v4266, %v4265
  %v4518 = vpack.c.bf16 %v4268, %v4267
  %v4519 = vpack.c.bf16 %v4270, %v4269
  %v4520 = vpack.c.bf16 %v4272, %v4271
  %v4521 = vpack.c.bf16 %v4274, %v4273
  %v4522 = vpack.c.bf16 %v4276, %v4275
  %v4523 = vpack.c.bf16 %v4278, %v4277
  %v4524 = vpack.c.bf16 %v4280, %v4279
  %v4525 = vpack.c.bf16 %v4282, %v4281
  %v4526 = vpack.c.bf16 %v4284, %v4283
  %v4527 = vpack.c.bf16 %v4286, %v4285
  %v4528 = vpack.c.bf16 %v4288, %v4287
  %v4529 = vpack.c.bf16 %v4290, %v4289
  %v4530 = vpack.c.bf16 %v4292, %v4291
  %v4531 = vpack.c.bf16 %v4294, %v4293
  %v4532 = vpack.c.bf16 %v4296, %v4295
  %v4533 = vpack.c.bf16 %v4298, %v4297
  %v4534 = vpack.c.bf16 %v4300, %v4299
  %v4535 = vpack.c.bf16 %v4302, %v4301
  %v4536 = vpack.c.bf16 %v4304, %v4303
  %v4537 = vpack.c.bf16 %v4306, %v4305
  %v4538 = vpack.c.bf16 %v4308, %v4307
  %v4539 = vpack.c.bf16 %v4310, %v4309
  %v4540 = vpack.c.bf16 %v4312, %v4311
  %v4541 = vpack.c.bf16 %v4314, %v4313
  %v4542 = vpack.c.bf16 %v4316, %v4315
  %v4543 = vpack.c.bf16 %v4318, %v4317
  %v4544 = vpack.c.bf16 %v4320, %v4319
  %v4545 = vpack.c.bf16 %v4322, %v4321
  %v4546 = vpack.c.bf16 %v4324, %v4323
  %v4547 = vpack.c.bf16 %v4326, %v4325
  %v4548 = vpack.c.bf16 %v4328, %v4327
  %v4549 = vpack.c.bf16 %v4330, %v4329
  %v4550 = vpack.c.bf16 %v4332, %v4331
  %v4551 = vpack.c.bf16 %v4334, %v4333
  %v4552 = vpack.c.bf16 %v4336, %v4335
  %v4553 = vpack.c.bf16 %v4338, %v4337
  %v4554 = vpack.c.bf16 %v4340, %v4339
  %v4555 = vpack.c.bf16 %v4342, %v4341
  %v4556 = vpack.c.bf16 %v4344, %v4343
  %v4557 = vpack.c.bf16 %v4346, %v4345
  %v4558 = vpack.c.bf16 %v4348, %v4347
  %v4559 = vpack.c.bf16 %v4350, %v4349
  %v4560 = vpack.c.bf16 %v4352, %v4351
  %v4561 = vpack.c.bf16 %v4354, %v4353
  %v4562 = vpack.c.bf16 %v4356, %v4355
  %v4563 = vpack.c.bf16 %v4358, %v4357
  %v4564 = vpack.c.bf16 %v4360, %v4359
  %v4565 = vpack.c.bf16 %v4362, %v4361
  %v4566 = vpack.c.bf16 %v4364, %v4363
  %v4567 = vpack.c.bf16 %v4366, %v4365
  %v4568 = vpack.c.bf16 %v4368, %v4367
  %v4569 = vpack.c.bf16 %v4370, %v4369
  %v4570 = vpack.c.bf16 %v4372, %v4371
  %v4571 = vpack.c.bf16 %v4374, %v4373
  %v4572 = vpack.c.bf16 %v4376, %v4375
  %v4573 = vpack.c.bf16 %v4378, %v4377
  %v4574 = vpack.c.bf16 %v4380, %v4379
  %v4575 = vpack.c.bf16 %v4382, %v4381
  %v4576 = vpack.c.bf16 %v4384, %v4383
  %v4577 = vpack.c.bf16 %v4386, %v4385
  %v4578 = vpack.c.bf16 %v4388, %v4387
  %v4579 = vpack.c.bf16 %v4390, %v4389
  %v4580 = vpack.c.bf16 %v4392, %v4391
  %v4581 = vpack.c.bf16 %v4394, %v4393
  %v4582 = vpack.c.bf16 %v4396, %v4395
  %v4583 = vpack.c.bf16 %v4398, %v4397
  %v4584 = vpack.c.bf16 %v4400, %v4399
  %v4585 = vpack.c.bf16 %v4402, %v4401
  %v4586 = vpack.c.bf16 %v4404, %v4403
  %v4587 = vpack.c.bf16 %v4406, %v4405
  %v4588 = vpack.c.bf16 %v4408, %v4407
  %v4589 = vpack.c.bf16 %v4410, %v4409
  %v4590 = vpack.c.bf16 %v4412, %v4411
  %v4591 = vpack.c.bf16 %v4414, %v4413
  %v4592 = vpack.c.bf16 %v4416, %v4415
  %v4593 = vpack.c.bf16 %v4418, %v4417
  %v4594 = vpack.c.bf16 %v4420, %v4419
  %v4595 = vpack.c.bf16 %v4422, %v4421
  %v4596 = vpack.c.bf16 %v4424, %v4423
  %v4597 = vpack.c.bf16 %v4426, %v4425
  %v4598 = vpack.c.bf16 %v4428, %v4427
  %v4599 = vpack.c.bf16 %v4430, %v4429
  %v4600 = vpack.c.bf16 %v4432, %v4431
  %v4601 = vpack.c.bf16 %v4434, %v4433
  %v4602 = vpack.c.bf16 %v4436, %v4435
  %v4603 = vpack.c.bf16 %v4438, %v4437
  %v4604 = vpack.c.bf16 %v4440, %v4439
  %v4605 = vpack.c.bf16 %v4442, %v4441
  %v4606 = vpack.c.bf16 %v4444, %v4443
  %v4607 = vpack.c.bf16 %v4446, %v4445
  %v4608 = vpack.c.bf16 %v4448, %v4447
  %v4609 = vpack.c.bf16 %v4450, %v4449
  %v4610 = vpack.c.bf16 %v4452, %v4451
  %v4611 = vpack.c.bf16 %v4454, %v4453
  %v4612 = vpack.c.bf16 %v4456, %v4455
  %v4613 = vpack.c.bf16 %v4458, %v4457
  %v4614 = vpack.c.bf16 %v4460, %v4459
  %v4615 = vpack.c.bf16 %v4462, %v4461
  %v4616 = vpack.c.bf16 %v4464, %v4463
  %v4617 = vpack.c.bf16 %v4466, %v4465
  %v4618 = vpack.c.bf16 %v4468, %v4467
  %v4619 = vpack.c.bf16 %v4470, %v4469
  %v4620 = vpack.c.bf16 %v4472, %v4471
  %v4621 = vpack.c.bf16 %v4474, %v4473
  %v4622 = vpack.c.bf16 %v4476, %v4475
  %v4623 = vpack.c.bf16 %v4478, %v4477
  %v4624 = vpack.c.bf16 %v4480, %v4479
  %v4625 = vpack.c.bf16 %v4482, %v4481
  %v4626 = vpack.c.bf16 %v4484, %v4483
  %v4627 = vpack.c.bf16 %v4486, %v4485
  %v4628 = vpack.c.bf16 %v4488, %v4487
  %v4629 = vpack.c.bf16 %v4490, %v4489
  %v4630 = vpack.c.bf16 %v4492, %v4491
  %v4631 = vpack.c.bf16 %v4494, %v4493
  %v4632 = vpack.c.bf16 %v4496, %v4495
  %v4633 = vpack.c.bf16 %v4498, %v4497
  %v4634 = vpack.c.bf16 %v4500, %v4499
  %v4635 = vpack.c.bf16 %v4502, %v4501
  %v4636 = vpack.c.bf16 %v4504, %v4503
  %v4637 = vpack.c.bf16 %v4506, %v4505
  %v4638 = vpack.c.bf16 %v4508, %v4507
  %v4639 = vpack.c.bf16 %v4510, %v4509
  %v4640 = vpack.c.bf16 %v4512, %v4511
  %v4769 = vunpack.c.l.b16 %v4513
  %v4770 = vunpack.c.h.b16 %v4513
  %v4771 = vunpack.c.l.b16 %v4514
  %v4772 = vunpack.c.h.b16 %v4514
  %v4773 = vunpack.c.l.b16 %v4515
  %v4774 = vunpack.c.h.b16 %v4515
  %v4775 = vunpack.c.l.b16 %v4516
  %v4776 = vunpack.c.h.b16 %v4516
  %v4777 = vunpack.c.l.b16 %v4517
  %v4778 = vunpack.c.h.b16 %v4517
  %v4779 = vunpack.c.l.b16 %v4518
  %v4780 = vunpack.c.h.b16 %v4518
  %v4781 = vunpack.c.l.b16 %v4519
  %v4782 = vunpack.c.h.b16 %v4519
  %v4783 = vunpack.c.l.b16 %v4520
  %v4784 = vunpack.c.h.b16 %v4520
  %v4785 = vunpack.c.l.b16 %v4521
  %v4786 = vunpack.c.h.b16 %v4521
  %v4787 = vunpack.c.l.b16 %v4522
  %v4788 = vunpack.c.h.b16 %v4522
  %v4789 = vunpack.c.l.b16 %v4523
  %v4790 = vunpack.c.h.b16 %v4523
  %v4791 = vunpack.c.l.b16 %v4524
  %v4792 = vunpack.c.h.b16 %v4524
  %v4793 = vunpack.c.l.b16 %v4525
  %v4794 = vunpack.c.h.b16 %v4525
  %v4795 = vunpack.c.l.b16 %v4526
  %v4796 = vunpack.c.h.b16 %v4526
  %v4797 = vunpack.c.l.b16 %v4527
  %v4798 = vunpack.c.h.b16 %v4527
  %v4799 = vunpack.c.l.b16 %v4528
  %v4800 = vunpack.c.h.b16 %v4528
  %v4801 = vunpack.c.l.b16 %v4529
  %v4802 = vunpack.c.h.b16 %v4529
  %v4803 = vunpack.c.l.b16 %v4530
  %v4804 = vunpack.c.h.b16 %v4530
  %v4805 = vunpack.c.l.b16 %v4531
  %v4806 = vunpack.c.h.b16 %v4531
  %v4807 = vunpack.c.l.b16 %v4532
  %v4808 = vunpack.c.h.b16 %v4532
  %v4809 = vunpack.c.l.b16 %v4533
  %v4810 = vunpack.c.h.b16 %v4533
  %v4811 = vunpack.c.l.b16 %v4534
  %v4812 = vunpack.c.h.b16 %v4534
  %v4813 = vunpack.c.l.b16 %v4535
  %v4814 = vunpack.c.h.b16 %v4535
  %v4815 = vunpack.c.l.b16 %v4536
  %v4816 = vunpack.c.h.b16 %v4536
  %v4817 = vunpack.c.l.b16 %v4537
  %v4818 = vunpack.c.h.b16 %v4537
  %v4819 = vunpack.c.l.b16 %v4538
  %v4820 = vunpack.c.h.b16 %v4538
  %v4821 = vunpack.c.l.b16 %v4539
  %v4822 = vunpack.c.h.b16 %v4539
  %v4823 = vunpack.c.l.b16 %v4540
  %v4824 = vunpack.c.h.b16 %v4540
  %v4825 = vunpack.c.l.b16 %v4541
  %v4826 = vunpack.c.h.b16 %v4541
  %v4827 = vunpack.c.l.b16 %v4542
  %v4828 = vunpack.c.h.b16 %v4542
  %v4829 = vunpack.c.l.b16 %v4543
  %v4830 = vunpack.c.h.b16 %v4543
  %v4831 = vunpack.c.l.b16 %v4544
  %v4832 = vunpack.c.h.b16 %v4544
  %v4833 = vunpack.c.l.b16 %v4545
  %v4834 = vunpack.c.h.b16 %v4545
  %v4835 = vunpack.c.l.b16 %v4546
  %v4836 = vunpack.c.h.b16 %v4546
  %v4837 = vunpack.c.l.b16 %v4547
  %v4838 = vunpack.c.h.b16 %v4547
  %v4839 = vunpack.c.l.b16 %v4548
  %v4840 = vunpack.c.h.b16 %v4548
  %v4841 = vunpack.c.l.b16 %v4549
  %v4842 = vunpack.c.h.b16 %v4549
  %v4843 = vunpack.c.l.b16 %v4550
  %v4844 = vunpack.c.h.b16 %v4550
  %v4845 = vunpack.c.l.b16 %v4551
  %v4846 = vunpack.c.h.b16 %v4551
  %v4847 = vunpack.c.l.b16 %v4552
  %v4848 = vunpack.c.h.b16 %v4552
  %v4849 = vunpack.c.l.b16 %v4553
  %v4850 = vunpack.c.h.b16 %v4553
  %v4851 = vunpack.c.l.b16 %v4554
  %v4852 = vunpack.c.h.b16 %v4554
  %v4853 = vunpack.c.l.b16 %v4555
  %v4854 = vunpack.c.h.b16 %v4555
  %v4855 = vunpack.c.l.b16 %v4556
  %v4856 = vunpack.c.h.b16 %v4556
  %v4857 = vunpack.c.l.b16 %v4557
  %v4858 = vunpack.c.h.b16 %v4557
  %v4859 = vunpack.c.l.b16 %v4558
  %v4860 = vunpack.c.h.b16 %v4558
  %v4861 = vunpack.c.l.b16 %v4559
  %v4862 = vunpack.c.h.b16 %v4559
  %v4863 = vunpack.c.l.b16 %v4560
  %v4864 = vunpack.c.h.b16 %v4560
  %v4865 = vunpack.c.l.b16 %v4561
  %v4866 = vunpack.c.h.b16 %v4561
  %v4867 = vunpack.c.l.b16 %v4562
  %v4868 = vunpack.c.h.b16 %v4562
  %v4869 = vunpack.c.l.b16 %v4563
  %v4870 = vunpack.c.h.b16 %v4563
  %v4871 = vunpack.c.l.b16 %v4564
  %v4872 = vunpack.c.h.b16 %v4564
  %v4873 = vunpack.c.l.b16 %v4565
  %v4874 = vunpack.c.h.b16 %v4565
  %v4875 = vunpack.c.l.b16 %v4566
  %v4876 = vunpack.c.h.b16 %v4566
  %v4877 = vunpack.c.l.b16 %v4567
  %v4878 = vunpack.c.h.b16 %v4567
  %v4879 = vunpack.c.l.b16 %v4568
  %v4880 = vunpack.c.h.b16 %v4568
  %v4881 = vunpack.c.l.b16 %v4569
  %v4882 = vunpack.c.h.b16 %v4569
  %v4883 = vunpack.c.l.b16 %v4570
  %v4884 = vunpack.c.h.b16 %v4570
  %v4885 = vunpack.c.l.b16 %v4571
  %v4886 = vunpack.c.h.b16 %v4571
  %v4887 = vunpack.c.l.b16 %v4572
  %v4888 = vunpack.c.h.b16 %v4572
  %v4889 = vunpack.c.l.b16 %v4573
  %v4890 = vunpack.c.h.b16 %v4573
  %v4891 = vunpack.c.l.b16 %v4574
  %v4892 = vunpack.c.h.b16 %v4574
  %v4893 = vunpack.c.l.b16 %v4575
  %v4894 = vunpack.c.h.b16 %v4575
  %v4895 = vunpack.c.l.b16 %v4576
  %v4896 = vunpack.c.h.b16 %v4576
  %v4897 = vunpack.c.l.b16 %v4577
  %v4898 = vunpack.c.h.b16 %v4577
  %v4899 = vunpack.c.l.b16 %v4578
  %v4900 = vunpack.c.h.b16 %v4578
  %v4901 = vunpack.c.l.b16 %v4579
  %v4902 = vunpack.c.h.b16 %v4579
  %v4903 = vunpack.c.l.b16 %v4580
  %v4904 = vunpack.c.h.b16 %v4580
  %v4905 = vunpack.c.l.b16 %v4581
  %v4906 = vunpack.c.h.b16 %v4581
  %v4907 = vunpack.c.l.b16 %v4582
  %v4908 = vunpack.c.h.b16 %v4582
  %v4909 = vunpack.c.l.b16 %v4583
  %v4910 = vunpack.c.h.b16 %v4583
  %v4911 = vunpack.c.l.b16 %v4584
  %v4912 = vunpack.c.h.b16 %v4584
  %v4913 = vunpack.c.l.b16 %v4585
  %v4914 = vunpack.c.h.b16 %v4585
  %v4915 = vunpack.c.l.b16 %v4586
  %v4916 = vunpack.c.h.b16 %v4586
  %v4917 = vunpack.c.l.b16 %v4587
  %v4918 = vunpack.c.h.b16 %v4587
  %v4919 = vunpack.c.l.b16 %v4588
  %v4920 = vunpack.c.h.b16 %v4588
  %v4921 = vunpack.c.l.b16 %v4589
  %v4922 = vunpack.c.h.b16 %v4589
  %v4923 = vunpack.c.l.b16 %v4590
  %v4924 = vunpack.c.h.b16 %v4590
  %v4925 = vunpack.c.l.b16 %v4591
  %v4926 = vunpack.c.h.b16 %v4591
  %v4927 = vunpack.c.l.b16 %v4592
  %v4928 = vunpack.c.h.b16 %v4592
  %v4929 = vunpack.c.l.b16 %v4593
  %v4930 = vunpack.c.h.b16 %v4593
  %v4931 = vunpack.c.l.b16 %v4594
  %v4932 = vunpack.c.h.b16 %v4594
  %v4933 = vunpack.c.l.b16 %v4595
  %v4934 = vunpack.c.h.b16 %v4595
  %v4935 = vunpack.c.l.b16 %v4596
  %v4936 = vunpack.c.h.b16 %v4596
  %v4937 = vunpack.c.l.b16 %v4597
  %v4938 = vunpack.c.h.b16 %v4597
  %v4939 = vunpack.c.l.b16 %v4598
  %v4940 = vunpack.c.h.b16 %v4598
  %v4941 = vunpack.c.l.b16 %v4599
  %v4942 = vunpack.c.h.b16 %v4599
  %v4943 = vunpack.c.l.b16 %v4600
  %v4944 = vunpack.c.h.b16 %v4600
  %v4945 = vunpack.c.l.b16 %v4601
  %v4946 = vunpack.c.h.b16 %v4601
  %v4947 = vunpack.c.l.b16 %v4602
  %v4948 = vunpack.c.h.b16 %v4602
  %v4949 = vunpack.c.l.b16 %v4603
  %v4950 = vunpack.c.h.b16 %v4603
  %v4951 = vunpack.c.l.b16 %v4604
  %v4952 = vunpack.c.h.b16 %v4604
  %v4953 = vunpack.c.l.b16 %v4605
  %v4954 = vunpack.c.h.b16 %v4605
  %v4955 = vunpack.c.l.b16 %v4606
  %v4956 = vunpack.c.h.b16 %v4606
  %v4957 = vunpack.c.l.b16 %v4607
  %v4958 = vunpack.c.h.b16 %v4607
  %v4959 = vunpack.c.l.b16 %v4608
  %v4960 = vunpack.c.h.b16 %v4608
  %v4961 = vunpack.c.l.b16 %v4609
  %v4962 = vunpack.c.h.b16 %v4609
  %v4963 = vunpack.c.l.b16 %v4610
  %v4964 = vunpack.c.h.b16 %v4610
  %v4965 = vunpack.c.l.b16 %v4611
  %v4966 = vunpack.c.h.b16 %v4611
  %v4967 = vunpack.c.l.b16 %v4612
  %v4968 = vunpack.c.h.b16 %v4612
  %v4969 = vunpack.c.l.b16 %v4613
  %v4970 = vunpack.c.h.b16 %v4613
  %v4971 = vunpack.c.l.b16 %v4614
  %v4972 = vunpack.c.h.b16 %v4614
  %v4973 = vunpack.c.l.b16 %v4615
  %v4974 = vunpack.c.h.b16 %v4615
  %v4975 = vunpack.c.l.b16 %v4616
  %v4976 = vunpack.c.h.b16 %v4616
  %v4977 = vunpack.c.l.b16 %v4617
  %v4978 = vunpack.c.h.b16 %v4617
  %v4979 = vunpack.c.l.b16 %v4618
  %v4980 = vunpack.c.h.b16 %v4618
  %v4981 = vunpack.c.l.b16 %v4619
  %v4982 = vunpack.c.h.b16 %v4619
  %v4983 = vunpack.c.l.b16 %v4620
  %v4984 = vunpack.c.h.b16 %v4620
  %v4985 = vunpack.c.l.b16 %v4621
  %v4986 = vunpack.c.h.b16 %v4621
  %v4987 = vunpack.c.l.b16 %v4622
  %v4988 = vunpack.c.h.b16 %v4622
  %v4989 = vunpack.c.l.b16 %v4623
  %v4990 = vunpack.c.h.b16 %v4623
  %v4991 = vunpack.c.l.b16 %v4624
  %v4992 = vunpack.c.h.b16 %v4624
  %v4993 = vunpack.c.l.b16 %v4625
  %v4994 = vunpack.c.h.b16 %v4625
  %v4995 = vunpack.c.l.b16 %v4626
  %v4996 = vunpack.c.h.b16 %v4626
  %v4997 = vunpack.c.l.b16 %v4627
  %v4998 = vunpack.c.h.b16 %v4627
  %v4999 = vunpack.c.l.b16 %v4628
  %v5000 = vunpack.c.h.b16 %v4628
  %v5001 = vunpack.c.l.b16 %v4629
  %v5002 = vunpack.c.h.b16 %v4629
  %v5003 = vunpack.c.l.b16 %v4630
  %v5004 = vunpack.c.h.b16 %v4630
  %v5005 = vunpack.c.l.b16 %v4631
  %v5006 = vunpack.c.h.b16 %v4631
  %v5007 = vunpack.c.l.b16 %v4632
  %v5008 = vunpack.c.h.b16 %v4632
  %v5009 = vunpack.c.l.b16 %v4633
  %v5010 = vunpack.c.h.b16 %v4633
  %v5011 = vunpack.c.l.b16 %v4634
  %v5012 = vunpack.c.h.b16 %v4634
  %v5013 = vunpack.c.l.b16 %v4635
  %v5014 = vunpack.c.h.b16 %v4635
  %v5015 = vunpack.c.l.b16 %v4636
  %v5016 = vunpack.c.h.b16 %v4636
  %v5017 = vunpack.c.l.b16 %v4637
  %v5018 = vunpack.c.h.b16 %v4637
  %v5019 = vunpack.c.l.b16 %v4638
  %v5020 = vunpack.c.h.b16 %v4638
  %v5021 = vunpack.c.l.b16 %v4639
  %v5022 = vunpack.c.h.b16 %v4639
  %v5023 = vunpack.c.l.b16 %v4640
  %v5024 = vunpack.c.h.b16 %v4640
  %v5025 = vpack.c.b16 %v4769, %v4769
  %v5026 = vpack.c.b16 %v4770, %v4770
  %v5027 = vpack.c.b16 %v4771, %v4771
  %v5028 = vpack.c.b16 %v4772, %v4772
  %v5029 = vpack.c.b16 %v4773, %v4773
  %v5030 = vpack.c.b16 %v4774, %v4774
  %v5031 = vpack.c.b16 %v4775, %v4775
  %v5032 = vpack.c.b16 %v4776, %v4776
  %v5033 = vpack.c.b16 %v4777, %v4777
  %v5034 = vpack.c.b16 %v4778, %v4778
  %v5035 = vpack.c.b16 %v4779, %v4779
  %v5036 = vpack.c.b16 %v4780, %v4780
  %v5037 = vpack.c.b16 %v4781, %v4781
  %v5038 = vpack.c.b16 %v4782, %v4782
  %v5039 = vpack.c.b16 %v4783, %v4783
  %v5040 = vpack.c.b16 %v4784, %v4784
  %v5041 = vpack.c.b16 %v4785, %v4785
  %v5042 = vpack.c.b16 %v4786, %v4786
  %v5043 = vpack.c.b16 %v4787, %v4787
  %v5044 = vpack.c.b16 %v4788, %v4788
  %v5045 = vpack.c.b16 %v4789, %v4789
  %v5046 = vpack.c.b16 %v4790, %v4790
  %v5047 = vpack.c.b16 %v4791, %v4791
  %v5048 = vpack.c.b16 %v4792, %v4792
  %v5049 = vpack.c.b16 %v4793, %v4793
  %v5050 = vpack.c.b16 %v4794, %v4794
  %v5051 = vpack.c.b16 %v4795, %v4795
  %v5052 = vpack.c.b16 %v4796, %v4796
  %v5053 = vpack.c.b16 %v4797, %v4797
  %v5054 = vpack.c.b16 %v4798, %v4798
  %v5055 = vpack.c.b16 %v4799, %v4799
  %v5056 = vpack.c.b16 %v4800, %v4800
  %v5057 = vpack.c.b16 %v4801, %v4801
  %v5058 = vpack.c.b16 %v4802, %v4802
  %v5059 = vpack.c.b16 %v4803, %v4803
  %v5060 = vpack.c.b16 %v4804, %v4804
  %v5061 = vpack.c.b16 %v4805, %v4805
  %v5062 = vpack.c.b16 %v4806, %v4806
  %v5063 = vpack.c.b16 %v4807, %v4807
  %v5064 = vpack.c.b16 %v4808, %v4808
  %v5065 = vpack.c.b16 %v4809, %v4809
  %v5066 = vpack.c.b16 %v4810, %v4810
  %v5067 = vpack.c.b16 %v4811, %v4811
  %v5068 = vpack.c.b16 %v4812, %v4812
  %v5069 = vpack.c.b16 %v4813, %v4813
  %v5070 = vpack.c.b16 %v4814, %v4814
  %v5071 = vpack.c.b16 %v4815, %v4815
  %v5072 = vpack.c.b16 %v4816, %v4816
  %v5073 = vpack.c.b16 %v4817, %v4817
  %v5074 = vpack.c.b16 %v4818, %v4818
  %v5075 = vpack.c.b16 %v4819, %v4819
  %v5076 = vpack.c.b16 %v4820, %v4820
  %v5077 = vpack.c.b16 %v4821, %v4821
  %v5078 = vpack.c.b16 %v4822, %v4822
  %v5079 = vpack.c.b16 %v4823, %v4823
  %v5080 = vpack.c.b16 %v4824, %v4824
  %v5081 = vpack.c.b16 %v4825, %v4825
  %v5082 = vpack.c.b16 %v4826, %v4826
  %v5083 = vpack.c.b16 %v4827, %v4827
  %v5084 = vpack.c.b16 %v4828, %v4828
  %v5085 = vpack.c.b16 %v4829, %v4829
  %v5086 = vpack.c.b16 %v4830, %v4830
  %v5087 = vpack.c.b16 %v4831, %v4831
  %v5088 = vpack.c.b16 %v4832, %v4832
  %v5089 = vpack.c.b16 %v4833, %v4833
  %v5090 = vpack.c.b16 %v4834, %v4834
  %v5091 = vpack.c.b16 %v4835, %v4835
  %v5092 = vpack.c.b16 %v4836, %v4836
  %v5093 = vpack.c.b16 %v4837, %v4837
  %v5094 = vpack.c.b16 %v4838, %v4838
  %v5095 = vpack.c.b16 %v4839, %v4839
  %v5096 = vpack.c.b16 %v4840, %v4840
  %v5097 = vpack.c.b16 %v4841, %v4841
  %v5098 = vpack.c.b16 %v4842, %v4842
  %v5099 = vpack.c.b16 %v4843, %v4843
  %v5100 = vpack.c.b16 %v4844, %v4844
  %v5101 = vpack.c.b16 %v4845, %v4845
  %v5102 = vpack.c.b16 %v4846, %v4846
  %v5103 = vpack.c.b16 %v4847, %v4847
  %v5104 = vpack.c.b16 %v4848, %v4848
  %v5105 = vpack.c.b16 %v4849, %v4849
  %v5106 = vpack.c.b16 %v4850, %v4850
  %v5107 = vpack.c.b16 %v4851, %v4851
  %v5108 = vpack.c.b16 %v4852, %v4852
  %v5109 = vpack.c.b16 %v4853, %v4853
  %v5110 = vpack.c.b16 %v4854, %v4854
  %v5111 = vpack.c.b16 %v4855, %v4855
  %v5112 = vpack.c.b16 %v4856, %v4856
  %v5113 = vpack.c.b16 %v4857, %v4857
  %v5114 = vpack.c.b16 %v4858, %v4858
  %v5115 = vpack.c.b16 %v4859, %v4859
  %v5116 = vpack.c.b16 %v4860, %v4860
  %v5117 = vpack.c.b16 %v4861, %v4861
  %v5118 = vpack.c.b16 %v4862, %v4862
  %v5119 = vpack.c.b16 %v4863, %v4863
  %v5120 = vpack.c.b16 %v4864, %v4864
  %v5121 = vpack.c.b16 %v4865, %v4865
  %v5122 = vpack.c.b16 %v4866, %v4866
  %v5123 = vpack.c.b16 %v4867, %v4867
  %v5124 = vpack.c.b16 %v4868, %v4868
  %v5125 = vpack.c.b16 %v4869, %v4869
  %v5126 = vpack.c.b16 %v4870, %v4870
  %v5127 = vpack.c.b16 %v4871, %v4871
  %v5128 = vpack.c.b16 %v4872, %v4872
  %v5129 = vpack.c.b16 %v4873, %v4873
  %v5130 = vpack.c.b16 %v4874, %v4874
  %v5131 = vpack.c.b16 %v4875, %v4875
  %v5132 = vpack.c.b16 %v4876, %v4876
  %v5133 = vpack.c.b16 %v4877, %v4877
  %v5134 = vpack.c.b16 %v4878, %v4878
  %v5135 = vpack.c.b16 %v4879, %v4879
  %v5136 = vpack.c.b16 %v4880, %v4880
  %v5137 = vpack.c.b16 %v4881, %v4881
  %v5138 = vpack.c.b16 %v4882, %v4882
  %v5139 = vpack.c.b16 %v4883, %v4883
  %v5140 = vpack.c.b16 %v4884, %v4884
  %v5141 = vpack.c.b16 %v4885, %v4885
  %v5142 = vpack.c.b16 %v4886, %v4886
  %v5143 = vpack.c.b16 %v4887, %v4887
  %v5144 = vpack.c.b16 %v4888, %v4888
  %v5145 = vpack.c.b16 %v4889, %v4889
  %v5146 = vpack.c.b16 %v4890, %v4890
  %v5147 = vpack.c.b16 %v4891, %v4891
  %v5148 = vpack.c.b16 %v4892, %v4892
  %v5149 = vpack.c.b16 %v4893, %v4893
  %v5150 = vpack.c.b16 %v4894, %v4894
  %v5151 = vpack.c.b16 %v4895, %v4895
  %v5152 = vpack.c.b16 %v4896, %v4896
  %v5153 = vpack.c.b16 %v4897, %v4897
  %v5154 = vpack.c.b16 %v4898, %v4898
  %v5155 = vpack.c.b16 %v4899, %v4899
  %v5156 = vpack.c.b16 %v4900, %v4900
  %v5157 = vpack.c.b16 %v4901, %v4901
  %v5158 = vpack.c.b16 %v4902, %v4902
  %v5159 = vpack.c.b16 %v4903, %v4903
  %v5160 = vpack.c.b16 %v4904, %v4904
  %v5161 = vpack.c.b16 %v4905, %v4905
  %v5162 = vpack.c.b16 %v4906, %v4906
  %v5163 = vpack.c.b16 %v4907, %v4907
  %v5164 = vpack.c.b16 %v4908, %v4908
  %v5165 = vpack.c.b16 %v4909, %v4909
  %v5166 = vpack.c.b16 %v4910, %v4910
  %v5167 = vpack.c.b16 %v4911, %v4911
  %v5168 = vpack.c.b16 %v4912, %v4912
  %v5169 = vpack.c.b16 %v4913, %v4913
  %v5170 = vpack.c.b16 %v4914, %v4914
  %v5171 = vpack.c.b16 %v4915, %v4915
  %v5172 = vpack.c.b16 %v4916, %v4916
  %v5173 = vpack.c.b16 %v4917, %v4917
  %v5174 = vpack.c.b16 %v4918, %v4918
  %v5175 = vpack.c.b16 %v4919, %v4919
  %v5176 = vpack.c.b16 %v4920, %v4920
  %v5177 = vpack.c.b16 %v4921, %v4921
  %v5178 = vpack.c.b16 %v4922, %v4922
  %v5179 = vpack.c.b16 %v4923, %v4923
  %v5180 = vpack.c.b16 %v4924, %v4924
  %v5181 = vpack.c.b16 %v4925, %v4925
  %v5182 = vpack.c.b16 %v4926, %v4926
  %v5183 = vpack.c.b16 %v4927, %v4927
  %v5184 = vpack.c.b16 %v4928, %v4928
  %v5185 = vpack.c.b16 %v4929, %v4929
  %v5186 = vpack.c.b16 %v4930, %v4930
  %v5187 = vpack.c.b16 %v4931, %v4931
  %v5188 = vpack.c.b16 %v4932, %v4932
  %v5189 = vpack.c.b16 %v4933, %v4933
  %v5190 = vpack.c.b16 %v4934, %v4934
  %v5191 = vpack.c.b16 %v4935, %v4935
  %v5192 = vpack.c.b16 %v4936, %v4936
  %v5193 = vpack.c.b16 %v4937, %v4937
  %v5194 = vpack.c.b16 %v4938, %v4938
  %v5195 = vpack.c.b16 %v4939, %v4939
  %v5196 = vpack.c.b16 %v4940, %v4940
  %v5197 = vpack.c.b16 %v4941, %v4941
  %v5198 = vpack.c.b16 %v4942, %v4942
  %v5199 = vpack.c.b16 %v4943, %v4943
  %v5200 = vpack.c.b16 %v4944, %v4944
  %v5201 = vpack.c.b16 %v4945, %v4945
  %v5202 = vpack.c.b16 %v4946, %v4946
  %v5203 = vpack.c.b16 %v4947, %v4947
  %v5204 = vpack.c.b16 %v4948, %v4948
  %v5205 = vpack.c.b16 %v4949, %v4949
  %v5206 = vpack.c.b16 %v4950, %v4950
  %v5207 = vpack.c.b16 %v4951, %v4951
  %v5208 = vpack.c.b16 %v4952, %v4952
  %v5209 = vpack.c.b16 %v4953, %v4953
  %v5210 = vpack.c.b16 %v4954, %v4954
  %v5211 = vpack.c.b16 %v4955, %v4955
  %v5212 = vpack.c.b16 %v4956, %v4956
  %v5213 = vpack.c.b16 %v4957, %v4957
  %v5214 = vpack.c.b16 %v4958, %v4958
  %v5215 = vpack.c.b16 %v4959, %v4959
  %v5216 = vpack.c.b16 %v4960, %v4960
  %v5217 = vpack.c.b16 %v4961, %v4961
  %v5218 = vpack.c.b16 %v4962, %v4962
  %v5219 = vpack.c.b16 %v4963, %v4963
  %v5220 = vpack.c.b16 %v4964, %v4964
  %v5221 = vpack.c.b16 %v4965, %v4965
  %v5222 = vpack.c.b16 %v4966, %v4966
  %v5223 = vpack.c.b16 %v4967, %v4967
  %v5224 = vpack.c.b16 %v4968, %v4968
  %v5225 = vpack.c.b16 %v4969, %v4969
  %v5226 = vpack.c.b16 %v4970, %v4970
  %v5227 = vpack.c.b16 %v4971, %v4971
  %v5228 = vpack.c.b16 %v4972, %v4972
  %v5229 = vpack.c.b16 %v4973, %v4973
  %v5230 = vpack.c.b16 %v4974, %v4974
  %v5231 = vpack.c.b16 %v4975, %v4975
  %v5232 = vpack.c.b16 %v4976, %v4976
  %v5233 = vpack.c.b16 %v4977, %v4977
  %v5234 = vpack.c.b16 %v4978, %v4978
  %v5235 = vpack.c.b16 %v4979, %v4979
  %v5236 = vpack.c.b16 %v4980, %v4980
  %v5237 = vpack.c.b16 %v4981, %v4981
  %v5238 = vpack.c.b16 %v4982, %v4982
  %v5239 = vpack.c.b16 %v4983, %v4983
  %v5240 = vpack.c.b16 %v4984, %v4984
  %v5241 = vpack.c.b16 %v4985, %v4985
  %v5242 = vpack.c.b16 %v4986, %v4986
  %v5243 = vpack.c.b16 %v4987, %v4987
  %v5244 = vpack.c.b16 %v4988, %v4988
  %v5245 = vpack.c.b16 %v4989, %v4989
  %v5246 = vpack.c.b16 %v4990, %v4990
  %v5247 = vpack.c.b16 %v4991, %v4991
  %v5248 = vpack.c.b16 %v4992, %v4992
  %v5249 = vpack.c.b16 %v4993, %v4993
  %v5250 = vpack.c.b16 %v4994, %v4994
  %v5251 = vpack.c.b16 %v4995, %v4995
  %v5252 = vpack.c.b16 %v4996, %v4996
  %v5253 = vpack.c.b16 %v4997, %v4997
  %v5254 = vpack.c.b16 %v4998, %v4998
  %v5255 = vpack.c.b16 %v4999, %v4999
  %v5256 = vpack.c.b16 %v5000, %v5000
  %v5257 = vpack.c.b16 %v5001, %v5001
  %v5258 = vpack.c.b16 %v5002, %v5002
  %v5259 = vpack.c.b16 %v5003, %v5003
  %v5260 = vpack.c.b16 %v5004, %v5004
  %v5261 = vpack.c.b16 %v5005, %v5005
  %v5262 = vpack.c.b16 %v5006, %v5006
  %v5263 = vpack.c.b16 %v5007, %v5007
  %v5264 = vpack.c.b16 %v5008, %v5008
  %v5265 = vpack.c.b16 %v5009, %v5009
  %v5266 = vpack.c.b16 %v5010, %v5010
  %v5267 = vpack.c.b16 %v5011, %v5011
  %v5268 = vpack.c.b16 %v5012, %v5012
  %v5269 = vpack.c.b16 %v5013, %v5013
  %v5270 = vpack.c.b16 %v5014, %v5014
  %v5271 = vpack.c.b16 %v5015, %v5015
  %v5272 = vpack.c.b16 %v5016, %v5016
  %v5273 = vpack.c.b16 %v5017, %v5017
  %v5274 = vpack.c.b16 %v5018, %v5018
  %v5275 = vpack.c.b16 %v5019, %v5019
  %v5276 = vpack.c.b16 %v5020, %v5020
  %v5277 = vpack.c.b16 %v5021, %v5021
  %v5278 = vpack.c.b16 %v5022, %v5022
  %v5279 = vpack.c.b16 %v5023, %v5023
  %v5280 = vpack.c.b16 %v5024, %v5024
  %vm5537 = vcmask 27648
  %5538 = vst.msk [vmem:[%s3] sm:$0xf] %vm5537, %v5025
  %5539 = vst.msk [vmem:[%s3 + $0x4] sm:$0xf] %vm5537, %v5026
  %5540 = vst.msk [vmem:[%s3 + $0x8] sm:$0xf] %vm5537, %v5027
  %5541 = vst.msk [vmem:[%s3 + $0xc] sm:$0xf] %vm5537, %v5028
  %5542 = vst.msk [vmem:[%s3 + $0x10] sm:$0xf] %vm5537, %v5029
  %5543 = vst.msk [vmem:[%s3 + $0x14] sm:$0xf] %vm5537, %v5030
  %5544 = vst.msk [vmem:[%s3 + $0x18] sm:$0xf] %vm5537, %v5031
  %5545 = vst.msk [vmem:[%s3 + $0x1c] sm:$0xf] %vm5537, %v5032
  %5546 = vst.msk [vmem:[%s3 + $0x20] sm:$0xf] %vm5537, %v5033
  %5547 = vst.msk [vmem:[%s3 + $0x24] sm:$0xf] %vm5537, %v5034
  %5548 = vst.msk [vmem:[%s3 + $0x28] sm:$0xf] %vm5537, %v5035
  %5549 = vst.msk [vmem:[%s3 + $0x2c] sm:$0xf] %vm5537, %v5036
  %5550 = vst.msk [vmem:[%s3 + $0x30] sm:$0xf] %vm5537, %v5037
  %5551 = vst.msk [vmem:[%s3 + $0x34] sm:$0xf] %vm5537, %v5038
  %5552 = vst.msk [vmem:[%s3 + $0x38] sm:$0xf] %vm5537, %v5039
  %5553 = vst.msk [vmem:[%s3 + $0x3c] sm:$0xf] %vm5537, %v5040
  %5554 = vst.msk [vmem:[%s3 + $0x40] sm:$0xf] %vm5537, %v5041
  %5555 = vst.msk [vmem:[%s3 + $0x44] sm:$0xf] %vm5537, %v5042
  %5556 = vst.msk [vmem:[%s3 + $0x48] sm:$0xf] %vm5537, %v5043
  %5557 = vst.msk [vmem:[%s3 + $0x4c] sm:$0xf] %vm5537, %v5044
  %5558 = vst.msk [vmem:[%s3 + $0x50] sm:$0xf] %vm5537, %v5045
  %5559 = vst.msk [vmem:[%s3 + $0x54] sm:$0xf] %vm5537, %v5046
  %5560 = vst.msk [vmem:[%s3 + $0x58] sm:$0xf] %vm5537, %v5047
  %5561 = vst.msk [vmem:[%s3 + $0x5c] sm:$0xf] %vm5537, %v5048
  %5562 = vst.msk [vmem:[%s3 + $0x60] sm:$0xf] %vm5537, %v5049
  %5563 = vst.msk [vmem:[%s3 + $0x64] sm:$0xf] %vm5537, %v5050
  %5564 = vst.msk [vmem:[%s3 + $0x68] sm:$0xf] %vm5537, %v5051
  %5565 = vst.msk [vmem:[%s3 + $0x6c] sm:$0xf] %vm5537, %v5052
  %5566 = vst.msk [vmem:[%s3 + $0x70] sm:$0xf] %vm5537, %v5053
  %5567 = vst.msk [vmem:[%s3 + $0x74] sm:$0xf] %vm5537, %v5054
  %5568 = vst.msk [vmem:[%s3 + $0x78] sm:$0xf] %vm5537, %v5055
  %5569 = vst.msk [vmem:[%s3 + $0x7c] sm:$0xf] %vm5537, %v5056
  %5570 = vst.msk [vmem:[%s3 + $0x80] sm:$0xf] %vm5537, %v5057
  %5571 = vst.msk [vmem:[%s3 + $0x84] sm:$0xf] %vm5537, %v5058
  %5572 = vst.msk [vmem:[%s3 + $0x88] sm:$0xf] %vm5537, %v5059
  %5573 = vst.msk [vmem:[%s3 + $0x8c] sm:$0xf] %vm5537, %v5060
  %5574 = vst.msk [vmem:[%s3 + $0x90] sm:$0xf] %vm5537, %v5061
  %5575 = vst.msk [vmem:[%s3 + $0x94] sm:$0xf] %vm5537, %v5062
  %5576 = vst.msk [vmem:[%s3 + $0x98] sm:$0xf] %vm5537, %v5063
  %5577 = vst.msk [vmem:[%s3 + $0x9c] sm:$0xf] %vm5537, %v5064
  %5578 = vst.msk [vmem:[%s3 + $0xa0] sm:$0xf] %vm5537, %v5065
  %5579 = vst.msk [vmem:[%s3 + $0xa4] sm:$0xf] %vm5537, %v5066
  %5580 = vst.msk [vmem:[%s3 + $0xa8] sm:$0xf] %vm5537, %v5067
  %5581 = vst.msk [vmem:[%s3 + $0xac] sm:$0xf] %vm5537, %v5068
  %5582 = vst.msk [vmem:[%s3 + $0xb0] sm:$0xf] %vm5537, %v5069
  %5583 = vst.msk [vmem:[%s3 + $0xb4] sm:$0xf] %vm5537, %v5070
  %5584 = vst.msk [vmem:[%s3 + $0xb8] sm:$0xf] %vm5537, %v5071
  %5585 = vst.msk [vmem:[%s3 + $0xbc] sm:$0xf] %vm5537, %v5072
  %5586 = vst.msk [vmem:[%s3 + $0xc0] sm:$0xf] %vm5537, %v5073
  %5587 = vst.msk [vmem:[%s3 + $0xc4] sm:$0xf] %vm5537, %v5074
  %5588 = vst.msk [vmem:[%s3 + $0xc8] sm:$0xf] %vm5537, %v5075
  %5589 = vst.msk [vmem:[%s3 + $0xcc] sm:$0xf] %vm5537, %v5076
  %5590 = vst.msk [vmem:[%s3 + $0xd0] sm:$0xf] %vm5537, %v5077
  %5591 = vst.msk [vmem:[%s3 + $0xd4] sm:$0xf] %vm5537, %v5078
  %5592 = vst.msk [vmem:[%s3 + $0xd8] sm:$0xf] %vm5537, %v5079
  %5593 = vst.msk [vmem:[%s3 + $0xdc] sm:$0xf] %vm5537, %v5080
  %5594 = vst.msk [vmem:[%s3 + $0xe0] sm:$0xf] %vm5537, %v5081
  %5595 = vst.msk [vmem:[%s3 + $0xe4] sm:$0xf] %vm5537, %v5082
  %5596 = vst.msk [vmem:[%s3 + $0xe8] sm:$0xf] %vm5537, %v5083
  %5597 = vst.msk [vmem:[%s3 + $0xec] sm:$0xf] %vm5537, %v5084
  %5598 = vst.msk [vmem:[%s3 + $0xf0] sm:$0xf] %vm5537, %v5085
  %5599 = vst.msk [vmem:[%s3 + $0xf4] sm:$0xf] %vm5537, %v5086
  %5600 = vst.msk [vmem:[%s3 + $0xf8] sm:$0xf] %vm5537, %v5087
  %5601 = vst.msk [vmem:[%s3 + $0xfc] sm:$0xf] %vm5537, %v5088
  %5602 = vst.msk [vmem:[%s3 + $0x100] sm:$0xf] %vm5537, %v5089
  %5603 = vst.msk [vmem:[%s3 + $0x104] sm:$0xf] %vm5537, %v5090
  %5604 = vst.msk [vmem:[%s3 + $0x108] sm:$0xf] %vm5537, %v5091
  %5605 = vst.msk [vmem:[%s3 + $0x10c] sm:$0xf] %vm5537, %v5092
  %5606 = vst.msk [vmem:[%s3 + $0x110] sm:$0xf] %vm5537, %v5093
  %5607 = vst.msk [vmem:[%s3 + $0x114] sm:$0xf] %vm5537, %v5094
  %5608 = vst.msk [vmem:[%s3 + $0x118] sm:$0xf] %vm5537, %v5095
  %5609 = vst.msk [vmem:[%s3 + $0x11c] sm:$0xf] %vm5537, %v5096
  %5610 = vst.msk [vmem:[%s3 + $0x120] sm:$0xf] %vm5537, %v5097
  %5611 = vst.msk [vmem:[%s3 + $0x124] sm:$0xf] %vm5537, %v5098
  %5612 = vst.msk [vmem:[%s3 + $0x128] sm:$0xf] %vm5537, %v5099
  %5613 = vst.msk [vmem:[%s3 + $0x12c] sm:$0xf] %vm5537, %v5100
  %5614 = vst.msk [vmem:[%s3 + $0x130] sm:$0xf] %vm5537, %v5101
  %5615 = vst.msk [vmem:[%s3 + $0x134] sm:$0xf] %vm5537, %v5102
  %5616 = vst.msk [vmem:[%s3 + $0x138] sm:$0xf] %vm5537, %v5103
  %5617 = vst.msk [vmem:[%s3 + $0x13c] sm:$0xf] %vm5537, %v5104
  %5618 = vst.msk [vmem:[%s3 + $0x140] sm:$0xf] %vm5537, %v5105
  %5619 = vst.msk [vmem:[%s3 + $0x144] sm:$0xf] %vm5537, %v5106
  %5620 = vst.msk [vmem:[%s3 + $0x148] sm:$0xf] %vm5537, %v5107
  %5621 = vst.msk [vmem:[%s3 + $0x14c] sm:$0xf] %vm5537, %v5108
  %5622 = vst.msk [vmem:[%s3 + $0x150] sm:$0xf] %vm5537, %v5109
  %5623 = vst.msk [vmem:[%s3 + $0x154] sm:$0xf] %vm5537, %v5110
  %5624 = vst.msk [vmem:[%s3 + $0x158] sm:$0xf] %vm5537, %v5111
  %5625 = vst.msk [vmem:[%s3 + $0x15c] sm:$0xf] %vm5537, %v5112
  %5626 = vst.msk [vmem:[%s3 + $0x160] sm:$0xf] %vm5537, %v5113
  %5627 = vst.msk [vmem:[%s3 + $0x164] sm:$0xf] %vm5537, %v5114
  %5628 = vst.msk [vmem:[%s3 + $0x168] sm:$0xf] %vm5537, %v5115
  %5629 = vst.msk [vmem:[%s3 + $0x16c] sm:$0xf] %vm5537, %v5116
  %5630 = vst.msk [vmem:[%s3 + $0x170] sm:$0xf] %vm5537, %v5117
  %5631 = vst.msk [vmem:[%s3 + $0x174] sm:$0xf] %vm5537, %v5118
  %5632 = vst.msk [vmem:[%s3 + $0x178] sm:$0xf] %vm5537, %v5119
  %5633 = vst.msk [vmem:[%s3 + $0x17c] sm:$0xf] %vm5537, %v5120
  %5634 = vst.msk [vmem:[%s3 + $0x180] sm:$0xf] %vm5537, %v5121
  %5635 = vst.msk [vmem:[%s3 + $0x184] sm:$0xf] %vm5537, %v5122
  %5636 = vst.msk [vmem:[%s3 + $0x188] sm:$0xf] %vm5537, %v5123
  %5637 = vst.msk [vmem:[%s3 + $0x18c] sm:$0xf] %vm5537, %v5124
  %5638 = vst.msk [vmem:[%s3 + $0x190] sm:$0xf] %vm5537, %v5125
  %5639 = vst.msk [vmem:[%s3 + $0x194] sm:$0xf] %vm5537, %v5126
  %5640 = vst.msk [vmem:[%s3 + $0x198] sm:$0xf] %vm5537, %v5127
  %5641 = vst.msk [vmem:[%s3 + $0x19c] sm:$0xf] %vm5537, %v5128
  %5642 = vst.msk [vmem:[%s3 + $0x1a0] sm:$0xf] %vm5537, %v5129
  %5643 = vst.msk [vmem:[%s3 + $0x1a4] sm:$0xf] %vm5537, %v5130
  %5644 = vst.msk [vmem:[%s3 + $0x1a8] sm:$0xf] %vm5537, %v5131
  %5645 = vst.msk [vmem:[%s3 + $0x1ac] sm:$0xf] %vm5537, %v5132
  %5646 = vst.msk [vmem:[%s3 + $0x1b0] sm:$0xf] %vm5537, %v5133
  %5647 = vst.msk [vmem:[%s3 + $0x1b4] sm:$0xf] %vm5537, %v5134
  %5648 = vst.msk [vmem:[%s3 + $0x1b8] sm:$0xf] %vm5537, %v5135
  %5649 = vst.msk [vmem:[%s3 + $0x1bc] sm:$0xf] %vm5537, %v5136
  %5650 = vst.msk [vmem:[%s3 + $0x1c0] sm:$0xf] %vm5537, %v5137
  %5651 = vst.msk [vmem:[%s3 + $0x1c4] sm:$0xf] %vm5537, %v5138
  %5652 = vst.msk [vmem:[%s3 + $0x1c8] sm:$0xf] %vm5537, %v5139
  %5653 = vst.msk [vmem:[%s3 + $0x1cc] sm:$0xf] %vm5537, %v5140
  %5654 = vst.msk [vmem:[%s3 + $0x1d0] sm:$0xf] %vm5537, %v5141
  %5655 = vst.msk [vmem:[%s3 + $0x1d4] sm:$0xf] %vm5537, %v5142
  %5656 = vst.msk [vmem:[%s3 + $0x1d8] sm:$0xf] %vm5537, %v5143
  %5657 = vst.msk [vmem:[%s3 + $0x1dc] sm:$0xf] %vm5537, %v5144
  %5658 = vst.msk [vmem:[%s3 + $0x1e0] sm:$0xf] %vm5537, %v5145
  %5659 = vst.msk [vmem:[%s3 + $0x1e4] sm:$0xf] %vm5537, %v5146
  %5660 = vst.msk [vmem:[%s3 + $0x1e8] sm:$0xf] %vm5537, %v5147
  %5661 = vst.msk [vmem:[%s3 + $0x1ec] sm:$0xf] %vm5537, %v5148
  %5662 = vst.msk [vmem:[%s3 + $0x1f0] sm:$0xf] %vm5537, %v5149
  %5663 = vst.msk [vmem:[%s3 + $0x1f4] sm:$0xf] %vm5537, %v5150
  %5664 = vst.msk [vmem:[%s3 + $0x1f8] sm:$0xf] %vm5537, %v5151
  %5665 = vst.msk [vmem:[%s3 + $0x1fc] sm:$0xf] %vm5537, %v5152
  %5666 = vst.msk [vmem:[%s3 + $0x200] sm:$0xf] %vm5537, %v5153
  %5667 = vst.msk [vmem:[%s3 + $0x204] sm:$0xf] %vm5537, %v5154
  %5668 = vst.msk [vmem:[%s3 + $0x208] sm:$0xf] %vm5537, %v5155
  %5669 = vst.msk [vmem:[%s3 + $0x20c] sm:$0xf] %vm5537, %v5156
  %5670 = vst.msk [vmem:[%s3 + $0x210] sm:$0xf] %vm5537, %v5157
  %5671 = vst.msk [vmem:[%s3 + $0x214] sm:$0xf] %vm5537, %v5158
  %5672 = vst.msk [vmem:[%s3 + $0x218] sm:$0xf] %vm5537, %v5159
  %5673 = vst.msk [vmem:[%s3 + $0x21c] sm:$0xf] %vm5537, %v5160
  %5674 = vst.msk [vmem:[%s3 + $0x220] sm:$0xf] %vm5537, %v5161
  %5675 = vst.msk [vmem:[%s3 + $0x224] sm:$0xf] %vm5537, %v5162
  %5676 = vst.msk [vmem:[%s3 + $0x228] sm:$0xf] %vm5537, %v5163
  %5677 = vst.msk [vmem:[%s3 + $0x22c] sm:$0xf] %vm5537, %v5164
  %5678 = vst.msk [vmem:[%s3 + $0x230] sm:$0xf] %vm5537, %v5165
  %5679 = vst.msk [vmem:[%s3 + $0x234] sm:$0xf] %vm5537, %v5166
  %5680 = vst.msk [vmem:[%s3 + $0x238] sm:$0xf] %vm5537, %v5167
  %5681 = vst.msk [vmem:[%s3 + $0x23c] sm:$0xf] %vm5537, %v5168
  %5682 = vst.msk [vmem:[%s3 + $0x240] sm:$0xf] %vm5537, %v5169
  %5683 = vst.msk [vmem:[%s3 + $0x244] sm:$0xf] %vm5537, %v5170
  %5684 = vst.msk [vmem:[%s3 + $0x248] sm:$0xf] %vm5537, %v5171
  %5685 = vst.msk [vmem:[%s3 + $0x24c] sm:$0xf] %vm5537, %v5172
  %5686 = vst.msk [vmem:[%s3 + $0x250] sm:$0xf] %vm5537, %v5173
  %5687 = vst.msk [vmem:[%s3 + $0x254] sm:$0xf] %vm5537, %v5174
  %5688 = vst.msk [vmem:[%s3 + $0x258] sm:$0xf] %vm5537, %v5175
  %5689 = vst.msk [vmem:[%s3 + $0x25c] sm:$0xf] %vm5537, %v5176
  %5690 = vst.msk [vmem:[%s3 + $0x260] sm:$0xf] %vm5537, %v5177
  %5691 = vst.msk [vmem:[%s3 + $0x264] sm:$0xf] %vm5537, %v5178
  %5692 = vst.msk [vmem:[%s3 + $0x268] sm:$0xf] %vm5537, %v5179
  %5693 = vst.msk [vmem:[%s3 + $0x26c] sm:$0xf] %vm5537, %v5180
  %5694 = vst.msk [vmem:[%s3 + $0x270] sm:$0xf] %vm5537, %v5181
  %5695 = vst.msk [vmem:[%s3 + $0x274] sm:$0xf] %vm5537, %v5182
  %5696 = vst.msk [vmem:[%s3 + $0x278] sm:$0xf] %vm5537, %v5183
  %5697 = vst.msk [vmem:[%s3 + $0x27c] sm:$0xf] %vm5537, %v5184
  %5698 = vst.msk [vmem:[%s3 + $0x280] sm:$0xf] %vm5537, %v5185
  %5699 = vst.msk [vmem:[%s3 + $0x284] sm:$0xf] %vm5537, %v5186
  %5700 = vst.msk [vmem:[%s3 + $0x288] sm:$0xf] %vm5537, %v5187
  %5701 = vst.msk [vmem:[%s3 + $0x28c] sm:$0xf] %vm5537, %v5188
  %5702 = vst.msk [vmem:[%s3 + $0x290] sm:$0xf] %vm5537, %v5189
  %5703 = vst.msk [vmem:[%s3 + $0x294] sm:$0xf] %vm5537, %v5190
  %5704 = vst.msk [vmem:[%s3 + $0x298] sm:$0xf] %vm5537, %v5191
  %5705 = vst.msk [vmem:[%s3 + $0x29c] sm:$0xf] %vm5537, %v5192
  %5706 = vst.msk [vmem:[%s3 + $0x2a0] sm:$0xf] %vm5537, %v5193
  %5707 = vst.msk [vmem:[%s3 + $0x2a4] sm:$0xf] %vm5537, %v5194
  %5708 = vst.msk [vmem:[%s3 + $0x2a8] sm:$0xf] %vm5537, %v5195
  %5709 = vst.msk [vmem:[%s3 + $0x2ac] sm:$0xf] %vm5537, %v5196
  %5710 = vst.msk [vmem:[%s3 + $0x2b0] sm:$0xf] %vm5537, %v5197
  %5711 = vst.msk [vmem:[%s3 + $0x2b4] sm:$0xf] %vm5537, %v5198
  %5712 = vst.msk [vmem:[%s3 + $0x2b8] sm:$0xf] %vm5537, %v5199
  %5713 = vst.msk [vmem:[%s3 + $0x2bc] sm:$0xf] %vm5537, %v5200
  %5714 = vst.msk [vmem:[%s3 + $0x2c0] sm:$0xf] %vm5537, %v5201
  %5715 = vst.msk [vmem:[%s3 + $0x2c4] sm:$0xf] %vm5537, %v5202
  %5716 = vst.msk [vmem:[%s3 + $0x2c8] sm:$0xf] %vm5537, %v5203
  %5717 = vst.msk [vmem:[%s3 + $0x2cc] sm:$0xf] %vm5537, %v5204
  %5718 = vst.msk [vmem:[%s3 + $0x2d0] sm:$0xf] %vm5537, %v5205
  %5719 = vst.msk [vmem:[%s3 + $0x2d4] sm:$0xf] %vm5537, %v5206
  %5720 = vst.msk [vmem:[%s3 + $0x2d8] sm:$0xf] %vm5537, %v5207
  %5721 = vst.msk [vmem:[%s3 + $0x2dc] sm:$0xf] %vm5537, %v5208
  %5722 = vst.msk [vmem:[%s3 + $0x2e0] sm:$0xf] %vm5537, %v5209
  %5723 = vst.msk [vmem:[%s3 + $0x2e4] sm:$0xf] %vm5537, %v5210
  %5724 = vst.msk [vmem:[%s3 + $0x2e8] sm:$0xf] %vm5537, %v5211
  %5725 = vst.msk [vmem:[%s3 + $0x2ec] sm:$0xf] %vm5537, %v5212
  %5726 = vst.msk [vmem:[%s3 + $0x2f0] sm:$0xf] %vm5537, %v5213
  %5727 = vst.msk [vmem:[%s3 + $0x2f4] sm:$0xf] %vm5537, %v5214
  %5728 = vst.msk [vmem:[%s3 + $0x2f8] sm:$0xf] %vm5537, %v5215
  %5729 = vst.msk [vmem:[%s3 + $0x2fc] sm:$0xf] %vm5537, %v5216
  %5730 = vst.msk [vmem:[%s3 + $0x300] sm:$0xf] %vm5537, %v5217
  %5731 = vst.msk [vmem:[%s3 + $0x304] sm:$0xf] %vm5537, %v5218
  %5732 = vst.msk [vmem:[%s3 + $0x308] sm:$0xf] %vm5537, %v5219
  %5733 = vst.msk [vmem:[%s3 + $0x30c] sm:$0xf] %vm5537, %v5220
  %5734 = vst.msk [vmem:[%s3 + $0x310] sm:$0xf] %vm5537, %v5221
  %5735 = vst.msk [vmem:[%s3 + $0x314] sm:$0xf] %vm5537, %v5222
  %5736 = vst.msk [vmem:[%s3 + $0x318] sm:$0xf] %vm5537, %v5223
  %5737 = vst.msk [vmem:[%s3 + $0x31c] sm:$0xf] %vm5537, %v5224
  %5738 = vst.msk [vmem:[%s3 + $0x320] sm:$0xf] %vm5537, %v5225
  %5739 = vst.msk [vmem:[%s3 + $0x324] sm:$0xf] %vm5537, %v5226
  %5740 = vst.msk [vmem:[%s3 + $0x328] sm:$0xf] %vm5537, %v5227
  %5741 = vst.msk [vmem:[%s3 + $0x32c] sm:$0xf] %vm5537, %v5228
  %5742 = vst.msk [vmem:[%s3 + $0x330] sm:$0xf] %vm5537, %v5229
  %5743 = vst.msk [vmem:[%s3 + $0x334] sm:$0xf] %vm5537, %v5230
  %5744 = vst.msk [vmem:[%s3 + $0x338] sm:$0xf] %vm5537, %v5231
  %5745 = vst.msk [vmem:[%s3 + $0x33c] sm:$0xf] %vm5537, %v5232
  %5746 = vst.msk [vmem:[%s3 + $0x340] sm:$0xf] %vm5537, %v5233
  %5747 = vst.msk [vmem:[%s3 + $0x344] sm:$0xf] %vm5537, %v5234
  %5748 = vst.msk [vmem:[%s3 + $0x348] sm:$0xf] %vm5537, %v5235
  %5749 = vst.msk [vmem:[%s3 + $0x34c] sm:$0xf] %vm5537, %v5236
  %5750 = vst.msk [vmem:[%s3 + $0x350] sm:$0xf] %vm5537, %v5237
  %5751 = vst.msk [vmem:[%s3 + $0x354] sm:$0xf] %vm5537, %v5238
  %5752 = vst.msk [vmem:[%s3 + $0x358] sm:$0xf] %vm5537, %v5239
  %5753 = vst.msk [vmem:[%s3 + $0x35c] sm:$0xf] %vm5537, %v5240
  %5754 = vst.msk [vmem:[%s3 + $0x360] sm:$0xf] %vm5537, %v5241
  %5755 = vst.msk [vmem:[%s3 + $0x364] sm:$0xf] %vm5537, %v5242
  %5756 = vst.msk [vmem:[%s3 + $0x368] sm:$0xf] %vm5537, %v5243
  %5757 = vst.msk [vmem:[%s3 + $0x36c] sm:$0xf] %vm5537, %v5244
  %5758 = vst.msk [vmem:[%s3 + $0x370] sm:$0xf] %vm5537, %v5245
  %5759 = vst.msk [vmem:[%s3 + $0x374] sm:$0xf] %vm5537, %v5246
  %5760 = vst.msk [vmem:[%s3 + $0x378] sm:$0xf] %vm5537, %v5247
  %5761 = vst.msk [vmem:[%s3 + $0x37c] sm:$0xf] %vm5537, %v5248
  %5762 = vst.msk [vmem:[%s3 + $0x380] sm:$0xf] %vm5537, %v5249
  %5763 = vst.msk [vmem:[%s3 + $0x384] sm:$0xf] %vm5537, %v5250
  %5764 = vst.msk [vmem:[%s3 + $0x388] sm:$0xf] %vm5537, %v5251
  %5765 = vst.msk [vmem:[%s3 + $0x38c] sm:$0xf] %vm5537, %v5252
  %5766 = vst.msk [vmem:[%s3 + $0x390] sm:$0xf] %vm5537, %v5253
  %5767 = vst.msk [vmem:[%s3 + $0x394] sm:$0xf] %vm5537, %v5254
  %5768 = vst.msk [vmem:[%s3 + $0x398] sm:$0xf] %vm5537, %v5255
  %5769 = vst.msk [vmem:[%s3 + $0x39c] sm:$0xf] %vm5537, %v5256
  %5770 = vst.msk [vmem:[%s3 + $0x3a0] sm:$0xf] %vm5537, %v5257
  %5771 = vst.msk [vmem:[%s3 + $0x3a4] sm:$0xf] %vm5537, %v5258
  %5772 = vst.msk [vmem:[%s3 + $0x3a8] sm:$0xf] %vm5537, %v5259
  %5773 = vst.msk [vmem:[%s3 + $0x3ac] sm:$0xf] %vm5537, %v5260
  %5774 = vst.msk [vmem:[%s3 + $0x3b0] sm:$0xf] %vm5537, %v5261
  %5775 = vst.msk [vmem:[%s3 + $0x3b4] sm:$0xf] %vm5537, %v5262
  %5776 = vst.msk [vmem:[%s3 + $0x3b8] sm:$0xf] %vm5537, %v5263
  %5777 = vst.msk [vmem:[%s3 + $0x3bc] sm:$0xf] %vm5537, %v5264
  %5778 = vst.msk [vmem:[%s3 + $0x3c0] sm:$0xf] %vm5537, %v5265
  %5779 = vst.msk [vmem:[%s3 + $0x3c4] sm:$0xf] %vm5537, %v5266
  %5780 = vst.msk [vmem:[%s3 + $0x3c8] sm:$0xf] %vm5537, %v5267
  %5781 = vst.msk [vmem:[%s3 + $0x3cc] sm:$0xf] %vm5537, %v5268
  %5782 = vst.msk [vmem:[%s3 + $0x3d0] sm:$0xf] %vm5537, %v5269
  %5783 = vst.msk [vmem:[%s3 + $0x3d4] sm:$0xf] %vm5537, %v5270
  %5784 = vst.msk [vmem:[%s3 + $0x3d8] sm:$0xf] %vm5537, %v5271
  %5785 = vst.msk [vmem:[%s3 + $0x3dc] sm:$0xf] %vm5537, %v5272
  %5786 = vst.msk [vmem:[%s3 + $0x3e0] sm:$0xf] %vm5537, %v5273
  %5787 = vst.msk [vmem:[%s3 + $0x3e4] sm:$0xf] %vm5537, %v5274
  %5788 = vst.msk [vmem:[%s3 + $0x3e8] sm:$0xf] %vm5537, %v5275
  %5789 = vst.msk [vmem:[%s3 + $0x3ec] sm:$0xf] %vm5537, %v5276
  %5790 = vst.msk [vmem:[%s3 + $0x3f0] sm:$0xf] %vm5537, %v5277
  %5791 = vst.msk [vmem:[%s3 + $0x3f4] sm:$0xf] %vm5537, %v5278
  %5792 = vst.msk [vmem:[%s3 + $0x3f8] sm:$0xf] %vm5537, %v5279
  %5793 = vst.msk [vmem:[%s3 + $0x3fc] sm:$0xf] %vm5537, %v5280
  // Predicated region
  $region14: #{discriminator_forward.5} parent=0 // pred_check
    _
  $region15: #{discriminator_forward.5} parent=0 // pred_check_branch
    %5795 = sbr.rel (0) target = $region17
  $region16: #{discriminator_forward.5} parent=0 // pred_region
    _
  $region17: #{discriminator_forward.5} parent=0 // pred_fallthru
    _
  // Predicated region
  $region18: #{discriminator_forward.5} parent=0 // pred_check
    _
  $region19: #{discriminator_forward.5} parent=0 // pred_check_branch
    %5797 = sbr.rel (0) target = $region21
  $region20: #{discriminator_forward.5} parent=0 // pred_region
    _
  $region21: #{discriminator_forward.5} parent=0 // pred_fallthru
    _

// kernel: discriminator_forward.7
$region0: #{discriminator_forward.7}
  #allocation0 [shape = 'u32[]', space=smem, size = 0x4, offset = 0x4, fixed_abs, tag = 'smem constant byte address 0x4 - core index']
  #allocation1 [shape = 'u32[144,128]{1,0:T(1,128)}', space=vmem, size = 0x12000, scoped, tag = 'internal scratch']
  %s0 = inlined_call_operand.vmem [shape: bf16[2,72,64], index: 0, kind: input, shape index: {}]
  %s1 = inlined_call_operand.vmem [shape: bf16[2,64,16], index: 1, kind: input, shape index: {}]
  %s2 = inlined_call_operand.vmem [shape: bf16[2,64,16], index: 2, kind: output, shape index: {0}]
  %s3 = inlined_call_operand.vmem [shape: f32[1,16], index: 3, kind: output, shape index: {1}]
  %s4 = inlined_call_operand.vmem [shape: f32[1,16], index: 4, kind: output, shape index: {2}]
  %5 = xla_tuple %s2, %s3, %s4
  %s6 = sld [smem:[#allocation0]]
  $region34: #{discriminator_forward.7} parent=0
    _
  %s8 = ssub.s32 1, %s6
  %s9 = scalar_select 0, %s8, %s6
  // Predicated region
  $region2: #{discriminator_forward.7} parent=0 // pred_check
    _
  $region3: #{discriminator_forward.7} parent=0 // pred_check_branch
    %11 = sbr.rel (0) target = $region5
  $region4: #{discriminator_forward.7} parent=0 // pred_region
    _
  $region5: #{discriminator_forward.7} parent=0 // pred_fallthru
    _
  // Predicated region
  $region6: #{discriminator_forward.7} parent=0 // pred_check
    _
  $region7: #{discriminator_forward.7} parent=0 // pred_check_branch
    %13 = sbr.rel (0) target = $region9
  $region8: #{discriminator_forward.7} parent=0 // pred_region
    _
  $region9: #{discriminator_forward.7} parent=0 // pred_fallthru
    _
  %v15 = vld [vmem:[%s0] sm:$0xf]
  %v16 = vld [vmem:[%s0 + $0x4] sm:$0xf]
  %v17 = vld [vmem:[%s0 + $0x8] sm:$0xf]
  %v18 = vld [vmem:[%s0 + $0xc] sm:$0xf]
  %v19 = vld [vmem:[%s0 + $0x10] sm:$0xf]
  %v20 = vld [vmem:[%s0 + $0x14] sm:$0xf]
  %v21 = vld [vmem:[%s0 + $0x18] sm:$0xf]
  %v22 = vld [vmem:[%s0 + $0x1c] sm:$0xf]
  %v23 = vld [vmem:[%s0 + $0x24] sm:$0xf]
  %v24 = vld [vmem:[%s0 + $0x28] sm:$0xf]
  %v25 = vld [vmem:[%s0 + $0x2c] sm:$0xf]
  %v26 = vld [vmem:[%s0 + $0x30] sm:$0xf]
  %v27 = vld [vmem:[%s0 + $0x34] sm:$0xf]
  %v28 = vld [vmem:[%s0 + $0x38] sm:$0xf]
  %v29 = vld [vmem:[%s0 + $0x3c] sm:$0xf]
  %v30 = vld [vmem:[%s0 + $0x40] sm:$0xf]
  %v31 = vld [vmem:[%s1] sm:$0xf]
  %v32 = vld [vmem:[%s1 + $0x4] sm:$0xf]
  %v33 = vld [vmem:[%s1 + $0x8] sm:$0xf]
  %v34 = vld [vmem:[%s1 + $0xc] sm:$0xf]
  %v35 = vld [vmem:[%s1 + $0x10] sm:$0xf]
  %v36 = vld [vmem:[%s1 + $0x14] sm:$0xf]
  %v37 = vld [vmem:[%s1 + $0x18] sm:$0xf]
  %v38 = vld [vmem:[%s1 + $0x1c] sm:$0xf]
  %v39 = vld [vmem:[%s0 + $0x20] sm:$0xf]
  %v40 = vld [vmem:[%s0 + $0x44] sm:$0xf]
  %s41 = scalar_lea.vmem %s1, 32
  %v42 = vld [vmem:[%s41] sm:$0xf]
  %v43 = vld [vmem:[%s41 + $0x4] sm:$0xf]
  %v44 = vld [vmem:[%s41 + $0x8] sm:$0xf]
  %v45 = vld [vmem:[%s41 + $0xc] sm:$0xf]
  %v46 = vld [vmem:[%s41 + $0x10] sm:$0xf]
  %v47 = vld [vmem:[%s41 + $0x14] sm:$0xf]
  %v48 = vld [vmem:[%s41 + $0x18] sm:$0xf]
  %v49 = vld [vmem:[%s41 + $0x1c] sm:$0xf]
  %v66 = vunpack.c.l.b16 %v16
  %v67 = vunpack.c.l.b16 %v17
  %v68 = vunpack.c.l.b16 %v18
  %v69 = vunpack.c.l.b16 %v19
  %v70 = vunpack.c.l.b16 %v20
  %v71 = vunpack.c.l.b16 %v21
  %v72 = vunpack.c.l.b16 %v22
  %v73 = vunpack.c.l.b16 %v39
  %v74 = vunpack.c.l.b16 %v24
  %v75 = vunpack.c.l.b16 %v25
  %v76 = vunpack.c.l.b16 %v26
  %v77 = vunpack.c.l.b16 %v27
  %v78 = vunpack.c.l.b16 %v28
  %v79 = vunpack.c.l.b16 %v29
  %v80 = vunpack.c.l.b16 %v30
  %v81 = vunpack.c.l.b16 %v40
  %v82 = vpack.c.b16 %v67, %v66
  %v83 = vpack.c.b16 %v69, %v68
  %v84 = vpack.c.b16 %v71, %v70
  %v85 = vpack.c.b16 %v73, %v72
  %v86 = vpack.c.b16 %v75, %v74
  %v87 = vpack.c.b16 %v77, %v76
  %v88 = vpack.c.b16 %v79, %v78
  %v89 = vpack.c.b16 %v81, %v80
  %v98 = vunpack.c.l.b16 %v42
  %v99 = vunpack.c.l.b16 %v43
  %v100 = vunpack.c.l.b16 %v44
  %v101 = vunpack.c.l.b16 %v45
  %v102 = vunpack.c.l.b16 %v46
  %v103 = vunpack.c.l.b16 %v47
  %v104 = vunpack.c.l.b16 %v48
  %v105 = vunpack.c.l.b16 %v49
  %v106 = vpack.c.b16 %v99, %v98
  %v107 = vpack.c.b16 %v101, %v100
  %v108 = vpack.c.b16 %v103, %v102
  %v109 = vpack.c.b16 %v105, %v104
  %vm114 = vcmask 523264
  %v116 = vsel %vm114, %v82, 0
  %v119 = vsel %vm114, %v83, 0
  %v122 = vsel %vm114, %v84, 0
  %v125 = vsel %vm114, %v85, 0
  %v128 = vsel %vm114, %v86, 0
  %v131 = vsel %vm114, %v87, 0
  %v134 = vsel %vm114, %v88, 0
  %v137 = vsel %vm114, %v89, 0
  %139 = vmatprep.subr.bf16.mxu0 0
  %140 = vmatpush1.bf16.msra.mxu0 %v106
  %141 = vmatprep.subr.bf16.mxu0 0
  %142 = vmatpush1.bf16.msra.mxu0 %v107
  %143 = vmatprep.subr.bf16.mxu0 0
  %144 = vmatpush1.bf16.msra.mxu0 %v108
  %145 = vmatprep.subr.bf16.mxu0 0
  %146 = vmatpush1.bf16.msra.mxu0 %v109
  %147 = vmatprep.subr.bf16.mxu0 0
  %148 = vmatpush1.bf16.msra.mxu0 0
  %149 = vmatprep.subr.bf16.mxu0 0
  %150 = vmatpush1.bf16.msra.mxu0 0
  %151 = vmatprep.subr.bf16.mxu0 0
  %152 = vmatpush1.bf16.msra.mxu0 0
  %153 = vmatprep.subr.bf16.mxu0 0
  %154 = vmatpush1.bf16.msra.mxu0 0
  %155 = vmatprep.subr.bf16.mxu0 0
  %156 = vmatpush1.bf16.msra.mxu0 0
  %157 = vmatprep.subr.bf16.mxu0 0
  %158 = vmatpush1.bf16.msra.mxu0 0
  %159 = vmatprep.subr.bf16.mxu0 0
  %160 = vmatpush1.bf16.msra.mxu0 0
  %161 = vmatprep.subr.bf16.mxu0 0
  %162 = vmatpush1.bf16.msra.mxu0 0
  %163 = vmatprep.subr.bf16.mxu0 0
  %164 = vmatpush1.bf16.msra.mxu0 0
  %165 = vmatprep.subr.bf16.mxu0 0
  %166 = vmatpush1.bf16.msra.mxu0 0
  %167 = vmatprep.subr.bf16.mxu0 0
  %168 = vmatpush1.bf16.msra.mxu0 0
  %169 = vmatprep.subr.bf16.mxu0 0
  %170 = vmatpush1.bf16.msra.mxu0 0
  %171 = vmatprep.mubr.bf16.mxu0 0
  %172 = vmatmul.mubr.bf16.gmra.mrb[0].mxu0 %v116
  %v173 = vpop.f32.mrb[0].mxu0
  %v174 = vadd.f32 0.0, %v173
  %v175 = vpop.f32.mrb[0].mxu0
  %v176 = vpop.f32.mrb[0].mxu0
  %v177 = vadd.f32 0.0, %v176
  %v178 = vpop.f32.mrb[0].mxu0
  %179 = vmatprep.mubr.bf16.mxu0 0
  %180 = vmatmul.mubr.bf16.gmra.mrb[0].mxu0 %v119
  %v181 = vpop.f32.mrb[0].mxu0
  %v182 = vadd.f32 0.0, %v181
  %v183 = vpop.f32.mrb[0].mxu0
  %v184 = vpop.f32.mrb[0].mxu0
  %v185 = vadd.f32 0.0, %v184
  %v186 = vpop.f32.mrb[0].mxu0
  %187 = vmatprep.mubr.bf16.mxu0 0
  %188 = vmatmul.mubr.bf16.gmra.mrb[0].mxu0 %v122
  %v189 = vpop.f32.mrb[0].mxu0
  %v190 = vadd.f32 0.0, %v189
  %v191 = vpop.f32.mrb[0].mxu0
  %v192 = vpop.f32.mrb[0].mxu0
  %v193 = vadd.f32 0.0, %v192
  %v194 = vpop.f32.mrb[0].mxu0
  %195 = vmatprep.mubr.bf16.mxu0 0
  %196 = vmatmul.mubr.bf16.gmra.mrb[0].mxu0 %v125
  %v197 = vpop.f32.mrb[0].mxu0
  %v198 = vadd.f32 0.0, %v197
  %v199 = vpop.f32.mrb[0].mxu0
  %v200 = vpop.f32.mrb[0].mxu0
  %v201 = vadd.f32 0.0, %v200
  %v202 = vpop.f32.mrb[0].mxu0
  %203 = vmatprep.mubr.bf16.mxu0 0
  %204 = vmatmul.mubr.bf16.gmra.mrb[0].mxu0 %v128
  %v205 = vpop.f32.mrb[0].mxu0
  %v206 = vadd.f32 0.0, %v205
  %v207 = vpop.f32.mrb[0].mxu0
  %v208 = vpop.f32.mrb[0].mxu0
  %v209 = vadd.f32 0.0, %v208
  %v210 = vpop.f32.mrb[0].mxu0
  %211 = vmatprep.mubr.bf16.mxu0 0
  %212 = vmatmul.mubr.bf16.gmra.mrb[0].mxu0 %v131
  %v213 = vpop.f32.mrb[0].mxu0
  %v214 = vadd.f32 0.0, %v213
  %v215 = vpop.f32.mrb[0].mxu0
  %v216 = vpop.f32.mrb[0].mxu0
  %v217 = vadd.f32 0.0, %v216
  %v218 = vpop.f32.mrb[0].mxu0
  %219 = vmatprep.mubr.bf16.mxu0 0
  %220 = vmatmul.mubr.bf16.gmra.mrb[0].mxu0 %v134
  %v221 = vpop.f32.mrb[0].mxu0
  %v222 = vadd.f32 0.0, %v221
  %v223 = vpop.f32.mrb[0].mxu0
  %v224 = vpop.f32.mrb[0].mxu0
  %v225 = vadd.f32 0.0, %v224
  %v226 = vpop.f32.mrb[0].mxu0
  %227 = vmatprep.mubr.bf16.mxu0 0
  %228 = vmatmul.mubr.bf16.gmra.mrb[0].mxu0 %v137
  %v229 = vpop.f32.mrb[0].mxu0
  %v230 = vadd.f32 0.0, %v229
  %v231 = vpop.f32.mrb[0].mxu0
  %v232 = vpop.f32.mrb[0].mxu0
  %v233 = vadd.f32 0.0, %v232
  %v234 = vpop.f32.mrb[0].mxu0
  %235 = vdwg.mxu0
  %v238 = vunpack.c.l.b16 %v15
  %v239 = vunpack.c.l.b16 %v23
  %v240 = vpack.c.b16 %v66, %v238
  %v241 = vpack.c.b16 %v68, %v67
  %v242 = vpack.c.b16 %v70, %v69
  %v243 = vpack.c.b16 %v72, %v71
  %v244 = vpack.c.b16 %v74, %v239
  %v245 = vpack.c.b16 %v76, %v75
  %v246 = vpack.c.b16 %v78, %v77
  %v247 = vpack.c.b16 %v80, %v79
  %v256 = vunpack.c.l.b16 %v31
  %v257 = vunpack.c.l.b16 %v32
  %v258 = vunpack.c.l.b16 %v33
  %v259 = vunpack.c.l.b16 %v34
  %v260 = vunpack.c.l.b16 %v35
  %v261 = vunpack.c.l.b16 %v36
  %v262 = vunpack.c.l.b16 %v37
  %v263 = vunpack.c.l.b16 %v38
  %v264 = vpack.c.b16 %v257, %v256
  %v265 = vpack.c.b16 %v259, %v258
  %v266 = vpack.c.b16 %v261, %v260
  %v267 = vpack.c.b16 %v263, %v262
  %v273 = vsel %vm114, %v240, 0
  %v276 = vsel %vm114, %v241, 0
  %v279 = vsel %vm114, %v242, 0
  %v282 = vsel %vm114, %v243, 0
  %v285 = vsel %vm114, %v244, 0
  %v288 = vsel %vm114, %v245, 0
  %v291 = vsel %vm114, %v246, 0
  %v294 = vsel %vm114, %v247, 0
  %296 = vmatprep.subr.bf16.mxu0 0
  %297 = vmatpush1.bf16.msra.mxu0 %v264
  %298 = vmatprep.subr.bf16.mxu0 0
  %299 = vmatpush1.bf16.msra.mxu0 %v265
  %300 = vmatprep.subr.bf16.mxu0 0
  %301 = vmatpush1.bf16.msra.mxu0 %v266
  %302 = vmatprep.subr.bf16.mxu0 0
  %303 = vmatpush1.bf16.msra.mxu0 %v267
  %304 = vmatprep.subr.bf16.mxu0 0
  %305 = vmatpush1.bf16.msra.mxu0 0
  %306 = vmatprep.subr.bf16.mxu0 0
  %307 = vmatpush1.bf16.msra.mxu0 0
  %308 = vmatprep.subr.bf16.mxu0 0
  %309 = vmatpush1.bf16.msra.mxu0 0
  %310 = vmatprep.subr.bf16.mxu0 0
  %311 = vmatpush1.bf16.msra.mxu0 0
  %312 = vmatprep.subr.bf16.mxu0 0
  %313 = vmatpush1.bf16.msra.mxu0 0
  %314 = vmatprep.subr.bf16.mxu0 0
  %315 = vmatpush1.bf16.msra.mxu0 0
  %316 = vmatprep.subr.bf16.mxu0 0
  %317 = vmatpush1.bf16.msra.mxu0 0
  %318 = vmatprep.subr.bf16.mxu0 0
  %319 = vmatpush1.bf16.msra.mxu0 0
  %320 = vmatprep.subr.bf16.mxu0 0
  %321 = vmatpush1.bf16.msra.mxu0 0
  %322 = vmatprep.subr.bf16.mxu0 0
  %323 = vmatpush1.bf16.msra.mxu0 0
  %324 = vmatprep.subr.bf16.mxu0 0
  %325 = vmatpush1.bf16.msra.mxu0 0
  %326 = vmatprep.subr.bf16.mxu0 0
  %327 = vmatpush1.bf16.msra.mxu0 0
  %328 = vmatprep.mubr.bf16.mxu0 0
  %329 = vmatmul.mubr.bf16.gmra.mrb[0].mxu0 %v273
  %v330 = vpop.f32.mrb[0].mxu0
  %v331 = vadd.f32 %v174, %v330
  %v332 = vpop.f32.mrb[0].mxu0
  %v333 = vpop.f32.mrb[0].mxu0
  %v334 = vadd.f32 %v177, %v333
  %v335 = vpop.f32.mrb[0].mxu0
  %336 = vmatprep.mubr.bf16.mxu0 0
  %337 = vmatmul.mubr.bf16.gmra.mrb[0].mxu0 %v276
  %v338 = vpop.f32.mrb[0].mxu0
  %v339 = vadd.f32 %v182, %v338
  %v340 = vpop.f32.mrb[0].mxu0
  %v341 = vpop.f32.mrb[0].mxu0
  %v342 = vadd.f32 %v185, %v341
  %v343 = vpop.f32.mrb[0].mxu0
  %344 = vmatprep.mubr.bf16.mxu0 0
  %345 = vmatmul.mubr.bf16.gmra.mrb[0].mxu0 %v279
  %v346 = vpop.f32.mrb[0].mxu0
  %v347 = vadd.f32 %v190, %v346
  %v348 = vpop.f32.mrb[0].mxu0
  %v349 = vpop.f32.mrb[0].mxu0
  %v350 = vadd.f32 %v193, %v349
  %v351 = vpop.f32.mrb[0].mxu0
  %352 = vmatprep.mubr.bf16.mxu0 0
  %353 = vmatmul.mubr.bf16.gmra.mrb[0].mxu0 %v282
  %v354 = vpop.f32.mrb[0].mxu0
  %v355 = vadd.f32 %v198, %v354
  %v356 = vpop.f32.mrb[0].mxu0
  %v357 = vpop.f32.mrb[0].mxu0
  %v358 = vadd.f32 %v201, %v357
  %v359 = vpop.f32.mrb[0].mxu0
  %360 = vmatprep.mubr.bf16.mxu0 0
  %361 = vmatmul.mubr.bf16.gmra.mrb[0].mxu0 %v285
  %v362 = vpop.f32.mrb[0].mxu0
  %v363 = vadd.f32 %v206, %v362
  %v364 = vpop.f32.mrb[0].mxu0
  %v365 = vpop.f32.mrb[0].mxu0
  %v366 = vadd.f32 %v209, %v365
  %v367 = vpop.f32.mrb[0].mxu0
  %368 = vmatprep.mubr.bf16.mxu0 0
  %369 = vmatmul.mubr.bf16.gmra.mrb[0].mxu0 %v288
  %v370 = vpop.f32.mrb[0].mxu0
  %v371 = vadd.f32 %v214, %v370
  %v372 = vpop.f32.mrb[0].mxu0
  %v373 = vpop.f32.mrb[0].mxu0
  %v374 = vadd.f32 %v217, %v373
  %v375 = vpop.f32.mrb[0].mxu0
  %376 = vmatprep.mubr.bf16.mxu0 0
  %377 = vmatmul.mubr.bf16.gmra.mrb[0].mxu0 %v291
  %v378 = vpop.f32.mrb[0].mxu0
  %v379 = vadd.f32 %v222, %v378
  %v380 = vpop.f32.mrb[0].mxu0
  %v381 = vpop.f32.mrb[0].mxu0
  %v382 = vadd.f32 %v225, %v381
  %v383 = vpop.f32.mrb[0].mxu0
  %384 = vmatprep.mubr.bf16.mxu0 0
  %385 = vmatmul.mubr.bf16.gmra.mrb[0].mxu0 %v294
  %v386 = vpop.f32.mrb[0].mxu0
  %v387 = vadd.f32 %v230, %v386
  %v388 = vpop.f32.mrb[0].mxu0
  %v389 = vpop.f32.mrb[0].mxu0
  %v390 = vadd.f32 %v233, %v389
  %v391 = vpop.f32.mrb[0].mxu0
  %392 = vdwg.mxu0
  %vm393 = vcmask 130048
  %v394 = vsel %vm393, %v331, 0.0
  %v395 = vsel %vm393, %v334, 0.0
  %v396 = vadd.f32 %v394, %v395
  %v397 = vsel %vm393, %v339, 0.0
  %v398 = vadd.f32 %v396, %v397
  %v399 = vsel %vm393, %v342, 0.0
  %v400 = vadd.f32 %v398, %v399
  %v401 = vsel %vm393, %v347, 0.0
  %v402 = vadd.f32 %v400, %v401
  %v403 = vsel %vm393, %v350, 0.0
  %v404 = vadd.f32 %v402, %v403
  %v405 = vsel %vm393, %v355, 0.0
  %v406 = vadd.f32 %v404, %v405
  %v407 = vsel %vm393, %v358, 0.0
  %v408 = vadd.f32 %v406, %v407
  %v409 = vsel %vm393, %v363, 0.0
  %v410 = vadd.f32 %v408, %v409
  %v411 = vsel %vm393, %v366, 0.0
  %v412 = vadd.f32 %v410, %v411
  %v413 = vsel %vm393, %v371, 0.0
  %v414 = vadd.f32 %v412, %v413
  %v415 = vsel %vm393, %v374, 0.0
  %v416 = vadd.f32 %v414, %v415
  %v417 = vsel %vm393, %v379, 0.0
  %v418 = vadd.f32 %v416, %v417
  %v419 = vsel %vm393, %v382, 0.0
  %v420 = vadd.f32 %v418, %v419
  %v421 = vsel %vm393, %v387, 0.0
  %v422 = vadd.f32 %v420, %v421
  %v423 = vsel %vm393, %v390, 0.0
  %v424 = vadd.f32 %v422, %v423
  %v425 = vrot.slane %v424, 4
  %v426 = vadd.f32 %v424, %v425
  %v427 = vrot.slane %v426, 2
  %v428 = vadd.f32 %v426, %v427
  %v429 = vrot.slane %v428, 1
  %v430 = vadd.f32 %v428, %v429
  %v431 = vadd.f32 %v430, 0.0
  %v432 = vmul.f32 %v331, %v331
  %v433 = vmul.f32 %v334, %v334
  %v434 = vmul.f32 %v339, %v339
  %v435 = vmul.f32 %v342, %v342
  %v436 = vmul.f32 %v347, %v347
  %v437 = vmul.f32 %v350, %v350
  %v438 = vmul.f32 %v355, %v355
  %v439 = vmul.f32 %v358, %v358
  %v440 = vmul.f32 %v363, %v363
  %v441 = vmul.f32 %v366, %v366
  %v442 = vmul.f32 %v371, %v371
  %v443 = vmul.f32 %v374, %v374
  %v444 = vmul.f32 %v379, %v379
  %v445 = vmul.f32 %v382, %v382
  %v446 = vmul.f32 %v387, %v387
  %v447 = vmul.f32 %v390, %v390
  %v448 = vsel %vm393, %v432, 0.0
  %v449 = vsel %vm393, %v433, 0.0
  %v450 = vadd.f32 %v448, %v449
  %v451 = vsel %vm393, %v434, 0.0
  %v452 = vadd.f32 %v450, %v451
  %v453 = vsel %vm393, %v435, 0.0
  %v454 = vadd.f32 %v452, %v453
  %v455 = vsel %vm393, %v436, 0.0
  %v456 = vadd.f32 %v454, %v455
  %v457 = vsel %vm393, %v437, 0.0
  %v458 = vadd.f32 %v456, %v457
  %v459 = vsel %vm393, %v438, 0.0
  %v460 = vadd.f32 %v458, %v459
  %v461 = vsel %vm393, %v439, 0.0
  %v462 = vadd.f32 %v460, %v461
  %v463 = vsel %vm393, %v440, 0.0
  %v464 = vadd.f32 %v462, %v463
  %v465 = vsel %vm393, %v441, 0.0
  %v466 = vadd.f32 %v464, %v465
  %v467 = vsel %vm393, %v442, 0.0
  %v468 = vadd.f32 %v466, %v467
  %v469 = vsel %vm393, %v443, 0.0
  %v470 = vadd.f32 %v468, %v469
  %v471 = vsel %vm393, %v444, 0.0
  %v472 = vadd.f32 %v470, %v471
  %v473 = vsel %vm393, %v445, 0.0
  %v474 = vadd.f32 %v472, %v473
  %v475 = vsel %vm393, %v446, 0.0
  %v476 = vadd.f32 %v474, %v475
  %v477 = vsel %vm393, %v447, 0.0
  %v478 = vadd.f32 %v476, %v477
  %v479 = vrot.slane %v478, 4
  %v480 = vadd.f32 %v478, %v479
  %v481 = vrot.slane %v480, 2
  %v482 = vadd.f32 %v480, %v481
  %v483 = vrot.slane %v482, 1
  %v484 = vadd.f32 %v482, %v483
  %v485 = vadd.f32 %v484, 0.0
  %v486 = vpack.c.bf16 %v334, %v331
  %v487 = vpack.c.bf16 %v342, %v339
  %v488 = vpack.c.bf16 %v350, %v347
  %v489 = vpack.c.bf16 %v358, %v355
  %v490 = vpack.c.bf16 %v366, %v363
  %v491 = vpack.c.bf16 %v374, %v371
  %v492 = vpack.c.bf16 %v382, %v379
  %v493 = vpack.c.bf16 %v390, %v387
  %v502 = vunpack.c.l.b16 %v486
  %v503 = vunpack.c.h.b16 %v486
  %v504 = vunpack.c.l.b16 %v487
  %v505 = vunpack.c.h.b16 %v487
  %v506 = vunpack.c.l.b16 %v488
  %v507 = vunpack.c.h.b16 %v488
  %v508 = vunpack.c.l.b16 %v489
  %v509 = vunpack.c.h.b16 %v489
  %v510 = vunpack.c.l.b16 %v490
  %v511 = vunpack.c.h.b16 %v490
  %v512 = vunpack.c.l.b16 %v491
  %v513 = vunpack.c.h.b16 %v491
  %v514 = vunpack.c.l.b16 %v492
  %v515 = vunpack.c.h.b16 %v492
  %v516 = vunpack.c.l.b16 %v493
  %v517 = vunpack.c.h.b16 %v493
  %v518 = vpack.c.b16 %v502, %v502
  %v519 = vpack.c.b16 %v503, %v503
  %v520 = vpack.c.b16 %v504, %v504
  %v521 = vpack.c.b16 %v505, %v505
  %v522 = vpack.c.b16 %v506, %v506
  %v523 = vpack.c.b16 %v507, %v507
  %v524 = vpack.c.b16 %v508, %v508
  %v525 = vpack.c.b16 %v509, %v509
  %v526 = vpack.c.b16 %v510, %v510
  %v527 = vpack.c.b16 %v511, %v511
  %v528 = vpack.c.b16 %v512, %v512
  %v529 = vpack.c.b16 %v513, %v513
  %v530 = vpack.c.b16 %v514, %v514
  %v531 = vpack.c.b16 %v515, %v515
  %v532 = vpack.c.b16 %v516, %v516
  %v533 = vpack.c.b16 %v517, %v517
  %vm550 = vcmask 125952
  %551 = vst.msk [vmem:[%s2] sm:$0xf] %vm550, %v518
  %552 = vst.msk [vmem:[%s2 + $0x4] sm:$0xf] %vm550, %v519
  %553 = vst.msk [vmem:[%s2 + $0x8] sm:$0xf] %vm550, %v520
  %554 = vst.msk [vmem:[%s2 + $0xc] sm:$0xf] %vm550, %v521
  %555 = vst.msk [vmem:[%s2 + $0x10] sm:$0xf] %vm550, %v522
  %556 = vst.msk [vmem:[%s2 + $0x14] sm:$0xf] %vm550, %v523
  %557 = vst.msk [vmem:[%s2 + $0x18] sm:$0xf] %vm550, %v524
  %558 = vst.msk [vmem:[%s2 + $0x1c] sm:$0xf] %vm550, %v525
  %559 = vst.msk [vmem:[%s2 + $0x20] sm:$0xf] %vm550, %v526
  %560 = vst.msk [vmem:[%s2 + $0x24] sm:$0xf] %vm550, %v527
  %561 = vst.msk [vmem:[%s2 + $0x28] sm:$0xf] %vm550, %v528
  %562 = vst.msk [vmem:[%s2 + $0x2c] sm:$0xf] %vm550, %v529
  %563 = vst.msk [vmem:[%s2 + $0x30] sm:$0xf] %vm550, %v530
  %564 = vst.msk [vmem:[%s2 + $0x34] sm:$0xf] %vm550, %v531
  %565 = vst.msk [vmem:[%s2 + $0x38] sm:$0xf] %vm550, %v532
  %566 = vst.msk [vmem:[%s2 + $0x3c] sm:$0xf] %vm550, %v533
  %vm567 = vcmask 122880
  %568 = vst.msk [vmem:[%s3] sm:$0x1] %vm567, %v431
  %569 = vst.msk [vmem:[%s4] sm:$0x1] %vm567, %v485
  // Predicated region
  $region10: #{discriminator_forward.7} parent=0 // pred_check
    _
  $region11: #{discriminator_forward.7} parent=0 // pred_check_branch
    %571 = sbr.rel (0) target = $region13
  $region12: #{discriminator_forward.7} parent=0 // pred_region
    _
  $region13: #{discriminator_forward.7} parent=0 // pred_fallthru
    _
  // Predicated region
  $region14: #{discriminator_forward.7} parent=0 // pred_check
    _
  $region15: #{discriminator_forward.7} parent=0 // pred_check_branch
    %573 = sbr.rel (0) target = $region17
  $region16: #{discriminator_forward.7} parent=0 // pred_region
    _
  $region17: #{discriminator_forward.7} parent=0 // pred_fallthru
    _
  // Predicated region
  $region18: #{discriminator_forward.7} parent=0 // pred_check
    _
  $region19: #{discriminator_forward.7} parent=0 // pred_check_branch
    %575 = sbr.rel (0) target = $region21
  $region20: #{discriminator_forward.7} parent=0 // pred_region
    _
  $region21: #{discriminator_forward.7} parent=0 // pred_fallthru
    _
  // Predicated region
  $region22: #{discriminator_forward.7} parent=0 // pred_check
    _
  $region23: #{discriminator_forward.7} parent=0 // pred_check_branch
    %577 = sbr.rel (0) target = $region25
  $region24: #{discriminator_forward.7} parent=0 // pred_region
    _
  $region25: #{discriminator_forward.7} parent=0 // pred_fallthru
    _
  // Predicated region
  $region26: #{discriminator_forward.7} parent=0 // pred_check
    _
  $region27: #{discriminator_forward.7} parent=0 // pred_check_branch
    %579 = sbr.rel (0) target = $region29
  $region28: #{discriminator_forward.7} parent=0 // pred_region
    _
  $region29: #{discriminator_forward.7} parent=0 // pred_fallthru
    _
  // Predicated region
  $region30: #{discriminator_forward.7} parent=0 // pred_check
    _
  $region31: #{discriminator_forward.7} parent=0 // pred_check_branch
    %581 = sbr.rel (0) target = $region33
  $region32: #{discriminator_forward.7} parent=0 // pred_region
    _
  $region33: #{discriminator_forward.7} parent=0 // pred_fallthru
    _

// kernel: discriminator_forward.8
$region0: #{discriminator_forward.8}
  #allocation0 [shape = 'u32[]', space=smem, size = 0x4, offset = 0x4, fixed_abs, tag = 'smem constant byte address 0x4 - core index']
  #allocation1 [shape = 'u32[144,128]{1,0:T(1,128)}', space=vmem, size = 0x12000, scoped, tag = 'internal scratch']
  %s0 = inlined_call_operand.vmem [shape: bf16[2,20,128], index: 0, kind: input, shape index: {}]
  %s1 = inlined_call_operand.vmem [shape: bf16[2,128,32], index: 1, kind: input, shape index: {}]
  %s2 = inlined_call_operand.vmem [shape: bf16[2,16,32], index: 2, kind: output, shape index: {0}]
  %s3 = inlined_call_operand.vmem [shape: f32[1,32], index: 3, kind: output, shape index: {1}]
  %s4 = inlined_call_operand.vmem [shape: f32[1,32], index: 4, kind: output, shape index: {2}]
  %5 = xla_tuple %s2, %s3, %s4
  %s6 = sld [smem:[#allocation0]]
  $region34: #{discriminator_forward.8} parent=0
    _
  %s8 = ssub.s32 1, %s6
  %s9 = scalar_select 0, %s8, %s6
  // Predicated region
  $region2: #{discriminator_forward.8} parent=0 // pred_check
    _
  $region3: #{discriminator_forward.8} parent=0 // pred_check_branch
    %11 = sbr.rel (0) target = $region5
  $region4: #{discriminator_forward.8} parent=0 // pred_region
    _
  $region5: #{discriminator_forward.8} parent=0 // pred_fallthru
    _
  // Predicated region
  $region6: #{discriminator_forward.8} parent=0 // pred_check
    _
  $region7: #{discriminator_forward.8} parent=0 // pred_check_branch
    %13 = sbr.rel (0) target = $region9
  $region8: #{discriminator_forward.8} parent=0 // pred_region
    _
  $region9: #{discriminator_forward.8} parent=0 // pred_fallthru
    _
  %v15 = vld [vmem:[%s0] sm:$0xf]
  %v16 = vld [vmem:[%s0 + $0x4] sm:$0xf]
  %v17 = vld [vmem:[%s0 + $0xc] sm:$0xf]
  %v18 = vld [vmem:[%s0 + $0x10] sm:$0xf]
  %v19 = vld [vmem:[%s1] sm:$0xf]
  %v20 = vld [vmem:[%s1 + $0x4] sm:$0xf]
  %v21 = vld [vmem:[%s1 + $0x8] sm:$0xf]
  %v22 = vld [vmem:[%s1 + $0xc] sm:$0xf]
  %v23 = vld [vmem:[%s1 + $0x10] sm:$0xf]
  %v24 = vld [vmem:[%s1 + $0x14] sm:$0xf]
  %v25 = vld [vmem:[%s1 + $0x18] sm:$0xf]
  %v26 = vld [vmem:[%s1 + $0x1c] sm:$0xf]
  %v27 = vld [vmem:[%s1 + $0x20] sm:$0xf]
  %v28 = vld [vmem:[%s1 + $0x24] sm:$0xf]
  %v29 = vld [vmem:[%s1 + $0x28] sm:$0xf]
  %v30 = vld [vmem:[%s1 + $0x2c] sm:$0xf]
  %v31 = vld [vmem:[%s1 + $0x30] sm:$0xf]
  %v32 = vld [vmem:[%s1 + $0x34] sm:$0xf]
  %v33 = vld [vmem:[%s1 + $0x38] sm:$0xf]
  %v34 = vld [vmem:[%s1 + $0x3c] sm:$0xf]
  %v35 = vld [vmem:[%s0] sm:$0xc]
  %v36 = vld [vmem:[%s0 + $0x8] sm:$0x3]
  %v37 = vld [vmem:[%s0 + $0xc] sm:$0xc]
  %v38 = vld [vmem:[%s0 + $0x14] sm:$0x3]
  %vm45 = vcmask 1041408
  %vm46 = vcmask 1045508
  %vm47 = vmor %vm45, %vm46
  %v48 = vrot.slane %v35, 6
  %v49 = vrot.slane %v48, 4
  %v50 = vrot.slane %v16, 6
  %v51 = vsel %vm47, %v49, %v50
  %v52 = vrot.slane %v50, 4
  %v53 = vrot.slane %v36, 6
  %v54 = vsel %vm47, %v52, %v53
  %v55 = vrot.slane %v37, 6
  %v56 = vrot.slane %v55, 4
  %v57 = vrot.slane %v18, 6
  %v58 = vsel %vm47, %v56, %v57
  %v59 = vrot.slane %v57, 4
  %v60 = vrot.slane %v38, 6
  %v61 = vsel %vm47, %v59, %v60
  %s62 = scalar_lea.vmem %s1, 64
  %v63 = vld [vmem:[%s62] sm:$0xf]
  %v64 = vld [vmem:[%s62 + $0x4] sm:$0xf]
  %v65 = vld [vmem:[%s62 + $0x8] sm:$0xf]
  %v66 = vld [vmem:[%s62 + $0xc] sm:$0xf]
  %v67 = vld [vmem:[%s62 + $0x10] sm:$0xf]
  %v68 = vld [vmem:[%s62 + $0x14] sm:$0xf]
  %v69 = vld [vmem:[%s62 + $0x18] sm:$0xf]
  %v70 = vld [vmem:[%s62 + $0x1c] sm:$0xf]
  %v71 = vld [vmem:[%s62 + $0x20] sm:$0xf]
  %v72 = vld [vmem:[%s62 + $0x24] sm:$0xf]
  %v73 = vld [vmem:[%s62 + $0x28] sm:$0xf]
  %v74 = vld [vmem:[%s62 + $0x2c] sm:$0xf]
  %v75 = vld [vmem:[%s62 + $0x30] sm:$0xf]
  %v76 = vld [vmem:[%s62 + $0x34] sm:$0xf]
  %v77 = vld [vmem:[%s62 + $0x38] sm:$0xf]
  %v78 = vld [vmem:[%s62 + $0x3c] sm:$0xf]
  %v79 = vunpack.c.l.b16 %v51
  %v80 = vunpack.c.l.b16 %v54
  %v81 = vunpack.c.l.b16 %v58
  %v82 = vunpack.c.l.b16 %v61
  %v83 = vpack.c.b16 %v80, %v79
  %v84 = vpack.c.b16 %v82, %v81
  %v103 = vunpack.c.l.b16 %v63
  %v104 = vunpack.c.l.b16 %v64
  %v105 = vunpack.c.l.b16 %v65
  %v106 = vunpack.c.l.b16 %v66
  %v107 = vunpack.c.l.b16 %v67
  %v108 = vunpack.c.l.b16 %v68
  %v109 = vunpack.c.l.b16 %v69
  %v110 = vunpack.c.l.b16 %v70
  %v111 = vunpack.c.l.b16 %v71
  %v112 = vunpack.c.l.b16 %v72
  %v113 = vunpack.c.l.b16 %v73
  %v114 = vunpack.c.l.b16 %v74
  %v115 = vunpack.c.l.b16 %v75
  %v116 = vunpack.c.l.b16 %v76
  %v117 = vunpack.c.l.b16 %v77
  %v118 = vunpack.c.l.b16 %v78
  %v119 = vpack.c.b16 %v104, %v103
  %v120 = vpack.c.b16 %v106, %v105
  %v121 = vpack.c.b16 %v108, %v107
  %v122 = vpack.c.b16 %v110, %v109
  %v123 = vpack.c.b16 %v112, %v111
  %v124 = vpack.c.b16 %v114, %v113
  %v125 = vpack.c.b16 %v116, %v115
  %v126 = vpack.c.b16 %v118, %v117
  %135 = vmatprep.subr.bf16.mxu0 0
  %136 = vmatpush1.bf16.msra.mxu0 %v119
  %137 = vmatprep.subr.bf16.mxu0 0
  %138 = vmatpush1.bf16.msra.mxu0 %v120
  %139 = vmatprep.subr.bf16.mxu0 0
  %140 = vmatpush1.bf16.msra.mxu0 %v121
  %141 = vmatprep.subr.bf16.mxu0 0
  %142 = vmatpush1.bf16.msra.mxu0 %v122
  %143 = vmatprep.subr.bf16.mxu0 0
  %144 = vmatpush1.bf16.msra.mxu0 %v123
  %145 = vmatprep.subr.bf16.mxu0 0
  %146 = vmatpush1.bf16.msra.mxu0 %v124
  %147 = vmatprep.subr.bf16.mxu0 0
  %148 = vmatpush1.bf16.msra.mxu0 %v125
  %149 = vmatprep.subr.bf16.mxu0 0
  %150 = vmatpush1.bf16.msra.mxu0 %v126
  %151 = vmatprep.subr.bf16.mxu0 0
  %152 = vmatpush1.bf16.msra.mxu0 0
  %153 = vmatprep.subr.bf16.mxu0 0
  %154 = vmatpush1.bf16.msra.mxu0 0
  %155 = vmatprep.subr.bf16.mxu0 0
  %156 = vmatpush1.bf16.msra.mxu0 0
  %157 = vmatprep.subr.bf16.mxu0 0
  %158 = vmatpush1.bf16.msra.mxu0 0
  %159 = vmatprep.subr.bf16.mxu0 0
  %160 = vmatpush1.bf16.msra.mxu0 0
  %161 = vmatprep.subr.bf16.mxu0 0
  %162 = vmatpush1.bf16.msra.mxu0 0
  %163 = vmatprep.subr.bf16.mxu0 0
  %164 = vmatpush1.bf16.msra.mxu0 0
  %165 = vmatprep.subr.bf16.mxu0 0
  %166 = vmatpush1.bf16.msra.mxu0 0
  %167 = vmatprep.mubr.bf16.mxu0 0
  %168 = vmatmul.mubr.bf16.gmra.mrb[0].mxu0 %v83
  %v169 = vpop.f32.mrb[0].mxu0
  %v170 = vadd.f32 0.0, %v169
  %v171 = vpop.f32.mrb[0].mxu0
  %v172 = vpop.f32.mrb[0].mxu0
  %v173 = vadd.f32 0.0, %v172
  %v174 = vpop.f32.mrb[0].mxu0
  %175 = vmatprep.mubr.bf16.mxu0 0
  %176 = vmatmul.mubr.bf16.gmra.mrb[0].mxu0 %v84
  %v177 = vpop.f32.mrb[0].mxu0
  %v178 = vadd.f32 0.0, %v177
  %v179 = vpop.f32.mrb[0].mxu0
  %v180 = vpop.f32.mrb[0].mxu0
  %v181 = vadd.f32 0.0, %v180
  %v182 = vpop.f32.mrb[0].mxu0
  %183 = vdwg.mxu0
  %v186 = vunpack.c.l.b16 %v15
  %v187 = vunpack.c.l.b16 %v16
  %v188 = vunpack.c.l.b16 %v17
  %v189 = vunpack.c.l.b16 %v18
  %v190 = vpack.c.b16 %v187, %v186
  %v191 = vpack.c.b16 %v189, %v188
  %v210 = vunpack.c.l.b16 %v19
  %v211 = vunpack.c.l.b16 %v20
  %v212 = vunpack.c.l.b16 %v21
  %v213 = vunpack.c.l.b16 %v22
  %v214 = vunpack.c.l.b16 %v23
  %v215 = vunpack.c.l.b16 %v24
  %v216 = vunpack.c.l.b16 %v25
  %v217 = vunpack.c.l.b16 %v26
  %v218 = vunpack.c.l.b16 %v27
  %v219 = vunpack.c.l.b16 %v28
  %v220 = vunpack.c.l.b16 %v29
  %v221 = vunpack.c.l.b16 %v30
  %v222 = vunpack.c.l.b16 %v31
  %v223 = vunpack.c.l.b16 %v32
  %v224 = vunpack.c.l.b16 %v33
  %v225 = vunpack.c.l.b16 %v34
  %v226 = vpack.c.b16 %v211, %v210
  %v227 = vpack.c.b16 %v213, %v212
  %v228 = vpack.c.b16 %v215, %v214
  %v229 = vpack.c.b16 %v217, %v216
  %v230 = vpack.c.b16 %v219, %v218
  %v231 = vpack.c.b16 %v221, %v220
  %v232 = vpack.c.b16 %v223, %v222
  %v233 = vpack.c.b16 %v225, %v224
  %242 = vmatprep.subr.bf16.mxu0 0
  %243 = vmatpush1.bf16.msra.mxu0 %v226
  %244 = vmatprep.subr.bf16.mxu0 0
  %245 = vmatpush1.bf16.msra.mxu0 %v227
  %246 = vmatprep.subr.bf16.mxu0 0
  %247 = vmatpush1.bf16.msra.mxu0 %v228
  %248 = vmatprep.subr.bf16.mxu0 0
  %249 = vmatpush1.bf16.msra.mxu0 %v229
  %250 = vmatprep.subr.bf16.mxu0 0
  %251 = vmatpush1.bf16.msra.mxu0 %v230
  %252 = vmatprep.subr.bf16.mxu0 0
  %253 = vmatpush1.bf16.msra.mxu0 %v231
  %254 = vmatprep.subr.bf16.mxu0 0
  %255 = vmatpush1.bf16.msra.mxu0 %v232
  %256 = vmatprep.subr.bf16.mxu0 0
  %257 = vmatpush1.bf16.msra.mxu0 %v233
  %258 = vmatprep.subr.bf16.mxu0 0
  %259 = vmatpush1.bf16.msra.mxu0 0
  %260 = vmatprep.subr.bf16.mxu0 0
  %261 = vmatpush1.bf16.msra.mxu0 0
  %262 = vmatprep.subr.bf16.mxu0 0
  %263 = vmatpush1.bf16.msra.mxu0 0
  %264 = vmatprep.subr.bf16.mxu0 0
  %265 = vmatpush1.bf16.msra.mxu0 0
  %266 = vmatprep.subr.bf16.mxu0 0
  %267 = vmatpush1.bf16.msra.mxu0 0
  %268 = vmatprep.subr.bf16.mxu0 0
  %269 = vmatpush1.bf16.msra.mxu0 0
  %270 = vmatprep.subr.bf16.mxu0 0
  %271 = vmatpush1.bf16.msra.mxu0 0
  %272 = vmatprep.subr.bf16.mxu0 0
  %273 = vmatpush1.bf16.msra.mxu0 0
  %274 = vmatprep.mubr.bf16.mxu0 0
  %275 = vmatmul.mubr.bf16.gmra.mrb[0].mxu0 %v190
  %v276 = vpop.f32.mrb[0].mxu0
  %v277 = vadd.f32 %v170, %v276
  %v278 = vpop.f32.mrb[0].mxu0
  %v279 = vpop.f32.mrb[0].mxu0
  %v280 = vadd.f32 %v173, %v279
  %v281 = vpop.f32.mrb[0].mxu0
  %282 = vmatprep.mubr.bf16.mxu0 0
  %283 = vmatmul.mubr.bf16.gmra.mrb[0].mxu0 %v191
  %v284 = vpop.f32.mrb[0].mxu0
  %v285 = vadd.f32 %v178, %v284
  %v286 = vpop.f32.mrb[0].mxu0
  %v287 = vpop.f32.mrb[0].mxu0
  %v288 = vadd.f32 %v181, %v287
  %v289 = vpop.f32.mrb[0].mxu0
  %290 = vdwg.mxu0
  %vm291 = vcmask 261120
  %v292 = vsel %vm291, %v277, 0.0
  %v293 = vsel %vm291, %v280, 0.0
  %v294 = vadd.f32 %v292, %v293
  %v295 = vsel %vm291, %v285, 0.0
  %v296 = vadd.f32 %v294, %v295
  %v297 = vsel %vm291, %v288, 0.0
  %v298 = vadd.f32 %v296, %v297
  %v299 = vrot.slane %v298, 4
  %v300 = vadd.f32 %v298, %v299
  %v301 = vrot.slane %v300, 2
  %v302 = vadd.f32 %v300, %v301
  %v303 = vrot.slane %v302, 1
  %v304 = vadd.f32 %v302, %v303
  %v305 = vadd.f32 %v304, 0.0
  %v306 = vmul.f32 %v277, %v277
  %v307 = vmul.f32 %v280, %v280
  %v308 = vmul.f32 %v285, %v285
  %v309 = vmul.f32 %v288, %v288
  %v310 = vsel %vm291, %v306, 0.0
  %v311 = vsel %vm291, %v307, 0.0
  %v312 = vadd.f32 %v310, %v311
  %v313 = vsel %vm291, %v308, 0.0
  %v314 = vadd.f32 %v312, %v313
  %v315 = vsel %vm291, %v309, 0.0
  %v316 = vadd.f32 %v314, %v315
  %v317 = vrot.slane %v316, 4
  %v318 = vadd.f32 %v316, %v317
  %v319 = vrot.slane %v318, 2
  %v320 = vadd.f32 %v318, %v319
  %v321 = vrot.slane %v320, 1
  %v322 = vadd.f32 %v320, %v321
  %v323 = vadd.f32 %v322, 0.0
  %v324 = vpack.c.bf16 %v280, %v277
  %v325 = vpack.c.bf16 %v288, %v285
  %v328 = vunpack.c.l.b16 %v324
  %v329 = vunpack.c.h.b16 %v324
  %v330 = vunpack.c.l.b16 %v325
  %v331 = vunpack.c.h.b16 %v325
  %v332 = vpack.c.b16 %v328, %v328
  %v333 = vpack.c.b16 %v329, %v329
  %v334 = vpack.c.b16 %v330, %v330
  %v335 = vpack.c.b16 %v331, %v331
  %vm340 = vcmask 257024
  %341 = vst.msk [vmem:[%s2] sm:$0xf] %vm340, %v332
  %342 = vst.msk [vmem:[%s2 + $0x4] sm:$0xf] %vm340, %v333
  %343 = vst.msk [vmem:[%s2 + $0x8] sm:$0xf] %vm340, %v334
  %344 = vst.msk [vmem:[%s2 + $0xc] sm:$0xf] %vm340, %v335
  %vm345 = vcmask 253952
  %346 = vst.msk [vmem:[%s3] sm:$0x1] %vm345, %v305
  %347 = vst.msk [vmem:[%s4] sm:$0x1] %vm345, %v323
  // Predicated region
  $region10: #{discriminator_forward.8} parent=0 // pred_check
    _
  $region11: #{discriminator_forward.8} parent=0 // pred_check_branch
    %349 = sbr.rel (0) target = $region13
  $region12: #{discriminator_forward.8} parent=0 // pred_region
    _
  $region13: #{discriminator_forward.8} parent=0 // pred_fallthru
    _
  // Predicated region
  $region14: #{discriminator_forward.8} parent=0 // pred_check
    _
  $region15: #{discriminator_forward.8} parent=0 // pred_check_branch
    %351 = sbr.rel (0) target = $region17
  $region16: #{discriminator_forward.8} parent=0 // pred_region
    _
  $region17: #{discriminator_forward.8} parent=0 // pred_fallthru
    _
  // Predicated region
  $region18: #{discriminator_forward.8} parent=0 // pred_check
    _
  $region19: #{discriminator_forward.8} parent=0 // pred_check_branch
    %353 = sbr.rel (0) target = $region21
  $region20: #{discriminator_forward.8} parent=0 // pred_region
    _
  $region21: #{discriminator_forward.8} parent=0 // pred_fallthru
    _
  // Predicated region
  $region22: #{discriminator_forward.8} parent=0 // pred_check
    _
  $region23: #{discriminator_forward.8} parent=0 // pred_check_branch
    %355 = sbr.rel (0) target = $region25
  $region24: #{discriminator_forward.8} parent=0 // pred_region
    _
  $region25: #{discriminator_forward.8} parent=0 // pred_fallthru
    _
  // Predicated region
  $region26: #{discriminator_forward.8} parent=0 // pred_check
    _
  $region27: #{discriminator_forward.8} parent=0 // pred_check_branch
    %357 = sbr.rel (0) target = $region29
  $region28: #{discriminator_forward.8} parent=0 // pred_region
    _
  $region29: #{discriminator_forward.8} parent=0 // pred_fallthru
    _
  // Predicated region
  $region30: #{discriminator_forward.8} parent=0 // pred_check
    _
  $region31: #{discriminator_forward.8} parent=0 // pred_check_branch
    %359 = sbr.rel (0) target = $region33
  $region32: #{discriminator_forward.8} parent=0 // pred_region
    _
  $region33: #{discriminator_forward.8} parent=0 // pred_fallthru
    _

// kernel: discriminator_forward.9
$region0: #{discriminator_forward.9}
  #allocation0 [shape = 'u32[]', space=smem, size = 0x4, offset = 0x4, fixed_abs, tag = 'smem constant byte address 0x4 - core index']
  #allocation1 [shape = 'u32[144,128]{1,0:T(1,128)}', space=vmem, size = 0x12000, scoped, tag = 'internal scratch']
  #allocation2 [shape = 'f32[1,1]{1,0:T(1,128)S(1)}', space=vmem, size = 0x200, scoped, tag = 'scoped memory for discriminator_forward.9']
  %s0 = inlined_call_operand.vmem [shape: f32[2,512], index: 0, kind: input, shape index: {}]
  %s1 = inlined_call_operand.vmem [shape: f32[2,6], index: 1, kind: input, shape index: {}]
  %s2 = inlined_call_operand.vmem [shape: f32[2,4], index: 2, kind: input, shape index: {}]
  %s3 = inlined_call_operand.vmem [shape: f32[1,512], index: 3, kind: input, shape index: {}]
  %s4 = inlined_call_operand.vmem [shape: f32[1,6], index: 4, kind: input, shape index: {}]
  %s5 = inlined_call_operand.vmem [shape: f32[1,4], index: 5, kind: input, shape index: {}]
  %s6 = inlined_call_operand.<no memory space> [shape: f32[1,1], index: 6, kind: input, shape index: {}]
  %s7 = inlined_call_operand.vmem [shape: f32[2,1], index: 7, kind: output, shape index: {0}]
  %s8 = inlined_call_operand.vmem [shape: f32[2,1], index: 8, kind: output, shape index: {1}]
  %9 = xla_tuple %s7, %s8
  %s10 = sld [smem:[#allocation0]]
  $region46: #{discriminator_forward.9} parent=0
    _
  %s12 = ssub.s32 1, %s10
  %s13 = scalar_select 0, %s12, %s10
  %v14 = vstv %s6
  %15 = vst [vmem:[#allocation2] sm:$0x1] %v14
  // Predicated region
  $region2: #{discriminator_forward.9} parent=0 // pred_check
    _
  $region3: #{discriminator_forward.9} parent=0 // pred_check_branch
    %17 = sbr.rel (0) target = $region5
  $region4: #{discriminator_forward.9} parent=0 // pred_region
    _
  $region5: #{discriminator_forward.9} parent=0 // pred_fallthru
    _
  // Predicated region
  $region6: #{discriminator_forward.9} parent=0 // pred_check
    _
  $region7: #{discriminator_forward.9} parent=0 // pred_check_branch
    %19 = sbr.rel (0) target = $region9
  $region8: #{discriminator_forward.9} parent=0 // pred_region
    _
  $region9: #{discriminator_forward.9} parent=0 // pred_fallthru
    _
  // Predicated region
  $region10: #{discriminator_forward.9} parent=0 // pred_check
    _
  $region11: #{discriminator_forward.9} parent=0 // pred_check_branch
    %21 = sbr.rel (0) target = $region13
  $region12: #{discriminator_forward.9} parent=0 // pred_region
    _
  $region13: #{discriminator_forward.9} parent=0 // pred_fallthru
    _
  // Predicated region
  $region14: #{discriminator_forward.9} parent=0 // pred_check
    _
  $region15: #{discriminator_forward.9} parent=0 // pred_check_branch
    %23 = sbr.rel (0) target = $region17
  $region16: #{discriminator_forward.9} parent=0 // pred_region
    _
  $region17: #{discriminator_forward.9} parent=0 // pred_fallthru
    _
  // Predicated region
  $region18: #{discriminator_forward.9} parent=0 // pred_check
    _
  $region19: #{discriminator_forward.9} parent=0 // pred_check_branch
    %25 = sbr.rel (0) target = $region21
  $region20: #{discriminator_forward.9} parent=0 // pred_region
    _
  $region21: #{discriminator_forward.9} parent=0 // pred_fallthru
    _
  // Predicated region
  $region22: #{discriminator_forward.9} parent=0 // pred_check
    _
  $region23: #{discriminator_forward.9} parent=0 // pred_check_branch
    %27 = sbr.rel (0) target = $region25
  $region24: #{discriminator_forward.9} parent=0 // pred_region
    _
  $region25: #{discriminator_forward.9} parent=0 // pred_fallthru
    _
  // Predicated region
  $region26: #{discriminator_forward.9} parent=0 // pred_check
    _
  $region27: #{discriminator_forward.9} parent=0 // pred_check_branch
    %29 = sbr.rel (0) target = $region29
  $region28: #{discriminator_forward.9} parent=0 // pred_region
    _
  $region29: #{discriminator_forward.9} parent=0 // pred_fallthru
    _
  %v30 = vld [vmem:[%s0] sm:$0xff]
  %v31 = vld [vmem:[%s3] sm:$0xf]
  %v33 = vlaneseq
  %v34 = vshrl.u32 %v33, 7
  %v35 = vsub.s32 0, %v34
  %v36 = vrot.slane %v31, %v35
  %v37 = vlaneseq
  %v38 = vshrl.u32 %v37, 7
  %v39 = vsub.s32 1, %v38
  %v40 = vrot.slane %v31, %v39
  %v41 = vlaneseq
  %v42 = vshrl.u32 %v41, 7
  %v43 = vsub.s32 2, %v42
  %v44 = vrot.slane %v31, %v43
  %v45 = vlaneseq
  %v46 = vshrl.u32 %v45, 7
  %v47 = vsub.s32 3, %v46
  %v48 = vrot.slane %v31, %v47
  %v49 = vcombine.low %v36, %v40
  %v50 = vcombine.low %v44, %v48
  %v52 = vunpack.c.l.s4 1983009808
  %v53 = vunpack.c.0.s8 %v52
  %v54 = vlaneseq
  %v55 = vshrl.u32 %v54, 7
  %v56 = vsub.s32 %v53, %v55
  %v57 = vrot.slane %v49, %v56
  %v59 = vunpack.c.l.s4 1983009808
  %v60 = vunpack.c.0.s8 %v59
  %v61 = vlaneseq
  %v62 = vshrl.u32 %v61, 7
  %v63 = vsub.s32 %v60, %v62
  %v64 = vrot.slane %v50, %v63
  %v65 = vcombine.low %v57, %v64
  %v67 = vmul.f32 %v30, %v65
  %v69 = vcombine.high %v67, %v67
  %v71 = vunpack.c.l.s4 1983009808
  %v72 = vunpack.c.0.s8 %v71
  %v73 = vlaneseq
  %v74 = vshrl.u32 %v73, 7
  %v75 = vsub.s32 %v72, %v74
  %v76 = vrot.slane %v67, %v75
  %v78 = vunpack.c.l.s4 1983009808
  %v79 = vunpack.c.0.s8 %v78
  %v80 = vlaneseq
  %v81 = vshrl.u32 %v80, 7
  %v82 = vsub.s32 %v79, %v81
  %v83 = vrot.slane %v69, %v82
  %v84 = vcombine.high %v76, %v76
  %v85 = vcombine.high %v83, %v83
  %vm90 = vcmask 1041408
  %v91 = vsel %vm90, %v76, 0.0
  %v92 = vsel %vm90, %v84, 0.0
  %v93 = vadd.f32 %v91, %v92
  %v94 = vsel %vm90, %v83, 0.0
  %v95 = vadd.f32 %v93, %v94
  %v96 = vsel %vm90, %v85, 0.0
  %v97 = vadd.f32 %v95, %v96
  %98 = vadd.xlane.f32.xlu0 %v97
  %v99 = vpop.xlane.xlu0 %98
  %v100 = vld [vmem:[%s1] sm:$0x3]
  %v101 = vld [vmem:[%s4] sm:$0x1]
  %v103 = vlaneseq
  %v104 = vshrl.u32 %v103, 7
  %v105 = vsub.s32 0, %v104
  %v106 = vrot.slane %v101, %v105
  %v108 = vmul.f32 %v100, %v106
  %vm109 = vcmask 41984
  %v110 = vsel %vm109, %v108, 0.0
  %111 = vadd.xlane.f32.xlu0 %v110
  %v112 = vpop.xlane.xlu0 %111
  %v113 = vadd.f32 %v99, %v112
  %v114 = vld [vmem:[%s2] sm:$0x3]
  %v115 = vld [vmem:[%s5] sm:$0x1]
  %v117 = vlaneseq
  %v118 = vshrl.u32 %v117, 7
  %v119 = vsub.s32 0, %v118
  %v120 = vrot.slane %v115, %v119
  %v122 = vmul.f32 %v114, %v120
  %vm123 = vcmask 25600
  %v124 = vsel %vm123, %v122, 0.0
  %125 = vadd.xlane.f32.xlu0 %v124
  %v126 = vpop.xlane.xlu0 %125
  %v127 = vadd.f32 %v113, %v126
  %v128 = vld [vmem:[#allocation2] sm:$0x1]
  %v130 = vlaneseq
  %v131 = vshrl.u32 %v130, 7
  %v132 = vsub.s32 0, %v131
  %v133 = vrot.slane %v128, %v132
  %v135 = vadd.f32 %v127, %v133
  %vm136 = vcmask 1024
  %137 = vst.msk [vmem:[%s7] sm:$0x3] %vm136, %v135
  %v138 = vsub.f32 0.0, %v135
  %v139 = vmul.f32 %v138, 1.442695
  %v140 = vpow.pop %v139
  %v141 = vadd.f32 %v140, 1.0
  %v142 = vrcp.pop %v141
  %v143 = vmul.f32 1.0, %v142
  %144 = vst.msk [vmem:[%s8] sm:$0x3] %vm136, %v143
  // Predicated region
  $region30: #{discriminator_forward.9} parent=0 // pred_check
    _
  $region31: #{discriminator_forward.9} parent=0 // pred_check_branch
    %146 = sbr.rel (0) target = $region33
  $region32: #{discriminator_forward.9} parent=0 // pred_region
    _
  $region33: #{discriminator_forward.9} parent=0 // pred_fallthru
    _
  // Predicated region
  $region34: #{discriminator_forward.9} parent=0 // pred_check
    _
  $region35: #{discriminator_forward.9} parent=0 // pred_check_branch
    %148 = sbr.rel (0) target = $region37
  $region36: #{discriminator_forward.9} parent=0 // pred_region
    _
  $region37: #{discriminator_forward.9} parent=0 // pred_fallthru
    _
  // Predicated region
  $region38: #{discriminator_forward.9} parent=0 // pred_check
    _
  $region39: #{discriminator_forward.9} parent=0 // pred_check_branch
    %150 = sbr.rel (0) target = $region41
  $region40: #{discriminator_forward.9} parent=0 // pred_region
    _
  $region41: #{discriminator_forward.9} parent=0 // pred_fallthru
    _
  // Predicated region
  $region42: #{discriminator_forward.9} parent=0 // pred_check
    _
  $region43: #{discriminator_forward.9} parent=0 // pred_check_branch
    %152 = sbr.rel (0) target = $region45
  $region44: #{discriminator_forward.9} parent=0 // pred_region
    _
  $region45: #{discriminator_forward.9} parent=0 // pred_fallthru
    _

</llo_original>
